<compile_context>
chip_gen: v6e
topology: v6e:2x2x1
jax: 0.10.0
libtpu: 0.0.40
codegen_flags: <defaults>
</compile_context>

<pallas_src>
import functools
import math

import jax
import jax.numpy as jnp
from jax.experimental import pallas as pl
from jax.experimental.pallas import tpu as pltpu


# ------------------------------ Pallas kernels ------------------------------

def _project_kernel(x_ref, w_ref, o_ref):
    """(rows, Cin) @ (Cin, 2*Cout): the conv11/conv21 weights that act on the
    to-be-upsampled operand, applied at LOW resolution.  bf16 in, f32 MXU
    accumulation, bf16 out."""
    o_ref[...] = jnp.dot(x_ref[...], w_ref[...],
                         preferred_element_type=jnp.float32).astype(o_ref.dtype)


def _up_block_kernel(u1_ref, u2_ref, prev_ref, mask_ref,
                     w11p_ref, b11_ref, w12_ref, b12_ref,
                     w21p_ref, w21x1_ref, b21_ref, w22_ref, b22_ref,
                     x1_ref, out_ref, ebuf,
                     *, P, Wp, lead, cout, slope):
    """Fused up block for one image on the zero-padded, flattened (P, C) grid.

    P = (H+2)*(W+2), Wp = W+2.  The padded map is stored in `ebuf` starting at
    sublane offset `lead`; the 3x3 conv with padding=1 then becomes a sum of 9
    matmuls over statically shifted row-slices of that buffer.  Only the two
    block outputs leave VMEM.
    """

    def leaky(v):
        return jnp.where(v > 0, v, slope * v)

    def conv3x3(w_ref, bias):
        acc = jnp.zeros((P, cout), jnp.float32)
        for k in range(9):
            ky, kx = divmod(k, 3)
            off = lead + (ky - 1) * Wp + (kx - 1)          # static offset
            acc = acc + jnp.dot(ebuf[off:off + P, :], w_ref[k],
                                preferred_element_type=jnp.float32)
        return acc + bias

    # Border rows of the scratch must read as the conv's implicit zero padding.
    ebuf[...] = jnp.zeros_like(ebuf)

    prev = prev_ref[0]                        # (P, Cskip) bf16
    mask = mask_ref[...]                      # (P, 1) f32: 1 interior, 0 pad ring
    u1 = u1_ref[0].astype(jnp.float32)        # up(x) @ W11_x (precomputed low-res)
    u2 = u2_ref[0].astype(jnp.float32)        # up(x) @ W21_x

    # x1 = LeakyReLU(conv12(conv11(cat[up(x), prev])))
    t1 = u1 + jnp.dot(prev, w11p_ref[...], preferred_element_type=jnp.float32)
    t1 = (t1 + b11_ref[...]) * mask           # re-zero pad ring before the 3x3
    ebuf[lead:lead + P, :] = t1.astype(jnp.bfloat16)
    x1 = leaky(conv3x3(w12_ref, b12_ref[...])) * mask
    x1_ref[0] = x1

    # out = LeakyReLU(conv22(conv21(cat[up(x), prev, x1])))
    t2 = u2 + jnp.dot(prev, w21p_ref[...], preferred_element_type=jnp.float32)
    t2 = t2 + jnp.dot(x1.astype(jnp.bfloat16), w21x1_ref[...],
                      preferred_element_type=jnp.float32)
    t2 = (t2 + b21_ref[...]) * mask
    ebuf[lead:lead + P, :] = t2.astype(jnp.bfloat16)
    out_ref[0] = leaky(conv3x3(w22_ref, b22_ref[...])) * mask


# ------------------------------ kernel wrappers ------------------------------

def _project(x_rows, w):
    n, k = x_rows.shape
    m = w.shape[1]
    bn = math.gcd(n, 512)
    if bn < 8:
        bn = n
    return pl.pallas_call(
        _project_kernel,
        out_shape=jax.ShapeDtypeStruct((n, m), jnp.bfloat16),
        grid=(n // bn,),
        in_specs=[pl.BlockSpec((bn, k), lambda i: (i, 0)),
                  pl.BlockSpec((k, m), lambda i: (0, 0))],
        out_specs=pl.BlockSpec((bn, m), lambda i: (i, 0)),
        compiler_params=pltpu.CompilerParams(dimension_semantics=("parallel",)),
    )(x_rows, w)


def _up_block_fused(u1, u2, prev_pad, mask, p, H, W, cout, slope=0.01):
    B, P, _ = prev_pad.shape
    Wp = W + 2
    lead = ((Wp + 1 + 15) // 16) * 16         # aligned start of the map in scratch
    pe = lead + Wp + 1 + P                    # scratch rows covering all 9 shifts

    kern = functools.partial(_up_block_kernel, P=P, Wp=Wp, lead=lead,
                             cout=cout, slope=slope)

    def img(c):      # per-image activation block
        return pl.BlockSpec((1, P, c), lambda b: (b, 0, 0))

    def res(a):      # weights / bias / mask: resident, DMA'd once
        return pl.BlockSpec(a.shape, lambda b, _n=a.ndim: (0,) * _n)

    return pl.pallas_call(
        kern,
        out_shape=(jax.ShapeDtypeStruct((B, P, cout), jnp.float32),
                   jax.ShapeDtypeStruct((B, P, cout), jnp.float32)),
        grid=(B,),
        in_specs=[img(cout), img(cout), img(prev_pad.shape[-1]), res(mask),
                  res(p['w11_p']), res(p['b11']), res(p['w12']), res(p['b12']),
                  res(p['w21_p']), res(p['w21_x1']), res(p['b21']),
                  res(p['w22']), res(p['b22'])],
        out_specs=(pl.BlockSpec((1, P, cout), lambda b: (b, 0, 0)),
                   pl.BlockSpec((1, P, cout), lambda b: (b, 0, 0))),
        scratch_shapes=[pltpu.VMEM((pe, cout), jnp.bfloat16)],
        compiler_params=pltpu.CompilerParams(dimension_semantics=("parallel",)),
    )(u1, u2, prev_pad, mask,
      p['w11_p'], p['b11'], p['w12'], p['b12'],
      p['w21_p'], p['w21_x1'], p['b21'], p['w22'], p['b22'])


# ------------------------------ forward (NCHW) -------------------------------

def up_block_forward(prev_feature_map, x, params, up_stride, residual_x=None,
                     slope=0.01):
    """Matches DenseNet2D_up_block_concat_original.forward (dropout=False path).
    Returns (out, first_fsp_layer, last_fsp_layer)."""
    if residual_x is not None:
        x = jnp.concatenate([x, residual_x], axis=1)       # glue: channel concat
    if prev_feature_map is None:
        # TODO(synk): prev_feature_map=None variant is never used by this module.
        raise NotImplementedError("prev_feature_map is required")
    if up_stride is None:
        sh = sw = 1
    elif isinstance(up_stride, int):
        sh = sw = up_stride
    else:
        sh, sw = up_stride

    B, cin, h, w = x.shape
    _, cskip, H, W = prev_feature_map.shape
    assert (H, W) == (h * sh, w * sw), "prev_feature_map must be up_stride x larger"
    cout = params['b11'].shape[-1]
    P = (H + 2) * (W + 2)
    bf = jnp.bfloat16

    # conv11/conv21 weights acting on the upsampled operand, applied at low res.
    x_rows = jnp.transpose(x, (0, 2, 3, 1)).reshape(B * h * w, cin).astype(bf)
    w_x = jnp.concatenate([params['w11_x'], params['w21_x']], axis=1).astype(bf)
    u_low = _project(x_rows, w_x).reshape(B, h, w, 2 * cout)

    # glue: nearest upsample of the cout-wide projection + zero pad ring + flatten
    u_up = jnp.repeat(jnp.repeat(u_low, sh, axis=1), sw, axis=2)
    u_up = jnp.pad(u_up, ((0, 0), (1, 1), (1, 1), (0, 0))).reshape(B, P, 2 * cout)
    u1, u2 = u_up[..., :cout], u_up[..., cout:]

    prev = jnp.transpose(prev_feature_map, (0, 2, 3, 1))
    prev = jnp.pad(prev, ((0, 0), (1, 1), (1, 1), (0, 0)))
    prev = prev.reshape(B, P, cskip).astype(bf)

    mask = jnp.pad(jnp.ones((H, W), jnp.float32), ((1, 1), (1, 1))).reshape(P, 1)

    pk = {k: (v.astype(bf) if k.startswith('w') else v) for k, v in params.items()}
    x1_flat, out_flat = _up_block_fused(u1, u2, prev, mask, pk, H, W, cout, slope)

    def unflatten(t):   # glue: drop pad ring, back to NCHW
        t = t.reshape(B, H + 2, W + 2, cout)[:, 1:-1, 1:-1, :]
        return jnp.transpose(t, (0, 3, 1, 2))

    out = unflatten(out_flat)
    x1 = unflatten(x1_flat)
    return out, x1, out


# ----------------------------- parameter setup -------------------------------

def init_params(key, skip_channels, input_channels, output_channels):
    ks = iter(jax.random.split(key, 12))

    def u(shape, fan_in):
        b = 1.0 / math.sqrt(fan_in)
        return jax.random.uniform(next(ks), shape, jnp.float32, -b, b)

    c = output_channels
    fan11 = skip_channels + input_channels
    fan21 = skip_channels + input_channels + c
    return {
        # conv11 (1x1): weight split over the [up(x) | prev] concat
        'w11_x': u((input_channels, c), fan11),
        'w11_p': u((skip_channels, c), fan11),
        'b11': u((1, c), fan11),
        # conv12 (3x3): layout (ky*3+kx, cin, cout)
        'w12': u((9, c, c), 9 * c),
        'b12': u((1, c), 9 * c),
        # conv21 (1x1): weight split over the [up(x) | prev | x1] concat
        'w21_x': u((input_channels, c), fan21),
        'w21_p': u((skip_channels, c), fan21),
        'w21_x1': u((c, c), fan21),
        'b21': u((1, c), fan21),
        # conv22 (3x3)
        'w22': u((9, c, c), 9 * c),
        'b22': u((1, c), 9 * c),
    }


if __name__ == "__main__":
    key = jax.random.PRNGKey(0)
    kp, kx, kprev = jax.random.split(key, 3)

    skip_channels, input_channels, output_channels = 32, 32, 32
    up_stride = (2, 2)
    B, h, w = 2, 8, 8
    H, W = h * up_stride[0], w * up_stride[1]

    params = init_params(kp, skip_channels, input_channels, output_channels)
    x = jax.random.normal(kx, (B, input_channels, h, w), jnp.float32)
    prev = jax.random.normal(kprev, (B, skip_channels, H, W), jnp.float32)

    fwd = jax.jit(lambda p_, x_: up_block_forward(p_, x_, params, up_stride))
    out, first_fsp, last_fsp = fwd(prev, x)
    jax.block_until_ready((out, first_fsp, last_fsp))

    assert out.shape == (B, output_channels, H, W), out.shape
    assert first_fsp.shape == (B, output_channels, H, W), first_fsp.shape
    assert out.dtype == jnp.float32 and first_fsp.dtype == jnp.float32
    print("KERNEL_OK")
</pallas_src>

<mosaic_0001>
module attributes {stable_mosaic.version = 11 : i64} {
  func.func @_project_kernel(%arg0: i32, %arg1: memref<128x32xbf16, #tpu.memory_space<vmem>>, %arg2: memref<32x64xbf16, #tpu.memory_space<vmem>>, %arg3: memref<128x64xbf16, #tpu.memory_space<vmem>>) attributes {dimension_semantics = [#tpu.dimension_semantics<parallel>], iteration_bounds = array<i64: 1>, scalar_prefetch = 0 : i64, scratch_operands = 0 : i64, tpu.core_type = #tpu.core_type<tc>, window_params = [{transform_indices = @transform_0, window_bounds = array<i64: 128, 32>}, {pipeline_mode = #tpu.pipeline_mode<synchronous>, transform_indices = @transform_1, window_bounds = array<i64: 32, 64>}, {transform_indices = @transform_2, window_bounds = array<i64: 128, 64>}]} {
    %c0 = arith.constant 0 : index
    %c0_0 = arith.constant 0 : index
    %0 = vector.load %arg1[%c0, %c0_0] : memref<128x32xbf16, #tpu.memory_space<vmem>>, vector<128x32xbf16>
    %c0_1 = arith.constant 0 : index
    %c0_2 = arith.constant 0 : index
    %1 = vector.load %arg2[%c0_1, %c0_2] : memref<32x64xbf16, #tpu.memory_space<vmem>>, vector<32x64xbf16>
    %cst = arith.constant dense<0.000000e+00> : vector<128x64xf32>
    %2 = tpu.matmul %0, %1, %cst {dimension_numbers = #tpu.dot_dimension_numbers<[1], [0], [0], [1], [0, 0, 1, 1], [], []>} : vector<128x32xbf16>, vector<32x64xbf16>, vector<128x64xf32> -> vector<128x64xf32>
    %3 = arith.truncf %2 : vector<128x64xf32> to vector<128x64xbf16>
    %c0_3 = arith.constant 0 : index
    %c0_4 = arith.constant 0 : index
    %4 = vector.load %arg3[%c0_3, %c0_4] : memref<128x64xbf16, #tpu.memory_space<vmem>>, vector<128x64xbf16>
    tpu.vector_store %arg3[%c0_3, %c0_4], %3 {strides = array<i32>} : memref<128x64xbf16, #tpu.memory_space<vmem>>, vector<128x64xbf16>,
    return
  }
  func.func @transform_0(%arg0: i32) -> (i32, i32) {
    %c0_i32 = arith.constant 0 : i32
    %c0_i32_0 = arith.constant 0 : i32
    return %arg0, %c0_i32 : i32, i32
  }
  func.func @transform_1(%arg0: i32) -> (i32, i32) {
    %c0_i32 = arith.constant 0 : i32
    %c0_i32_0 = arith.constant 0 : i32
    %c0_i32_1 = arith.constant 0 : i32
    return %c0_i32, %c0_i32_0 : i32, i32
  }
  func.func @transform_2(%arg0: i32) -> (i32, i32) {
    %c0_i32 = arith.constant 0 : i32
    %c0_i32_0 = arith.constant 0 : i32
    return %arg0, %c0_i32 : i32, i32
  }
}

module attributes {stable_mosaic.version = 11 : i64} {
  func.func @_up_block_kernel(%arg0: i32, %arg1: memref<1x324x32xbf16, #tpu.memory_space<vmem>>, %arg2: memref<1x324x32xbf16, #tpu.memory_space<vmem>>, %arg3: memref<1x324x32xbf16, #tpu.memory_space<vmem>>, %arg4: memref<324x1xf32, #tpu.memory_space<vmem>>, %arg5: memref<32x32xbf16, #tpu.memory_space<vmem>>, %arg6: memref<1x32xf32, #tpu.memory_space<vmem>>, %arg7: memref<9x32x32xbf16, #tpu.memory_space<vmem>>, %arg8: memref<1x32xf32, #tpu.memory_space<vmem>>, %arg9: memref<32x32xbf16, #tpu.memory_space<vmem>>, %arg10: memref<32x32xbf16, #tpu.memory_space<vmem>>, %arg11: memref<1x32xf32, #tpu.memory_space<vmem>>, %arg12: memref<9x32x32xbf16, #tpu.memory_space<vmem>>, %arg13: memref<1x32xf32, #tpu.memory_space<vmem>>, %arg14: memref<1x324x32xf32, #tpu.memory_space<vmem>>, %arg15: memref<1x324x32xf32, #tpu.memory_space<vmem>>, %arg16: memref<375x32xbf16, #tpu.memory_space<vmem>>) attributes {dimension_semantics = [#tpu.dimension_semantics<parallel>], iteration_bounds = array<i64: 2>, scalar_prefetch = 0 : i64, scratch_operands = 1 : i64, tpu.core_type = #tpu.core_type<tc>, window_params = [{transform_indices = @transform_0, window_bounds = array<i64: 1, 324, 32>}, {transform_indices = @transform_1, window_bounds = array<i64: 1, 324, 32>}, {transform_indices = @transform_2, window_bounds = array<i64: 1, 324, 32>}, {pipeline_mode = #tpu.pipeline_mode<synchronous>, transform_indices = @transform_3, window_bounds = array<i64: 324, 1>}, {pipeline_mode = #tpu.pipeline_mode<synchronous>, transform_indices = @transform_4, window_bounds = array<i64: 32, 32>}, {pipeline_mode = #tpu.pipeline_mode<synchronous>, transform_indices = @transform_5, window_bounds = array<i64: 1, 32>}, {pipeline_mode = #tpu.pipeline_mode<synchronous>, transform_indices = @transform_6, window_bounds = array<i64: 9, 32, 32>}, {pipeline_mode = #tpu.pipeline_mode<synchronous>, transform_indices = @transform_7, window_bounds = array<i64: 1, 32>}, {pipeline_mode = #tpu.pipeline_mode<synchronous>, transform_indices = @transform_8, window_bounds = array<i64: 32, 32>}, {pipeline_mode = #tpu.pipeline_mode<synchronous>, transform_indices = @transform_9, window_bounds = array<i64: 32, 32>}, {pipeline_mode = #tpu.pipeline_mode<synchronous>, transform_indices = @transform_10, window_bounds = array<i64: 1, 32>}, {pipeline_mode = #tpu.pipeline_mode<synchronous>, transform_indices = @transform_11, window_bounds = array<i64: 9, 32, 32>}, {pipeline_mode = #tpu.pipeline_mode<synchronous>, transform_indices = @transform_12, window_bounds = array<i64: 1, 32>}, {transform_indices = @transform_13, window_bounds = array<i64: 1, 324, 32>}, {transform_indices = @transform_14, window_bounds = array<i64: 1, 324, 32>}]} {
    %cst = arith.constant 0.000000e+00 : bf16
    %0 = vector.broadcast %cst : bf16 to vector<375x32xbf16>
    %c0 = arith.constant 0 : index
    %c0_0 = arith.constant 0 : index
    %1 = vector.load %arg16[%c0, %c0_0] : memref<375x32xbf16, #tpu.memory_space<vmem>>, vector<375x32xbf16>
    tpu.vector_store %arg16[%c0, %c0_0], %0 {strides = array<i32>} : memref<375x32xbf16, #tpu.memory_space<vmem>>, vector<375x32xbf16>,
    %c0_1 = arith.constant 0 : index
    %c0_2 = arith.constant 0 : index
    %c0_3 = arith.constant 0 : index
    %2 = vector.load %arg3[%c0_1, %c0_2, %c0_3] : memref<1x324x32xbf16, #tpu.memory_space<vmem>>, vector<1x324x32xbf16>
    %3 = vector.shape_cast %2 : vector<1x324x32xbf16> to vector<324x32xbf16>
    %c0_4 = arith.constant 0 : index
    %c0_5 = arith.constant 0 : index
    %4 = vector.load %arg4[%c0_4, %c0_5] : memref<324x1xf32, #tpu.memory_space<vmem>>, vector<324x1xf32>
    %c0_6 = arith.constant 0 : index
    %c0_7 = arith.constant 0 : index
    %c0_8 = arith.constant 0 : index
    %5 = vector.load %arg1[%c0_6, %c0_7, %c0_8] : memref<1x324x32xbf16, #tpu.memory_space<vmem>>, vector<1x324x32xbf16>
    %6 = vector.shape_cast %5 : vector<1x324x32xbf16> to vector<324x32xbf16>
    %7 = arith.extf %6 : vector<324x32xbf16> to vector<324x32xf32>
    %c0_9 = arith.constant 0 : index
    %c0_10 = arith.constant 0 : index
    %c0_11 = arith.constant 0 : index
    %8 = vector.load %arg2[%c0_9, %c0_10, %c0_11] : memref<1x324x32xbf16, #tpu.memory_space<vmem>>, vector<1x324x32xbf16>
    %9 = vector.shape_cast %8 : vector<1x324x32xbf16> to vector<324x32xbf16>
    %10 = arith.extf %9 : vector<324x32xbf16> to vector<324x32xf32>
    %c0_12 = arith.constant 0 : index
    %c0_13 = arith.constant 0 : index
    %11 = vector.load %arg5[%c0_12, %c0_13] : memref<32x32xbf16, #tpu.memory_space<vmem>>, vector<32x32xbf16>
    %cst_14 = arith.constant dense<0.000000e+00> : vector<324x32xf32>
    %12 = tpu.matmul %3, %11, %cst_14 {dimension_numbers = #tpu.dot_dimension_numbers<[1], [0], [0], [1], [0, 0, 1, 1], [], []>} : vector<324x32xbf16>, vector<32x32xbf16>, vector<324x32xf32> -> vector<324x32xf32>
    %13 = arith.addf %7, %12 : vector<324x32xf32>
    %c0_15 = arith.constant 0 : index
    %c0_16 = arith.constant 0 : index
    %14 = vector.load %arg6[%c0_15, %c0_16] : memref<1x32xf32, #tpu.memory_space<vmem>>, vector<1x32xf32>
    %15 = vector.broadcast %14 : vector<1x32xf32> to vector<324x32xf32>
    %16 = arith.addf %13, %15 : vector<324x32xf32>
    %17 = vector.broadcast %4 : vector<324x1xf32> to vector<324x32xf32>
    %18 = arith.mulf %16, %17 : vector<324x32xf32>
    %19 = arith.truncf %18 : vector<324x32xf32> to vector<324x32xbf16>
    %c32 = arith.constant 32 : index
    %c0_17 = arith.constant 0 : index
    %20 = vector.load %arg16[%c32, %c0_17] : memref<375x32xbf16, #tpu.memory_space<vmem>>, vector<324x32xbf16>
    tpu.vector_store %arg16[%c32, %c0_17], %19 {strides = array<i32>} : memref<375x32xbf16, #tpu.memory_space<vmem>>, vector<324x32xbf16>,
    %c0_18 = arith.constant 0 : index
    %c0_19 = arith.constant 0 : index
    %21 = vector.load %arg8[%c0_18, %c0_19] : memref<1x32xf32, #tpu.memory_space<vmem>>, vector<1x32xf32>
    %cst_20 = arith.constant 0.000000e+00 : f32
    %22 = vector.broadcast %cst_20 : f32 to vector<324x32xf32>
    %c13 = arith.constant 13 : index
    %c0_21 = arith.constant 0 : index
    %23 = vector.load %arg16[%c13, %c0_21] : memref<375x32xbf16, #tpu.memory_space<vmem>>, vector<324x32xbf16>
    %c0_22 = arith.constant 0 : index
    %c0_23 = arith.constant 0 : index
    %c0_24 = arith.constant 0 : index
    %24 = vector.load %arg7[%c0_22, %c0_23, %c0_24] : memref<9x32x32xbf16, #tpu.memory_space<vmem>>, vector<1x32x32xbf16>
    %25 = vector.shape_cast %24 : vector<1x32x32xbf16> to vector<32x32xbf16>
    %cst_25 = arith.constant dense<0.000000e+00> : vector<324x32xf32>
    %26 = tpu.matmul %23, %25, %cst_25 {dimension_numbers = #tpu.dot_dimension_numbers<[1], [0], [0], [1], [0, 0, 1, 1], [], []>} : vector<324x32xbf16>, vector<32x32xbf16>, vector<324x32xf32> -> vector<324x32xf32>
    %27 = arith.addf %22, %26 : vector<324x32xf32>
    %c14 = arith.constant 14 : index
    %c0_26 = arith.constant 0 : index
    %28 = vector.load %arg16[%c14, %c0_26] : memref<375x32xbf16, #tpu.memory_space<vmem>>, vector<324x32xbf16>
    %c1 = arith.constant 1 : index
    %c0_27 = arith.constant 0 : index
    %c0_28 = arith.constant 0 : index
    %29 = vector.load %arg7[%c1, %c0_27, %c0_28] : memref<9x32x32xbf16, #tpu.memory_space<vmem>>, vector<1x32x32xbf16>
    %30 = vector.shape_cast %29 : vector<1x32x32xbf16> to vector<32x32xbf16>
    %cst_29 = arith.constant dense<0.000000e+00> : vector<324x32xf32>
    %31 = tpu.matmul %28, %30, %cst_29 {dimension_numbers = #tpu.dot_dimension_numbers<[1], [0], [0], [1], [0, 0, 1, 1], [], []>} : vector<324x32xbf16>, vector<32x32xbf16>, vector<324x32xf32> -> vector<324x32xf32>
    %32 = arith.addf %27, %31 : vector<324x32xf32>
    %c15 = arith.constant 15 : index
    %c0_30 = arith.constant 0 : index
    %33 = vector.load %arg16[%c15, %c0_30] : memref<375x32xbf16, #tpu.memory_space<vmem>>, vector<324x32xbf16>
    %c2 = arith.constant 2 : index
    %c0_31 = arith.constant 0 : index
    %c0_32 = arith.constant 0 : index
    %34 = vector.load %arg7[%c2, %c0_31, %c0_32] : memref<9x32x32xbf16, #tpu.memory_space<vmem>>, vector<1x32x32xbf16>
    %35 = vector.shape_cast %34 : vector<1x32x32xbf16> to vector<32x32xbf16>
    %cst_33 = arith.constant dense<0.000000e+00> : vector<324x32xf32>
    %36 = tpu.matmul %33, %35, %cst_33 {dimension_numbers = #tpu.dot_dimension_numbers<[1], [0], [0], [1], [0, 0, 1, 1], [], []>} : vector<324x32xbf16>, vector<32x32xbf16>, vector<324x32xf32> -> vector<324x32xf32>
    %37 = arith.addf %32, %36 : vector<324x32xf32>
    %c31 = arith.constant 31 : index
    %c0_34 = arith.constant 0 : index
    %38 = vector.load %arg16[%c31, %c0_34] : memref<375x32xbf16, #tpu.memory_space<vmem>>, vector<324x32xbf16>
    %c3 = arith.constant 3 : index
    %c0_35 = arith.constant 0 : index
    %c0_36 = arith.constant 0 : index
    %39 = vector.load %arg7[%c3, %c0_35, %c0_36] : memref<9x32x32xbf16, #tpu.memory_space<vmem>>, vector<1x32x32xbf16>
    %40 = vector.shape_cast %39 : vector<1x32x32xbf16> to vector<32x32xbf16>
    %cst_37 = arith.constant dense<0.000000e+00> : vector<324x32xf32>
    %41 = tpu.matmul %38, %40, %cst_37 {dimension_numbers = #tpu.dot_dimension_numbers<[1], [0], [0], [1], [0, 0, 1, 1], [], []>} : vector<324x32xbf16>, vector<32x32xbf16>, vector<324x32xf32> -> vector<324x32xf32>
    %42 = arith.addf %37, %41 : vector<324x32xf32>
    %c32_38 = arith.constant 32 : index
    %c0_39 = arith.constant 0 : index
    %43 = vector.load %arg16[%c32_38, %c0_39] : memref<375x32xbf16, #tpu.memory_space<vmem>>, vector<324x32xbf16>
    %c4 = arith.constant 4 : index
    %c0_40 = arith.constant 0 : index
    %c0_41 = arith.constant 0 : index
    %44 = vector.load %arg7[%c4, %c0_40, %c0_41] : memref<9x32x32xbf16, #tpu.memory_space<vmem>>, vector<1x32x32xbf16>
    %45 = vector.shape_cast %44 : vector<1x32x32xbf16> to vector<32x32xbf16>
    %cst_42 = arith.constant dense<0.000000e+00> : vector<324x32xf32>
    %46 = tpu.matmul %43, %45, %cst_42 {dimension_numbers = #tpu.dot_dimension_numbers<[1], [0], [0], [1], [0, 0, 1, 1], [], []>} : vector<324x32xbf16>, vector<32x32xbf16>, vector<324x32xf32> -> vector<324x32xf32>
    %47 = arith.addf %42, %46 : vector<324x32xf32>
    %c33 = arith.constant 33 : index
    %c0_43 = arith.constant 0 : index
    %48 = vector.load %arg16[%c33, %c0_43] : memref<375x32xbf16, #tpu.memory_space<vmem>>, vector<324x32xbf16>
    %c5 = arith.constant 5 : index
    %c0_44 = arith.constant 0 : index
    %c0_45 = arith.constant 0 : index
    %49 = vector.load %arg7[%c5, %c0_44, %c0_45] : memref<9x32x32xbf16, #tpu.memory_space<vmem>>, vector<1x32x32xbf16>
    %50 = vector.shape_cast %49 : vector<1x32x32xbf16> to vector<32x32xbf16>
    %cst_46 = arith.constant dense<0.000000e+00> : vector<324x32xf32>
    %51 = tpu.matmul %48, %50, %cst_46 {dimension_numbers = #tpu.dot_dimension_numbers<[1], [0], [0], [1], [0, 0, 1, 1], [], []>} : vector<324x32xbf16>, vector<32x32xbf16>, vector<324x32xf32> -> vector<324x32xf32>
    %52 = arith.addf %47, %51 : vector<324x32xf32>
    %c49 = arith.constant 49 : index
    %c0_47 = arith.constant 0 : index
    %53 = vector.load %arg16[%c49, %c0_47] : memref<375x32xbf16, #tpu.memory_space<vmem>>, vector<324x32xbf16>
    %c6 = arith.constant 6 : index
    %c0_48 = arith.constant 0 : index
    %c0_49 = arith.constant 0 : index
    %54 = vector.load %arg7[%c6, %c0_48, %c0_49] : memref<9x32x32xbf16, #tpu.memory_space<vmem>>, vector<1x32x32xbf16>
    %55 = vector.shape_cast %54 : vector<1x32x32xbf16> to vector<32x32xbf16>
    %cst_50 = arith.constant dense<0.000000e+00> : vector<324x32xf32>
    %56 = tpu.matmul %53, %55, %cst_50 {dimension_numbers = #tpu.dot_dimension_numbers<[1], [0], [0], [1], [0, 0, 1, 1], [], []>} : vector<324x32xbf16>, vector<32x32xbf16>, vector<324x32xf32> -> vector<324x32xf32>
    %57 = arith.addf %52, %56 : vector<324x32xf32>
    %c50 = arith.constant 50 : index
    %c0_51 = arith.constant 0 : index
    %58 = vector.load %arg16[%c50, %c0_51] : memref<375x32xbf16, #tpu.memory_space<vmem>>, vector<324x32xbf16>
    %c7 = arith.constant 7 : index
    %c0_52 = arith.constant 0 : index
    %c0_53 = arith.constant 0 : index
    %59 = vector.load %arg7[%c7, %c0_52, %c0_53] : memref<9x32x32xbf16, #tpu.memory_space<vmem>>, vector<1x32x32xbf16>
    %60 = vector.shape_cast %59 : vector<1x32x32xbf16> to vector<32x32xbf16>
    %cst_54 = arith.constant dense<0.000000e+00> : vector<324x32xf32>
    %61 = tpu.matmul %58, %60, %cst_54 {dimension_numbers = #tpu.dot_dimension_numbers<[1], [0], [0], [1], [0, 0, 1, 1], [], []>} : vector<324x32xbf16>, vector<32x32xbf16>, vector<324x32xf32> -> vector<324x32xf32>
    %62 = arith.addf %57, %61 : vector<324x32xf32>
    %c51 = arith.constant 51 : index
    %c0_55 = arith.constant 0 : index
    %63 = vector.load %arg16[%c51, %c0_55] : memref<375x32xbf16, #tpu.memory_space<vmem>>, vector<324x32xbf16>
    %c8 = arith.constant 8 : index
    %c0_56 = arith.constant 0 : index
    %c0_57 = arith.constant 0 : index
    %64 = vector.load %arg7[%c8, %c0_56, %c0_57] : memref<9x32x32xbf16, #tpu.memory_space<vmem>>, vector<1x32x32xbf16>
    %65 = vector.shape_cast %64 : vector<1x32x32xbf16> to vector<32x32xbf16>
    %cst_58 = arith.constant dense<0.000000e+00> : vector<324x32xf32>
    %66 = tpu.matmul %63, %65, %cst_58 {dimension_numbers = #tpu.dot_dimension_numbers<[1], [0], [0], [1], [0, 0, 1, 1], [], []>} : vector<324x32xbf16>, vector<32x32xbf16>, vector<324x32xf32> -> vector<324x32xf32>
    %67 = arith.addf %62, %66 : vector<324x32xf32>
    %68 = vector.broadcast %21 : vector<1x32xf32> to vector<324x32xf32>
    %69 = arith.addf %67, %68 : vector<324x32xf32>
    %cst_59 = arith.constant 0.000000e+00 : f32
    %70 = vector.broadcast %cst_59 : f32 to vector<324x32xf32>
    %71 = arith.cmpf ogt, %69, %70 : vector<324x32xf32>
    %cst_60 = arith.constant 0.00999999977 : f32
    %72 = vector.broadcast %cst_60 : f32 to vector<324x32xf32>
    %73 = arith.mulf %72, %69 : vector<324x32xf32>
    %74 = arith.select %71, %69, %73 : vector<324x32xi1>, vector<324x32xf32>
    %75 = vector.broadcast %4 : vector<324x1xf32> to vector<324x32xf32>
    %76 = arith.mulf %74, %75 : vector<324x32xf32>
    %c0_61 = arith.constant 0 : index
    %c0_62 = arith.constant 0 : index
    %c0_63 = arith.constant 0 : index
    %77 = vector.load %arg14[%c0_61, %c0_62, %c0_63] : memref<1x324x32xf32, #tpu.memory_space<vmem>>, vector<1x324x32xf32>
    %78 = vector.shape_cast %77 : vector<1x324x32xf32> to vector<324x32xf32>
    %79 = vector.shape_cast %76 : vector<324x32xf32> to vector<1x324x32xf32>
    tpu.vector_store %arg14[%c0_61, %c0_62, %c0_63], %79 {strides = array<i32>} : memref<1x324x32xf32, #tpu.memory_space<vmem>>, vector<1x324x32xf32>,
    %c0_64 = arith.constant 0 : index
    %c0_65 = arith.constant 0 : index
    %80 = vector.load %arg9[%c0_64, %c0_65] : memref<32x32xbf16, #tpu.memory_space<vmem>>, vector<32x32xbf16>
    %cst_66 = arith.constant dense<0.000000e+00> : vector<324x32xf32>
    %81 = tpu.matmul %3, %80, %cst_66 {dimension_numbers = #tpu.dot_dimension_numbers<[1], [0], [0], [1], [0, 0, 1, 1], [], []>} : vector<324x32xbf16>, vector<32x32xbf16>, vector<324x32xf32> -> vector<324x32xf32>
    %82 = arith.addf %10, %81 : vector<324x32xf32>
    %83 = arith.truncf %76 : vector<324x32xf32> to vector<324x32xbf16>
    %c0_67 = arith.constant 0 : index
    %c0_68 = arith.constant 0 : index
    %84 = vector.load %arg10[%c0_67, %c0_68] : memref<32x32xbf16, #tpu.memory_space<vmem>>, vector<32x32xbf16>
    %cst_69 = arith.constant dense<0.000000e+00> : vector<324x32xf32>
    %85 = tpu.matmul %83, %84, %cst_69 {dimension_numbers = #tpu.dot_dimension_numbers<[1], [0], [0], [1], [0, 0, 1, 1], [], []>} : vector<324x32xbf16>, vector<32x32xbf16>, vector<324x32xf32> -> vector<324x32xf32>
    %86 = arith.addf %82, %85 : vector<324x32xf32>
    %c0_70 = arith.constant 0 : index
    %c0_71 = arith.constant 0 : index
    %87 = vector.load %arg11[%c0_70, %c0_71] : memref<1x32xf32, #tpu.memory_space<vmem>>, vector<1x32xf32>
    %88 = vector.broadcast %87 : vector<1x32xf32> to vector<324x32xf32>
    %89 = arith.addf %86, %88 : vector<324x32xf32>
    %90 = vector.broadcast %4 : vector<324x1xf32> to vector<324x32xf32>
    %91 = arith.mulf %89, %90 : vector<324x32xf32>
    %92 = arith.truncf %91 : vector<324x32xf32> to vector<324x32xbf16>
    %c32_72 = arith.constant 32 : index
    %c0_73 = arith.constant 0 : index
    %93 = vector.load %arg16[%c32_72, %c0_73] : memref<375x32xbf16, #tpu.memory_space<vmem>>, vector<324x32xbf16>
    tpu.vector_store %arg16[%c32_72, %c0_73], %92 {strides = array<i32>} : memref<375x32xbf16, #tpu.memory_space<vmem>>, vector<324x32xbf16>,
    %c0_74 = arith.constant 0 : index
    %c0_75 = arith.constant 0 : index
    %94 = vector.load %arg13[%c0_74, %c0_75] : memref<1x32xf32, #tpu.memory_space<vmem>>, vector<1x32xf32>
    %cst_76 = arith.constant 0.000000e+00 : f32
    %95 = vector.broadcast %cst_76 : f32 to vector<324x32xf32>
    %c13_77 = arith.constant 13 : index
    %c0_78 = arith.constant 0 : index
    %96 = vector.load %arg16[%c13_77, %c0_78] : memref<375x32xbf16, #tpu.memory_space<vmem>>, vector<324x32xbf16>
    %c0_79 = arith.constant 0 : index
    %c0_80 = arith.constant 0 : index
    %c0_81 = arith.constant 0 : index
    %97 = vector.load %arg12[%c0_79, %c0_80, %c0_81] : memref<9x32x32xbf16, #tpu.memory_space<vmem>>, vector<1x32x32xbf16>
    %98 = vector.shape_cast %97 : vector<1x32x32xbf16> to vector<32x32xbf16>
    %cst_82 = arith.constant dense<0.000000e+00> : vector<324x32xf32>
    %99 = tpu.matmul %96, %98, %cst_82 {dimension_numbers = #tpu.dot_dimension_numbers<[1], [0], [0], [1], [0, 0, 1, 1], [], []>} : vector<324x32xbf16>, vector<32x32xbf16>, vector<324x32xf32> -> vector<324x32xf32>
    %100 = arith.addf %95, %99 : vector<324x32xf32>
    %c14_83 = arith.constant 14 : index
    %c0_84 = arith.constant 0 : index
    %101 = vector.load %arg16[%c14_83, %c0_84] : memref<375x32xbf16, #tpu.memory_space<vmem>>, vector<324x32xbf16>
    %c1_85 = arith.constant 1 : index
    %c0_86 = arith.constant 0 : index
    %c0_87 = arith.constant 0 : index
    %102 = vector.load %arg12[%c1_85, %c0_86, %c0_87] : memref<9x32x32xbf16, #tpu.memory_space<vmem>>, vector<1x32x32xbf16>
    %103 = vector.shape_cast %102 : vector<1x32x32xbf16> to vector<32x32xbf16>
    %cst_88 = arith.constant dense<0.000000e+00> : vector<324x32xf32>
    %104 = tpu.matmul %101, %103, %cst_88 {dimension_numbers = #tpu.dot_dimension_numbers<[1], [0], [0], [1], [0, 0, 1, 1], [], []>} : vector<324x32xbf16>, vector<32x32xbf16>, vector<324x32xf32> -> vector<324x32xf32>
    %105 = arith.addf %100, %104 : vector<324x32xf32>
    %c15_89 = arith.constant 15 : index
    %c0_90 = arith.constant 0 : index
    %106 = vector.load %arg16[%c15_89, %c0_90] : memref<375x32xbf16, #tpu.memory_space<vmem>>, vector<324x32xbf16>
    %c2_91 = arith.constant 2 : index
    %c0_92 = arith.constant 0 : index
    %c0_93 = arith.constant 0 : index
    %107 = vector.load %arg12[%c2_91, %c0_92, %c0_93] : memref<9x32x32xbf16, #tpu.memory_space<vmem>>, vector<1x32x32xbf16>
    %108 = vector.shape_cast %107 : vector<1x32x32xbf16> to vector<32x32xbf16>
    %cst_94 = arith.constant dense<0.000000e+00> : vector<324x32xf32>
    %109 = tpu.matmul %106, %108, %cst_94 {dimension_numbers = #tpu.dot_dimension_numbers<[1], [0], [0], [1], [0, 0, 1, 1], [], []>} : vector<324x32xbf16>, vector<32x32xbf16>, vector<324x32xf32> -> vector<324x32xf32>
    %110 = arith.addf %105, %109 : vector<324x32xf32>
    %c31_95 = arith.constant 31 : index
    %c0_96 = arith.constant 0 : index
    %111 = vector.load %arg16[%c31_95, %c0_96] : memref<375x32xbf16, #tpu.memory_space<vmem>>, vector<324x32xbf16>
    %c3_97 = arith.constant 3 : index
    %c0_98 = arith.constant 0 : index
    %c0_99 = arith.constant 0 : index
    %112 = vector.load %arg12[%c3_97, %c0_98, %c0_99] : memref<9x32x32xbf16, #tpu.memory_space<vmem>>, vector<1x32x32xbf16>
    %113 = vector.shape_cast %112 : vector<1x32x32xbf16> to vector<32x32xbf16>
    %cst_100 = arith.constant dense<0.000000e+00> : vector<324x32xf32>
    %114 = tpu.matmul %111, %113, %cst_100 {dimension_numbers = #tpu.dot_dimension_numbers<[1], [0], [0], [1], [0, 0, 1, 1], [], []>} : vector<324x32xbf16>, vector<32x32xbf16>, vector<324x32xf32> -> vector<324x32xf32>
    %115 = arith.addf %110, %114 : vector<324x32xf32>
    %c32_101 = arith.constant 32 : index
    %c0_102 = arith.constant 0 : index
    %116 = vector.load %arg16[%c32_101, %c0_102] : memref<375x32xbf16, #tpu.memory_space<vmem>>, vector<324x32xbf16>
    %c4_103 = arith.constant 4 : index
    %c0_104 = arith.constant 0 : index
    %c0_105 = arith.constant 0 : index
    %117 = vector.load %arg12[%c4_103, %c0_104, %c0_105] : memref<9x32x32xbf16, #tpu.memory_space<vmem>>, vector<1x32x32xbf16>
    %118 = vector.shape_cast %117 : vector<1x32x32xbf16> to vector<32x32xbf16>
    %cst_106 = arith.constant dense<0.000000e+00> : vector<324x32xf32>
    %119 = tpu.matmul %116, %118, %cst_106 {dimension_numbers = #tpu.dot_dimension_numbers<[1], [0], [0], [1], [0, 0, 1, 1], [], []>} : vector<324x32xbf16>, vector<32x32xbf16>, vector<324x32xf32> -> vector<324x32xf32>
    %120 = arith.addf %115, %119 : vector<324x32xf32>
    %c33_107 = arith.constant 33 : index
    %c0_108 = arith.constant 0 : index
    %121 = vector.load %arg16[%c33_107, %c0_108] : memref<375x32xbf16, #tpu.memory_space<vmem>>, vector<324x32xbf16>
    %c5_109 = arith.constant 5 : index
    %c0_110 = arith.constant 0 : index
    %c0_111 = arith.constant 0 : index
    %122 = vector.load %arg12[%c5_109, %c0_110, %c0_111] : memref<9x32x32xbf16, #tpu.memory_space<vmem>>, vector<1x32x32xbf16>
    %123 = vector.shape_cast %122 : vector<1x32x32xbf16> to vector<32x32xbf16>
    %cst_112 = arith.constant dense<0.000000e+00> : vector<324x32xf32>
    %124 = tpu.matmul %121, %123, %cst_112 {dimension_numbers = #tpu.dot_dimension_numbers<[1], [0], [0], [1], [0, 0, 1, 1], [], []>} : vector<324x32xbf16>, vector<32x32xbf16>, vector<324x32xf32> -> vector<324x32xf32>
    %125 = arith.addf %120, %124 : vector<324x32xf32>
    %c49_113 = arith.constant 49 : index
    %c0_114 = arith.constant 0 : index
    %126 = vector.load %arg16[%c49_113, %c0_114] : memref<375x32xbf16, #tpu.memory_space<vmem>>, vector<324x32xbf16>
    %c6_115 = arith.constant 6 : index
    %c0_116 = arith.constant 0 : index
    %c0_117 = arith.constant 0 : index
    %127 = vector.load %arg12[%c6_115, %c0_116, %c0_117] : memref<9x32x32xbf16, #tpu.memory_space<vmem>>, vector<1x32x32xbf16>
    %128 = vector.shape_cast %127 : vector<1x32x32xbf16> to vector<32x32xbf16>
    %cst_118 = arith.constant dense<0.000000e+00> : vector<324x32xf32>
    %129 = tpu.matmul %126, %128, %cst_118 {dimension_numbers = #tpu.dot_dimension_numbers<[1], [0], [0], [1], [0, 0, 1, 1], [], []>} : vector<324x32xbf16>, vector<32x32xbf16>, vector<324x32xf32> -> vector<324x32xf32>
    %130 = arith.addf %125, %129 : vector<324x32xf32>
    %c50_119 = arith.constant 50 : index
    %c0_120 = arith.constant 0 : index
    %131 = vector.load %arg16[%c50_119, %c0_120] : memref<375x32xbf16, #tpu.memory_space<vmem>>, vector<324x32xbf16>
    %c7_121 = arith.constant 7 : index
    %c0_122 = arith.constant 0 : index
    %c0_123 = arith.constant 0 : index
    %132 = vector.load %arg12[%c7_121, %c0_122, %c0_123] : memref<9x32x32xbf16, #tpu.memory_space<vmem>>, vector<1x32x32xbf16>
    %133 = vector.shape_cast %132 : vector<1x32x32xbf16> to vector<32x32xbf16>
    %cst_124 = arith.constant dense<0.000000e+00> : vector<324x32xf32>
    %134 = tpu.matmul %131, %133, %cst_124 {dimension_numbers = #tpu.dot_dimension_numbers<[1], [0], [0], [1], [0, 0, 1, 1], [], []>} : vector<324x32xbf16>, vector<32x32xbf16>, vector<324x32xf32> -> vector<324x32xf32>
    %135 = arith.addf %130, %134 : vector<324x32xf32>
    %c51_125 = arith.constant 51 : index
    %c0_126 = arith.constant 0 : index
    %136 = vector.load %arg16[%c51_125, %c0_126] : memref<375x32xbf16, #tpu.memory_space<vmem>>, vector<324x32xbf16>
    %c8_127 = arith.constant 8 : index
    %c0_128 = arith.constant 0 : index
    %c0_129 = arith.constant 0 : index
    %137 = vector.load %arg12[%c8_127, %c0_128, %c0_129] : memref<9x32x32xbf16, #tpu.memory_space<vmem>>, vector<1x32x32xbf16>
    %138 = vector.shape_cast %137 : vector<1x32x32xbf16> to vector<32x32xbf16>
    %cst_130 = arith.constant dense<0.000000e+00> : vector<324x32xf32>
    %139 = tpu.matmul %136, %138, %cst_130 {dimension_numbers = #tpu.dot_dimension_numbers<[1], [0], [0], [1], [0, 0, 1, 1], [], []>} : vector<324x32xbf16>, vector<32x32xbf16>, vector<324x32xf32> -> vector<324x32xf32>
    %140 = arith.addf %135, %139 : vector<324x32xf32>
    %141 = vector.broadcast %94 : vector<1x32xf32> to vector<324x32xf32>
    %142 = arith.addf %140, %141 : vector<324x32xf32>
    %cst_131 = arith.constant 0.000000e+00 : f32
    %143 = vector.broadcast %cst_131 : f32 to vector<324x32xf32>
    %144 = arith.cmpf ogt, %142, %143 : vector<324x32xf32>
    %cst_132 = arith.constant 0.00999999977 : f32
    %145 = vector.broadcast %cst_132 : f32 to vector<324x32xf32>
    %146 = arith.mulf %145, %142 : vector<324x32xf32>
    %147 = arith.select %144, %142, %146 : vector<324x32xi1>, vector<324x32xf32>
    %148 = vector.broadcast %4 : vector<324x1xf32> to vector<324x32xf32>
    %149 = arith.mulf %147, %148 : vector<324x32xf32>
    %c0_133 = arith.constant 0 : index
    %c0_134 = arith.constant 0 : index
    %c0_135 = arith.constant 0 : index
    %150 = vector.load %arg15[%c0_133, %c0_134, %c0_135] : memref<1x324x32xf32, #tpu.memory_space<vmem>>, vector<1x324x32xf32>
    %151 = vector.shape_cast %150 : vector<1x324x32xf32> to vector<324x32xf32>
    %152 = vector.shape_cast %149 : vector<324x32xf32> to vector<1x324x32xf32>
    tpu.vector_store %arg15[%c0_133, %c0_134, %c0_135], %152 {strides = array<i32>} : memref<1x324x32xf32, #tpu.memory_space<vmem>>, vector<1x324x32xf32>,
    return
  }
  func.func @transform_0(%arg0: i32) -> (i32, i32, i32) {
    %c0_i32 = arith.constant 0 : i32
    %c0_i32_0 = arith.constant 0 : i32
    %c0_i32_1 = arith.constant 0 : i32
    return %arg0, %c0_i32, %c0_i32_0 : i32, i32, i32
  }
  func.func @transform_1(%arg0: i32) -> (i32, i32, i32) {
    %c0_i32 = arith.constant 0 : i32
    %c0_i32_0 = arith.constant 0 : i32
    %c0_i32_1 = arith.constant 0 : i32
    return %arg0, %c0_i32, %c0_i32_0 : i32, i32, i32
  }
  func.func @transform_2(%arg0: i32) -> (i32, i32, i32) {
    %c0_i32 = arith.constant 0 : i32
    %c0_i32_0 = arith.constant 0 : i32
    %c0_i32_1 = arith.constant 0 : i32
    return %arg0, %c0_i32, %c0_i32_0 : i32, i32, i32
  }
  func.func @transform_3(%arg0: i32) -> (i32, i32) {
    %c0_i32 = arith.constant 0 : i32
    %c0_i32_0 = arith.constant 0 : i32
    %c0_i32_1 = arith.constant 0 : i32
    return %c0_i32, %c0_i32_0 : i32, i32
  }
  func.func @transform_4(%arg0: i32) -> (i32, i32) {
    %c0_i32 = arith.constant 0 : i32
    %c0_i32_0 = arith.constant 0 : i32
    %c0_i32_1 = arith.constant 0 : i32
    return %c0_i32, %c0_i32_0 : i32, i32
  }
  func.func @transform_5(%arg0: i32) -> (i32, i32) {
    %c0_i32 = arith.constant 0 : i32
    %c0_i32_0 = arith.constant 0 : i32
    %c0_i32_1 = arith.constant 0 : i32
    return %c0_i32, %c0_i32_0 : i32, i32
  }
  func.func @transform_6(%arg0: i32) -> (i32, i32, i32) {
    %c0_i32 = arith.constant 0 : i32
    %c0_i32_0 = arith.constant 0 : i32
    %c0_i32_1 = arith.constant 0 : i32
    %c0_i32_2 = arith.constant 0 : i32
    return %c0_i32, %c0_i32_0, %c0_i32_1 : i32, i32, i32
  }
  func.func @transform_7(%arg0: i32) -> (i32, i32) {
    %c0_i32 = arith.constant 0 : i32
    %c0_i32_0 = arith.constant 0 : i32
    %c0_i32_1 = arith.constant 0 : i32
    return %c0_i32, %c0_i32_0 : i32, i32
  }
  func.func @transform_8(%arg0: i32) -> (i32, i32) {
    %c0_i32 = arith.constant 0 : i32
    %c0_i32_0 = arith.constant 0 : i32
    %c0_i32_1 = arith.constant 0 : i32
    return %c0_i32, %c0_i32_0 : i32, i32
  }
  func.func @transform_9(%arg0: i32) -> (i32, i32) {
    %c0_i32 = arith.constant 0 : i32
    %c0_i32_0 = arith.constant 0 : i32
    %c0_i32_1 = arith.constant 0 : i32
    return %c0_i32, %c0_i32_0 : i32, i32
  }
  func.func @transform_10(%arg0: i32) -> (i32, i32) {
    %c0_i32 = arith.constant 0 : i32
    %c0_i32_0 = arith.constant 0 : i32
    %c0_i32_1 = arith.constant 0 : i32
    return %c0_i32, %c0_i32_0 : i32, i32
  }
  func.func @transform_11(%arg0: i32) -> (i32, i32, i32) {
    %c0_i32 = arith.constant 0 : i32
    %c0_i32_0 = arith.constant 0 : i32
    %c0_i32_1 = arith.constant 0 : i32
    %c0_i32_2 = arith.constant 0 : i32
    return %c0_i32, %c0_i32_0, %c0_i32_1 : i32, i32, i32
  }
  func.func @transform_12(%arg0: i32) -> (i32, i32) {
    %c0_i32 = arith.constant 0 : i32
    %c0_i32_0 = arith.constant 0 : i32
    %c0_i32_1 = arith.constant 0 : i32
    return %c0_i32, %c0_i32_0 : i32, i32
  }
  func.func @transform_13(%arg0: i32) -> (i32, i32, i32) {
    %c0_i32 = arith.constant 0 : i32
    %c0_i32_0 = arith.constant 0 : i32
    %c0_i32_1 = arith.constant 0 : i32
    return %arg0, %c0_i32, %c0_i32_0 : i32, i32, i32
  }
  func.func @transform_14(%arg0: i32) -> (i32, i32, i32) {
    %c0_i32 = arith.constant 0 : i32
    %c0_i32_0 = arith.constant 0 : i32
    %c0_i32_1 = arith.constant 0 : i32
    return %arg0, %c0_i32, %c0_i32_0 : i32, i32, i32
  }
}

</mosaic_0001>

<llo_original>
// kernel: _lambda_.2
$region0: #{_lambda_.2}
  #allocation0 [shape = 'u32[]', space=smem, size = 0x4, offset = 0x4, fixed_abs, tag = 'smem constant byte address 0x4 - core index']
  #allocation1 [shape = 'u32[144,128]{1,0:T(1,128)}', space=vmem, size = 0x12000, scoped, tag = 'internal scratch']
  %s0 = inlined_call_operand.vmem [shape: bf16[128,32], index: 0, kind: input, shape index: {}]
  %s1 = inlined_call_operand.vmem [shape: bf16[32,64], index: 1, kind: input, shape index: {}]
  %s2 = inlined_call_operand.vmem [shape: bf16[128,64], index: 2, kind: output, shape index: {}]
  %s3 = sld [smem:[#allocation0]]
  $region18: #{_lambda_.2} parent=0
    _
  %s5 = ssub.s32 1, %s3
  %s6 = scalar_select 0, %s5, %s3
  // Predicated region
  $region2: #{_lambda_.2} parent=0 // pred_check
    _
  $region3: #{_lambda_.2} parent=0 // pred_check_branch
    %8 = sbr.rel (0) target = $region5
  $region4: #{_lambda_.2} parent=0 // pred_region
    _
  $region5: #{_lambda_.2} parent=0 // pred_fallthru
    _
  // Predicated region
  $region6: #{_lambda_.2} parent=0 // pred_check
    _
  $region7: #{_lambda_.2} parent=0 // pred_check_branch
    %10 = sbr.rel (0) target = $region9
  $region8: #{_lambda_.2} parent=0 // pred_region
    _
  $region9: #{_lambda_.2} parent=0 // pred_fallthru
    _
  %v12 = vld [vmem:[%s0] sm:$0xf]
  %v13 = vld [vmem:[%s0 + $0x4] sm:$0xf]
  %v14 = vld [vmem:[%s0 + $0x8] sm:$0xf]
  %v15 = vld [vmem:[%s0 + $0xc] sm:$0xf]
  %v16 = vld [vmem:[%s0 + $0x10] sm:$0xf]
  %v17 = vld [vmem:[%s0 + $0x14] sm:$0xf]
  %v18 = vld [vmem:[%s0 + $0x18] sm:$0xf]
  %v19 = vld [vmem:[%s0 + $0x1c] sm:$0xf]
  %v20 = vld [vmem:[%s0 + $0x20] sm:$0xf]
  %v21 = vld [vmem:[%s0 + $0x24] sm:$0xf]
  %v22 = vld [vmem:[%s0 + $0x28] sm:$0xf]
  %v23 = vld [vmem:[%s0 + $0x2c] sm:$0xf]
  %v24 = vld [vmem:[%s0 + $0x30] sm:$0xf]
  %v25 = vld [vmem:[%s0 + $0x34] sm:$0xf]
  %v26 = vld [vmem:[%s0 + $0x38] sm:$0xf]
  %v27 = vld [vmem:[%s0 + $0x3c] sm:$0xf]
  %v28 = vld [vmem:[%s1] sm:$0xf]
  %v29 = vld [vmem:[%s1 + $0x4] sm:$0xf]
  %v30 = vld [vmem:[%s1 + $0x8] sm:$0xf]
  %v31 = vld [vmem:[%s1 + $0xc] sm:$0xf]
  %v48 = vunpack.c.l.b16 %v12
  %v49 = vunpack.c.l.b16 %v13
  %v50 = vunpack.c.l.b16 %v14
  %v51 = vunpack.c.l.b16 %v15
  %v52 = vunpack.c.l.b16 %v16
  %v53 = vunpack.c.l.b16 %v17
  %v54 = vunpack.c.l.b16 %v18
  %v55 = vunpack.c.l.b16 %v19
  %v56 = vunpack.c.l.b16 %v20
  %v57 = vunpack.c.l.b16 %v21
  %v58 = vunpack.c.l.b16 %v22
  %v59 = vunpack.c.l.b16 %v23
  %v60 = vunpack.c.l.b16 %v24
  %v61 = vunpack.c.l.b16 %v25
  %v62 = vunpack.c.l.b16 %v26
  %v63 = vunpack.c.l.b16 %v27
  %v64 = vpack.c.b16 %v49, %v48
  %v65 = vpack.c.b16 %v51, %v50
  %v66 = vpack.c.b16 %v53, %v52
  %v67 = vpack.c.b16 %v55, %v54
  %v68 = vpack.c.b16 %v57, %v56
  %v69 = vpack.c.b16 %v59, %v58
  %v70 = vpack.c.b16 %v61, %v60
  %v71 = vpack.c.b16 %v63, %v62
  %v76 = vunpack.c.l.b16 %v28
  %v77 = vunpack.c.l.b16 %v29
  %v78 = vunpack.c.l.b16 %v30
  %v79 = vunpack.c.l.b16 %v31
  %v80 = vpack.c.b16 %v77, %v76
  %v81 = vpack.c.b16 %v79, %v78
  %vm84 = vcmask 261120
  %v86 = vsel %vm84, %v64, 0
  %v89 = vsel %vm84, %v65, 0
  %v92 = vsel %vm84, %v66, 0
  %v95 = vsel %vm84, %v67, 0
  %v98 = vsel %vm84, %v68, 0
  %v101 = vsel %vm84, %v69, 0
  %v104 = vsel %vm84, %v70, 0
  %v107 = vsel %vm84, %v71, 0
  %109 = vmatprep.subr.bf16.mxu0 0
  %110 = vmatpush1.bf16.msra.mxu0 0
  %111 = vmatprep.subr.bf16.mxu0 0
  %112 = vmatpush1.bf16.msra.mxu0 0
  %113 = vmatprep.subr.bf16.mxu0 0
  %114 = vmatpush1.bf16.msra.mxu0 0
  %115 = vmatprep.subr.bf16.mxu0 0
  %116 = vmatpush1.bf16.msra.mxu0 0
  %117 = vmatprep.subr.bf16.mxu0 0
  %118 = vmatpush1.bf16.msra.mxu0 0
  %119 = vmatprep.subr.bf16.mxu0 0
  %120 = vmatpush1.bf16.msra.mxu0 0
  %121 = vmatprep.subr.bf16.mxu0 0
  %122 = vmatpush1.bf16.msra.mxu0 %v81
  %123 = vmatprep.subr.bf16.mxu0 0
  %124 = vmatpush1.bf16.msra.mxu0 %v80
  %125 = vmatprep.subr.bf16.mxu0 0
  %126 = vmatpush2.bf16.msra.mxu0 0
  %127 = vmatprep.subr.bf16.mxu0 0
  %128 = vmatpush2.bf16.msra.mxu0 0
  %129 = vmatprep.subr.bf16.mxu0 0
  %130 = vmatpush2.bf16.msra.mxu0 0
  %131 = vmatprep.subr.bf16.mxu0 0
  %132 = vmatpush2.bf16.msra.mxu0 0
  %133 = vmatprep.subr.bf16.mxu0 0
  %134 = vmatpush2.bf16.msra.mxu0 0
  %135 = vmatprep.subr.bf16.mxu0 0
  %136 = vmatpush2.bf16.msra.mxu0 0
  %137 = vmatprep.subr.bf16.mxu0 0
  %138 = vmatpush2.bf16.msra.mxu0 0
  %139 = vmatprep.subr.bf16.mxu0 0
  %140 = vmatpush2.bf16.msra.mxu0 0
  %141 = vmatprep.mubr.bf16.mxu0 0
  %142 = vmatmul.mubr.bf16.gmra.mxu0 %v86
  %v143 = vpop.f32.mrf.mxu0
  %v144 = vadd.f32 0.0, %v143
  %v145 = vpop.f32.mrf.mxu0
  %v146 = vpop.f32.mrf.mxu0
  %v147 = vadd.f32 0.0, %v146
  %v148 = vpop.f32.mrf.mxu0
  %149 = vmatprep.mubr.bf16.mxu0 0
  %150 = vmatmul.mubr.bf16.gmra.mxu0 %v89
  %v151 = vpop.f32.mrf.mxu0
  %v152 = vadd.f32 0.0, %v151
  %v153 = vpop.f32.mrf.mxu0
  %v154 = vpop.f32.mrf.mxu0
  %v155 = vadd.f32 0.0, %v154
  %v156 = vpop.f32.mrf.mxu0
  %157 = vmatprep.mubr.bf16.mxu0 0
  %158 = vmatmul.mubr.bf16.gmra.mxu0 %v92
  %v159 = vpop.f32.mrf.mxu0
  %v160 = vadd.f32 0.0, %v159
  %v161 = vpop.f32.mrf.mxu0
  %v162 = vpop.f32.mrf.mxu0
  %v163 = vadd.f32 0.0, %v162
  %v164 = vpop.f32.mrf.mxu0
  %165 = vmatprep.mubr.bf16.mxu0 0
  %166 = vmatmul.mubr.bf16.gmra.mxu0 %v95
  %v167 = vpop.f32.mrf.mxu0
  %v168 = vadd.f32 0.0, %v167
  %v169 = vpop.f32.mrf.mxu0
  %v170 = vpop.f32.mrf.mxu0
  %v171 = vadd.f32 0.0, %v170
  %v172 = vpop.f32.mrf.mxu0
  %173 = vmatprep.mubr.bf16.mxu0 0
  %174 = vmatmul.mubr.bf16.gmra.mxu0 %v98
  %v175 = vpop.f32.mrf.mxu0
  %v176 = vadd.f32 0.0, %v175
  %v177 = vpop.f32.mrf.mxu0
  %v178 = vpop.f32.mrf.mxu0
  %v179 = vadd.f32 0.0, %v178
  %v180 = vpop.f32.mrf.mxu0
  %181 = vmatprep.mubr.bf16.mxu0 0
  %182 = vmatmul.mubr.bf16.gmra.mxu0 %v101
  %v183 = vpop.f32.mrf.mxu0
  %v184 = vadd.f32 0.0, %v183
  %v185 = vpop.f32.mrf.mxu0
  %v186 = vpop.f32.mrf.mxu0
  %v187 = vadd.f32 0.0, %v186
  %v188 = vpop.f32.mrf.mxu0
  %189 = vmatprep.mubr.bf16.mxu0 0
  %190 = vmatmul.mubr.bf16.gmra.mxu0 %v104
  %v191 = vpop.f32.mrf.mxu0
  %v192 = vadd.f32 0.0, %v191
  %v193 = vpop.f32.mrf.mxu0
  %v194 = vpop.f32.mrf.mxu0
  %v195 = vadd.f32 0.0, %v194
  %v196 = vpop.f32.mrf.mxu0
  %197 = vmatprep.mubr.bf16.mxu0 0
  %198 = vmatmul.mubr.bf16.gmra.mxu0 %v107
  %v199 = vpop.f32.mrf.mxu0
  %v200 = vadd.f32 0.0, %v199
  %v201 = vpop.f32.mrf.mxu0
  %v202 = vpop.f32.mrf.mxu0
  %v203 = vadd.f32 0.0, %v202
  %v204 = vpop.f32.mrf.mxu0
  %205 = vdwg.mxu0
  %v206 = vpack.c.bf16 %v147, %v144
  %v207 = vpack.c.bf16 %v155, %v152
  %v208 = vpack.c.bf16 %v163, %v160
  %v209 = vpack.c.bf16 %v171, %v168
  %v210 = vpack.c.bf16 %v179, %v176
  %v211 = vpack.c.bf16 %v187, %v184
  %v212 = vpack.c.bf16 %v195, %v192
  %v213 = vpack.c.bf16 %v203, %v200
  %v222 = vunpack.c.l.b16 %v206
  %v223 = vunpack.c.h.b16 %v206
  %v224 = vunpack.c.l.b16 %v207
  %v225 = vunpack.c.h.b16 %v207
  %v226 = vunpack.c.l.b16 %v208
  %v227 = vunpack.c.h.b16 %v208
  %v228 = vunpack.c.l.b16 %v209
  %v229 = vunpack.c.h.b16 %v209
  %v230 = vunpack.c.l.b16 %v210
  %v231 = vunpack.c.h.b16 %v210
  %v232 = vunpack.c.l.b16 %v211
  %v233 = vunpack.c.h.b16 %v211
  %v234 = vunpack.c.l.b16 %v212
  %v235 = vunpack.c.h.b16 %v212
  %v236 = vunpack.c.l.b16 %v213
  %v237 = vunpack.c.h.b16 %v213
  %v238 = vpack.c.b16 %v222, %v222
  %v239 = vpack.c.b16 %v223, %v223
  %v240 = vpack.c.b16 %v224, %v224
  %v241 = vpack.c.b16 %v225, %v225
  %v242 = vpack.c.b16 %v226, %v226
  %v243 = vpack.c.b16 %v227, %v227
  %v244 = vpack.c.b16 %v228, %v228
  %v245 = vpack.c.b16 %v229, %v229
  %v246 = vpack.c.b16 %v230, %v230
  %v247 = vpack.c.b16 %v231, %v231
  %v248 = vpack.c.b16 %v232, %v232
  %v249 = vpack.c.b16 %v233, %v233
  %v250 = vpack.c.b16 %v234, %v234
  %v251 = vpack.c.b16 %v235, %v235
  %v252 = vpack.c.b16 %v236, %v236
  %v253 = vpack.c.b16 %v237, %v237
  %vm270 = vcmask 519168
  %271 = vst.msk [vmem:[%s2] sm:$0xf] %vm270, %v238
  %272 = vst.msk [vmem:[%s2 + $0x4] sm:$0xf] %vm270, %v239
  %273 = vst.msk [vmem:[%s2 + $0x8] sm:$0xf] %vm270, %v240
  %274 = vst.msk [vmem:[%s2 + $0xc] sm:$0xf] %vm270, %v241
  %275 = vst.msk [vmem:[%s2 + $0x10] sm:$0xf] %vm270, %v242
  %276 = vst.msk [vmem:[%s2 + $0x14] sm:$0xf] %vm270, %v243
  %277 = vst.msk [vmem:[%s2 + $0x18] sm:$0xf] %vm270, %v244
  %278 = vst.msk [vmem:[%s2 + $0x1c] sm:$0xf] %vm270, %v245
  %279 = vst.msk [vmem:[%s2 + $0x20] sm:$0xf] %vm270, %v246
  %280 = vst.msk [vmem:[%s2 + $0x24] sm:$0xf] %vm270, %v247
  %281 = vst.msk [vmem:[%s2 + $0x28] sm:$0xf] %vm270, %v248
  %282 = vst.msk [vmem:[%s2 + $0x2c] sm:$0xf] %vm270, %v249
  %283 = vst.msk [vmem:[%s2 + $0x30] sm:$0xf] %vm270, %v250
  %284 = vst.msk [vmem:[%s2 + $0x34] sm:$0xf] %vm270, %v251
  %285 = vst.msk [vmem:[%s2 + $0x38] sm:$0xf] %vm270, %v252
  %286 = vst.msk [vmem:[%s2 + $0x3c] sm:$0xf] %vm270, %v253
  // Predicated region
  $region10: #{_lambda_.2} parent=0 // pred_check
    _
  $region11: #{_lambda_.2} parent=0 // pred_check_branch
    %288 = sbr.rel (0) target = $region13
  $region12: #{_lambda_.2} parent=0 // pred_region
    _
  $region13: #{_lambda_.2} parent=0 // pred_fallthru
    _
  // Predicated region
  $region14: #{_lambda_.2} parent=0 // pred_check
    _
  $region15: #{_lambda_.2} parent=0 // pred_check_branch
    %290 = sbr.rel (0) target = $region17
  $region16: #{_lambda_.2} parent=0 // pred_region
    _
  $region17: #{_lambda_.2} parent=0 // pred_fallthru
    _

// kernel: _lambda_.3
$region0: #{_lambda_.3}
  #allocation0 [shape = 'u32[]', space=smem, size = 0x4, offset = 0x4, fixed_abs, tag = 'smem constant byte address 0x4 - core index']
  #allocation1 [shape = 'u32[144,128]{1,0:T(1,128)}', space=vmem, size = 0x12000, scoped, tag = 'internal scratch']
  #allocation2 [shape = 'bf16[375,32]{1,0:T(8,128)(2,1)}', space=vmem, size = 0x17800, scoped, tag = 'scratch operand']
  %s0 = inlined_call_operand.vmem [shape: bf16[2,324,32], index: 0, kind: input, shape index: {}]
  %s1 = inlined_call_operand.vmem [shape: bf16[2,324,32], index: 1, kind: input, shape index: {}]
  %s2 = inlined_call_operand.vmem [shape: bf16[2,324,32], index: 2, kind: input, shape index: {}]
  %s3 = inlined_call_operand.vmem [shape: f32[324,1], index: 3, kind: input, shape index: {}]
  %s4 = inlined_call_operand.vmem [shape: bf16[32,32], index: 4, kind: input, shape index: {}]
  %s5 = inlined_call_operand.vmem [shape: f32[1,32], index: 5, kind: input, shape index: {}]
  %s6 = inlined_call_operand.vmem [shape: bf16[9,32,32], index: 6, kind: input, shape index: {}]
  %s7 = inlined_call_operand.vmem [shape: f32[1,32], index: 7, kind: input, shape index: {}]
  %s8 = inlined_call_operand.vmem [shape: bf16[32,32], index: 8, kind: input, shape index: {}]
  %s9 = inlined_call_operand.vmem [shape: bf16[32,32], index: 9, kind: input, shape index: {}]
  %s10 = inlined_call_operand.vmem [shape: f32[1,32], index: 10, kind: input, shape index: {}]
  %s11 = inlined_call_operand.vmem [shape: bf16[9,32,32], index: 11, kind: input, shape index: {}]
  %s12 = inlined_call_operand.vmem [shape: f32[1,32], index: 12, kind: input, shape index: {}]
  %s13 = inlined_call_operand.vmem [shape: f32[2,324,32], index: 13, kind: output, shape index: {0}]
  %s14 = inlined_call_operand.vmem [shape: f32[2,324,32], index: 14, kind: output, shape index: {1}]
  %15 = xla_tuple %s13, %s14
  %s16 = sld [smem:[#allocation0]]
  $region93: #{_lambda_.3} parent=0
    _
  %s18 = ssub.s32 1, %s16
  %s19 = scalar_select 0, %s18, %s16
  loop: start=0, step=1, limit=4
  $region2: #{_lambda_.3} parent=0 // loop_pre_header
    _
  $region3: #{_lambda_.3} parent=0 // loop_header
    %s21 = sphi 0, %s25
    %p22 = scmp.ge.s32.totalorder %s21, 4
    %s31 = sphi 0, %s33
    %s34 = sphi 0, %s31
    %s35 = sphi 0, %s34
    %s51 = sphi 0, %s35
    %s57 = sphi 0, %s59
    %s60 = sphi 0, %s57
    %s61 = sphi 0, %s60
    %s77 = sphi 0, %s61
    %s83 = sphi 0, %s85
    %s86 = sphi 0, %s83
    %s87 = sphi 0, %s86
    %s103 = sphi 0, %s87
    %s107 = sphi 0, %s107
    %s109 = sphi 0, %s107
    %s110 = sphi 0, %s109
    %s124 = sphi 0, %s110
    %s128 = sphi 0, %s128
    %s130 = sphi 0, %s128
    %s131 = sphi 0, %s130
    %s145 = sphi 0, %s131
    %s149 = sphi 0, %s149
    %s151 = sphi 0, %s149
    %s152 = sphi 0, %s151
    %s166 = sphi 0, %s152
    %s170 = sphi 0, %s170
    %s172 = sphi 0, %s170
    %s173 = sphi 0, %s172
    %s187 = sphi 0, %s173
    %s191 = sphi 0, %s191
    %s193 = sphi 0, %s191
    %s194 = sphi 0, %s193
    %s208 = sphi 0, %s194
    %s212 = sphi 0, %s212
    %s214 = sphi 0, %s212
    %s215 = sphi 0, %s214
    %s229 = sphi 0, %s215
    %s233 = sphi 0, %s233
    %s235 = sphi 0, %s233
    %s236 = sphi 0, %s235
    %s250 = sphi 0, %s236
    %s254 = sphi 0, %s254
    %s256 = sphi 0, %s254
    %s257 = sphi 0, %s256
    %s271 = sphi 0, %s257
    %s275 = sphi 0, %s275
    %s277 = sphi 0, %s275
    %s278 = sphi 0, %s277
    %s292 = sphi 0, %s278
    %s296 = sphi 0, %s296
    %s298 = sphi 0, %s296
    %s299 = sphi 0, %s298
    %s313 = sphi 0, %s299
    %s319 = sphi 0, %s321
    %s322 = sphi 0, %s319
    %s323 = sphi 0, %s322
    %s339 = sphi 0, %s323
    %s345 = sphi 0, %s347
    %s348 = sphi 0, %s345
    %s349 = sphi 0, %s348
    %s365 = sphi 0, %s349
  $region4: #{_lambda_.3} parent=0 // loop_header_branch
    %24 = sbr.rel (%p22) target = $region8
  $region5: #{_lambda_.3} parent=0 // loop_body
    %s26 = ssub.s32 %s21, 1
    %s27 = ssub.s32 %s21, 2
    %s28 = sadd.s32 %s21, 1
    %s29 = ssub.s32 %s21, %s28
    %p30 = scmp.eq.s32.totalorder %s29, 0
    %s32 = sadd.s32 %s31, 1
    %s33 = scalar_select %p30, %s31, %s32
    %p36 = pneg %p30
    %p37 = scmp.eq.s32.totalorder %s21, 1
    %p38 = por %p36, %p37
    %p39 = scmp.ne.s32.totalorder %s31, %s34
    %p40 = scmp.eq.s32.totalorder %s21, 0
    %p41 = por %p39, %p40
    %p42 = scmp.ne.s32.totalorder %s31, %s34
    %p43 = scmp.eq.s32.totalorder %s26, 1
    %p44 = por %p42, %p43
    %p45 = scmp.ne.s32.totalorder %s34, %s35
    %p46 = scmp.eq.s32.totalorder %s26, 0
    %p47 = por %p45, %p46
    %p48 = scmp.ne.s32.totalorder %s34, %s35
    %p49 = scmp.eq.s32.totalorder %s27, 1
    %p50 = por %p48, %p49
    %p52 = scmp.ne.s32.totalorder %s35, %s51
    %p53 = scmp.eq.s32.totalorder %s27, 0
    %p54 = por %p52, %p53
    %s55 = ssub.s32 %s21, %s28
    %p56 = scmp.eq.s32.totalorder %s55, 0
    %s58 = sadd.s32 %s57, 1
    %s59 = scalar_select %p56, %s57, %s58
    %p62 = pneg %p56
    %p63 = scmp.eq.s32.totalorder %s21, 1
    %p64 = por %p62, %p63
    %p65 = scmp.ne.s32.totalorder %s57, %s60
    %p66 = scmp.eq.s32.totalorder %s21, 0
    %p67 = por %p65, %p66
    %p68 = scmp.ne.s32.totalorder %s57, %s60
    %p69 = scmp.eq.s32.totalorder %s26, 1
    %p70 = por %p68, %p69
    %p71 = scmp.ne.s32.totalorder %s60, %s61
    %p72 = scmp.eq.s32.totalorder %s26, 0
    %p73 = por %p71, %p72
    %p74 = scmp.ne.s32.totalorder %s60, %s61
    %p75 = scmp.eq.s32.totalorder %s27, 1
    %p76 = por %p74, %p75
    %p78 = scmp.ne.s32.totalorder %s61, %s77
    %p79 = scmp.eq.s32.totalorder %s27, 0
    %p80 = por %p78, %p79
    %s81 = ssub.s32 %s21, %s28
    %p82 = scmp.eq.s32.totalorder %s81, 0
    %s84 = sadd.s32 %s83, 1
    %s85 = scalar_select %p82, %s83, %s84
    %p88 = pneg %p82
    %p89 = scmp.eq.s32.totalorder %s21, 1
    %p90 = por %p88, %p89
    %p91 = scmp.ne.s32.totalorder %s83, %s86
    %p92 = scmp.eq.s32.totalorder %s21, 0
    %p93 = por %p91, %p92
    %p94 = scmp.ne.s32.totalorder %s83, %s86
    %p95 = scmp.eq.s32.totalorder %s26, 1
    %p96 = por %p94, %p95
    %p97 = scmp.ne.s32.totalorder %s86, %s87
    %p98 = scmp.eq.s32.totalorder %s26, 0
    %p99 = por %p97, %p98
    %p100 = scmp.ne.s32.totalorder %s86, %s87
    %p101 = scmp.eq.s32.totalorder %s27, 1
    %p102 = por %p100, %p101
    %p104 = scmp.ne.s32.totalorder %s87, %s103
    %p105 = scmp.eq.s32.totalorder %s27, 0
    %p106 = por %p104, %p105
    %s108 = sadd.s32 %s107, 1
    %p111 = scmp.eq.s32.totalorder %s21, 1
    %p112 = scmp.ne.s32.totalorder %s107, %s109
    %p113 = scmp.eq.s32.totalorder %s21, 0
    %p114 = por %p112, %p113
    %p115 = scmp.ne.s32.totalorder %s107, %s109
    %p116 = scmp.eq.s32.totalorder %s26, 1
    %p117 = por %p115, %p116
    %p118 = scmp.ne.s32.totalorder %s109, %s110
    %p119 = scmp.eq.s32.totalorder %s26, 0
    %p120 = por %p118, %p119
    %p121 = scmp.ne.s32.totalorder %s109, %s110
    %p122 = scmp.eq.s32.totalorder %s27, 1
    %p123 = por %p121, %p122
    %p125 = scmp.ne.s32.totalorder %s110, %s124
    %p126 = scmp.eq.s32.totalorder %s27, 0
    %p127 = por %p125, %p126
    %s129 = sadd.s32 %s128, 1
    %p132 = scmp.eq.s32.totalorder %s21, 1
    %p133 = scmp.ne.s32.totalorder %s128, %s130
    %p134 = scmp.eq.s32.totalorder %s21, 0
    %p135 = por %p133, %p134
    %p136 = scmp.ne.s32.totalorder %s128, %s130
    %p137 = scmp.eq.s32.totalorder %s26, 1
    %p138 = por %p136, %p137
    %p139 = scmp.ne.s32.totalorder %s130, %s131
    %p140 = scmp.eq.s32.totalorder %s26, 0
    %p141 = por %p139, %p140
    %p142 = scmp.ne.s32.totalorder %s130, %s131
    %p143 = scmp.eq.s32.totalorder %s27, 1
    %p144 = por %p142, %p143
    %p146 = scmp.ne.s32.totalorder %s131, %s145
    %p147 = scmp.eq.s32.totalorder %s27, 0
    %p148 = por %p146, %p147
    %s150 = sadd.s32 %s149, 1
    %p153 = scmp.eq.s32.totalorder %s21, 1
    %p154 = scmp.ne.s32.totalorder %s149, %s151
    %p155 = scmp.eq.s32.totalorder %s21, 0
    %p156 = por %p154, %p155
    %p157 = scmp.ne.s32.totalorder %s149, %s151
    %p158 = scmp.eq.s32.totalorder %s26, 1
    %p159 = por %p157, %p158
    %p160 = scmp.ne.s32.totalorder %s151, %s152
    %p161 = scmp.eq.s32.totalorder %s26, 0
    %p162 = por %p160, %p161
    %p163 = scmp.ne.s32.totalorder %s151, %s152
    %p164 = scmp.eq.s32.totalorder %s27, 1
    %p165 = por %p163, %p164
    %p167 = scmp.ne.s32.totalorder %s152, %s166
    %p168 = scmp.eq.s32.totalorder %s27, 0
    %p169 = por %p167, %p168
    %s171 = sadd.s32 %s170, 1
    %p174 = scmp.eq.s32.totalorder %s21, 1
    %p175 = scmp.ne.s32.totalorder %s170, %s172
    %p176 = scmp.eq.s32.totalorder %s21, 0
    %p177 = por %p175, %p176
    %p178 = scmp.ne.s32.totalorder %s170, %s172
    %p179 = scmp.eq.s32.totalorder %s26, 1
    %p180 = por %p178, %p179
    %p181 = scmp.ne.s32.totalorder %s172, %s173
    %p182 = scmp.eq.s32.totalorder %s26, 0
    %p183 = por %p181, %p182
    %p184 = scmp.ne.s32.totalorder %s172, %s173
    %p185 = scmp.eq.s32.totalorder %s27, 1
    %p186 = por %p184, %p185
    %p188 = scmp.ne.s32.totalorder %s173, %s187
    %p189 = scmp.eq.s32.totalorder %s27, 0
    %p190 = por %p188, %p189
    %s192 = sadd.s32 %s191, 1
    %p195 = scmp.eq.s32.totalorder %s21, 1
    %p196 = scmp.ne.s32.totalorder %s191, %s193
    %p197 = scmp.eq.s32.totalorder %s21, 0
    %p198 = por %p196, %p197
    %p199 = scmp.ne.s32.totalorder %s191, %s193
    %p200 = scmp.eq.s32.totalorder %s26, 1
    %p201 = por %p199, %p200
    %p202 = scmp.ne.s32.totalorder %s193, %s194
    %p203 = scmp.eq.s32.totalorder %s26, 0
    %p204 = por %p202, %p203
    %p205 = scmp.ne.s32.totalorder %s193, %s194
    %p206 = scmp.eq.s32.totalorder %s27, 1
    %p207 = por %p205, %p206
    %p209 = scmp.ne.s32.totalorder %s194, %s208
    %p210 = scmp.eq.s32.totalorder %s27, 0
    %p211 = por %p209, %p210
    %s213 = sadd.s32 %s212, 1
    %p216 = scmp.eq.s32.totalorder %s21, 1
    %p217 = scmp.ne.s32.totalorder %s212, %s214
    %p218 = scmp.eq.s32.totalorder %s21, 0
    %p219 = por %p217, %p218
    %p220 = scmp.ne.s32.totalorder %s212, %s214
    %p221 = scmp.eq.s32.totalorder %s26, 1
    %p222 = por %p220, %p221
    %p223 = scmp.ne.s32.totalorder %s214, %s215
    %p224 = scmp.eq.s32.totalorder %s26, 0
    %p225 = por %p223, %p224
    %p226 = scmp.ne.s32.totalorder %s214, %s215
    %p227 = scmp.eq.s32.totalorder %s27, 1
    %p228 = por %p226, %p227
    %p230 = scmp.ne.s32.totalorder %s215, %s229
    %p231 = scmp.eq.s32.totalorder %s27, 0
    %p232 = por %p230, %p231
    %s234 = sadd.s32 %s233, 1
    %p237 = scmp.eq.s32.totalorder %s21, 1
    %p238 = scmp.ne.s32.totalorder %s233, %s235
    %p239 = scmp.eq.s32.totalorder %s21, 0
    %p240 = por %p238, %p239
    %p241 = scmp.ne.s32.totalorder %s233, %s235
    %p242 = scmp.eq.s32.totalorder %s26, 1
    %p243 = por %p241, %p242
    %p244 = scmp.ne.s32.totalorder %s235, %s236
    %p245 = scmp.eq.s32.totalorder %s26, 0
    %p246 = por %p244, %p245
    %p247 = scmp.ne.s32.totalorder %s235, %s236
    %p248 = scmp.eq.s32.totalorder %s27, 1
    %p249 = por %p247, %p248
    %p251 = scmp.ne.s32.totalorder %s236, %s250
    %p252 = scmp.eq.s32.totalorder %s27, 0
    %p253 = por %p251, %p252
    %s255 = sadd.s32 %s254, 1
    %p258 = scmp.eq.s32.totalorder %s21, 1
    %p259 = scmp.ne.s32.totalorder %s254, %s256
    %p260 = scmp.eq.s32.totalorder %s21, 0
    %p261 = por %p259, %p260
    %p262 = scmp.ne.s32.totalorder %s254, %s256
    %p263 = scmp.eq.s32.totalorder %s26, 1
    %p264 = por %p262, %p263
    %p265 = scmp.ne.s32.totalorder %s256, %s257
    %p266 = scmp.eq.s32.totalorder %s26, 0
    %p267 = por %p265, %p266
    %p268 = scmp.ne.s32.totalorder %s256, %s257
    %p269 = scmp.eq.s32.totalorder %s27, 1
    %p270 = por %p268, %p269
    %p272 = scmp.ne.s32.totalorder %s257, %s271
    %p273 = scmp.eq.s32.totalorder %s27, 0
    %p274 = por %p272, %p273
    %s276 = sadd.s32 %s275, 1
    %p279 = scmp.eq.s32.totalorder %s21, 1
    %p280 = scmp.ne.s32.totalorder %s275, %s277
    %p281 = scmp.eq.s32.totalorder %s21, 0
    %p282 = por %p280, %p281
    %p283 = scmp.ne.s32.totalorder %s275, %s277
    %p284 = scmp.eq.s32.totalorder %s26, 1
    %p285 = por %p283, %p284
    %p286 = scmp.ne.s32.totalorder %s277, %s278
    %p287 = scmp.eq.s32.totalorder %s26, 0
    %p288 = por %p286, %p287
    %p289 = scmp.ne.s32.totalorder %s277, %s278
    %p290 = scmp.eq.s32.totalorder %s27, 1
    %p291 = por %p289, %p290
    %p293 = scmp.ne.s32.totalorder %s278, %s292
    %p294 = scmp.eq.s32.totalorder %s27, 0
    %p295 = por %p293, %p294
    %s297 = sadd.s32 %s296, 1
    %p300 = scmp.eq.s32.totalorder %s21, 1
    %p301 = scmp.ne.s32.totalorder %s296, %s298
    %p302 = scmp.eq.s32.totalorder %s21, 0
    %p303 = por %p301, %p302
    %p304 = scmp.ne.s32.totalorder %s296, %s298
    %p305 = scmp.eq.s32.totalorder %s26, 1
    %p306 = por %p304, %p305
    %p307 = scmp.ne.s32.totalorder %s298, %s299
    %p308 = scmp.eq.s32.totalorder %s26, 0
    %p309 = por %p307, %p308
    %p310 = scmp.ne.s32.totalorder %s298, %s299
    %p311 = scmp.eq.s32.totalorder %s27, 1
    %p312 = por %p310, %p311
    %p314 = scmp.ne.s32.totalorder %s299, %s313
    %p315 = scmp.eq.s32.totalorder %s27, 0
    %p316 = por %p314, %p315
    %s317 = ssub.s32 %s21, %s28
    %p318 = scmp.eq.s32.totalorder %s317, 0
    %s320 = sadd.s32 %s319, 1
    %s321 = scalar_select %p318, %s319, %s320
    %p324 = pneg %p318
    %p325 = scmp.eq.s32.totalorder %s21, 1
    %p326 = por %p324, %p325
    %p327 = scmp.ne.s32.totalorder %s319, %s322
    %p328 = scmp.eq.s32.totalorder %s21, 0
    %p329 = por %p327, %p328
    %p330 = scmp.ne.s32.totalorder %s319, %s322
    %p331 = scmp.eq.s32.totalorder %s26, 1
    %p332 = por %p330, %p331
    %p333 = scmp.ne.s32.totalorder %s322, %s323
    %p334 = scmp.eq.s32.totalorder %s26, 0
    %p335 = por %p333, %p334
    %p336 = scmp.ne.s32.totalorder %s322, %s323
    %p337 = scmp.eq.s32.totalorder %s27, 1
    %p338 = por %p336, %p337
    %p340 = scmp.ne.s32.totalorder %s323, %s339
    %p341 = scmp.eq.s32.totalorder %s27, 0
    %p342 = por %p340, %p341
    %s343 = ssub.s32 %s21, %s28
    %p344 = scmp.eq.s32.totalorder %s343, 0
    %s346 = sadd.s32 %s345, 1
    %s347 = scalar_select %p344, %s345, %s346
    %p350 = pneg %p344
    %p351 = scmp.eq.s32.totalorder %s21, 1
    %p352 = por %p350, %p351
    %p353 = scmp.ne.s32.totalorder %s345, %s348
    %p354 = scmp.eq.s32.totalorder %s21, 0
    %p355 = por %p353, %p354
    %p356 = scmp.ne.s32.totalorder %s345, %s348
    %p357 = scmp.eq.s32.totalorder %s26, 1
    %p358 = por %p356, %p357
    %p359 = scmp.ne.s32.totalorder %s348, %s349
    %p360 = scmp.eq.s32.totalorder %s26, 0
    %p361 = por %p359, %p360
    %p362 = scmp.ne.s32.totalorder %s348, %s349
    %p363 = scmp.eq.s32.totalorder %s27, 1
    %p364 = por %p362, %p363
    %p366 = scmp.ne.s32.totalorder %s349, %s365
    %p367 = scmp.eq.s32.totalorder %s27, 0
    %p368 = por %p366, %p367
    %p369 = scmp.le.s32.totalorder 1, %s21
    %p370 = scmp.lt.s32.totalorder %s21, 3
    %p371 = pnand %p369, %p370
    %p372 = pneg %p371
    // Predicated region
    $region9: #{_lambda_.3} parent=5 // pred_check
      _
    $region10: #{_lambda_.3} parent=5 // pred_check_branch
      %374 = sbr.rel (%p371) target = $region12
    $region11: #{_lambda_.3} parent=5 // pred_region
      %s375 = ssub.s32 %s21, 1
      // Predicated region
      $region13: #{_lambda_.3} parent=11 // pred_check
        %p376 = pneg %p120
      $region14: #{_lambda_.3} parent=11 // pred_check_branch
        %378 = sbr.rel (%p376) target = $region16
      $region15: #{_lambda_.3} parent=11 // pred_region
        _
      $region16: #{_lambda_.3} parent=11 // pred_fallthru
        _
      // Predicated region
      $region17: #{_lambda_.3} parent=11 // pred_check
        %p379 = pneg %p141
      $region18: #{_lambda_.3} parent=11 // pred_check_branch
        %381 = sbr.rel (%p379) target = $region20
      $region19: #{_lambda_.3} parent=11 // pred_region
        _
      $region20: #{_lambda_.3} parent=11 // pred_fallthru
        _
      // Predicated region
      $region21: #{_lambda_.3} parent=11 // pred_check
        %p382 = pneg %p162
      $region22: #{_lambda_.3} parent=11 // pred_check_branch
        %384 = sbr.rel (%p382) target = $region24
      $region23: #{_lambda_.3} parent=11 // pred_region
        _
      $region24: #{_lambda_.3} parent=11 // pred_fallthru
        _
      // Predicated region
      $region25: #{_lambda_.3} parent=11 // pred_check
        %p385 = pneg %p183
      $region26: #{_lambda_.3} parent=11 // pred_check_branch
        %387 = sbr.rel (%p385) target = $region28
      $region27: #{_lambda_.3} parent=11 // pred_region
        _
      $region28: #{_lambda_.3} parent=11 // pred_fallthru
        _
      // Predicated region
      $region29: #{_lambda_.3} parent=11 // pred_check
        %p388 = pneg %p204
      $region30: #{_lambda_.3} parent=11 // pred_check_branch
        %390 = sbr.rel (%p388) target = $region32
      $region31: #{_lambda_.3} parent=11 // pred_region
        _
      $region32: #{_lambda_.3} parent=11 // pred_fallthru
        _
      // Predicated region
      $region33: #{_lambda_.3} parent=11 // pred_check
        %p391 = pneg %p225
      $region34: #{_lambda_.3} parent=11 // pred_check_branch
        %393 = sbr.rel (%p391) target = $region36
      $region35: #{_lambda_.3} parent=11 // pred_region
        _
      $region36: #{_lambda_.3} parent=11 // pred_fallthru
        _
      // Predicated region
      $region37: #{_lambda_.3} parent=11 // pred_check
        %p394 = pneg %p246
      $region38: #{_lambda_.3} parent=11 // pred_check_branch
        %396 = sbr.rel (%p394) target = $region40
      $region39: #{_lambda_.3} parent=11 // pred_region
        _
      $region40: #{_lambda_.3} parent=11 // pred_fallthru
        _
      // Predicated region
      $region41: #{_lambda_.3} parent=11 // pred_check
        %p397 = pneg %p267
      $region42: #{_lambda_.3} parent=11 // pred_check_branch
        %399 = sbr.rel (%p397) target = $region44
      $region43: #{_lambda_.3} parent=11 // pred_region
        _
      $region44: #{_lambda_.3} parent=11 // pred_fallthru
        _
      // Predicated region
      $region45: #{_lambda_.3} parent=11 // pred_check
        %p400 = pneg %p288
      $region46: #{_lambda_.3} parent=11 // pred_check_branch
        %402 = sbr.rel (%p400) target = $region48
      $region47: #{_lambda_.3} parent=11 // pred_region
        _
      $region48: #{_lambda_.3} parent=11 // pred_fallthru
        _
      // Predicated region
      $region49: #{_lambda_.3} parent=11 // pred_check
        %p403 = pneg %p309
      $region50: #{_lambda_.3} parent=11 // pred_check_branch
        %405 = sbr.rel (%p403) target = $region52
      $region51: #{_lambda_.3} parent=11 // pred_region
        _
      $region52: #{_lambda_.3} parent=11 // pred_fallthru
        _
    $region12: #{_lambda_.3} parent=5 // pred_fallthru
      _
    %p406 = scmp.lt.s32.totalorder %s21, 2
    // Predicated region
    $region53: #{_lambda_.3} parent=5 // pred_check
      %p407 = pneg %p406
    $region54: #{_lambda_.3} parent=5 // pred_check_branch
      %409 = sbr.rel (%p407) target = $region56
    $region55: #{_lambda_.3} parent=5 // pred_region
      // Predicated region
      $region57: #{_lambda_.3} parent=55 // pred_check
        %p410 = pneg %p41
      $region58: #{_lambda_.3} parent=55 // pred_check_branch
        %412 = sbr.rel (%p410) target = $region60
      $region59: #{_lambda_.3} parent=55 // pred_region
        %p413 = scmp.lt.s32.totalorder %s21, 1
        %s414 = scalar_select %p413, %s21, 1
        %s415 = smul.addr %s414, 41
        %s416 = smul.addr %s415, 4
        %s417 = scalar_lea.vmem %s0, %s416
      $region60: #{_lambda_.3} parent=55 // pred_fallthru
        _
      // Predicated region
      $region61: #{_lambda_.3} parent=55 // pred_check
        %p418 = pneg %p67
      $region62: #{_lambda_.3} parent=55 // pred_check_branch
        %420 = sbr.rel (%p418) target = $region64
      $region63: #{_lambda_.3} parent=55 // pred_region
        %p421 = scmp.lt.s32.totalorder %s21, 1
        %s422 = scalar_select %p421, %s21, 1
        %s423 = smul.addr %s422, 41
        %s424 = smul.addr %s423, 4
        %s425 = scalar_lea.vmem %s1, %s424
      $region64: #{_lambda_.3} parent=55 // pred_fallthru
        _
      // Predicated region
      $region65: #{_lambda_.3} parent=55 // pred_check
        %p426 = pneg %p93
      $region66: #{_lambda_.3} parent=55 // pred_check_branch
        %428 = sbr.rel (%p426) target = $region68
      $region67: #{_lambda_.3} parent=55 // pred_region
        %p429 = scmp.lt.s32.totalorder %s21, 1
        %s430 = scalar_select %p429, %s21, 1
        %s431 = smul.addr %s430, 41
        %s432 = smul.addr %s431, 4
        %s433 = scalar_lea.vmem %s2, %s432
      $region68: #{_lambda_.3} parent=55 // pred_fallthru
        _
    $region56: #{_lambda_.3} parent=5 // pred_fallthru
      _
    %p434 = scmp.le.s32.totalorder 1, %s21
    %p435 = scmp.lt.s32.totalorder %s21, 3
    %p436 = pnand %p434, %p435
    %p437 = pneg %p436
    // Predicated region
    $region69: #{_lambda_.3} parent=5 // pred_check
      _
    $region70: #{_lambda_.3} parent=5 // pred_check_branch
      %439 = sbr.rel (%p436) target = $region72
    $region71: #{_lambda_.3} parent=5 // pred_region
      %s440 = ssub.s32 %s21, 1
      %p441 = scmp.lt.s32.totalorder %s26, 1
      %s442 = scalar_select %p441, %s26, 1
      %s443 = smul.addr %s442, 41
      %s444 = smul.addr %s443, 4
      %s445 = scalar_lea.vmem %s0, %s444
      %p446 = pneg %p47
      %p447 = pneg %p44
      %p448 = scmp.lt.s32.totalorder %s26, 1
      %s449 = scalar_select %p448, %s26, 1
      %s450 = smul.addr %s449, 41
      %s451 = smul.addr %s450, 4
      %s452 = scalar_lea.vmem %s1, %s451
      %p453 = pneg %p73
      %p454 = pneg %p70
      %p455 = scmp.lt.s32.totalorder %s26, 1
      %s456 = scalar_select %p455, %s26, 1
      %s457 = smul.addr %s456, 41
      %s458 = smul.addr %s457, 4
      %s459 = scalar_lea.vmem %s2, %s458
      %p460 = pneg %p99
      %p461 = pneg %p96
      %p462 = pneg %p120
      %p463 = pneg %p117
      %p464 = pneg %p141
      %p465 = pneg %p138
      %p466 = pneg %p162
      %p467 = pneg %p159
      %p468 = pneg %p183
      %p469 = pneg %p180
      %p470 = pneg %p204
      %p471 = pneg %p201
      %p472 = pneg %p225
      %p473 = pneg %p222
      %p474 = pneg %p246
      %p475 = pneg %p243
      %p476 = pneg %p267
      %p477 = pneg %p264
      %p478 = pneg %p288
      %p479 = pneg %p285
      %p480 = pneg %p309
      %p481 = pneg %p306
      %p482 = pneg %p335
      %p483 = pneg %p332
      %p484 = scmp.lt.s32.totalorder %s26, 1
      %s485 = scalar_select %p484, %s26, 1
      %s486 = smul.addr %s485, 41
      %s487 = smul.addr %s486, 8
      %s488 = scalar_lea.vmem %s13, %s487
      %p489 = pneg %p361
      %p490 = pneg %p358
      %p491 = scmp.lt.s32.totalorder %s26, 1
      %s492 = scalar_select %p491, %s26, 1
      %s493 = smul.addr %s492, 41
      %s494 = smul.addr %s493, 8
      %s495 = scalar_lea.vmem %s14, %s494
      %p496 = scmp.lt.s32.totalorder %s26, 1
      %s497 = scalar_select %p496, %s26, 1
      %s498 = smul.addr %s497, 41
      %s499 = smul.addr %s498, 4
      %s500 = scalar_lea.vmem %s0, %s499
      %p501 = scmp.lt.s32.totalorder %s26, 1
      %s502 = scalar_select %p501, %s26, 1
      %s503 = smul.addr %s502, 41
      %s504 = smul.addr %s503, 4
      %s505 = scalar_lea.vmem %s1, %s504
      %p506 = scmp.lt.s32.totalorder %s26, 1
      %s507 = scalar_select %p506, %s26, 1
      %s508 = smul.addr %s507, 41
      %s509 = smul.addr %s508, 4
      %s510 = scalar_lea.vmem %s2, %s509
      %p511 = scmp.lt.s32.totalorder %s26, 1
      %s512 = scalar_select %p511, %s26, 1
      %s513 = smul.addr %s512, 41
      %s514 = smul.addr %s513, 8
      %s515 = scalar_lea.vmem %s13, %s514
      %p516 = scmp.lt.s32.totalorder %s26, 1
      %s517 = scalar_select %p516, %s26, 1
      %s518 = smul.addr %s517, 41
      %s519 = smul.addr %s518, 8
      %s520 = scalar_lea.vmem %s14, %s519
      %vm522 = vcmask 257024
      %523 = vst.msk [vmem:[#allocation2] sm:$0xf] %vm522, 0
      %524 = vst.msk [vmem:[#allocation2 + $0x4] sm:$0xf] %vm522, 0
      %525 = vst.msk [vmem:[#allocation2 + $0x8] sm:$0xf] %vm522, 0
      %526 = vst.msk [vmem:[#allocation2 + $0xc] sm:$0xf] %vm522, 0
      %527 = vst.msk [vmem:[#allocation2 + $0x10] sm:$0xf] %vm522, 0
      %528 = vst.msk [vmem:[#allocation2 + $0x14] sm:$0xf] %vm522, 0
      %529 = vst.msk [vmem:[#allocation2 + $0x18] sm:$0xf] %vm522, 0
      %530 = vst.msk [vmem:[#allocation2 + $0x1c] sm:$0xf] %vm522, 0
      %531 = vst.msk [vmem:[#allocation2 + $0x20] sm:$0xf] %vm522, 0
      %532 = vst.msk [vmem:[#allocation2 + $0x24] sm:$0xf] %vm522, 0
      %533 = vst.msk [vmem:[#allocation2 + $0x28] sm:$0xf] %vm522, 0
      %534 = vst.msk [vmem:[#allocation2 + $0x2c] sm:$0xf] %vm522, 0
      %535 = vst.msk [vmem:[#allocation2 + $0x30] sm:$0xf] %vm522, 0
      %536 = vst.msk [vmem:[#allocation2 + $0x34] sm:$0xf] %vm522, 0
      %537 = vst.msk [vmem:[#allocation2 + $0x38] sm:$0xf] %vm522, 0
      %538 = vst.msk [vmem:[#allocation2 + $0x3c] sm:$0xf] %vm522, 0
      %539 = vst.msk [vmem:[#allocation2 + $0x40] sm:$0xf] %vm522, 0
      %540 = vst.msk [vmem:[#allocation2 + $0x44] sm:$0xf] %vm522, 0
      %541 = vst.msk [vmem:[#allocation2 + $0x48] sm:$0xf] %vm522, 0
      %542 = vst.msk [vmem:[#allocation2 + $0x4c] sm:$0xf] %vm522, 0
      %543 = vst.msk [vmem:[#allocation2 + $0x50] sm:$0xf] %vm522, 0
      %544 = vst.msk [vmem:[#allocation2 + $0x54] sm:$0xf] %vm522, 0
      %545 = vst.msk [vmem:[#allocation2 + $0x58] sm:$0xf] %vm522, 0
      %546 = vst.msk [vmem:[#allocation2 + $0x5c] sm:$0xf] %vm522, 0
      %547 = vst.msk [vmem:[#allocation2 + $0x60] sm:$0xf] %vm522, 0
      %548 = vst.msk [vmem:[#allocation2 + $0x64] sm:$0xf] %vm522, 0
      %549 = vst.msk [vmem:[#allocation2 + $0x68] sm:$0xf] %vm522, 0
      %550 = vst.msk [vmem:[#allocation2 + $0x6c] sm:$0xf] %vm522, 0
      %551 = vst.msk [vmem:[#allocation2 + $0x70] sm:$0xf] %vm522, 0
      %552 = vst.msk [vmem:[#allocation2 + $0x74] sm:$0xf] %vm522, 0
      %553 = vst.msk [vmem:[#allocation2 + $0x78] sm:$0xf] %vm522, 0
      %554 = vst.msk [vmem:[#allocation2 + $0x7c] sm:$0xf] %vm522, 0
      %555 = vst.msk [vmem:[#allocation2 + $0x80] sm:$0xf] %vm522, 0
      %556 = vst.msk [vmem:[#allocation2 + $0x84] sm:$0xf] %vm522, 0
      %557 = vst.msk [vmem:[#allocation2 + $0x88] sm:$0xf] %vm522, 0
      %558 = vst.msk [vmem:[#allocation2 + $0x8c] sm:$0xf] %vm522, 0
      %559 = vst.msk [vmem:[#allocation2 + $0x90] sm:$0xf] %vm522, 0
      %560 = vst.msk [vmem:[#allocation2 + $0x94] sm:$0xf] %vm522, 0
      %561 = vst.msk [vmem:[#allocation2 + $0x98] sm:$0xf] %vm522, 0
      %562 = vst.msk [vmem:[#allocation2 + $0x9c] sm:$0xf] %vm522, 0
      %563 = vst.msk [vmem:[#allocation2 + $0xa0] sm:$0xf] %vm522, 0
      %564 = vst.msk [vmem:[#allocation2 + $0xa4] sm:$0xf] %vm522, 0
      %565 = vst.msk [vmem:[#allocation2 + $0xa8] sm:$0xf] %vm522, 0
      %566 = vst.msk [vmem:[#allocation2 + $0xac] sm:$0xf] %vm522, 0
      %567 = vst.msk [vmem:[#allocation2 + $0xb0] sm:$0xf] %vm522, 0
      %568 = vst.msk [vmem:[#allocation2 + $0xb4] sm:$0xf] %vm522, 0
      %vm569 = vcmask 257024
      %vm570 = vsmask.f32 3328
      %vm571 = vmand %vm569, %vm570
      %v572 = vld [vmem:[#allocation2 + $0xb8] sm:$0xf]
      %v573 = vsel %vm571, 0, %v572
      %574 = vst [vmem:[#allocation2 + $0xb8] sm:$0xf] %v573
      %v575 = vld [vmem:[%s510] sm:$0xf]
      %v576 = vld [vmem:[%s510 + $0x4] sm:$0xf]
      %v577 = vld [vmem:[%s510 + $0x8] sm:$0xf]
      %v578 = vld [vmem:[%s510 + $0xc] sm:$0xf]
      %v579 = vld [vmem:[%s510 + $0x10] sm:$0xf]
      %v580 = vld [vmem:[%s510 + $0x14] sm:$0xf]
      %v581 = vld [vmem:[%s510 + $0x18] sm:$0xf]
      %v582 = vld [vmem:[%s510 + $0x1c] sm:$0xf]
      %v583 = vld [vmem:[%s510 + $0x20] sm:$0xf]
      %v584 = vld [vmem:[%s510 + $0x24] sm:$0xf]
      %v585 = vld [vmem:[%s510 + $0x28] sm:$0xf]
      %v586 = vld [vmem:[%s510 + $0x2c] sm:$0xf]
      %v587 = vld [vmem:[%s510 + $0x30] sm:$0xf]
      %v588 = vld [vmem:[%s510 + $0x34] sm:$0xf]
      %v589 = vld [vmem:[%s510 + $0x38] sm:$0xf]
      %v590 = vld [vmem:[%s510 + $0x3c] sm:$0xf]
      %v591 = vld [vmem:[%s510 + $0x40] sm:$0xf]
      %v592 = vld [vmem:[%s510 + $0x44] sm:$0xf]
      %v593 = vld [vmem:[%s510 + $0x48] sm:$0xf]
      %v594 = vld [vmem:[%s510 + $0x4c] sm:$0xf]
      %v595 = vld [vmem:[%s510 + $0x50] sm:$0xf]
      %v596 = vld [vmem:[%s510 + $0x54] sm:$0xf]
      %v597 = vld [vmem:[%s510 + $0x58] sm:$0xf]
      %v598 = vld [vmem:[%s510 + $0x5c] sm:$0xf]
      %v599 = vld [vmem:[%s510 + $0x60] sm:$0xf]
      %v600 = vld [vmem:[%s510 + $0x64] sm:$0xf]
      %v601 = vld [vmem:[%s510 + $0x68] sm:$0xf]
      %v602 = vld [vmem:[%s510 + $0x6c] sm:$0xf]
      %v603 = vld [vmem:[%s510 + $0x70] sm:$0xf]
      %v604 = vld [vmem:[%s510 + $0x74] sm:$0xf]
      %v605 = vld [vmem:[%s510 + $0x78] sm:$0xf]
      %v606 = vld [vmem:[%s510 + $0x7c] sm:$0xf]
      %v607 = vld [vmem:[%s510 + $0x80] sm:$0xf]
      %v608 = vld [vmem:[%s510 + $0x84] sm:$0xf]
      %v609 = vld [vmem:[%s510 + $0x88] sm:$0xf]
      %v610 = vld [vmem:[%s510 + $0x8c] sm:$0xf]
      %v611 = vld [vmem:[%s510 + $0x90] sm:$0xf]
      %v612 = vld [vmem:[%s510 + $0x94] sm:$0xf]
      %v613 = vld [vmem:[%s510 + $0x98] sm:$0xf]
      %v614 = vld [vmem:[%s510 + $0x9c] sm:$0xf]
      %v615 = vld [vmem:[%s510 + $0xa0] sm:$0x3]
      %v616 = vld [vmem:[%s3] sm:$0xff]
      %v617 = vld [vmem:[%s3 + $0x8] sm:$0xff]
      %v618 = vld [vmem:[%s3 + $0x10] sm:$0xff]
      %v619 = vld [vmem:[%s3 + $0x18] sm:$0xff]
      %v620 = vld [vmem:[%s3 + $0x20] sm:$0xff]
      %v621 = vld [vmem:[%s3 + $0x28] sm:$0xff]
      %v622 = vld [vmem:[%s3 + $0x30] sm:$0xff]
      %v623 = vld [vmem:[%s3 + $0x38] sm:$0xff]
      %v624 = vld [vmem:[%s3 + $0x40] sm:$0xff]
      %v625 = vld [vmem:[%s3 + $0x48] sm:$0xff]
      %v626 = vld [vmem:[%s3 + $0x50] sm:$0xff]
      %v627 = vld [vmem:[%s3 + $0x58] sm:$0xff]
      %v628 = vld [vmem:[%s3 + $0x60] sm:$0xff]
      %v629 = vld [vmem:[%s3 + $0x68] sm:$0xff]
      %v630 = vld [vmem:[%s3 + $0x70] sm:$0xff]
      %v631 = vld [vmem:[%s3 + $0x78] sm:$0xff]
      %v632 = vld [vmem:[%s3 + $0x80] sm:$0xff]
      %v633 = vld [vmem:[%s3 + $0x88] sm:$0xff]
      %v634 = vld [vmem:[%s3 + $0x90] sm:$0xff]
      %v635 = vld [vmem:[%s3 + $0x98] sm:$0xff]
      %v636 = vld [vmem:[%s3 + $0xa0] sm:$0xff]
      %v637 = vld [vmem:[%s3 + $0xa8] sm:$0xff]
      %v638 = vld [vmem:[%s3 + $0xb0] sm:$0xff]
      %v639 = vld [vmem:[%s3 + $0xb8] sm:$0xff]
      %v640 = vld [vmem:[%s3 + $0xc0] sm:$0xff]
      %v641 = vld [vmem:[%s3 + $0xc8] sm:$0xff]
      %v642 = vld [vmem:[%s3 + $0xd0] sm:$0xff]
      %v643 = vld [vmem:[%s3 + $0xd8] sm:$0xff]
      %v644 = vld [vmem:[%s3 + $0xe0] sm:$0xff]
      %v645 = vld [vmem:[%s3 + $0xe8] sm:$0xff]
      %v646 = vld [vmem:[%s3 + $0xf0] sm:$0xff]
      %v647 = vld [vmem:[%s3 + $0xf8] sm:$0xff]
      %v648 = vld [vmem:[%s3 + $0x100] sm:$0xff]
      %v649 = vld [vmem:[%s3 + $0x108] sm:$0xff]
      %v650 = vld [vmem:[%s3 + $0x110] sm:$0xff]
      %v651 = vld [vmem:[%s3 + $0x118] sm:$0xff]
      %v652 = vld [vmem:[%s3 + $0x120] sm:$0xff]
      %v653 = vld [vmem:[%s3 + $0x128] sm:$0xff]
      %v654 = vld [vmem:[%s3 + $0x130] sm:$0xff]
      %v655 = vld [vmem:[%s3 + $0x138] sm:$0xff]
      %v656 = vld [vmem:[%s3 + $0x140] sm:$0xf]
      %v657 = vld [vmem:[%s500] sm:$0xf]
      %v658 = vld [vmem:[%s500 + $0x4] sm:$0xf]
      %v659 = vld [vmem:[%s500 + $0x8] sm:$0xf]
      %v660 = vld [vmem:[%s500 + $0xc] sm:$0xf]
      %v661 = vld [vmem:[%s500 + $0x10] sm:$0xf]
      %v662 = vld [vmem:[%s500 + $0x14] sm:$0xf]
      %v663 = vld [vmem:[%s500 + $0x18] sm:$0xf]
      %v664 = vld [vmem:[%s500 + $0x1c] sm:$0xf]
      %v665 = vld [vmem:[%s500 + $0x20] sm:$0xf]
      %v666 = vld [vmem:[%s500 + $0x24] sm:$0xf]
      %v667 = vld [vmem:[%s500 + $0x28] sm:$0xf]
      %v668 = vld [vmem:[%s500 + $0x2c] sm:$0xf]
      %v669 = vld [vmem:[%s500 + $0x30] sm:$0xf]
      %v670 = vld [vmem:[%s500 + $0x34] sm:$0xf]
      %v671 = vld [vmem:[%s500 + $0x38] sm:$0xf]
      %v672 = vld [vmem:[%s500 + $0x3c] sm:$0xf]
      %v673 = vld [vmem:[%s500 + $0x40] sm:$0xf]
      %v674 = vld [vmem:[%s500 + $0x44] sm:$0xf]
      %v675 = vld [vmem:[%s500 + $0x48] sm:$0xf]
      %v676 = vld [vmem:[%s500 + $0x4c] sm:$0xf]
      %v677 = vld [vmem:[%s500 + $0x50] sm:$0xf]
      %v678 = vld [vmem:[%s500 + $0x54] sm:$0xf]
      %v679 = vld [vmem:[%s500 + $0x58] sm:$0xf]
      %v680 = vld [vmem:[%s500 + $0x5c] sm:$0xf]
      %v681 = vld [vmem:[%s500 + $0x60] sm:$0xf]
      %v682 = vld [vmem:[%s500 + $0x64] sm:$0xf]
      %v683 = vld [vmem:[%s500 + $0x68] sm:$0xf]
      %v684 = vld [vmem:[%s500 + $0x6c] sm:$0xf]
      %v685 = vld [vmem:[%s500 + $0x70] sm:$0xf]
      %v686 = vld [vmem:[%s500 + $0x74] sm:$0xf]
      %v687 = vld [vmem:[%s500 + $0x78] sm:$0xf]
      %v688 = vld [vmem:[%s500 + $0x7c] sm:$0xf]
      %v689 = vld [vmem:[%s500 + $0x80] sm:$0xf]
      %v690 = vld [vmem:[%s500 + $0x84] sm:$0xf]
      %v691 = vld [vmem:[%s500 + $0x88] sm:$0xf]
      %v692 = vld [vmem:[%s500 + $0x8c] sm:$0xf]
      %v693 = vld [vmem:[%s500 + $0x90] sm:$0xf]
      %v694 = vld [vmem:[%s500 + $0x94] sm:$0xf]
      %v695 = vld [vmem:[%s500 + $0x98] sm:$0xf]
      %v696 = vld [vmem:[%s500 + $0x9c] sm:$0xf]
      %v697 = vld [vmem:[%s500 + $0xa0] sm:$0x3]
      %v698 = vunpack.c.l.bf16 %v657
      %v699 = vunpack.c.l.bf16 %v658
      %v700 = vunpack.c.l.bf16 %v659
      %v701 = vunpack.c.l.bf16 %v660
      %v702 = vunpack.c.l.bf16 %v661
      %v703 = vunpack.c.l.bf16 %v662
      %v704 = vunpack.c.l.bf16 %v663
      %v705 = vunpack.c.l.bf16 %v664
      %v706 = vunpack.c.l.bf16 %v665
      %v707 = vunpack.c.l.bf16 %v666
      %v708 = vunpack.c.l.bf16 %v667
      %v709 = vunpack.c.l.bf16 %v668
      %v710 = vunpack.c.l.bf16 %v669
      %v711 = vunpack.c.l.bf16 %v670
      %v712 = vunpack.c.l.bf16 %v671
      %v713 = vunpack.c.l.bf16 %v672
      %v714 = vunpack.c.l.bf16 %v673
      %v715 = vunpack.c.l.bf16 %v674
      %v716 = vunpack.c.l.bf16 %v675
      %v717 = vunpack.c.l.bf16 %v676
      %v718 = vunpack.c.l.bf16 %v677
      %v719 = vunpack.c.l.bf16 %v678
      %v720 = vunpack.c.l.bf16 %v679
      %v721 = vunpack.c.l.bf16 %v680
      %v722 = vunpack.c.l.bf16 %v681
      %v723 = vunpack.c.l.bf16 %v682
      %v724 = vunpack.c.l.bf16 %v683
      %v725 = vunpack.c.l.bf16 %v684
      %v726 = vunpack.c.l.bf16 %v685
      %v727 = vunpack.c.l.bf16 %v686
      %v728 = vunpack.c.l.bf16 %v687
      %v729 = vunpack.c.l.bf16 %v688
      %v730 = vunpack.c.l.bf16 %v689
      %v731 = vunpack.c.l.bf16 %v690
      %v732 = vunpack.c.l.bf16 %v691
      %v733 = vunpack.c.l.bf16 %v692
      %v734 = vunpack.c.l.bf16 %v693
      %v735 = vunpack.c.l.bf16 %v694
      %v736 = vunpack.c.l.bf16 %v695
      %v737 = vunpack.c.l.bf16 %v696
      %v738 = vunpack.c.l.bf16 %v697
      %v739 = vld [vmem:[%s505] sm:$0xf]
      %v740 = vld [vmem:[%s505 + $0x4] sm:$0xf]
      %v741 = vld [vmem:[%s505 + $0x8] sm:$0xf]
      %v742 = vld [vmem:[%s505 + $0xc] sm:$0xf]
      %v743 = vld [vmem:[%s505 + $0x10] sm:$0xf]
      %v744 = vld [vmem:[%s505 + $0x14] sm:$0xf]
      %v745 = vld [vmem:[%s505 + $0x18] sm:$0xf]
      %v746 = vld [vmem:[%s505 + $0x1c] sm:$0xf]
      %v747 = vld [vmem:[%s505 + $0x20] sm:$0xf]
      %v748 = vld [vmem:[%s505 + $0x24] sm:$0xf]
      %v749 = vld [vmem:[%s505 + $0x28] sm:$0xf]
      %v750 = vld [vmem:[%s505 + $0x2c] sm:$0xf]
      %v751 = vld [vmem:[%s505 + $0x30] sm:$0xf]
      %v752 = vld [vmem:[%s505 + $0x34] sm:$0xf]
      %v753 = vld [vmem:[%s505 + $0x38] sm:$0xf]
      %v754 = vld [vmem:[%s505 + $0x3c] sm:$0xf]
      %v755 = vld [vmem:[%s505 + $0x40] sm:$0xf]
      %v756 = vld [vmem:[%s505 + $0x44] sm:$0xf]
      %v757 = vld [vmem:[%s505 + $0x48] sm:$0xf]
      %v758 = vld [vmem:[%s505 + $0x4c] sm:$0xf]
      %v759 = vld [vmem:[%s505 + $0x50] sm:$0xf]
      %v760 = vld [vmem:[%s505 + $0x54] sm:$0xf]
      %v761 = vld [vmem:[%s505 + $0x58] sm:$0xf]
      %v762 = vld [vmem:[%s505 + $0x5c] sm:$0xf]
      %v763 = vld [vmem:[%s505 + $0x60] sm:$0xf]
      %v764 = vld [vmem:[%s505 + $0x64] sm:$0xf]
      %v765 = vld [vmem:[%s505 + $0x68] sm:$0xf]
      %v766 = vld [vmem:[%s505 + $0x6c] sm:$0xf]
      %v767 = vld [vmem:[%s505 + $0x70] sm:$0xf]
      %v768 = vld [vmem:[%s505 + $0x74] sm:$0xf]
      %v769 = vld [vmem:[%s505 + $0x78] sm:$0xf]
      %v770 = vld [vmem:[%s505 + $0x7c] sm:$0xf]
      %v771 = vld [vmem:[%s505 + $0x80] sm:$0xf]
      %v772 = vld [vmem:[%s505 + $0x84] sm:$0xf]
      %v773 = vld [vmem:[%s505 + $0x88] sm:$0xf]
      %v774 = vld [vmem:[%s505 + $0x8c] sm:$0xf]
      %v775 = vld [vmem:[%s505 + $0x90] sm:$0xf]
      %v776 = vld [vmem:[%s505 + $0x94] sm:$0xf]
      %v777 = vld [vmem:[%s505 + $0x98] sm:$0xf]
      %v778 = vld [vmem:[%s505 + $0x9c] sm:$0xf]
      %v779 = vld [vmem:[%s505 + $0xa0] sm:$0x3]
      %v780 = vunpack.c.l.bf16 %v739
      %v781 = vunpack.c.l.bf16 %v740
      %v782 = vunpack.c.l.bf16 %v741
      %v783 = vunpack.c.l.bf16 %v742
      %v784 = vunpack.c.l.bf16 %v743
      %v785 = vunpack.c.l.bf16 %v744
      %v786 = vunpack.c.l.bf16 %v745
      %v787 = vunpack.c.l.bf16 %v746
      %v788 = vunpack.c.l.bf16 %v747
      %v789 = vunpack.c.l.bf16 %v748
      %v790 = vunpack.c.l.bf16 %v749
      %v791 = vunpack.c.l.bf16 %v750
      %v792 = vunpack.c.l.bf16 %v751
      %v793 = vunpack.c.l.bf16 %v752
      %v794 = vunpack.c.l.bf16 %v753
      %v795 = vunpack.c.l.bf16 %v754
      %v796 = vunpack.c.l.bf16 %v755
      %v797 = vunpack.c.l.bf16 %v756
      %v798 = vunpack.c.l.bf16 %v757
      %v799 = vunpack.c.l.bf16 %v758
      %v800 = vunpack.c.l.bf16 %v759
      %v801 = vunpack.c.l.bf16 %v760
      %v802 = vunpack.c.l.bf16 %v761
      %v803 = vunpack.c.l.bf16 %v762
      %v804 = vunpack.c.l.bf16 %v763
      %v805 = vunpack.c.l.bf16 %v764
      %v806 = vunpack.c.l.bf16 %v765
      %v807 = vunpack.c.l.bf16 %v766
      %v808 = vunpack.c.l.bf16 %v767
      %v809 = vunpack.c.l.bf16 %v768
      %v810 = vunpack.c.l.bf16 %v769
      %v811 = vunpack.c.l.bf16 %v770
      %v812 = vunpack.c.l.bf16 %v771
      %v813 = vunpack.c.l.bf16 %v772
      %v814 = vunpack.c.l.bf16 %v773
      %v815 = vunpack.c.l.bf16 %v774
      %v816 = vunpack.c.l.bf16 %v775
      %v817 = vunpack.c.l.bf16 %v776
      %v818 = vunpack.c.l.bf16 %v777
      %v819 = vunpack.c.l.bf16 %v778
      %v820 = vunpack.c.l.bf16 %v779
      %v821 = vld [vmem:[%s4] sm:$0xf]
      %v822 = vld [vmem:[%s4 + $0x4] sm:$0xf]
      %v823 = vld [vmem:[%s4 + $0x8] sm:$0xf]
      %v824 = vld [vmem:[%s4 + $0xc] sm:$0xf]
      %v866 = vunpack.c.l.b16 %v575
      %v867 = vunpack.c.l.b16 %v576
      %v868 = vunpack.c.l.b16 %v577
      %v869 = vunpack.c.l.b16 %v578
      %v870 = vunpack.c.l.b16 %v579
      %v871 = vunpack.c.l.b16 %v580
      %v872 = vunpack.c.l.b16 %v581
      %v873 = vunpack.c.l.b16 %v582
      %v874 = vunpack.c.l.b16 %v583
      %v875 = vunpack.c.l.b16 %v584
      %v876 = vunpack.c.l.b16 %v585
      %v877 = vunpack.c.l.b16 %v586
      %v878 = vunpack.c.l.b16 %v587
      %v879 = vunpack.c.l.b16 %v588
      %v880 = vunpack.c.l.b16 %v589
      %v881 = vunpack.c.l.b16 %v590
      %v882 = vunpack.c.l.b16 %v591
      %v883 = vunpack.c.l.b16 %v592
      %v884 = vunpack.c.l.b16 %v593
      %v885 = vunpack.c.l.b16 %v594
      %v886 = vunpack.c.l.b16 %v595
      %v887 = vunpack.c.l.b16 %v596
      %v888 = vunpack.c.l.b16 %v597
      %v889 = vunpack.c.l.b16 %v598
      %v890 = vunpack.c.l.b16 %v599
      %v891 = vunpack.c.l.b16 %v600
      %v892 = vunpack.c.l.b16 %v601
      %v893 = vunpack.c.l.b16 %v602
      %v894 = vunpack.c.l.b16 %v603
      %v895 = vunpack.c.l.b16 %v604
      %v896 = vunpack.c.l.b16 %v605
      %v897 = vunpack.c.l.b16 %v606
      %v898 = vunpack.c.l.b16 %v607
      %v899 = vunpack.c.l.b16 %v608
      %v900 = vunpack.c.l.b16 %v609
      %v901 = vunpack.c.l.b16 %v610
      %v902 = vunpack.c.l.b16 %v611
      %v903 = vunpack.c.l.b16 %v612
      %v904 = vunpack.c.l.b16 %v613
      %v905 = vunpack.c.l.b16 %v614
      %v906 = vunpack.c.l.b16 %v615
      %v907 = vpack.c.b16 %v867, %v866
      %v908 = vpack.c.b16 %v869, %v868
      %v909 = vpack.c.b16 %v871, %v870
      %v910 = vpack.c.b16 %v873, %v872
      %v911 = vpack.c.b16 %v875, %v874
      %v912 = vpack.c.b16 %v877, %v876
      %v913 = vpack.c.b16 %v879, %v878
      %v914 = vpack.c.b16 %v881, %v880
      %v915 = vpack.c.b16 %v883, %v882
      %v916 = vpack.c.b16 %v885, %v884
      %v917 = vpack.c.b16 %v887, %v886
      %v918 = vpack.c.b16 %v889, %v888
      %v919 = vpack.c.b16 %v891, %v890
      %v920 = vpack.c.b16 %v893, %v892
      %v921 = vpack.c.b16 %v895, %v894
      %v922 = vpack.c.b16 %v897, %v896
      %v923 = vpack.c.b16 %v899, %v898
      %v924 = vpack.c.b16 %v901, %v900
      %v925 = vpack.c.b16 %v903, %v902
      %v926 = vpack.c.b16 %v905, %v904
      %v927 = vpack.c.b16 %v906, %v906
      %v932 = vunpack.c.l.b16 %v821
      %v933 = vunpack.c.l.b16 %v822
      %v934 = vunpack.c.l.b16 %v823
      %v935 = vunpack.c.l.b16 %v824
      %v936 = vpack.c.b16 %v933, %v932
      %v937 = vpack.c.b16 %v935, %v934
      %vm940 = vcmask 261120
      %v942 = vsel %vm940, %v907, 0
      %v945 = vsel %vm940, %v908, 0
      %v948 = vsel %vm940, %v909, 0
      %v951 = vsel %vm940, %v910, 0
      %v954 = vsel %vm940, %v911, 0
      %v957 = vsel %vm940, %v912, 0
      %v960 = vsel %vm940, %v913, 0
      %v963 = vsel %vm940, %v914, 0
      %v966 = vsel %vm940, %v915, 0
      %v969 = vsel %vm940, %v916, 0
      %v972 = vsel %vm940, %v917, 0
      %v975 = vsel %vm940, %v918, 0
      %v978 = vsel %vm940, %v919, 0
      %v981 = vsel %vm940, %v920, 0
      %v984 = vsel %vm940, %v921, 0
      %v987 = vsel %vm940, %v922, 0
      %v990 = vsel %vm940, %v923, 0
      %v993 = vsel %vm940, %v924, 0
      %v996 = vsel %vm940, %v925, 0
      %v999 = vsel %vm940, %v926, 0
      %v1002 = vsel %vm940, %v927, 0
      %1004 = vmatprep.subr.bf16.mxu0 0
      %1005 = vmatpush1.bf16.msra.mxu0 0
      %1006 = vmatprep.subr.bf16.mxu0 0
      %1007 = vmatpush1.bf16.msra.mxu0 0
      %1008 = vmatprep.subr.bf16.mxu0 0
      %1009 = vmatpush1.bf16.msra.mxu0 0
      %1010 = vmatprep.subr.bf16.mxu0 0
      %1011 = vmatpush1.bf16.msra.mxu0 0
      %1012 = vmatprep.subr.bf16.mxu0 0
      %1013 = vmatpush1.bf16.msra.mxu0 0
      %1014 = vmatprep.subr.bf16.mxu0 0
      %1015 = vmatpush1.bf16.msra.mxu0 0
      %1016 = vmatprep.subr.bf16.mxu0 0
      %1017 = vmatpush1.bf16.msra.mxu0 %v937
      %1018 = vmatprep.subr.bf16.mxu0 0
      %1019 = vmatpush1.bf16.msra.mxu0 %v936
      %1020 = vmatprep.subr.bf16.mxu0 0
      %1021 = vmatpush2.bf16.msra.mxu0 0
      %1022 = vmatprep.subr.bf16.mxu0 0
      %1023 = vmatpush2.bf16.msra.mxu0 0
      %1024 = vmatprep.subr.bf16.mxu0 0
      %1025 = vmatpush2.bf16.msra.mxu0 0
      %1026 = vmatprep.subr.bf16.mxu0 0
      %1027 = vmatpush2.bf16.msra.mxu0 0
      %1028 = vmatprep.subr.bf16.mxu0 0
      %1029 = vmatpush2.bf16.msra.mxu0 0
      %1030 = vmatprep.subr.bf16.mxu0 0
      %1031 = vmatpush2.bf16.msra.mxu0 0
      %1032 = vmatprep.subr.bf16.mxu0 0
      %1033 = vmatpush2.bf16.msra.mxu0 0
      %1034 = vmatprep.subr.bf16.mxu0 0
      %1035 = vmatpush2.bf16.msra.mxu0 0
      %1036 = vmatprep.mubr.bf16.mxu0 0
      %1037 = vmatmul.mubr.bf16.gmra.mxu0 %v942
      %v1038 = vpop.f32.mrf.mxu0
      %v1039 = vadd.f32 0.0, %v1038
      %v1040 = vpop.f32.mrf.mxu0
      %v1041 = vpop.f32.mrf.mxu0
      %v1042 = vadd.f32 0.0, %v1041
      %v1043 = vpop.f32.mrf.mxu0
      %1044 = vmatprep.mubr.bf16.mxu0 0
      %1045 = vmatmul.mubr.bf16.gmra.mxu0 %v945
      %v1046 = vpop.f32.mrf.mxu0
      %v1047 = vadd.f32 0.0, %v1046
      %v1048 = vpop.f32.mrf.mxu0
      %v1049 = vpop.f32.mrf.mxu0
      %v1050 = vadd.f32 0.0, %v1049
      %v1051 = vpop.f32.mrf.mxu0
      %1052 = vmatprep.mubr.bf16.mxu0 0
      %1053 = vmatmul.mubr.bf16.gmra.mxu0 %v948
      %v1054 = vpop.f32.mrf.mxu0
      %v1055 = vadd.f32 0.0, %v1054
      %v1056 = vpop.f32.mrf.mxu0
      %v1057 = vpop.f32.mrf.mxu0
      %v1058 = vadd.f32 0.0, %v1057
      %v1059 = vpop.f32.mrf.mxu0
      %1060 = vmatprep.mubr.bf16.mxu0 0
      %1061 = vmatmul.mubr.bf16.gmra.mxu0 %v951
      %v1062 = vpop.f32.mrf.mxu0
      %v1063 = vadd.f32 0.0, %v1062
      %v1064 = vpop.f32.mrf.mxu0
      %v1065 = vpop.f32.mrf.mxu0
      %v1066 = vadd.f32 0.0, %v1065
      %v1067 = vpop.f32.mrf.mxu0
      %1068 = vmatprep.mubr.bf16.mxu0 0
      %1069 = vmatmul.mubr.bf16.gmra.mxu0 %v954
      %v1070 = vpop.f32.mrf.mxu0
      %v1071 = vadd.f32 0.0, %v1070
      %v1072 = vpop.f32.mrf.mxu0
      %v1073 = vpop.f32.mrf.mxu0
      %v1074 = vadd.f32 0.0, %v1073
      %v1075 = vpop.f32.mrf.mxu0
      %1076 = vmatprep.mubr.bf16.mxu0 0
      %1077 = vmatmul.mubr.bf16.gmra.mxu0 %v957
      %v1078 = vpop.f32.mrf.mxu0
      %v1079 = vadd.f32 0.0, %v1078
      %v1080 = vpop.f32.mrf.mxu0
      %v1081 = vpop.f32.mrf.mxu0
      %v1082 = vadd.f32 0.0, %v1081
      %v1083 = vpop.f32.mrf.mxu0
      %1084 = vmatprep.mubr.bf16.mxu0 0
      %1085 = vmatmul.mubr.bf16.gmra.mxu0 %v960
      %v1086 = vpop.f32.mrf.mxu0
      %v1087 = vadd.f32 0.0, %v1086
      %v1088 = vpop.f32.mrf.mxu0
      %v1089 = vpop.f32.mrf.mxu0
      %v1090 = vadd.f32 0.0, %v1089
      %v1091 = vpop.f32.mrf.mxu0
      %1092 = vmatprep.mubr.bf16.mxu0 0
      %1093 = vmatmul.mubr.bf16.gmra.mxu0 %v963
      %v1094 = vpop.f32.mrf.mxu0
      %v1095 = vadd.f32 0.0, %v1094
      %v1096 = vpop.f32.mrf.mxu0
      %v1097 = vpop.f32.mrf.mxu0
      %v1098 = vadd.f32 0.0, %v1097
      %v1099 = vpop.f32.mrf.mxu0
      %1100 = vmatprep.mubr.bf16.mxu0 0
      %1101 = vmatmul.mubr.bf16.gmra.mxu0 %v966
      %v1102 = vpop.f32.mrf.mxu0
      %v1103 = vadd.f32 0.0, %v1102
      %v1104 = vpop.f32.mrf.mxu0
      %v1105 = vpop.f32.mrf.mxu0
      %v1106 = vadd.f32 0.0, %v1105
      %v1107 = vpop.f32.mrf.mxu0
      %1108 = vmatprep.mubr.bf16.mxu0 0
      %1109 = vmatmul.mubr.bf16.gmra.mxu0 %v969
      %v1110 = vpop.f32.mrf.mxu0
      %v1111 = vadd.f32 0.0, %v1110
      %v1112 = vpop.f32.mrf.mxu0
      %v1113 = vpop.f32.mrf.mxu0
      %v1114 = vadd.f32 0.0, %v1113
      %v1115 = vpop.f32.mrf.mxu0
      %1116 = vmatprep.mubr.bf16.mxu0 0
      %1117 = vmatmul.mubr.bf16.gmra.mxu0 %v972
      %v1118 = vpop.f32.mrf.mxu0
      %v1119 = vadd.f32 0.0, %v1118
      %v1120 = vpop.f32.mrf.mxu0
      %v1121 = vpop.f32.mrf.mxu0
      %v1122 = vadd.f32 0.0, %v1121
      %v1123 = vpop.f32.mrf.mxu0
      %1124 = vmatprep.mubr.bf16.mxu0 0
      %1125 = vmatmul.mubr.bf16.gmra.mxu0 %v975
      %v1126 = vpop.f32.mrf.mxu0
      %v1127 = vadd.f32 0.0, %v1126
      %v1128 = vpop.f32.mrf.mxu0
      %v1129 = vpop.f32.mrf.mxu0
      %v1130 = vadd.f32 0.0, %v1129
      %v1131 = vpop.f32.mrf.mxu0
      %1132 = vmatprep.mubr.bf16.mxu0 0
      %1133 = vmatmul.mubr.bf16.gmra.mxu0 %v978
      %v1134 = vpop.f32.mrf.mxu0
      %v1135 = vadd.f32 0.0, %v1134
      %v1136 = vpop.f32.mrf.mxu0
      %v1137 = vpop.f32.mrf.mxu0
      %v1138 = vadd.f32 0.0, %v1137
      %v1139 = vpop.f32.mrf.mxu0
      %1140 = vmatprep.mubr.bf16.mxu0 0
      %1141 = vmatmul.mubr.bf16.gmra.mxu0 %v981
      %v1142 = vpop.f32.mrf.mxu0
      %v1143 = vadd.f32 0.0, %v1142
      %v1144 = vpop.f32.mrf.mxu0
      %v1145 = vpop.f32.mrf.mxu0
      %v1146 = vadd.f32 0.0, %v1145
      %v1147 = vpop.f32.mrf.mxu0
      %1148 = vmatprep.mubr.bf16.mxu0 0
      %1149 = vmatmul.mubr.bf16.gmra.mxu0 %v984
      %v1150 = vpop.f32.mrf.mxu0
      %v1151 = vadd.f32 0.0, %v1150
      %v1152 = vpop.f32.mrf.mxu0
      %v1153 = vpop.f32.mrf.mxu0
      %v1154 = vadd.f32 0.0, %v1153
      %v1155 = vpop.f32.mrf.mxu0
      %1156 = vmatprep.mubr.bf16.mxu0 0
      %1157 = vmatmul.mubr.bf16.gmra.mxu0 %v987
      %v1158 = vpop.f32.mrf.mxu0
      %v1159 = vadd.f32 0.0, %v1158
      %v1160 = vpop.f32.mrf.mxu0
      %v1161 = vpop.f32.mrf.mxu0
      %v1162 = vadd.f32 0.0, %v1161
      %v1163 = vpop.f32.mrf.mxu0
      %1164 = vmatprep.mubr.bf16.mxu0 0
      %1165 = vmatmul.mubr.bf16.gmra.mxu0 %v990
      %v1166 = vpop.f32.mrf.mxu0
      %v1167 = vadd.f32 0.0, %v1166
      %v1168 = vpop.f32.mrf.mxu0
      %v1169 = vpop.f32.mrf.mxu0
      %v1170 = vadd.f32 0.0, %v1169
      %v1171 = vpop.f32.mrf.mxu0
      %1172 = vmatprep.mubr.bf16.mxu0 0
      %1173 = vmatmul.mubr.bf16.gmra.mxu0 %v993
      %v1174 = vpop.f32.mrf.mxu0
      %v1175 = vadd.f32 0.0, %v1174
      %v1176 = vpop.f32.mrf.mxu0
      %v1177 = vpop.f32.mrf.mxu0
      %v1178 = vadd.f32 0.0, %v1177
      %v1179 = vpop.f32.mrf.mxu0
      %1180 = vmatprep.mubr.bf16.mxu0 0
      %1181 = vmatmul.mubr.bf16.gmra.mxu0 %v996
      %v1182 = vpop.f32.mrf.mxu0
      %v1183 = vadd.f32 0.0, %v1182
      %v1184 = vpop.f32.mrf.mxu0
      %v1185 = vpop.f32.mrf.mxu0
      %v1186 = vadd.f32 0.0, %v1185
      %v1187 = vpop.f32.mrf.mxu0
      %1188 = vmatprep.mubr.bf16.mxu0 0
      %1189 = vmatmul.mubr.bf16.gmra.mxu0 %v999
      %v1190 = vpop.f32.mrf.mxu0
      %v1191 = vadd.f32 0.0, %v1190
      %v1192 = vpop.f32.mrf.mxu0
      %v1193 = vpop.f32.mrf.mxu0
      %v1194 = vadd.f32 0.0, %v1193
      %v1195 = vpop.f32.mrf.mxu0
      %1196 = vmatprep.mubr.bf16.mxu0 0
      %1197 = vmatmul.mubr.bf16.gmra.mxu0 %v1002
      %v1198 = vpop.f32.mrf.mxu0
      %v1199 = vadd.f32 0.0, %v1198
      %v1200 = vpop.f32.mrf.mxu0
      %v1201 = vpop.f32.mrf.mxu0
      %v1202 = vpop.f32.mrf.mxu0
      %1203 = vdwg.mxu0
      %v1204 = vadd.f32 %v698, %v1039
      %v1205 = vadd.f32 %v699, %v1042
      %v1206 = vadd.f32 %v700, %v1047
      %v1207 = vadd.f32 %v701, %v1050
      %v1208 = vadd.f32 %v702, %v1055
      %v1209 = vadd.f32 %v703, %v1058
      %v1210 = vadd.f32 %v704, %v1063
      %v1211 = vadd.f32 %v705, %v1066
      %v1212 = vadd.f32 %v706, %v1071
      %v1213 = vadd.f32 %v707, %v1074
      %v1214 = vadd.f32 %v708, %v1079
      %v1215 = vadd.f32 %v709, %v1082
      %v1216 = vadd.f32 %v710, %v1087
      %v1217 = vadd.f32 %v711, %v1090
      %v1218 = vadd.f32 %v712, %v1095
      %v1219 = vadd.f32 %v713, %v1098
      %v1220 = vadd.f32 %v714, %v1103
      %v1221 = vadd.f32 %v715, %v1106
      %v1222 = vadd.f32 %v716, %v1111
      %v1223 = vadd.f32 %v717, %v1114
      %v1224 = vadd.f32 %v718, %v1119
      %v1225 = vadd.f32 %v719, %v1122
      %v1226 = vadd.f32 %v720, %v1127
      %v1227 = vadd.f32 %v721, %v1130
      %v1228 = vadd.f32 %v722, %v1135
      %v1229 = vadd.f32 %v723, %v1138
      %v1230 = vadd.f32 %v724, %v1143
      %v1231 = vadd.f32 %v725, %v1146
      %v1232 = vadd.f32 %v726, %v1151
      %v1233 = vadd.f32 %v727, %v1154
      %v1234 = vadd.f32 %v728, %v1159
      %v1235 = vadd.f32 %v729, %v1162
      %v1236 = vadd.f32 %v730, %v1167
      %v1237 = vadd.f32 %v731, %v1170
      %v1238 = vadd.f32 %v732, %v1175
      %v1239 = vadd.f32 %v733, %v1178
      %v1240 = vadd.f32 %v734, %v1183
      %v1241 = vadd.f32 %v735, %v1186
      %v1242 = vadd.f32 %v736, %v1191
      %v1243 = vadd.f32 %v737, %v1194
      %v1244 = vadd.f32 %v738, %v1199
      %v1245 = vld [vmem:[%s5] sm:$0x1]
      %v1247 = vlaneseq
      %v1248 = vshrl.u32 %v1247, 7
      %v1249 = vsub.s32 0, %v1248
      %v1250 = vrot.slane %v1245, %v1249
      %v1252 = vadd.f32 %v1204, %v1250
      %v1253 = vadd.f32 %v1205, %v1250
      %v1254 = vadd.f32 %v1206, %v1250
      %v1255 = vadd.f32 %v1207, %v1250
      %v1256 = vadd.f32 %v1208, %v1250
      %v1257 = vadd.f32 %v1209, %v1250
      %v1258 = vadd.f32 %v1210, %v1250
      %v1259 = vadd.f32 %v1211, %v1250
      %v1260 = vadd.f32 %v1212, %v1250
      %v1261 = vadd.f32 %v1213, %v1250
      %v1262 = vadd.f32 %v1214, %v1250
      %v1263 = vadd.f32 %v1215, %v1250
      %v1264 = vadd.f32 %v1216, %v1250
      %v1265 = vadd.f32 %v1217, %v1250
      %v1266 = vadd.f32 %v1218, %v1250
      %v1267 = vadd.f32 %v1219, %v1250
      %v1268 = vadd.f32 %v1220, %v1250
      %v1269 = vadd.f32 %v1221, %v1250
      %v1270 = vadd.f32 %v1222, %v1250
      %v1271 = vadd.f32 %v1223, %v1250
      %v1272 = vadd.f32 %v1224, %v1250
      %v1273 = vadd.f32 %v1225, %v1250
      %v1274 = vadd.f32 %v1226, %v1250
      %v1275 = vadd.f32 %v1227, %v1250
      %v1276 = vadd.f32 %v1228, %v1250
      %v1277 = vadd.f32 %v1229, %v1250
      %v1278 = vadd.f32 %v1230, %v1250
      %v1279 = vadd.f32 %v1231, %v1250
      %v1280 = vadd.f32 %v1232, %v1250
      %v1281 = vadd.f32 %v1233, %v1250
      %v1282 = vadd.f32 %v1234, %v1250
      %v1283 = vadd.f32 %v1235, %v1250
      %v1284 = vadd.f32 %v1236, %v1250
      %v1285 = vadd.f32 %v1237, %v1250
      %v1286 = vadd.f32 %v1238, %v1250
      %v1287 = vadd.f32 %v1239, %v1250
      %v1288 = vadd.f32 %v1240, %v1250
      %v1289 = vadd.f32 %v1241, %v1250
      %v1290 = vadd.f32 %v1242, %v1250
      %v1291 = vadd.f32 %v1243, %v1250
      %v1292 = vadd.f32 %v1244, %v1250
      %1294 = vset.pattern.permute.xlu0 0
      %1295 = vperm.xlu0 %1294, %v616
      %v1296 = vpop.permute.xlu0 %1295
      %1299 = vset.pattern.permute.xlu0 0
      %1300 = vperm.xlu0 %1299, %v617
      %v1301 = vpop.permute.xlu0 %1300
      %1304 = vset.pattern.permute.xlu0 0
      %1305 = vperm.xlu0 %1304, %v618
      %v1306 = vpop.permute.xlu0 %1305
      %1309 = vset.pattern.permute.xlu0 0
      %1310 = vperm.xlu0 %1309, %v619
      %v1311 = vpop.permute.xlu0 %1310
      %1314 = vset.pattern.permute.xlu0 0
      %1315 = vperm.xlu0 %1314, %v620
      %v1316 = vpop.permute.xlu0 %1315
      %1319 = vset.pattern.permute.xlu0 0
      %1320 = vperm.xlu0 %1319, %v621
      %v1321 = vpop.permute.xlu0 %1320
      %1324 = vset.pattern.permute.xlu0 0
      %1325 = vperm.xlu0 %1324, %v622
      %v1326 = vpop.permute.xlu0 %1325
      %1329 = vset.pattern.permute.xlu0 0
      %1330 = vperm.xlu0 %1329, %v623
      %v1331 = vpop.permute.xlu0 %1330
      %1334 = vset.pattern.permute.xlu0 0
      %1335 = vperm.xlu0 %1334, %v624
      %v1336 = vpop.permute.xlu0 %1335
      %1339 = vset.pattern.permute.xlu0 0
      %1340 = vperm.xlu0 %1339, %v625
      %v1341 = vpop.permute.xlu0 %1340
      %1344 = vset.pattern.permute.xlu0 0
      %1345 = vperm.xlu0 %1344, %v626
      %v1346 = vpop.permute.xlu0 %1345
      %1349 = vset.pattern.permute.xlu0 0
      %1350 = vperm.xlu0 %1349, %v627
      %v1351 = vpop.permute.xlu0 %1350
      %1354 = vset.pattern.permute.xlu0 0
      %1355 = vperm.xlu0 %1354, %v628
      %v1356 = vpop.permute.xlu0 %1355
      %1359 = vset.pattern.permute.xlu0 0
      %1360 = vperm.xlu0 %1359, %v629
      %v1361 = vpop.permute.xlu0 %1360
      %1364 = vset.pattern.permute.xlu0 0
      %1365 = vperm.xlu0 %1364, %v630
      %v1366 = vpop.permute.xlu0 %1365
      %1369 = vset.pattern.permute.xlu0 0
      %1370 = vperm.xlu0 %1369, %v631
      %v1371 = vpop.permute.xlu0 %1370
      %1374 = vset.pattern.permute.xlu0 0
      %1375 = vperm.xlu0 %1374, %v632
      %v1376 = vpop.permute.xlu0 %1375
      %1379 = vset.pattern.permute.xlu0 0
      %1380 = vperm.xlu0 %1379, %v633
      %v1381 = vpop.permute.xlu0 %1380
      %1384 = vset.pattern.permute.xlu0 0
      %1385 = vperm.xlu0 %1384, %v634
      %v1386 = vpop.permute.xlu0 %1385
      %1389 = vset.pattern.permute.xlu0 0
      %1390 = vperm.xlu0 %1389, %v635
      %v1391 = vpop.permute.xlu0 %1390
      %1394 = vset.pattern.permute.xlu0 0
      %1395 = vperm.xlu0 %1394, %v636
      %v1396 = vpop.permute.xlu0 %1395
      %1399 = vset.pattern.permute.xlu0 0
      %1400 = vperm.xlu0 %1399, %v637
      %v1401 = vpop.permute.xlu0 %1400
      %1404 = vset.pattern.permute.xlu0 0
      %1405 = vperm.xlu0 %1404, %v638
      %v1406 = vpop.permute.xlu0 %1405
      %1409 = vset.pattern.permute.xlu0 0
      %1410 = vperm.xlu0 %1409, %v639
      %v1411 = vpop.permute.xlu0 %1410
      %1414 = vset.pattern.permute.xlu0 0
      %1415 = vperm.xlu0 %1414, %v640
      %v1416 = vpop.permute.xlu0 %1415
      %1419 = vset.pattern.permute.xlu0 0
      %1420 = vperm.xlu0 %1419, %v641
      %v1421 = vpop.permute.xlu0 %1420
      %1424 = vset.pattern.permute.xlu0 0
      %1425 = vperm.xlu0 %1424, %v642
      %v1426 = vpop.permute.xlu0 %1425
      %1429 = vset.pattern.permute.xlu0 0
      %1430 = vperm.xlu0 %1429, %v643
      %v1431 = vpop.permute.xlu0 %1430
      %1434 = vset.pattern.permute.xlu0 0
      %1435 = vperm.xlu0 %1434, %v644
      %v1436 = vpop.permute.xlu0 %1435
      %1439 = vset.pattern.permute.xlu0 0
      %1440 = vperm.xlu0 %1439, %v645
      %v1441 = vpop.permute.xlu0 %1440
      %1444 = vset.pattern.permute.xlu0 0
      %1445 = vperm.xlu0 %1444, %v646
      %v1446 = vpop.permute.xlu0 %1445
      %1449 = vset.pattern.permute.xlu0 0
      %1450 = vperm.xlu0 %1449, %v647
      %v1451 = vpop.permute.xlu0 %1450
      %1454 = vset.pattern.permute.xlu0 0
      %1455 = vperm.xlu0 %1454, %v648
      %v1456 = vpop.permute.xlu0 %1455
      %1459 = vset.pattern.permute.xlu0 0
      %1460 = vperm.xlu0 %1459, %v649
      %v1461 = vpop.permute.xlu0 %1460
      %1464 = vset.pattern.permute.xlu0 0
      %1465 = vperm.xlu0 %1464, %v650
      %v1466 = vpop.permute.xlu0 %1465
      %1469 = vset.pattern.permute.xlu0 0
      %1470 = vperm.xlu0 %1469, %v651
      %v1471 = vpop.permute.xlu0 %1470
      %1474 = vset.pattern.permute.xlu0 0
      %1475 = vperm.xlu0 %1474, %v652
      %v1476 = vpop.permute.xlu0 %1475
      %1479 = vset.pattern.permute.xlu0 0
      %1480 = vperm.xlu0 %1479, %v653
      %v1481 = vpop.permute.xlu0 %1480
      %1484 = vset.pattern.permute.xlu0 0
      %1485 = vperm.xlu0 %1484, %v654
      %v1486 = vpop.permute.xlu0 %1485
      %1489 = vset.pattern.permute.xlu0 0
      %1490 = vperm.xlu0 %1489, %v655
      %v1491 = vpop.permute.xlu0 %1490
      %1494 = vset.pattern.permute.xlu0 0
      %1495 = vperm.xlu0 %1494, %v656
      %v1496 = vpop.permute.xlu0 %1495
      %v1498 = vmul.f32 %v1252, %v1296
      %v1499 = vmul.f32 %v1253, %v1301
      %v1500 = vmul.f32 %v1254, %v1306
      %v1501 = vmul.f32 %v1255, %v1311
      %v1502 = vmul.f32 %v1256, %v1316
      %v1503 = vmul.f32 %v1257, %v1321
      %v1504 = vmul.f32 %v1258, %v1326
      %v1505 = vmul.f32 %v1259, %v1331
      %v1506 = vmul.f32 %v1260, %v1336
      %v1507 = vmul.f32 %v1261, %v1341
      %v1508 = vmul.f32 %v1262, %v1346
      %v1509 = vmul.f32 %v1263, %v1351
      %v1510 = vmul.f32 %v1264, %v1356
      %v1511 = vmul.f32 %v1265, %v1361
      %v1512 = vmul.f32 %v1266, %v1366
      %v1513 = vmul.f32 %v1267, %v1371
      %v1514 = vmul.f32 %v1268, %v1376
      %v1515 = vmul.f32 %v1269, %v1381
      %v1516 = vmul.f32 %v1270, %v1386
      %v1517 = vmul.f32 %v1271, %v1391
      %v1518 = vmul.f32 %v1272, %v1396
      %v1519 = vmul.f32 %v1273, %v1401
      %v1520 = vmul.f32 %v1274, %v1406
      %v1521 = vmul.f32 %v1275, %v1411
      %v1522 = vmul.f32 %v1276, %v1416
      %v1523 = vmul.f32 %v1277, %v1421
      %v1524 = vmul.f32 %v1278, %v1426
      %v1525 = vmul.f32 %v1279, %v1431
      %v1526 = vmul.f32 %v1280, %v1436
      %v1527 = vmul.f32 %v1281, %v1441
      %v1528 = vmul.f32 %v1282, %v1446
      %v1529 = vmul.f32 %v1283, %v1451
      %v1530 = vmul.f32 %v1284, %v1456
      %v1531 = vmul.f32 %v1285, %v1461
      %v1532 = vmul.f32 %v1286, %v1466
      %v1533 = vmul.f32 %v1287, %v1471
      %v1534 = vmul.f32 %v1288, %v1476
      %v1535 = vmul.f32 %v1289, %v1481
      %v1536 = vmul.f32 %v1290, %v1486
      %v1537 = vmul.f32 %v1291, %v1491
      %v1538 = vmul.f32 %v1292, %v1496
      %v1539 = vpack.c.bf16 %v1499, %v1498
      %v1540 = vpack.c.bf16 %v1501, %v1500
      %v1541 = vpack.c.bf16 %v1503, %v1502
      %v1542 = vpack.c.bf16 %v1505, %v1504
      %v1543 = vpack.c.bf16 %v1507, %v1506
      %v1544 = vpack.c.bf16 %v1509, %v1508
      %v1545 = vpack.c.bf16 %v1511, %v1510
      %v1546 = vpack.c.bf16 %v1513, %v1512
      %v1547 = vpack.c.bf16 %v1515, %v1514
      %v1548 = vpack.c.bf16 %v1517, %v1516
      %v1549 = vpack.c.bf16 %v1519, %v1518
      %v1550 = vpack.c.bf16 %v1521, %v1520
      %v1551 = vpack.c.bf16 %v1523, %v1522
      %v1552 = vpack.c.bf16 %v1525, %v1524
      %v1553 = vpack.c.bf16 %v1527, %v1526
      %v1554 = vpack.c.bf16 %v1529, %v1528
      %v1555 = vpack.c.bf16 %v1531, %v1530
      %v1556 = vpack.c.bf16 %v1533, %v1532
      %v1557 = vpack.c.bf16 %v1535, %v1534
      %v1558 = vpack.c.bf16 %v1537, %v1536
      %v1559 = vpack.c.bf16 %v1538, %v1538
      %v1581 = vunpack.c.l.b16 %v1539
      %v1582 = vunpack.c.h.b16 %v1539
      %v1583 = vunpack.c.l.b16 %v1540
      %v1584 = vunpack.c.h.b16 %v1540
      %v1585 = vunpack.c.l.b16 %v1541
      %v1586 = vunpack.c.h.b16 %v1541
      %v1587 = vunpack.c.l.b16 %v1542
      %v1588 = vunpack.c.h.b16 %v1542
      %v1589 = vunpack.c.l.b16 %v1543
      %v1590 = vunpack.c.h.b16 %v1543
      %v1591 = vunpack.c.l.b16 %v1544
      %v1592 = vunpack.c.h.b16 %v1544
      %v1593 = vunpack.c.l.b16 %v1545
      %v1594 = vunpack.c.h.b16 %v1545
      %v1595 = vunpack.c.l.b16 %v1546
      %v1596 = vunpack.c.h.b16 %v1546
      %v1597 = vunpack.c.l.b16 %v1547
      %v1598 = vunpack.c.h.b16 %v1547
      %v1599 = vunpack.c.l.b16 %v1548
      %v1600 = vunpack.c.h.b16 %v1548
      %v1601 = vunpack.c.l.b16 %v1549
      %v1602 = vunpack.c.h.b16 %v1549
      %v1603 = vunpack.c.l.b16 %v1550
      %v1604 = vunpack.c.h.b16 %v1550
      %v1605 = vunpack.c.l.b16 %v1551
      %v1606 = vunpack.c.h.b16 %v1551
      %v1607 = vunpack.c.l.b16 %v1552
      %v1608 = vunpack.c.h.b16 %v1552
      %v1609 = vunpack.c.l.b16 %v1553
      %v1610 = vunpack.c.h.b16 %v1553
      %v1611 = vunpack.c.l.b16 %v1554
      %v1612 = vunpack.c.h.b16 %v1554
      %v1613 = vunpack.c.l.b16 %v1555
      %v1614 = vunpack.c.h.b16 %v1555
      %v1615 = vunpack.c.l.b16 %v1556
      %v1616 = vunpack.c.h.b16 %v1556
      %v1617 = vunpack.c.l.b16 %v1557
      %v1618 = vunpack.c.h.b16 %v1557
      %v1619 = vunpack.c.l.b16 %v1558
      %v1620 = vunpack.c.h.b16 %v1558
      %v1621 = vunpack.c.l.b16 %v1559
      %v1622 = vpack.c.b16 %v1581, %v1581
      %v1623 = vpack.c.b16 %v1582, %v1582
      %v1624 = vpack.c.b16 %v1583, %v1583
      %v1625 = vpack.c.b16 %v1584, %v1584
      %v1626 = vpack.c.b16 %v1585, %v1585
      %v1627 = vpack.c.b16 %v1586, %v1586
      %v1628 = vpack.c.b16 %v1587, %v1587
      %v1629 = vpack.c.b16 %v1588, %v1588
      %v1630 = vpack.c.b16 %v1589, %v1589
      %v1631 = vpack.c.b16 %v1590, %v1590
      %v1632 = vpack.c.b16 %v1591, %v1591
      %v1633 = vpack.c.b16 %v1592, %v1592
      %v1634 = vpack.c.b16 %v1593, %v1593
      %v1635 = vpack.c.b16 %v1594, %v1594
      %v1636 = vpack.c.b16 %v1595, %v1595
      %v1637 = vpack.c.b16 %v1596, %v1596
      %v1638 = vpack.c.b16 %v1597, %v1597
      %v1639 = vpack.c.b16 %v1598, %v1598
      %v1640 = vpack.c.b16 %v1599, %v1599
      %v1641 = vpack.c.b16 %v1600, %v1600
      %v1642 = vpack.c.b16 %v1601, %v1601
      %v1643 = vpack.c.b16 %v1602, %v1602
      %v1644 = vpack.c.b16 %v1603, %v1603
      %v1645 = vpack.c.b16 %v1604, %v1604
      %v1646 = vpack.c.b16 %v1605, %v1605
      %v1647 = vpack.c.b16 %v1606, %v1606
      %v1648 = vpack.c.b16 %v1607, %v1607
      %v1649 = vpack.c.b16 %v1608, %v1608
      %v1650 = vpack.c.b16 %v1609, %v1609
      %v1651 = vpack.c.b16 %v1610, %v1610
      %v1652 = vpack.c.b16 %v1611, %v1611
      %v1653 = vpack.c.b16 %v1612, %v1612
      %v1654 = vpack.c.b16 %v1613, %v1613
      %v1655 = vpack.c.b16 %v1614, %v1614
      %v1656 = vpack.c.b16 %v1615, %v1615
      %v1657 = vpack.c.b16 %v1616, %v1616
      %v1658 = vpack.c.b16 %v1617, %v1617
      %v1659 = vpack.c.b16 %v1618, %v1618
      %v1660 = vpack.c.b16 %v1619, %v1619
      %v1661 = vpack.c.b16 %v1620, %v1620
      %v1662 = vpack.c.b16 %v1621, %v1621
      %1704 = vst.msk [vmem:[#allocation2 + $0x10] sm:$0xf] %vm522, %v1622
      %1705 = vst.msk [vmem:[#allocation2 + $0x14] sm:$0xf] %vm522, %v1623
      %1706 = vst.msk [vmem:[#allocation2 + $0x18] sm:$0xf] %vm522, %v1624
      %1707 = vst.msk [vmem:[#allocation2 + $0x1c] sm:$0xf] %vm522, %v1625
      %1708 = vst.msk [vmem:[#allocation2 + $0x20] sm:$0xf] %vm522, %v1626
      %1709 = vst.msk [vmem:[#allocation2 + $0x24] sm:$0xf] %vm522, %v1627
      %1710 = vst.msk [vmem:[#allocation2 + $0x28] sm:$0xf] %vm522, %v1628
      %1711 = vst.msk [vmem:[#allocation2 + $0x2c] sm:$0xf] %vm522, %v1629
      %1712 = vst.msk [vmem:[#allocation2 + $0x30] sm:$0xf] %vm522, %v1630
      %1713 = vst.msk [vmem:[#allocation2 + $0x34] sm:$0xf] %vm522, %v1631
      %1714 = vst.msk [vmem:[#allocation2 + $0x38] sm:$0xf] %vm522, %v1632
      %1715 = vst.msk [vmem:[#allocation2 + $0x3c] sm:$0xf] %vm522, %v1633
      %1716 = vst.msk [vmem:[#allocation2 + $0x40] sm:$0xf] %vm522, %v1634
      %1717 = vst.msk [vmem:[#allocation2 + $0x44] sm:$0xf] %vm522, %v1635
      %1718 = vst.msk [vmem:[#allocation2 + $0x48] sm:$0xf] %vm522, %v1636
      %1719 = vst.msk [vmem:[#allocation2 + $0x4c] sm:$0xf] %vm522, %v1637
      %1720 = vst.msk [vmem:[#allocation2 + $0x50] sm:$0xf] %vm522, %v1638
      %1721 = vst.msk [vmem:[#allocation2 + $0x54] sm:$0xf] %vm522, %v1639
      %1722 = vst.msk [vmem:[#allocation2 + $0x58] sm:$0xf] %vm522, %v1640
      %1723 = vst.msk [vmem:[#allocation2 + $0x5c] sm:$0xf] %vm522, %v1641
      %1724 = vst.msk [vmem:[#allocation2 + $0x60] sm:$0xf] %vm522, %v1642
      %1725 = vst.msk [vmem:[#allocation2 + $0x64] sm:$0xf] %vm522, %v1643
      %1726 = vst.msk [vmem:[#allocation2 + $0x68] sm:$0xf] %vm522, %v1644
      %1727 = vst.msk [vmem:[#allocation2 + $0x6c] sm:$0xf] %vm522, %v1645
      %1728 = vst.msk [vmem:[#allocation2 + $0x70] sm:$0xf] %vm522, %v1646
      %1729 = vst.msk [vmem:[#allocation2 + $0x74] sm:$0xf] %vm522, %v1647
      %1730 = vst.msk [vmem:[#allocation2 + $0x78] sm:$0xf] %vm522, %v1648
      %1731 = vst.msk [vmem:[#allocation2 + $0x7c] sm:$0xf] %vm522, %v1649
      %1732 = vst.msk [vmem:[#allocation2 + $0x80] sm:$0xf] %vm522, %v1650
      %1733 = vst.msk [vmem:[#allocation2 + $0x84] sm:$0xf] %vm522, %v1651
      %1734 = vst.msk [vmem:[#allocation2 + $0x88] sm:$0xf] %vm522, %v1652
      %1735 = vst.msk [vmem:[#allocation2 + $0x8c] sm:$0xf] %vm522, %v1653
      %1736 = vst.msk [vmem:[#allocation2 + $0x90] sm:$0xf] %vm522, %v1654
      %1737 = vst.msk [vmem:[#allocation2 + $0x94] sm:$0xf] %vm522, %v1655
      %1738 = vst.msk [vmem:[#allocation2 + $0x98] sm:$0xf] %vm522, %v1656
      %1739 = vst.msk [vmem:[#allocation2 + $0x9c] sm:$0xf] %vm522, %v1657
      %1740 = vst.msk [vmem:[#allocation2 + $0xa0] sm:$0xf] %vm522, %v1658
      %1741 = vst.msk [vmem:[#allocation2 + $0xa4] sm:$0xf] %vm522, %v1659
      %1742 = vst.msk [vmem:[#allocation2 + $0xa8] sm:$0xf] %vm522, %v1660
      %1743 = vst.msk [vmem:[#allocation2 + $0xac] sm:$0xf] %vm522, %v1661
      %vm1744 = vcmask 254976
      %1745 = vst.msk [vmem:[#allocation2 + $0xb0] sm:$0x3] %vm1744, %v1662
      %v1746 = vld [vmem:[%s7] sm:$0x1]
      %v1747 = vld [vmem:[#allocation2 + $0x4] sm:$0xc]
      %v1748 = vld [vmem:[#allocation2 + $0x8] sm:$0xf]
      %v1749 = vld [vmem:[#allocation2 + $0xc] sm:$0xf]
      %v1750 = vld [vmem:[#allocation2 + $0x10] sm:$0xf]
      %v1751 = vld [vmem:[#allocation2 + $0x14] sm:$0xf]
      %v1752 = vld [vmem:[#allocation2 + $0x18] sm:$0xf]
      %v1753 = vld [vmem:[#allocation2 + $0x1c] sm:$0xf]
      %v1754 = vld [vmem:[#allocation2 + $0x20] sm:$0xf]
      %v1755 = vld [vmem:[#allocation2 + $0x24] sm:$0xf]
      %v1756 = vld [vmem:[#allocation2 + $0x28] sm:$0xf]
      %v1757 = vld [vmem:[#allocation2 + $0x2c] sm:$0xf]
      %v1758 = vld [vmem:[#allocation2 + $0x30] sm:$0xf]
      %v1759 = vld [vmem:[#allocation2 + $0x34] sm:$0xf]
      %v1760 = vld [vmem:[#allocation2 + $0x38] sm:$0xf]
      %v1761 = vld [vmem:[#allocation2 + $0x3c] sm:$0xf]
      %v1762 = vld [vmem:[#allocation2 + $0x40] sm:$0xf]
      %v1763 = vld [vmem:[#allocation2 + $0x44] sm:$0xf]
      %v1764 = vld [vmem:[#allocation2 + $0x48] sm:$0xf]
      %v1765 = vld [vmem:[#allocation2 + $0x4c] sm:$0xf]
      %v1766 = vld [vmem:[#allocation2 + $0x50] sm:$0xf]
      %v1767 = vld [vmem:[#allocation2 + $0x54] sm:$0xf]
      %v1768 = vld [vmem:[#allocation2 + $0x58] sm:$0xf]
      %v1769 = vld [vmem:[#allocation2 + $0x5c] sm:$0xf]
      %v1770 = vld [vmem:[#allocation2 + $0x60] sm:$0xf]
      %v1771 = vld [vmem:[#allocation2 + $0x64] sm:$0xf]
      %v1772 = vld [vmem:[#allocation2 + $0x68] sm:$0xf]
      %v1773 = vld [vmem:[#allocation2 + $0x6c] sm:$0xf]
      %v1774 = vld [vmem:[#allocation2 + $0x70] sm:$0xf]
      %v1775 = vld [vmem:[#allocation2 + $0x74] sm:$0xf]
      %v1776 = vld [vmem:[#allocation2 + $0x78] sm:$0xf]
      %v1777 = vld [vmem:[#allocation2 + $0x7c] sm:$0xf]
      %v1778 = vld [vmem:[#allocation2 + $0x80] sm:$0xf]
      %v1779 = vld [vmem:[#allocation2 + $0x84] sm:$0xf]
      %v1780 = vld [vmem:[#allocation2 + $0x88] sm:$0xf]
      %v1781 = vld [vmem:[#allocation2 + $0x8c] sm:$0xf]
      %v1782 = vld [vmem:[#allocation2 + $0x90] sm:$0xf]
      %v1783 = vld [vmem:[#allocation2 + $0x94] sm:$0xf]
      %v1784 = vld [vmem:[#allocation2 + $0x98] sm:$0xf]
      %v1785 = vld [vmem:[#allocation2 + $0x9c] sm:$0xf]
      %v1786 = vld [vmem:[#allocation2 + $0xa0] sm:$0xf]
      %v1787 = vld [vmem:[#allocation2 + $0xa4] sm:$0xf]
      %v1788 = vld [vmem:[#allocation2 + $0xa8] sm:$0x1]
      %v1789 = vld [vmem:[%s6] sm:$0xf]
      %v1790 = vld [vmem:[%s6 + $0x4] sm:$0xf]
      %v1791 = vld [vmem:[%s6 + $0x8] sm:$0xf]
      %v1792 = vld [vmem:[%s6 + $0xc] sm:$0xf]
      %v1793 = vld [vmem:[#allocation2 + $0x4] sm:$0x8]
      %s1794 = scalar_lea.vmem %s6, 16
      %v1795 = vld [vmem:[%s1794] sm:$0xf]
      %v1796 = vld [vmem:[%s1794 + $0x4] sm:$0xf]
      %v1797 = vld [vmem:[%s1794 + $0x8] sm:$0xf]
      %v1798 = vld [vmem:[%s1794 + $0xc] sm:$0xf]
      %v1841 = vunpack.c.l.b16 %v1793
      %v1842 = vunpack.c.l.b16 %v1748
      %v1843 = vunpack.c.l.b16 %v1749
      %v1844 = vunpack.c.l.b16 %v1750
      %v1845 = vunpack.c.l.b16 %v1751
      %v1846 = vunpack.c.l.b16 %v1752
      %v1847 = vunpack.c.l.b16 %v1753
      %v1848 = vunpack.c.l.b16 %v1754
      %v1849 = vunpack.c.l.b16 %v1755
      %v1850 = vunpack.c.l.b16 %v1756
      %v1851 = vunpack.c.l.b16 %v1757
      %v1852 = vunpack.c.l.b16 %v1758
      %v1853 = vunpack.c.l.b16 %v1759
      %v1854 = vunpack.c.l.b16 %v1760
      %v1855 = vunpack.c.l.b16 %v1761
      %v1856 = vunpack.c.l.b16 %v1762
      %v1857 = vunpack.c.l.b16 %v1763
      %v1858 = vunpack.c.l.b16 %v1764
      %v1859 = vunpack.c.l.b16 %v1765
      %v1860 = vunpack.c.l.b16 %v1766
      %v1861 = vunpack.c.l.b16 %v1767
      %v1862 = vunpack.c.l.b16 %v1768
      %v1863 = vunpack.c.l.b16 %v1769
      %v1864 = vunpack.c.l.b16 %v1770
      %v1865 = vunpack.c.l.b16 %v1771
      %v1866 = vunpack.c.l.b16 %v1772
      %v1867 = vunpack.c.l.b16 %v1773
      %v1868 = vunpack.c.l.b16 %v1774
      %v1869 = vunpack.c.l.b16 %v1775
      %v1870 = vunpack.c.l.b16 %v1776
      %v1871 = vunpack.c.l.b16 %v1777
      %v1872 = vunpack.c.l.b16 %v1778
      %v1873 = vunpack.c.l.b16 %v1779
      %v1874 = vunpack.c.l.b16 %v1780
      %v1875 = vunpack.c.l.b16 %v1781
      %v1876 = vunpack.c.l.b16 %v1782
      %v1877 = vunpack.c.l.b16 %v1783
      %v1878 = vunpack.c.l.b16 %v1784
      %v1879 = vunpack.c.l.b16 %v1785
      %v1880 = vunpack.c.l.b16 %v1786
      %v1881 = vunpack.c.l.b16 %v1787
      %v1882 = vunpack.c.l.b16 %v1788
      %v1883 = vpack.c.b16 %v1842, %v1841
      %v1884 = vpack.c.b16 %v1844, %v1843
      %v1885 = vpack.c.b16 %v1846, %v1845
      %v1886 = vpack.c.b16 %v1848, %v1847
      %v1887 = vpack.c.b16 %v1850, %v1849
      %v1888 = vpack.c.b16 %v1852, %v1851
      %v1889 = vpack.c.b16 %v1854, %v1853
      %v1890 = vpack.c.b16 %v1856, %v1855
      %v1891 = vpack.c.b16 %v1858, %v1857
      %v1892 = vpack.c.b16 %v1860, %v1859
      %v1893 = vpack.c.b16 %v1862, %v1861
      %v1894 = vpack.c.b16 %v1864, %v1863
      %v1895 = vpack.c.b16 %v1866, %v1865
      %v1896 = vpack.c.b16 %v1868, %v1867
      %v1897 = vpack.c.b16 %v1870, %v1869
      %v1898 = vpack.c.b16 %v1872, %v1871
      %v1899 = vpack.c.b16 %v1874, %v1873
      %v1900 = vpack.c.b16 %v1876, %v1875
      %v1901 = vpack.c.b16 %v1878, %v1877
      %v1902 = vpack.c.b16 %v1880, %v1879
      %v1903 = vpack.c.b16 %v1882, %v1881
      %vm1904 = vcmask 1044480
      %v1905 = vrot.slane %v1883, 3
      %v1906 = vrot.slane %v1884, 3
      %v1907 = vsel %vm1904, %v1905, %v1906
      %v1908 = vrot.slane %v1885, 3
      %v1909 = vsel %vm1904, %v1906, %v1908
      %v1910 = vrot.slane %v1886, 3
      %v1911 = vsel %vm1904, %v1908, %v1910
      %v1912 = vrot.slane %v1887, 3
      %v1913 = vsel %vm1904, %v1910, %v1912
      %v1914 = vrot.slane %v1888, 3
      %v1915 = vsel %vm1904, %v1912, %v1914
      %v1916 = vrot.slane %v1889, 3
      %v1917 = vsel %vm1904, %v1914, %v1916
      %v1918 = vrot.slane %v1890, 3
      %v1919 = vsel %vm1904, %v1916, %v1918
      %v1920 = vrot.slane %v1891, 3
      %v1921 = vsel %vm1904, %v1918, %v1920
      %v1922 = vrot.slane %v1892, 3
      %v1923 = vsel %vm1904, %v1920, %v1922
      %v1924 = vrot.slane %v1893, 3
      %v1925 = vsel %vm1904, %v1922, %v1924
      %v1926 = vrot.slane %v1894, 3
      %v1927 = vsel %vm1904, %v1924, %v1926
      %v1928 = vrot.slane %v1895, 3
      %v1929 = vsel %vm1904, %v1926, %v1928
      %v1930 = vrot.slane %v1896, 3
      %v1931 = vsel %vm1904, %v1928, %v1930
      %v1932 = vrot.slane %v1897, 3
      %v1933 = vsel %vm1904, %v1930, %v1932
      %v1934 = vrot.slane %v1898, 3
      %v1935 = vsel %vm1904, %v1932, %v1934
      %v1936 = vrot.slane %v1899, 3
      %v1937 = vsel %vm1904, %v1934, %v1936
      %v1938 = vrot.slane %v1900, 3
      %v1939 = vsel %vm1904, %v1936, %v1938
      %v1940 = vrot.slane %v1901, 3
      %v1941 = vsel %vm1904, %v1938, %v1940
      %v1942 = vrot.slane %v1902, 3
      %v1943 = vsel %vm1904, %v1940, %v1942
      %v1944 = vrot.slane %v1903, 3
      %v1945 = vsel %vm1904, %v1942, %v1944
      %v1950 = vunpack.c.l.b16 %v1795
      %v1951 = vunpack.c.l.b16 %v1796
      %v1952 = vunpack.c.l.b16 %v1797
      %v1953 = vunpack.c.l.b16 %v1798
      %v1954 = vpack.c.b16 %v1951, %v1950
      %v1955 = vpack.c.b16 %v1953, %v1952
      %v1959 = vsel %vm940, %v1907, 0
      %v1962 = vsel %vm940, %v1909, 0
      %v1965 = vsel %vm940, %v1911, 0
      %v1968 = vsel %vm940, %v1913, 0
      %v1971 = vsel %vm940, %v1915, 0
      %v1974 = vsel %vm940, %v1917, 0
      %v1977 = vsel %vm940, %v1919, 0
      %v1980 = vsel %vm940, %v1921, 0
      %v1983 = vsel %vm940, %v1923, 0
      %v1986 = vsel %vm940, %v1925, 0
      %v1989 = vsel %vm940, %v1927, 0
      %v1992 = vsel %vm940, %v1929, 0
      %v1995 = vsel %vm940, %v1931, 0
      %v1998 = vsel %vm940, %v1933, 0
      %v2001 = vsel %vm940, %v1935, 0
      %v2004 = vsel %vm940, %v1937, 0
      %v2007 = vsel %vm940, %v1939, 0
      %v2010 = vsel %vm940, %v1941, 0
      %v2013 = vsel %vm940, %v1943, 0
      %v2016 = vsel %vm940, %v1945, 0
      %v2019 = vsel %vm940, %v1944, 0
      %2021 = vmatprep.subr.bf16.mxu0 0
      %2022 = vmatpush1.bf16.msra.mxu0 0
      %2023 = vmatprep.subr.bf16.mxu0 0
      %2024 = vmatpush1.bf16.msra.mxu0 0
      %2025 = vmatprep.subr.bf16.mxu0 0
      %2026 = vmatpush1.bf16.msra.mxu0 0
      %2027 = vmatprep.subr.bf16.mxu0 0
      %2028 = vmatpush1.bf16.msra.mxu0 0
      %2029 = vmatprep.subr.bf16.mxu0 0
      %2030 = vmatpush1.bf16.msra.mxu0 0
      %2031 = vmatprep.subr.bf16.mxu0 0
      %2032 = vmatpush1.bf16.msra.mxu0 0
      %2033 = vmatprep.subr.bf16.mxu0 0
      %2034 = vmatpush1.bf16.msra.mxu0 %v1955
      %2035 = vmatprep.subr.bf16.mxu0 0
      %2036 = vmatpush1.bf16.msra.mxu0 %v1954
      %2037 = vmatprep.subr.bf16.mxu0 0
      %2038 = vmatpush2.bf16.msra.mxu0 0
      %2039 = vmatprep.subr.bf16.mxu0 0
      %2040 = vmatpush2.bf16.msra.mxu0 0
      %2041 = vmatprep.subr.bf16.mxu0 0
      %2042 = vmatpush2.bf16.msra.mxu0 0
      %2043 = vmatprep.subr.bf16.mxu0 0
      %2044 = vmatpush2.bf16.msra.mxu0 0
      %2045 = vmatprep.subr.bf16.mxu0 0
      %2046 = vmatpush2.bf16.msra.mxu0 0
      %2047 = vmatprep.subr.bf16.mxu0 0
      %2048 = vmatpush2.bf16.msra.mxu0 0
      %2049 = vmatprep.subr.bf16.mxu0 0
      %2050 = vmatpush2.bf16.msra.mxu0 0
      %2051 = vmatprep.subr.bf16.mxu0 0
      %2052 = vmatpush2.bf16.msra.mxu0 0
      %2053 = vmatprep.mubr.bf16.mxu0 0
      %2054 = vmatmul.mubr.bf16.gmra.mxu0 %v1959
      %v2055 = vpop.f32.mrf.mxu0
      %v2056 = vadd.f32 0.0, %v2055
      %v2057 = vpop.f32.mrf.mxu0
      %v2058 = vpop.f32.mrf.mxu0
      %v2059 = vadd.f32 0.0, %v2058
      %v2060 = vpop.f32.mrf.mxu0
      %2061 = vmatprep.mubr.bf16.mxu0 0
      %2062 = vmatmul.mubr.bf16.gmra.mxu0 %v1962
      %v2063 = vpop.f32.mrf.mxu0
      %v2064 = vadd.f32 0.0, %v2063
      %v2065 = vpop.f32.mrf.mxu0
      %v2066 = vpop.f32.mrf.mxu0
      %v2067 = vadd.f32 0.0, %v2066
      %v2068 = vpop.f32.mrf.mxu0
      %2069 = vmatprep.mubr.bf16.mxu0 0
      %2070 = vmatmul.mubr.bf16.gmra.mxu0 %v1965
      %v2071 = vpop.f32.mrf.mxu0
      %v2072 = vadd.f32 0.0, %v2071
      %v2073 = vpop.f32.mrf.mxu0
      %v2074 = vpop.f32.mrf.mxu0
      %v2075 = vadd.f32 0.0, %v2074
      %v2076 = vpop.f32.mrf.mxu0
      %2077 = vmatprep.mubr.bf16.mxu0 0
      %2078 = vmatmul.mubr.bf16.gmra.mxu0 %v1968
      %v2079 = vpop.f32.mrf.mxu0
      %v2080 = vadd.f32 0.0, %v2079
      %v2081 = vpop.f32.mrf.mxu0
      %v2082 = vpop.f32.mrf.mxu0
      %v2083 = vadd.f32 0.0, %v2082
      %v2084 = vpop.f32.mrf.mxu0
      %2085 = vmatprep.mubr.bf16.mxu0 0
      %2086 = vmatmul.mubr.bf16.gmra.mxu0 %v1971
      %v2087 = vpop.f32.mrf.mxu0
      %v2088 = vadd.f32 0.0, %v2087
      %v2089 = vpop.f32.mrf.mxu0
      %v2090 = vpop.f32.mrf.mxu0
      %v2091 = vadd.f32 0.0, %v2090
      %v2092 = vpop.f32.mrf.mxu0
      %2093 = vmatprep.mubr.bf16.mxu0 0
      %2094 = vmatmul.mubr.bf16.gmra.mxu0 %v1974
      %v2095 = vpop.f32.mrf.mxu0
      %v2096 = vadd.f32 0.0, %v2095
      %v2097 = vpop.f32.mrf.mxu0
      %v2098 = vpop.f32.mrf.mxu0
      %v2099 = vadd.f32 0.0, %v2098
      %v2100 = vpop.f32.mrf.mxu0
      %2101 = vmatprep.mubr.bf16.mxu0 0
      %2102 = vmatmul.mubr.bf16.gmra.mxu0 %v1977
      %v2103 = vpop.f32.mrf.mxu0
      %v2104 = vadd.f32 0.0, %v2103
      %v2105 = vpop.f32.mrf.mxu0
      %v2106 = vpop.f32.mrf.mxu0
      %v2107 = vadd.f32 0.0, %v2106
      %v2108 = vpop.f32.mrf.mxu0
      %2109 = vmatprep.mubr.bf16.mxu0 0
      %2110 = vmatmul.mubr.bf16.gmra.mxu0 %v1980
      %v2111 = vpop.f32.mrf.mxu0
      %v2112 = vadd.f32 0.0, %v2111
      %v2113 = vpop.f32.mrf.mxu0
      %v2114 = vpop.f32.mrf.mxu0
      %v2115 = vadd.f32 0.0, %v2114
      %v2116 = vpop.f32.mrf.mxu0
      %2117 = vmatprep.mubr.bf16.mxu0 0
      %2118 = vmatmul.mubr.bf16.gmra.mxu0 %v1983
      %v2119 = vpop.f32.mrf.mxu0
      %v2120 = vadd.f32 0.0, %v2119
      %v2121 = vpop.f32.mrf.mxu0
      %v2122 = vpop.f32.mrf.mxu0
      %v2123 = vadd.f32 0.0, %v2122
      %v2124 = vpop.f32.mrf.mxu0
      %2125 = vmatprep.mubr.bf16.mxu0 0
      %2126 = vmatmul.mubr.bf16.gmra.mxu0 %v1986
      %v2127 = vpop.f32.mrf.mxu0
      %v2128 = vadd.f32 0.0, %v2127
      %v2129 = vpop.f32.mrf.mxu0
      %v2130 = vpop.f32.mrf.mxu0
      %v2131 = vadd.f32 0.0, %v2130
      %v2132 = vpop.f32.mrf.mxu0
      %2133 = vmatprep.mubr.bf16.mxu0 0
      %2134 = vmatmul.mubr.bf16.gmra.mxu0 %v1989
      %v2135 = vpop.f32.mrf.mxu0
      %v2136 = vadd.f32 0.0, %v2135
      %v2137 = vpop.f32.mrf.mxu0
      %v2138 = vpop.f32.mrf.mxu0
      %v2139 = vadd.f32 0.0, %v2138
      %v2140 = vpop.f32.mrf.mxu0
      %2141 = vmatprep.mubr.bf16.mxu0 0
      %2142 = vmatmul.mubr.bf16.gmra.mxu0 %v1992
      %v2143 = vpop.f32.mrf.mxu0
      %v2144 = vadd.f32 0.0, %v2143
      %v2145 = vpop.f32.mrf.mxu0
      %v2146 = vpop.f32.mrf.mxu0
      %v2147 = vadd.f32 0.0, %v2146
      %v2148 = vpop.f32.mrf.mxu0
      %2149 = vmatprep.mubr.bf16.mxu0 0
      %2150 = vmatmul.mubr.bf16.gmra.mxu0 %v1995
      %v2151 = vpop.f32.mrf.mxu0
      %v2152 = vadd.f32 0.0, %v2151
      %v2153 = vpop.f32.mrf.mxu0
      %v2154 = vpop.f32.mrf.mxu0
      %v2155 = vadd.f32 0.0, %v2154
      %v2156 = vpop.f32.mrf.mxu0
      %2157 = vmatprep.mubr.bf16.mxu0 0
      %2158 = vmatmul.mubr.bf16.gmra.mxu0 %v1998
      %v2159 = vpop.f32.mrf.mxu0
      %v2160 = vadd.f32 0.0, %v2159
      %v2161 = vpop.f32.mrf.mxu0
      %v2162 = vpop.f32.mrf.mxu0
      %v2163 = vadd.f32 0.0, %v2162
      %v2164 = vpop.f32.mrf.mxu0
      %2165 = vmatprep.mubr.bf16.mxu0 0
      %2166 = vmatmul.mubr.bf16.gmra.mxu0 %v2001
      %v2167 = vpop.f32.mrf.mxu0
      %v2168 = vadd.f32 0.0, %v2167
      %v2169 = vpop.f32.mrf.mxu0
      %v2170 = vpop.f32.mrf.mxu0
      %v2171 = vadd.f32 0.0, %v2170
      %v2172 = vpop.f32.mrf.mxu0
      %2173 = vmatprep.mubr.bf16.mxu0 0
      %2174 = vmatmul.mubr.bf16.gmra.mxu0 %v2004
      %v2175 = vpop.f32.mrf.mxu0
      %v2176 = vadd.f32 0.0, %v2175
      %v2177 = vpop.f32.mrf.mxu0
      %v2178 = vpop.f32.mrf.mxu0
      %v2179 = vadd.f32 0.0, %v2178
      %v2180 = vpop.f32.mrf.mxu0
      %2181 = vmatprep.mubr.bf16.mxu0 0
      %2182 = vmatmul.mubr.bf16.gmra.mxu0 %v2007
      %v2183 = vpop.f32.mrf.mxu0
      %v2184 = vadd.f32 0.0, %v2183
      %v2185 = vpop.f32.mrf.mxu0
      %v2186 = vpop.f32.mrf.mxu0
      %v2187 = vadd.f32 0.0, %v2186
      %v2188 = vpop.f32.mrf.mxu0
      %2189 = vmatprep.mubr.bf16.mxu0 0
      %2190 = vmatmul.mubr.bf16.gmra.mxu0 %v2010
      %v2191 = vpop.f32.mrf.mxu0
      %v2192 = vadd.f32 0.0, %v2191
      %v2193 = vpop.f32.mrf.mxu0
      %v2194 = vpop.f32.mrf.mxu0
      %v2195 = vadd.f32 0.0, %v2194
      %v2196 = vpop.f32.mrf.mxu0
      %2197 = vmatprep.mubr.bf16.mxu0 0
      %2198 = vmatmul.mubr.bf16.gmra.mxu0 %v2013
      %v2199 = vpop.f32.mrf.mxu0
      %v2200 = vadd.f32 0.0, %v2199
      %v2201 = vpop.f32.mrf.mxu0
      %v2202 = vpop.f32.mrf.mxu0
      %v2203 = vadd.f32 0.0, %v2202
      %v2204 = vpop.f32.mrf.mxu0
      %2205 = vmatprep.mubr.bf16.mxu0 0
      %2206 = vmatmul.mubr.bf16.gmra.mxu0 %v2016
      %v2207 = vpop.f32.mrf.mxu0
      %v2208 = vadd.f32 0.0, %v2207
      %v2209 = vpop.f32.mrf.mxu0
      %v2210 = vpop.f32.mrf.mxu0
      %v2211 = vadd.f32 0.0, %v2210
      %v2212 = vpop.f32.mrf.mxu0
      %2213 = vmatprep.mubr.bf16.mxu0 0
      %2214 = vmatmul.mubr.bf16.gmra.mxu0 %v2019
      %v2215 = vpop.f32.mrf.mxu0
      %v2216 = vadd.f32 0.0, %v2215
      %v2217 = vpop.f32.mrf.mxu0
      %v2218 = vpop.f32.mrf.mxu0
      %v2219 = vpop.f32.mrf.mxu0
      %2220 = vdwg.mxu0
      %v2222 = vunpack.c.l.b16 %v1747
      %v2223 = vpack.c.b16 %v1842, %v2222
      %vm2224 = vsmask.f32 5376
      %v2226 = vshrl.u32 %v2223, 16
      %v2228 = vrot.slane %v2226, 2
      %v2229 = vshll.u32 %v2223, 16
      %v2231 = vrot.slane %v2229, 3
      %v2232 = vor.u32 %v2228, %v2231
      %v2234 = vshrl.u32 %v1884, 16
      %v2236 = vrot.slane %v2234, 2
      %v2237 = vshll.u32 %v1884, 16
      %v2239 = vrot.slane %v2237, 3
      %v2240 = vor.u32 %v2236, %v2239
      %v2241 = vsel %vm2224, %v2232, %v2240
      %v2243 = vshrl.u32 %v1885, 16
      %v2245 = vrot.slane %v2243, 2
      %v2246 = vshll.u32 %v1885, 16
      %v2248 = vrot.slane %v2246, 3
      %v2249 = vor.u32 %v2245, %v2248
      %v2250 = vsel %vm2224, %v2240, %v2249
      %v2252 = vshrl.u32 %v1886, 16
      %v2254 = vrot.slane %v2252, 2
      %v2255 = vshll.u32 %v1886, 16
      %v2257 = vrot.slane %v2255, 3
      %v2258 = vor.u32 %v2254, %v2257
      %v2259 = vsel %vm2224, %v2249, %v2258
      %v2261 = vshrl.u32 %v1887, 16
      %v2263 = vrot.slane %v2261, 2
      %v2264 = vshll.u32 %v1887, 16
      %v2266 = vrot.slane %v2264, 3
      %v2267 = vor.u32 %v2263, %v2266
      %v2268 = vsel %vm2224, %v2258, %v2267
      %v2270 = vshrl.u32 %v1888, 16
      %v2272 = vrot.slane %v2270, 2
      %v2273 = vshll.u32 %v1888, 16
      %v2275 = vrot.slane %v2273, 3
      %v2276 = vor.u32 %v2272, %v2275
      %v2277 = vsel %vm2224, %v2267, %v2276
      %v2279 = vshrl.u32 %v1889, 16
      %v2281 = vrot.slane %v2279, 2
      %v2282 = vshll.u32 %v1889, 16
      %v2284 = vrot.slane %v2282, 3
      %v2285 = vor.u32 %v2281, %v2284
      %v2286 = vsel %vm2224, %v2276, %v2285
      %v2288 = vshrl.u32 %v1890, 16
      %v2290 = vrot.slane %v2288, 2
      %v2291 = vshll.u32 %v1890, 16
      %v2293 = vrot.slane %v2291, 3
      %v2294 = vor.u32 %v2290, %v2293
      %v2295 = vsel %vm2224, %v2285, %v2294
      %v2297 = vshrl.u32 %v1891, 16
      %v2299 = vrot.slane %v2297, 2
      %v2300 = vshll.u32 %v1891, 16
      %v2302 = vrot.slane %v2300, 3
      %v2303 = vor.u32 %v2299, %v2302
      %v2304 = vsel %vm2224, %v2294, %v2303
      %v2306 = vshrl.u32 %v1892, 16
      %v2308 = vrot.slane %v2306, 2
      %v2309 = vshll.u32 %v1892, 16
      %v2311 = vrot.slane %v2309, 3
      %v2312 = vor.u32 %v2308, %v2311
      %v2313 = vsel %vm2224, %v2303, %v2312
      %v2315 = vshrl.u32 %v1893, 16
      %v2317 = vrot.slane %v2315, 2
      %v2318 = vshll.u32 %v1893, 16
      %v2320 = vrot.slane %v2318, 3
      %v2321 = vor.u32 %v2317, %v2320
      %v2322 = vsel %vm2224, %v2312, %v2321
      %v2324 = vshrl.u32 %v1894, 16
      %v2326 = vrot.slane %v2324, 2
      %v2327 = vshll.u32 %v1894, 16
      %v2329 = vrot.slane %v2327, 3
      %v2330 = vor.u32 %v2326, %v2329
      %v2331 = vsel %vm2224, %v2321, %v2330
      %v2333 = vshrl.u32 %v1895, 16
      %v2335 = vrot.slane %v2333, 2
      %v2336 = vshll.u32 %v1895, 16
      %v2338 = vrot.slane %v2336, 3
      %v2339 = vor.u32 %v2335, %v2338
      %v2340 = vsel %vm2224, %v2330, %v2339
      %v2342 = vshrl.u32 %v1896, 16
      %v2344 = vrot.slane %v2342, 2
      %v2345 = vshll.u32 %v1896, 16
      %v2347 = vrot.slane %v2345, 3
      %v2348 = vor.u32 %v2344, %v2347
      %v2349 = vsel %vm2224, %v2339, %v2348
      %v2351 = vshrl.u32 %v1897, 16
      %v2353 = vrot.slane %v2351, 2
      %v2354 = vshll.u32 %v1897, 16
      %v2356 = vrot.slane %v2354, 3
      %v2357 = vor.u32 %v2353, %v2356
      %v2358 = vsel %vm2224, %v2348, %v2357
      %v2360 = vshrl.u32 %v1898, 16
      %v2362 = vrot.slane %v2360, 2
      %v2363 = vshll.u32 %v1898, 16
      %v2365 = vrot.slane %v2363, 3
      %v2366 = vor.u32 %v2362, %v2365
      %v2367 = vsel %vm2224, %v2357, %v2366
      %v2369 = vshrl.u32 %v1899, 16
      %v2371 = vrot.slane %v2369, 2
      %v2372 = vshll.u32 %v1899, 16
      %v2374 = vrot.slane %v2372, 3
      %v2375 = vor.u32 %v2371, %v2374
      %v2376 = vsel %vm2224, %v2366, %v2375
      %v2378 = vshrl.u32 %v1900, 16
      %v2380 = vrot.slane %v2378, 2
      %v2381 = vshll.u32 %v1900, 16
      %v2383 = vrot.slane %v2381, 3
      %v2384 = vor.u32 %v2380, %v2383
      %v2385 = vsel %vm2224, %v2375, %v2384
      %v2387 = vshrl.u32 %v1901, 16
      %v2389 = vrot.slane %v2387, 2
      %v2390 = vshll.u32 %v1901, 16
      %v2392 = vrot.slane %v2390, 3
      %v2393 = vor.u32 %v2389, %v2392
      %v2394 = vsel %vm2224, %v2384, %v2393
      %v2396 = vshrl.u32 %v1902, 16
      %v2398 = vrot.slane %v2396, 2
      %v2399 = vshll.u32 %v1902, 16
      %v2401 = vrot.slane %v2399, 3
      %v2402 = vor.u32 %v2398, %v2401
      %v2403 = vsel %vm2224, %v2393, %v2402
      %v2405 = vshrl.u32 %v1903, 16
      %v2407 = vrot.slane %v2405, 2
      %v2408 = vshll.u32 %v1903, 16
      %v2410 = vrot.slane %v2408, 3
      %v2411 = vor.u32 %v2407, %v2410
      %v2412 = vsel %vm2224, %v2402, %v2411
      %v2417 = vunpack.c.l.b16 %v1789
      %v2418 = vunpack.c.l.b16 %v1790
      %v2419 = vunpack.c.l.b16 %v1791
      %v2420 = vunpack.c.l.b16 %v1792
      %v2421 = vpack.c.b16 %v2418, %v2417
      %v2422 = vpack.c.b16 %v2420, %v2419
      %v2426 = vsel %vm940, %v2241, 0
      %v2429 = vsel %vm940, %v2250, 0
      %v2432 = vsel %vm940, %v2259, 0
      %v2435 = vsel %vm940, %v2268, 0
      %v2438 = vsel %vm940, %v2277, 0
      %v2441 = vsel %vm940, %v2286, 0
      %v2444 = vsel %vm940, %v2295, 0
      %v2447 = vsel %vm940, %v2304, 0
      %v2450 = vsel %vm940, %v2313, 0
      %v2453 = vsel %vm940, %v2322, 0
      %v2456 = vsel %vm940, %v2331, 0
      %v2459 = vsel %vm940, %v2340, 0
      %v2462 = vsel %vm940, %v2349, 0
      %v2465 = vsel %vm940, %v2358, 0
      %v2468 = vsel %vm940, %v2367, 0
      %v2471 = vsel %vm940, %v2376, 0
      %v2474 = vsel %vm940, %v2385, 0
      %v2477 = vsel %vm940, %v2394, 0
      %v2480 = vsel %vm940, %v2403, 0
      %v2483 = vsel %vm940, %v2412, 0
      %v2486 = vsel %vm940, %v2411, 0
      %2488 = vmatprep.subr.bf16.mxu0 0
      %2489 = vmatpush1.bf16.msra.mxu0 0
      %2490 = vmatprep.subr.bf16.mxu0 0
      %2491 = vmatpush1.bf16.msra.mxu0 0
      %2492 = vmatprep.subr.bf16.mxu0 0
      %2493 = vmatpush1.bf16.msra.mxu0 0
      %2494 = vmatprep.subr.bf16.mxu0 0
      %2495 = vmatpush1.bf16.msra.mxu0 0
      %2496 = vmatprep.subr.bf16.mxu0 0
      %2497 = vmatpush1.bf16.msra.mxu0 0
      %2498 = vmatprep.subr.bf16.mxu0 0
      %2499 = vmatpush1.bf16.msra.mxu0 0
      %2500 = vmatprep.subr.bf16.mxu0 0
      %2501 = vmatpush1.bf16.msra.mxu0 %v2422
      %2502 = vmatprep.subr.bf16.mxu0 0
      %2503 = vmatpush1.bf16.msra.mxu0 %v2421
      %2504 = vmatprep.subr.bf16.mxu0 0
      %2505 = vmatpush2.bf16.msra.mxu0 0
      %2506 = vmatprep.subr.bf16.mxu0 0
      %2507 = vmatpush2.bf16.msra.mxu0 0
      %2508 = vmatprep.subr.bf16.mxu0 0
      %2509 = vmatpush2.bf16.msra.mxu0 0
      %2510 = vmatprep.subr.bf16.mxu0 0
      %2511 = vmatpush2.bf16.msra.mxu0 0
      %2512 = vmatprep.subr.bf16.mxu0 0
      %2513 = vmatpush2.bf16.msra.mxu0 0
      %2514 = vmatprep.subr.bf16.mxu0 0
      %2515 = vmatpush2.bf16.msra.mxu0 0
      %2516 = vmatprep.subr.bf16.mxu0 0
      %2517 = vmatpush2.bf16.msra.mxu0 0
      %2518 = vmatprep.subr.bf16.mxu0 0
      %2519 = vmatpush2.bf16.msra.mxu0 0
      %2520 = vmatprep.mubr.bf16.mxu0 0
      %2521 = vmatmul.mubr.bf16.gmra.mxu0 %v2426
      %v2522 = vpop.f32.mrf.mxu0
      %v2523 = vadd.f32 %v2056, %v2522
      %v2524 = vpop.f32.mrf.mxu0
      %v2525 = vpop.f32.mrf.mxu0
      %v2526 = vadd.f32 %v2059, %v2525
      %v2527 = vpop.f32.mrf.mxu0
      %2528 = vmatprep.mubr.bf16.mxu0 0
      %2529 = vmatmul.mubr.bf16.gmra.mxu0 %v2429
      %v2530 = vpop.f32.mrf.mxu0
      %v2531 = vadd.f32 %v2064, %v2530
      %v2532 = vpop.f32.mrf.mxu0
      %v2533 = vpop.f32.mrf.mxu0
      %v2534 = vadd.f32 %v2067, %v2533
      %v2535 = vpop.f32.mrf.mxu0
      %2536 = vmatprep.mubr.bf16.mxu0 0
      %2537 = vmatmul.mubr.bf16.gmra.mxu0 %v2432
      %v2538 = vpop.f32.mrf.mxu0
      %v2539 = vadd.f32 %v2072, %v2538
      %v2540 = vpop.f32.mrf.mxu0
      %v2541 = vpop.f32.mrf.mxu0
      %v2542 = vadd.f32 %v2075, %v2541
      %v2543 = vpop.f32.mrf.mxu0
      %2544 = vmatprep.mubr.bf16.mxu0 0
      %2545 = vmatmul.mubr.bf16.gmra.mxu0 %v2435
      %v2546 = vpop.f32.mrf.mxu0
      %v2547 = vadd.f32 %v2080, %v2546
      %v2548 = vpop.f32.mrf.mxu0
      %v2549 = vpop.f32.mrf.mxu0
      %v2550 = vadd.f32 %v2083, %v2549
      %v2551 = vpop.f32.mrf.mxu0
      %2552 = vmatprep.mubr.bf16.mxu0 0
      %2553 = vmatmul.mubr.bf16.gmra.mxu0 %v2438
      %v2554 = vpop.f32.mrf.mxu0
      %v2555 = vadd.f32 %v2088, %v2554
      %v2556 = vpop.f32.mrf.mxu0
      %v2557 = vpop.f32.mrf.mxu0
      %v2558 = vadd.f32 %v2091, %v2557
      %v2559 = vpop.f32.mrf.mxu0
      %2560 = vmatprep.mubr.bf16.mxu0 0
      %2561 = vmatmul.mubr.bf16.gmra.mxu0 %v2441
      %v2562 = vpop.f32.mrf.mxu0
      %v2563 = vadd.f32 %v2096, %v2562
      %v2564 = vpop.f32.mrf.mxu0
      %v2565 = vpop.f32.mrf.mxu0
      %v2566 = vadd.f32 %v2099, %v2565
      %v2567 = vpop.f32.mrf.mxu0
      %2568 = vmatprep.mubr.bf16.mxu0 0
      %2569 = vmatmul.mubr.bf16.gmra.mxu0 %v2444
      %v2570 = vpop.f32.mrf.mxu0
      %v2571 = vadd.f32 %v2104, %v2570
      %v2572 = vpop.f32.mrf.mxu0
      %v2573 = vpop.f32.mrf.mxu0
      %v2574 = vadd.f32 %v2107, %v2573
      %v2575 = vpop.f32.mrf.mxu0
      %2576 = vmatprep.mubr.bf16.mxu0 0
      %2577 = vmatmul.mubr.bf16.gmra.mxu0 %v2447
      %v2578 = vpop.f32.mrf.mxu0
      %v2579 = vadd.f32 %v2112, %v2578
      %v2580 = vpop.f32.mrf.mxu0
      %v2581 = vpop.f32.mrf.mxu0
      %v2582 = vadd.f32 %v2115, %v2581
      %v2583 = vpop.f32.mrf.mxu0
      %2584 = vmatprep.mubr.bf16.mxu0 0
      %2585 = vmatmul.mubr.bf16.gmra.mxu0 %v2450
      %v2586 = vpop.f32.mrf.mxu0
      %v2587 = vadd.f32 %v2120, %v2586
      %v2588 = vpop.f32.mrf.mxu0
      %v2589 = vpop.f32.mrf.mxu0
      %v2590 = vadd.f32 %v2123, %v2589
      %v2591 = vpop.f32.mrf.mxu0
      %2592 = vmatprep.mubr.bf16.mxu0 0
      %2593 = vmatmul.mubr.bf16.gmra.mxu0 %v2453
      %v2594 = vpop.f32.mrf.mxu0
      %v2595 = vadd.f32 %v2128, %v2594
      %v2596 = vpop.f32.mrf.mxu0
      %v2597 = vpop.f32.mrf.mxu0
      %v2598 = vadd.f32 %v2131, %v2597
      %v2599 = vpop.f32.mrf.mxu0
      %2600 = vmatprep.mubr.bf16.mxu0 0
      %2601 = vmatmul.mubr.bf16.gmra.mxu0 %v2456
      %v2602 = vpop.f32.mrf.mxu0
      %v2603 = vadd.f32 %v2136, %v2602
      %v2604 = vpop.f32.mrf.mxu0
      %v2605 = vpop.f32.mrf.mxu0
      %v2606 = vadd.f32 %v2139, %v2605
      %v2607 = vpop.f32.mrf.mxu0
      %2608 = vmatprep.mubr.bf16.mxu0 0
      %2609 = vmatmul.mubr.bf16.gmra.mxu0 %v2459
      %v2610 = vpop.f32.mrf.mxu0
      %v2611 = vadd.f32 %v2144, %v2610
      %v2612 = vpop.f32.mrf.mxu0
      %v2613 = vpop.f32.mrf.mxu0
      %v2614 = vadd.f32 %v2147, %v2613
      %v2615 = vpop.f32.mrf.mxu0
      %2616 = vmatprep.mubr.bf16.mxu0 0
      %2617 = vmatmul.mubr.bf16.gmra.mxu0 %v2462
      %v2618 = vpop.f32.mrf.mxu0
      %v2619 = vadd.f32 %v2152, %v2618
      %v2620 = vpop.f32.mrf.mxu0
      %v2621 = vpop.f32.mrf.mxu0
      %v2622 = vadd.f32 %v2155, %v2621
      %v2623 = vpop.f32.mrf.mxu0
      %2624 = vmatprep.mubr.bf16.mxu0 0
      %2625 = vmatmul.mubr.bf16.gmra.mxu0 %v2465
      %v2626 = vpop.f32.mrf.mxu0
      %v2627 = vadd.f32 %v2160, %v2626
      %v2628 = vpop.f32.mrf.mxu0
      %v2629 = vpop.f32.mrf.mxu0
      %v2630 = vadd.f32 %v2163, %v2629
      %v2631 = vpop.f32.mrf.mxu0
      %2632 = vmatprep.mubr.bf16.mxu0 0
      %2633 = vmatmul.mubr.bf16.gmra.mxu0 %v2468
      %v2634 = vpop.f32.mrf.mxu0
      %v2635 = vadd.f32 %v2168, %v2634
      %v2636 = vpop.f32.mrf.mxu0
      %v2637 = vpop.f32.mrf.mxu0
      %v2638 = vadd.f32 %v2171, %v2637
      %v2639 = vpop.f32.mrf.mxu0
      %2640 = vmatprep.mubr.bf16.mxu0 0
      %2641 = vmatmul.mubr.bf16.gmra.mxu0 %v2471
      %v2642 = vpop.f32.mrf.mxu0
      %v2643 = vadd.f32 %v2176, %v2642
      %v2644 = vpop.f32.mrf.mxu0
      %v2645 = vpop.f32.mrf.mxu0
      %v2646 = vadd.f32 %v2179, %v2645
      %v2647 = vpop.f32.mrf.mxu0
      %2648 = vmatprep.mubr.bf16.mxu0 0
      %2649 = vmatmul.mubr.bf16.gmra.mxu0 %v2474
      %v2650 = vpop.f32.mrf.mxu0
      %v2651 = vadd.f32 %v2184, %v2650
      %v2652 = vpop.f32.mrf.mxu0
      %v2653 = vpop.f32.mrf.mxu0
      %v2654 = vadd.f32 %v2187, %v2653
      %v2655 = vpop.f32.mrf.mxu0
      %2656 = vmatprep.mubr.bf16.mxu0 0
      %2657 = vmatmul.mubr.bf16.gmra.mxu0 %v2477
      %v2658 = vpop.f32.mrf.mxu0
      %v2659 = vadd.f32 %v2192, %v2658
      %v2660 = vpop.f32.mrf.mxu0
      %v2661 = vpop.f32.mrf.mxu0
      %v2662 = vadd.f32 %v2195, %v2661
      %v2663 = vpop.f32.mrf.mxu0
      %2664 = vmatprep.mubr.bf16.mxu0 0
      %2665 = vmatmul.mubr.bf16.gmra.mxu0 %v2480
      %v2666 = vpop.f32.mrf.mxu0
      %v2667 = vadd.f32 %v2200, %v2666
      %v2668 = vpop.f32.mrf.mxu0
      %v2669 = vpop.f32.mrf.mxu0
      %v2670 = vadd.f32 %v2203, %v2669
      %v2671 = vpop.f32.mrf.mxu0
      %2672 = vmatprep.mubr.bf16.mxu0 0
      %2673 = vmatmul.mubr.bf16.gmra.mxu0 %v2483
      %v2674 = vpop.f32.mrf.mxu0
      %v2675 = vadd.f32 %v2208, %v2674
      %v2676 = vpop.f32.mrf.mxu0
      %v2677 = vpop.f32.mrf.mxu0
      %v2678 = vadd.f32 %v2211, %v2677
      %v2679 = vpop.f32.mrf.mxu0
      %2680 = vmatprep.mubr.bf16.mxu0 0
      %2681 = vmatmul.mubr.bf16.gmra.mxu0 %v2486
      %v2682 = vpop.f32.mrf.mxu0
      %v2683 = vadd.f32 %v2216, %v2682
      %v2684 = vpop.f32.mrf.mxu0
      %v2685 = vpop.f32.mrf.mxu0
      %v2686 = vpop.f32.mrf.mxu0
      %2687 = vdwg.mxu0
      %v2688 = vld [vmem:[#allocation2 + $0xa8] sm:$0x3]
      %s2689 = scalar_lea.vmem %s6, 32
      %v2690 = vld [vmem:[%s2689] sm:$0xf]
      %v2691 = vld [vmem:[%s2689 + $0x4] sm:$0xf]
      %v2692 = vld [vmem:[%s2689 + $0x8] sm:$0xf]
      %v2693 = vld [vmem:[%s2689 + $0xc] sm:$0xf]
      %v2695 = vunpack.c.l.b16 %v2688
      %v2696 = vpack.c.b16 %v2695, %v1881
      %vm2697 = vsmask.f32 4352
      %v2699 = vshrl.u32 %v1883, 16
      %v2701 = vrot.slane %v2699, 3
      %v2702 = vshll.u32 %v1883, 16
      %v2704 = vrot.slane %v2702, 4
      %v2705 = vor.u32 %v2701, %v2704
      %v2706 = vrot.slane %v2234, 3
      %v2707 = vrot.slane %v2237, 4
      %v2708 = vor.u32 %v2706, %v2707
      %v2709 = vsel %vm2697, %v2705, %v2708
      %v2710 = vrot.slane %v2243, 3
      %v2711 = vrot.slane %v2246, 4
      %v2712 = vor.u32 %v2710, %v2711
      %v2713 = vsel %vm2697, %v2708, %v2712
      %v2714 = vrot.slane %v2252, 3
      %v2715 = vrot.slane %v2255, 4
      %v2716 = vor.u32 %v2714, %v2715
      %v2717 = vsel %vm2697, %v2712, %v2716
      %v2718 = vrot.slane %v2261, 3
      %v2719 = vrot.slane %v2264, 4
      %v2720 = vor.u32 %v2718, %v2719
      %v2721 = vsel %vm2697, %v2716, %v2720
      %v2722 = vrot.slane %v2270, 3
      %v2723 = vrot.slane %v2273, 4
      %v2724 = vor.u32 %v2722, %v2723
      %v2725 = vsel %vm2697, %v2720, %v2724
      %v2726 = vrot.slane %v2279, 3
      %v2727 = vrot.slane %v2282, 4
      %v2728 = vor.u32 %v2726, %v2727
      %v2729 = vsel %vm2697, %v2724, %v2728
      %v2730 = vrot.slane %v2288, 3
      %v2731 = vrot.slane %v2291, 4
      %v2732 = vor.u32 %v2730, %v2731
      %v2733 = vsel %vm2697, %v2728, %v2732
      %v2734 = vrot.slane %v2297, 3
      %v2735 = vrot.slane %v2300, 4
      %v2736 = vor.u32 %v2734, %v2735
      %v2737 = vsel %vm2697, %v2732, %v2736
      %v2738 = vrot.slane %v2306, 3
      %v2739 = vrot.slane %v2309, 4
      %v2740 = vor.u32 %v2738, %v2739
      %v2741 = vsel %vm2697, %v2736, %v2740
      %v2742 = vrot.slane %v2315, 3
      %v2743 = vrot.slane %v2318, 4
      %v2744 = vor.u32 %v2742, %v2743
      %v2745 = vsel %vm2697, %v2740, %v2744
      %v2746 = vrot.slane %v2324, 3
      %v2747 = vrot.slane %v2327, 4
      %v2748 = vor.u32 %v2746, %v2747
      %v2749 = vsel %vm2697, %v2744, %v2748
      %v2750 = vrot.slane %v2333, 3
      %v2751 = vrot.slane %v2336, 4
      %v2752 = vor.u32 %v2750, %v2751
      %v2753 = vsel %vm2697, %v2748, %v2752
      %v2754 = vrot.slane %v2342, 3
      %v2755 = vrot.slane %v2345, 4
      %v2756 = vor.u32 %v2754, %v2755
      %v2757 = vsel %vm2697, %v2752, %v2756
      %v2758 = vrot.slane %v2351, 3
      %v2759 = vrot.slane %v2354, 4
      %v2760 = vor.u32 %v2758, %v2759
      %v2761 = vsel %vm2697, %v2756, %v2760
      %v2762 = vrot.slane %v2360, 3
      %v2763 = vrot.slane %v2363, 4
      %v2764 = vor.u32 %v2762, %v2763
      %v2765 = vsel %vm2697, %v2760, %v2764
      %v2766 = vrot.slane %v2369, 3
      %v2767 = vrot.slane %v2372, 4
      %v2768 = vor.u32 %v2766, %v2767
      %v2769 = vsel %vm2697, %v2764, %v2768
      %v2770 = vrot.slane %v2378, 3
      %v2771 = vrot.slane %v2381, 4
      %v2772 = vor.u32 %v2770, %v2771
      %v2773 = vsel %vm2697, %v2768, %v2772
      %v2774 = vrot.slane %v2387, 3
      %v2775 = vrot.slane %v2390, 4
      %v2776 = vor.u32 %v2774, %v2775
      %v2777 = vsel %vm2697, %v2772, %v2776
      %v2778 = vrot.slane %v2396, 3
      %v2779 = vrot.slane %v2399, 4
      %v2780 = vor.u32 %v2778, %v2779
      %v2781 = vsel %vm2697, %v2776, %v2780
      %v2783 = vshrl.u32 %v2696, 16
      %v2785 = vrot.slane %v2783, 3
      %v2786 = vshll.u32 %v2696, 16
      %v2788 = vrot.slane %v2786, 4
      %v2789 = vor.u32 %v2785, %v2788
      %v2790 = vsel %vm2697, %v2780, %v2789
      %v2795 = vunpack.c.l.b16 %v2690
      %v2796 = vunpack.c.l.b16 %v2691
      %v2797 = vunpack.c.l.b16 %v2692
      %v2798 = vunpack.c.l.b16 %v2693
      %v2799 = vpack.c.b16 %v2796, %v2795
      %v2800 = vpack.c.b16 %v2798, %v2797
      %v2804 = vsel %vm940, %v2709, 0
      %v2807 = vsel %vm940, %v2713, 0
      %v2810 = vsel %vm940, %v2717, 0
      %v2813 = vsel %vm940, %v2721, 0
      %v2816 = vsel %vm940, %v2725, 0
      %v2819 = vsel %vm940, %v2729, 0
      %v2822 = vsel %vm940, %v2733, 0
      %v2825 = vsel %vm940, %v2737, 0
      %v2828 = vsel %vm940, %v2741, 0
      %v2831 = vsel %vm940, %v2745, 0
      %v2834 = vsel %vm940, %v2749, 0
      %v2837 = vsel %vm940, %v2753, 0
      %v2840 = vsel %vm940, %v2757, 0
      %v2843 = vsel %vm940, %v2761, 0
      %v2846 = vsel %vm940, %v2765, 0
      %v2849 = vsel %vm940, %v2769, 0
      %v2852 = vsel %vm940, %v2773, 0
      %v2855 = vsel %vm940, %v2777, 0
      %v2858 = vsel %vm940, %v2781, 0
      %v2861 = vsel %vm940, %v2790, 0
      %v2864 = vsel %vm940, %v2789, 0
      %2866 = vmatprep.subr.bf16.mxu0 0
      %2867 = vmatpush1.bf16.msra.mxu0 0
      %2868 = vmatprep.subr.bf16.mxu0 0
      %2869 = vmatpush1.bf16.msra.mxu0 0
      %2870 = vmatprep.subr.bf16.mxu0 0
      %2871 = vmatpush1.bf16.msra.mxu0 0
      %2872 = vmatprep.subr.bf16.mxu0 0
      %2873 = vmatpush1.bf16.msra.mxu0 0
      %2874 = vmatprep.subr.bf16.mxu0 0
      %2875 = vmatpush1.bf16.msra.mxu0 0
      %2876 = vmatprep.subr.bf16.mxu0 0
      %2877 = vmatpush1.bf16.msra.mxu0 0
      %2878 = vmatprep.subr.bf16.mxu0 0
      %2879 = vmatpush1.bf16.msra.mxu0 %v2800
      %2880 = vmatprep.subr.bf16.mxu0 0
      %2881 = vmatpush1.bf16.msra.mxu0 %v2799
      %2882 = vmatprep.subr.bf16.mxu0 0
      %2883 = vmatpush2.bf16.msra.mxu0 0
      %2884 = vmatprep.subr.bf16.mxu0 0
      %2885 = vmatpush2.bf16.msra.mxu0 0
      %2886 = vmatprep.subr.bf16.mxu0 0
      %2887 = vmatpush2.bf16.msra.mxu0 0
      %2888 = vmatprep.subr.bf16.mxu0 0
      %2889 = vmatpush2.bf16.msra.mxu0 0
      %2890 = vmatprep.subr.bf16.mxu0 0
      %2891 = vmatpush2.bf16.msra.mxu0 0
      %2892 = vmatprep.subr.bf16.mxu0 0
      %2893 = vmatpush2.bf16.msra.mxu0 0
      %2894 = vmatprep.subr.bf16.mxu0 0
      %2895 = vmatpush2.bf16.msra.mxu0 0
      %2896 = vmatprep.subr.bf16.mxu0 0
      %2897 = vmatpush2.bf16.msra.mxu0 0
      %2898 = vmatprep.mubr.bf16.mxu0 0
      %2899 = vmatmul.mubr.bf16.gmra.mxu0 %v2804
      %v2900 = vpop.f32.mrf.mxu0
      %v2901 = vadd.f32 0.0, %v2900
      %v2902 = vpop.f32.mrf.mxu0
      %v2903 = vpop.f32.mrf.mxu0
      %v2904 = vadd.f32 0.0, %v2903
      %v2905 = vpop.f32.mrf.mxu0
      %2906 = vmatprep.mubr.bf16.mxu0 0
      %2907 = vmatmul.mubr.bf16.gmra.mxu0 %v2807
      %v2908 = vpop.f32.mrf.mxu0
      %v2909 = vadd.f32 0.0, %v2908
      %v2910 = vpop.f32.mrf.mxu0
      %v2911 = vpop.f32.mrf.mxu0
      %v2912 = vadd.f32 0.0, %v2911
      %v2913 = vpop.f32.mrf.mxu0
      %2914 = vmatprep.mubr.bf16.mxu0 0
      %2915 = vmatmul.mubr.bf16.gmra.mxu0 %v2810
      %v2916 = vpop.f32.mrf.mxu0
      %v2917 = vadd.f32 0.0, %v2916
      %v2918 = vpop.f32.mrf.mxu0
      %v2919 = vpop.f32.mrf.mxu0
      %v2920 = vadd.f32 0.0, %v2919
      %v2921 = vpop.f32.mrf.mxu0
      %2922 = vmatprep.mubr.bf16.mxu0 0
      %2923 = vmatmul.mubr.bf16.gmra.mxu0 %v2813
      %v2924 = vpop.f32.mrf.mxu0
      %v2925 = vadd.f32 0.0, %v2924
      %v2926 = vpop.f32.mrf.mxu0
      %v2927 = vpop.f32.mrf.mxu0
      %v2928 = vadd.f32 0.0, %v2927
      %v2929 = vpop.f32.mrf.mxu0
      %2930 = vmatprep.mubr.bf16.mxu0 0
      %2931 = vmatmul.mubr.bf16.gmra.mxu0 %v2816
      %v2932 = vpop.f32.mrf.mxu0
      %v2933 = vadd.f32 0.0, %v2932
      %v2934 = vpop.f32.mrf.mxu0
      %v2935 = vpop.f32.mrf.mxu0
      %v2936 = vadd.f32 0.0, %v2935
      %v2937 = vpop.f32.mrf.mxu0
      %2938 = vmatprep.mubr.bf16.mxu0 0
      %2939 = vmatmul.mubr.bf16.gmra.mxu0 %v2819
      %v2940 = vpop.f32.mrf.mxu0
      %v2941 = vadd.f32 0.0, %v2940
      %v2942 = vpop.f32.mrf.mxu0
      %v2943 = vpop.f32.mrf.mxu0
      %v2944 = vadd.f32 0.0, %v2943
      %v2945 = vpop.f32.mrf.mxu0
      %2946 = vmatprep.mubr.bf16.mxu0 0
      %2947 = vmatmul.mubr.bf16.gmra.mxu0 %v2822
      %v2948 = vpop.f32.mrf.mxu0
      %v2949 = vadd.f32 0.0, %v2948
      %v2950 = vpop.f32.mrf.mxu0
      %v2951 = vpop.f32.mrf.mxu0
      %v2952 = vadd.f32 0.0, %v2951
      %v2953 = vpop.f32.mrf.mxu0
      %2954 = vmatprep.mubr.bf16.mxu0 0
      %2955 = vmatmul.mubr.bf16.gmra.mxu0 %v2825
      %v2956 = vpop.f32.mrf.mxu0
      %v2957 = vadd.f32 0.0, %v2956
      %v2958 = vpop.f32.mrf.mxu0
      %v2959 = vpop.f32.mrf.mxu0
      %v2960 = vadd.f32 0.0, %v2959
      %v2961 = vpop.f32.mrf.mxu0
      %2962 = vmatprep.mubr.bf16.mxu0 0
      %2963 = vmatmul.mubr.bf16.gmra.mxu0 %v2828
      %v2964 = vpop.f32.mrf.mxu0
      %v2965 = vadd.f32 0.0, %v2964
      %v2966 = vpop.f32.mrf.mxu0
      %v2967 = vpop.f32.mrf.mxu0
      %v2968 = vadd.f32 0.0, %v2967
      %v2969 = vpop.f32.mrf.mxu0
      %2970 = vmatprep.mubr.bf16.mxu0 0
      %2971 = vmatmul.mubr.bf16.gmra.mxu0 %v2831
      %v2972 = vpop.f32.mrf.mxu0
      %v2973 = vadd.f32 0.0, %v2972
      %v2974 = vpop.f32.mrf.mxu0
      %v2975 = vpop.f32.mrf.mxu0
      %v2976 = vadd.f32 0.0, %v2975
      %v2977 = vpop.f32.mrf.mxu0
      %2978 = vmatprep.mubr.bf16.mxu0 0
      %2979 = vmatmul.mubr.bf16.gmra.mxu0 %v2834
      %v2980 = vpop.f32.mrf.mxu0
      %v2981 = vadd.f32 0.0, %v2980
      %v2982 = vpop.f32.mrf.mxu0
      %v2983 = vpop.f32.mrf.mxu0
      %v2984 = vadd.f32 0.0, %v2983
      %v2985 = vpop.f32.mrf.mxu0
      %2986 = vmatprep.mubr.bf16.mxu0 0
      %2987 = vmatmul.mubr.bf16.gmra.mxu0 %v2837
      %v2988 = vpop.f32.mrf.mxu0
      %v2989 = vadd.f32 0.0, %v2988
      %v2990 = vpop.f32.mrf.mxu0
      %v2991 = vpop.f32.mrf.mxu0
      %v2992 = vadd.f32 0.0, %v2991
      %v2993 = vpop.f32.mrf.mxu0
      %2994 = vmatprep.mubr.bf16.mxu0 0
      %2995 = vmatmul.mubr.bf16.gmra.mxu0 %v2840
      %v2996 = vpop.f32.mrf.mxu0
      %v2997 = vadd.f32 0.0, %v2996
      %v2998 = vpop.f32.mrf.mxu0
      %v2999 = vpop.f32.mrf.mxu0
      %v3000 = vadd.f32 0.0, %v2999
      %v3001 = vpop.f32.mrf.mxu0
      %3002 = vmatprep.mubr.bf16.mxu0 0
      %3003 = vmatmul.mubr.bf16.gmra.mxu0 %v2843
      %v3004 = vpop.f32.mrf.mxu0
      %v3005 = vadd.f32 0.0, %v3004
      %v3006 = vpop.f32.mrf.mxu0
      %v3007 = vpop.f32.mrf.mxu0
      %v3008 = vadd.f32 0.0, %v3007
      %v3009 = vpop.f32.mrf.mxu0
      %3010 = vmatprep.mubr.bf16.mxu0 0
      %3011 = vmatmul.mubr.bf16.gmra.mxu0 %v2846
      %v3012 = vpop.f32.mrf.mxu0
      %v3013 = vadd.f32 0.0, %v3012
      %v3014 = vpop.f32.mrf.mxu0
      %v3015 = vpop.f32.mrf.mxu0
      %v3016 = vadd.f32 0.0, %v3015
      %v3017 = vpop.f32.mrf.mxu0
      %3018 = vmatprep.mubr.bf16.mxu0 0
      %3019 = vmatmul.mubr.bf16.gmra.mxu0 %v2849
      %v3020 = vpop.f32.mrf.mxu0
      %v3021 = vadd.f32 0.0, %v3020
      %v3022 = vpop.f32.mrf.mxu0
      %v3023 = vpop.f32.mrf.mxu0
      %v3024 = vadd.f32 0.0, %v3023
      %v3025 = vpop.f32.mrf.mxu0
      %3026 = vmatprep.mubr.bf16.mxu0 0
      %3027 = vmatmul.mubr.bf16.gmra.mxu0 %v2852
      %v3028 = vpop.f32.mrf.mxu0
      %v3029 = vadd.f32 0.0, %v3028
      %v3030 = vpop.f32.mrf.mxu0
      %v3031 = vpop.f32.mrf.mxu0
      %v3032 = vadd.f32 0.0, %v3031
      %v3033 = vpop.f32.mrf.mxu0
      %3034 = vmatprep.mubr.bf16.mxu0 0
      %3035 = vmatmul.mubr.bf16.gmra.mxu0 %v2855
      %v3036 = vpop.f32.mrf.mxu0
      %v3037 = vadd.f32 0.0, %v3036
      %v3038 = vpop.f32.mrf.mxu0
      %v3039 = vpop.f32.mrf.mxu0
      %v3040 = vadd.f32 0.0, %v3039
      %v3041 = vpop.f32.mrf.mxu0
      %3042 = vmatprep.mubr.bf16.mxu0 0
      %3043 = vmatmul.mubr.bf16.gmra.mxu0 %v2858
      %v3044 = vpop.f32.mrf.mxu0
      %v3045 = vadd.f32 0.0, %v3044
      %v3046 = vpop.f32.mrf.mxu0
      %v3047 = vpop.f32.mrf.mxu0
      %v3048 = vadd.f32 0.0, %v3047
      %v3049 = vpop.f32.mrf.mxu0
      %3050 = vmatprep.mubr.bf16.mxu0 0
      %3051 = vmatmul.mubr.bf16.gmra.mxu0 %v2861
      %v3052 = vpop.f32.mrf.mxu0
      %v3053 = vadd.f32 0.0, %v3052
      %v3054 = vpop.f32.mrf.mxu0
      %v3055 = vpop.f32.mrf.mxu0
      %v3056 = vadd.f32 0.0, %v3055
      %v3057 = vpop.f32.mrf.mxu0
      %3058 = vmatprep.mubr.bf16.mxu0 0
      %3059 = vmatmul.mubr.bf16.gmra.mxu0 %v2864
      %v3060 = vpop.f32.mrf.mxu0
      %v3061 = vadd.f32 0.0, %v3060
      %v3062 = vpop.f32.mrf.mxu0
      %v3063 = vpop.f32.mrf.mxu0
      %v3064 = vpop.f32.mrf.mxu0
      %3065 = vdwg.mxu0
      %v3066 = vadd.f32 %v2523, %v2901
      %v3067 = vadd.f32 %v2526, %v2904
      %v3068 = vadd.f32 %v2531, %v2909
      %v3069 = vadd.f32 %v2534, %v2912
      %v3070 = vadd.f32 %v2539, %v2917
      %v3071 = vadd.f32 %v2542, %v2920
      %v3072 = vadd.f32 %v2547, %v2925
      %v3073 = vadd.f32 %v2550, %v2928
      %v3074 = vadd.f32 %v2555, %v2933
      %v3075 = vadd.f32 %v2558, %v2936
      %v3076 = vadd.f32 %v2563, %v2941
      %v3077 = vadd.f32 %v2566, %v2944
      %v3078 = vadd.f32 %v2571, %v2949
      %v3079 = vadd.f32 %v2574, %v2952
      %v3080 = vadd.f32 %v2579, %v2957
      %v3081 = vadd.f32 %v2582, %v2960
      %v3082 = vadd.f32 %v2587, %v2965
      %v3083 = vadd.f32 %v2590, %v2968
      %v3084 = vadd.f32 %v2595, %v2973
      %v3085 = vadd.f32 %v2598, %v2976
      %v3086 = vadd.f32 %v2603, %v2981
      %v3087 = vadd.f32 %v2606, %v2984
      %v3088 = vadd.f32 %v2611, %v2989
      %v3089 = vadd.f32 %v2614, %v2992
      %v3090 = vadd.f32 %v2619, %v2997
      %v3091 = vadd.f32 %v2622, %v3000
      %v3092 = vadd.f32 %v2627, %v3005
      %v3093 = vadd.f32 %v2630, %v3008
      %v3094 = vadd.f32 %v2635, %v3013
      %v3095 = vadd.f32 %v2638, %v3016
      %v3096 = vadd.f32 %v2643, %v3021
      %v3097 = vadd.f32 %v2646, %v3024
      %v3098 = vadd.f32 %v2651, %v3029
      %v3099 = vadd.f32 %v2654, %v3032
      %v3100 = vadd.f32 %v2659, %v3037
      %v3101 = vadd.f32 %v2662, %v3040
      %v3102 = vadd.f32 %v2667, %v3045
      %v3103 = vadd.f32 %v2670, %v3048
      %v3104 = vadd.f32 %v2675, %v3053
      %v3105 = vadd.f32 %v2678, %v3056
      %v3106 = vadd.f32 %v2683, %v3061
      %v3107 = vld [vmem:[#allocation2 + $0xc] sm:$0x8]
      %v3108 = vld [vmem:[#allocation2 + $0x10] sm:$0xf]
      %v3109 = vld [vmem:[#allocation2 + $0x14] sm:$0xf]
      %v3110 = vld [vmem:[#allocation2 + $0x18] sm:$0xf]
      %v3111 = vld [vmem:[#allocation2 + $0x1c] sm:$0xf]
      %v3112 = vld [vmem:[#allocation2 + $0x20] sm:$0xf]
      %v3113 = vld [vmem:[#allocation2 + $0x24] sm:$0xf]
      %v3114 = vld [vmem:[#allocation2 + $0x28] sm:$0xf]
      %v3115 = vld [vmem:[#allocation2 + $0x2c] sm:$0xf]
      %v3116 = vld [vmem:[#allocation2 + $0x30] sm:$0xf]
      %v3117 = vld [vmem:[#allocation2 + $0x34] sm:$0xf]
      %v3118 = vld [vmem:[#allocation2 + $0x38] sm:$0xf]
      %v3119 = vld [vmem:[#allocation2 + $0x3c] sm:$0xf]
      %v3120 = vld [vmem:[#allocation2 + $0x40] sm:$0xf]
      %v3121 = vld [vmem:[#allocation2 + $0x44] sm:$0xf]
      %v3122 = vld [vmem:[#allocation2 + $0x48] sm:$0xf]
      %v3123 = vld [vmem:[#allocation2 + $0x4c] sm:$0xf]
      %v3124 = vld [vmem:[#allocation2 + $0x50] sm:$0xf]
      %v3125 = vld [vmem:[#allocation2 + $0x54] sm:$0xf]
      %v3126 = vld [vmem:[#allocation2 + $0x58] sm:$0xf]
      %v3127 = vld [vmem:[#allocation2 + $0x5c] sm:$0xf]
      %v3128 = vld [vmem:[#allocation2 + $0x60] sm:$0xf]
      %v3129 = vld [vmem:[#allocation2 + $0x64] sm:$0xf]
      %v3130 = vld [vmem:[#allocation2 + $0x68] sm:$0xf]
      %v3131 = vld [vmem:[#allocation2 + $0x6c] sm:$0xf]
      %v3132 = vld [vmem:[#allocation2 + $0x70] sm:$0xf]
      %v3133 = vld [vmem:[#allocation2 + $0x74] sm:$0xf]
      %v3134 = vld [vmem:[#allocation2 + $0x78] sm:$0xf]
      %v3135 = vld [vmem:[#allocation2 + $0x7c] sm:$0xf]
      %v3136 = vld [vmem:[#allocation2 + $0x80] sm:$0xf]
      %v3137 = vld [vmem:[#allocation2 + $0x84] sm:$0xf]
      %v3138 = vld [vmem:[#allocation2 + $0x88] sm:$0xf]
      %v3139 = vld [vmem:[#allocation2 + $0x8c] sm:$0xf]
      %v3140 = vld [vmem:[#allocation2 + $0x90] sm:$0xf]
      %v3141 = vld [vmem:[#allocation2 + $0x94] sm:$0xf]
      %v3142 = vld [vmem:[#allocation2 + $0x98] sm:$0xf]
      %v3143 = vld [vmem:[#allocation2 + $0x9c] sm:$0xf]
      %v3144 = vld [vmem:[#allocation2 + $0xa0] sm:$0xf]
      %v3145 = vld [vmem:[#allocation2 + $0xa4] sm:$0xf]
      %v3146 = vld [vmem:[#allocation2 + $0xa8] sm:$0xf]
      %v3147 = vld [vmem:[#allocation2 + $0xac] sm:$0xf]
      %v3148 = vld [vmem:[#allocation2 + $0xb0] sm:$0x3]
      %s3149 = scalar_lea.vmem %s6, 48
      %v3150 = vld [vmem:[%s3149] sm:$0xf]
      %v3151 = vld [vmem:[%s3149 + $0x4] sm:$0xf]
      %v3152 = vld [vmem:[%s3149 + $0x8] sm:$0xf]
      %v3153 = vld [vmem:[%s3149 + $0xc] sm:$0xf]
      %v3196 = vunpack.c.l.b16 %v3107
      %v3197 = vunpack.c.l.b16 %v3108
      %v3198 = vunpack.c.l.b16 %v3109
      %v3199 = vunpack.c.l.b16 %v3110
      %v3200 = vunpack.c.l.b16 %v3111
      %v3201 = vunpack.c.l.b16 %v3112
      %v3202 = vunpack.c.l.b16 %v3113
      %v3203 = vunpack.c.l.b16 %v3114
      %v3204 = vunpack.c.l.b16 %v3115
      %v3205 = vunpack.c.l.b16 %v3116
      %v3206 = vunpack.c.l.b16 %v3117
      %v3207 = vunpack.c.l.b16 %v3118
      %v3208 = vunpack.c.l.b16 %v3119
      %v3209 = vunpack.c.l.b16 %v3120
      %v3210 = vunpack.c.l.b16 %v3121
      %v3211 = vunpack.c.l.b16 %v3122
      %v3212 = vunpack.c.l.b16 %v3123
      %v3213 = vunpack.c.l.b16 %v3124
      %v3214 = vunpack.c.l.b16 %v3125
      %v3215 = vunpack.c.l.b16 %v3126
      %v3216 = vunpack.c.l.b16 %v3127
      %v3217 = vunpack.c.l.b16 %v3128
      %v3218 = vunpack.c.l.b16 %v3129
      %v3219 = vunpack.c.l.b16 %v3130
      %v3220 = vunpack.c.l.b16 %v3131
      %v3221 = vunpack.c.l.b16 %v3132
      %v3222 = vunpack.c.l.b16 %v3133
      %v3223 = vunpack.c.l.b16 %v3134
      %v3224 = vunpack.c.l.b16 %v3135
      %v3225 = vunpack.c.l.b16 %v3136
      %v3226 = vunpack.c.l.b16 %v3137
      %v3227 = vunpack.c.l.b16 %v3138
      %v3228 = vunpack.c.l.b16 %v3139
      %v3229 = vunpack.c.l.b16 %v3140
      %v3230 = vunpack.c.l.b16 %v3141
      %v3231 = vunpack.c.l.b16 %v3142
      %v3232 = vunpack.c.l.b16 %v3143
      %v3233 = vunpack.c.l.b16 %v3144
      %v3234 = vunpack.c.l.b16 %v3145
      %v3235 = vunpack.c.l.b16 %v3146
      %v3236 = vunpack.c.l.b16 %v3147
      %v3237 = vunpack.c.l.b16 %v3148
      %v3238 = vpack.c.b16 %v3197, %v3196
      %v3239 = vpack.c.b16 %v3199, %v3198
      %v3240 = vpack.c.b16 %v3201, %v3200
      %v3241 = vpack.c.b16 %v3203, %v3202
      %v3242 = vpack.c.b16 %v3205, %v3204
      %v3243 = vpack.c.b16 %v3207, %v3206
      %v3244 = vpack.c.b16 %v3209, %v3208
      %v3245 = vpack.c.b16 %v3211, %v3210
      %v3246 = vpack.c.b16 %v3213, %v3212
      %v3247 = vpack.c.b16 %v3215, %v3214
      %v3248 = vpack.c.b16 %v3217, %v3216
      %v3249 = vpack.c.b16 %v3219, %v3218
      %v3250 = vpack.c.b16 %v3221, %v3220
      %v3251 = vpack.c.b16 %v3223, %v3222
      %v3252 = vpack.c.b16 %v3225, %v3224
      %v3253 = vpack.c.b16 %v3227, %v3226
      %v3254 = vpack.c.b16 %v3229, %v3228
      %v3255 = vpack.c.b16 %v3231, %v3230
      %v3256 = vpack.c.b16 %v3233, %v3232
      %v3257 = vpack.c.b16 %v3235, %v3234
      %v3258 = vpack.c.b16 %v3237, %v3236
      %v3260 = vshrl.u32 %v3238, 16
      %v3262 = vrot.slane %v3260, 3
      %v3263 = vshll.u32 %v3238, 16
      %v3265 = vrot.slane %v3263, 4
      %v3266 = vor.u32 %v3262, %v3265
      %v3268 = vshrl.u32 %v3239, 16
      %v3270 = vrot.slane %v3268, 3
      %v3271 = vshll.u32 %v3239, 16
      %v3273 = vrot.slane %v3271, 4
      %v3274 = vor.u32 %v3270, %v3273
      %v3275 = vsel %vm2697, %v3266, %v3274
      %v3277 = vshrl.u32 %v3240, 16
      %v3279 = vrot.slane %v3277, 3
      %v3280 = vshll.u32 %v3240, 16
      %v3282 = vrot.slane %v3280, 4
      %v3283 = vor.u32 %v3279, %v3282
      %v3284 = vsel %vm2697, %v3274, %v3283
      %v3286 = vshrl.u32 %v3241, 16
      %v3288 = vrot.slane %v3286, 3
      %v3289 = vshll.u32 %v3241, 16
      %v3291 = vrot.slane %v3289, 4
      %v3292 = vor.u32 %v3288, %v3291
      %v3293 = vsel %vm2697, %v3283, %v3292
      %v3295 = vshrl.u32 %v3242, 16
      %v3297 = vrot.slane %v3295, 3
      %v3298 = vshll.u32 %v3242, 16
      %v3300 = vrot.slane %v3298, 4
      %v3301 = vor.u32 %v3297, %v3300
      %v3302 = vsel %vm2697, %v3292, %v3301
      %v3304 = vshrl.u32 %v3243, 16
      %v3306 = vrot.slane %v3304, 3
      %v3307 = vshll.u32 %v3243, 16
      %v3309 = vrot.slane %v3307, 4
      %v3310 = vor.u32 %v3306, %v3309
      %v3311 = vsel %vm2697, %v3301, %v3310
      %v3313 = vshrl.u32 %v3244, 16
      %v3315 = vrot.slane %v3313, 3
      %v3316 = vshll.u32 %v3244, 16
      %v3318 = vrot.slane %v3316, 4
      %v3319 = vor.u32 %v3315, %v3318
      %v3320 = vsel %vm2697, %v3310, %v3319
      %v3322 = vshrl.u32 %v3245, 16
      %v3324 = vrot.slane %v3322, 3
      %v3325 = vshll.u32 %v3245, 16
      %v3327 = vrot.slane %v3325, 4
      %v3328 = vor.u32 %v3324, %v3327
      %v3329 = vsel %vm2697, %v3319, %v3328
      %v3331 = vshrl.u32 %v3246, 16
      %v3333 = vrot.slane %v3331, 3
      %v3334 = vshll.u32 %v3246, 16
      %v3336 = vrot.slane %v3334, 4
      %v3337 = vor.u32 %v3333, %v3336
      %v3338 = vsel %vm2697, %v3328, %v3337
      %v3340 = vshrl.u32 %v3247, 16
      %v3342 = vrot.slane %v3340, 3
      %v3343 = vshll.u32 %v3247, 16
      %v3345 = vrot.slane %v3343, 4
      %v3346 = vor.u32 %v3342, %v3345
      %v3347 = vsel %vm2697, %v3337, %v3346
      %v3349 = vshrl.u32 %v3248, 16
      %v3351 = vrot.slane %v3349, 3
      %v3352 = vshll.u32 %v3248, 16
      %v3354 = vrot.slane %v3352, 4
      %v3355 = vor.u32 %v3351, %v3354
      %v3356 = vsel %vm2697, %v3346, %v3355
      %v3358 = vshrl.u32 %v3249, 16
      %v3360 = vrot.slane %v3358, 3
      %v3361 = vshll.u32 %v3249, 16
      %v3363 = vrot.slane %v3361, 4
      %v3364 = vor.u32 %v3360, %v3363
      %v3365 = vsel %vm2697, %v3355, %v3364
      %v3367 = vshrl.u32 %v3250, 16
      %v3369 = vrot.slane %v3367, 3
      %v3370 = vshll.u32 %v3250, 16
      %v3372 = vrot.slane %v3370, 4
      %v3373 = vor.u32 %v3369, %v3372
      %v3374 = vsel %vm2697, %v3364, %v3373
      %v3376 = vshrl.u32 %v3251, 16
      %v3378 = vrot.slane %v3376, 3
      %v3379 = vshll.u32 %v3251, 16
      %v3381 = vrot.slane %v3379, 4
      %v3382 = vor.u32 %v3378, %v3381
      %v3383 = vsel %vm2697, %v3373, %v3382
      %v3385 = vshrl.u32 %v3252, 16
      %v3387 = vrot.slane %v3385, 3
      %v3388 = vshll.u32 %v3252, 16
      %v3390 = vrot.slane %v3388, 4
      %v3391 = vor.u32 %v3387, %v3390
      %v3392 = vsel %vm2697, %v3382, %v3391
      %v3394 = vshrl.u32 %v3253, 16
      %v3396 = vrot.slane %v3394, 3
      %v3397 = vshll.u32 %v3253, 16
      %v3399 = vrot.slane %v3397, 4
      %v3400 = vor.u32 %v3396, %v3399
      %v3401 = vsel %vm2697, %v3391, %v3400
      %v3403 = vshrl.u32 %v3254, 16
      %v3405 = vrot.slane %v3403, 3
      %v3406 = vshll.u32 %v3254, 16
      %v3408 = vrot.slane %v3406, 4
      %v3409 = vor.u32 %v3405, %v3408
      %v3410 = vsel %vm2697, %v3400, %v3409
      %v3412 = vshrl.u32 %v3255, 16
      %v3414 = vrot.slane %v3412, 3
      %v3415 = vshll.u32 %v3255, 16
      %v3417 = vrot.slane %v3415, 4
      %v3418 = vor.u32 %v3414, %v3417
      %v3419 = vsel %vm2697, %v3409, %v3418
      %v3421 = vshrl.u32 %v3256, 16
      %v3423 = vrot.slane %v3421, 3
      %v3424 = vshll.u32 %v3256, 16
      %v3426 = vrot.slane %v3424, 4
      %v3427 = vor.u32 %v3423, %v3426
      %v3428 = vsel %vm2697, %v3418, %v3427
      %v3430 = vshrl.u32 %v3257, 16
      %v3432 = vrot.slane %v3430, 3
      %v3433 = vshll.u32 %v3257, 16
      %v3435 = vrot.slane %v3433, 4
      %v3436 = vor.u32 %v3432, %v3435
      %v3437 = vsel %vm2697, %v3427, %v3436
      %v3439 = vshrl.u32 %v3258, 16
      %v3441 = vrot.slane %v3439, 3
      %v3442 = vshll.u32 %v3258, 16
      %v3444 = vrot.slane %v3442, 4
      %v3445 = vor.u32 %v3441, %v3444
      %v3446 = vsel %vm2697, %v3436, %v3445
      %v3451 = vunpack.c.l.b16 %v3150
      %v3452 = vunpack.c.l.b16 %v3151
      %v3453 = vunpack.c.l.b16 %v3152
      %v3454 = vunpack.c.l.b16 %v3153
      %v3455 = vpack.c.b16 %v3452, %v3451
      %v3456 = vpack.c.b16 %v3454, %v3453
      %v3460 = vsel %vm940, %v3275, 0
      %v3463 = vsel %vm940, %v3284, 0
      %v3466 = vsel %vm940, %v3293, 0
      %v3469 = vsel %vm940, %v3302, 0
      %v3472 = vsel %vm940, %v3311, 0
      %v3475 = vsel %vm940, %v3320, 0
      %v3478 = vsel %vm940, %v3329, 0
      %v3481 = vsel %vm940, %v3338, 0
      %v3484 = vsel %vm940, %v3347, 0
      %v3487 = vsel %vm940, %v3356, 0
      %v3490 = vsel %vm940, %v3365, 0
      %v3493 = vsel %vm940, %v3374, 0
      %v3496 = vsel %vm940, %v3383, 0
      %v3499 = vsel %vm940, %v3392, 0
      %v3502 = vsel %vm940, %v3401, 0
      %v3505 = vsel %vm940, %v3410, 0
      %v3508 = vsel %vm940, %v3419, 0
      %v3511 = vsel %vm940, %v3428, 0
      %v3514 = vsel %vm940, %v3437, 0
      %v3517 = vsel %vm940, %v3446, 0
      %v3520 = vsel %vm940, %v3445, 0
      %3522 = vmatprep.subr.bf16.mxu0 0
      %3523 = vmatpush1.bf16.msra.mxu0 0
      %3524 = vmatprep.subr.bf16.mxu0 0
      %3525 = vmatpush1.bf16.msra.mxu0 0
      %3526 = vmatprep.subr.bf16.mxu0 0
      %3527 = vmatpush1.bf16.msra.mxu0 0
      %3528 = vmatprep.subr.bf16.mxu0 0
      %3529 = vmatpush1.bf16.msra.mxu0 0
      %3530 = vmatprep.subr.bf16.mxu0 0
      %3531 = vmatpush1.bf16.msra.mxu0 0
      %3532 = vmatprep.subr.bf16.mxu0 0
      %3533 = vmatpush1.bf16.msra.mxu0 0
      %3534 = vmatprep.subr.bf16.mxu0 0
      %3535 = vmatpush1.bf16.msra.mxu0 %v3456
      %3536 = vmatprep.subr.bf16.mxu0 0
      %3537 = vmatpush1.bf16.msra.mxu0 %v3455
      %3538 = vmatprep.subr.bf16.mxu0 0
      %3539 = vmatpush2.bf16.msra.mxu0 0
      %3540 = vmatprep.subr.bf16.mxu0 0
      %3541 = vmatpush2.bf16.msra.mxu0 0
      %3542 = vmatprep.subr.bf16.mxu0 0
      %3543 = vmatpush2.bf16.msra.mxu0 0
      %3544 = vmatprep.subr.bf16.mxu0 0
      %3545 = vmatpush2.bf16.msra.mxu0 0
      %3546 = vmatprep.subr.bf16.mxu0 0
      %3547 = vmatpush2.bf16.msra.mxu0 0
      %3548 = vmatprep.subr.bf16.mxu0 0
      %3549 = vmatpush2.bf16.msra.mxu0 0
      %3550 = vmatprep.subr.bf16.mxu0 0
      %3551 = vmatpush2.bf16.msra.mxu0 0
      %3552 = vmatprep.subr.bf16.mxu0 0
      %3553 = vmatpush2.bf16.msra.mxu0 0
      %3554 = vmatprep.mubr.bf16.mxu0 0
      %3555 = vmatmul.mubr.bf16.gmra.mxu0 %v3460
      %v3556 = vpop.f32.mrf.mxu0
      %v3557 = vadd.f32 0.0, %v3556
      %v3558 = vpop.f32.mrf.mxu0
      %v3559 = vpop.f32.mrf.mxu0
      %v3560 = vadd.f32 0.0, %v3559
      %v3561 = vpop.f32.mrf.mxu0
      %3562 = vmatprep.mubr.bf16.mxu0 0
      %3563 = vmatmul.mubr.bf16.gmra.mxu0 %v3463
      %v3564 = vpop.f32.mrf.mxu0
      %v3565 = vadd.f32 0.0, %v3564
      %v3566 = vpop.f32.mrf.mxu0
      %v3567 = vpop.f32.mrf.mxu0
      %v3568 = vadd.f32 0.0, %v3567
      %v3569 = vpop.f32.mrf.mxu0
      %3570 = vmatprep.mubr.bf16.mxu0 0
      %3571 = vmatmul.mubr.bf16.gmra.mxu0 %v3466
      %v3572 = vpop.f32.mrf.mxu0
      %v3573 = vadd.f32 0.0, %v3572
      %v3574 = vpop.f32.mrf.mxu0
      %v3575 = vpop.f32.mrf.mxu0
      %v3576 = vadd.f32 0.0, %v3575
      %v3577 = vpop.f32.mrf.mxu0
      %3578 = vmatprep.mubr.bf16.mxu0 0
      %3579 = vmatmul.mubr.bf16.gmra.mxu0 %v3469
      %v3580 = vpop.f32.mrf.mxu0
      %v3581 = vadd.f32 0.0, %v3580
      %v3582 = vpop.f32.mrf.mxu0
      %v3583 = vpop.f32.mrf.mxu0
      %v3584 = vadd.f32 0.0, %v3583
      %v3585 = vpop.f32.mrf.mxu0
      %3586 = vmatprep.mubr.bf16.mxu0 0
      %3587 = vmatmul.mubr.bf16.gmra.mxu0 %v3472
      %v3588 = vpop.f32.mrf.mxu0
      %v3589 = vadd.f32 0.0, %v3588
      %v3590 = vpop.f32.mrf.mxu0
      %v3591 = vpop.f32.mrf.mxu0
      %v3592 = vadd.f32 0.0, %v3591
      %v3593 = vpop.f32.mrf.mxu0
      %3594 = vmatprep.mubr.bf16.mxu0 0
      %3595 = vmatmul.mubr.bf16.gmra.mxu0 %v3475
      %v3596 = vpop.f32.mrf.mxu0
      %v3597 = vadd.f32 0.0, %v3596
      %v3598 = vpop.f32.mrf.mxu0
      %v3599 = vpop.f32.mrf.mxu0
      %v3600 = vadd.f32 0.0, %v3599
      %v3601 = vpop.f32.mrf.mxu0
      %3602 = vmatprep.mubr.bf16.mxu0 0
      %3603 = vmatmul.mubr.bf16.gmra.mxu0 %v3478
      %v3604 = vpop.f32.mrf.mxu0
      %v3605 = vadd.f32 0.0, %v3604
      %v3606 = vpop.f32.mrf.mxu0
      %v3607 = vpop.f32.mrf.mxu0
      %v3608 = vadd.f32 0.0, %v3607
      %v3609 = vpop.f32.mrf.mxu0
      %3610 = vmatprep.mubr.bf16.mxu0 0
      %3611 = vmatmul.mubr.bf16.gmra.mxu0 %v3481
      %v3612 = vpop.f32.mrf.mxu0
      %v3613 = vadd.f32 0.0, %v3612
      %v3614 = vpop.f32.mrf.mxu0
      %v3615 = vpop.f32.mrf.mxu0
      %v3616 = vadd.f32 0.0, %v3615
      %v3617 = vpop.f32.mrf.mxu0
      %3618 = vmatprep.mubr.bf16.mxu0 0
      %3619 = vmatmul.mubr.bf16.gmra.mxu0 %v3484
      %v3620 = vpop.f32.mrf.mxu0
      %v3621 = vadd.f32 0.0, %v3620
      %v3622 = vpop.f32.mrf.mxu0
      %v3623 = vpop.f32.mrf.mxu0
      %v3624 = vadd.f32 0.0, %v3623
      %v3625 = vpop.f32.mrf.mxu0
      %3626 = vmatprep.mubr.bf16.mxu0 0
      %3627 = vmatmul.mubr.bf16.gmra.mxu0 %v3487
      %v3628 = vpop.f32.mrf.mxu0
      %v3629 = vadd.f32 0.0, %v3628
      %v3630 = vpop.f32.mrf.mxu0
      %v3631 = vpop.f32.mrf.mxu0
      %v3632 = vadd.f32 0.0, %v3631
      %v3633 = vpop.f32.mrf.mxu0
      %3634 = vmatprep.mubr.bf16.mxu0 0
      %3635 = vmatmul.mubr.bf16.gmra.mxu0 %v3490
      %v3636 = vpop.f32.mrf.mxu0
      %v3637 = vadd.f32 0.0, %v3636
      %v3638 = vpop.f32.mrf.mxu0
      %v3639 = vpop.f32.mrf.mxu0
      %v3640 = vadd.f32 0.0, %v3639
      %v3641 = vpop.f32.mrf.mxu0
      %3642 = vmatprep.mubr.bf16.mxu0 0
      %3643 = vmatmul.mubr.bf16.gmra.mxu0 %v3493
      %v3644 = vpop.f32.mrf.mxu0
      %v3645 = vadd.f32 0.0, %v3644
      %v3646 = vpop.f32.mrf.mxu0
      %v3647 = vpop.f32.mrf.mxu0
      %v3648 = vadd.f32 0.0, %v3647
      %v3649 = vpop.f32.mrf.mxu0
      %3650 = vmatprep.mubr.bf16.mxu0 0
      %3651 = vmatmul.mubr.bf16.gmra.mxu0 %v3496
      %v3652 = vpop.f32.mrf.mxu0
      %v3653 = vadd.f32 0.0, %v3652
      %v3654 = vpop.f32.mrf.mxu0
      %v3655 = vpop.f32.mrf.mxu0
      %v3656 = vadd.f32 0.0, %v3655
      %v3657 = vpop.f32.mrf.mxu0
      %3658 = vmatprep.mubr.bf16.mxu0 0
      %3659 = vmatmul.mubr.bf16.gmra.mxu0 %v3499
      %v3660 = vpop.f32.mrf.mxu0
      %v3661 = vadd.f32 0.0, %v3660
      %v3662 = vpop.f32.mrf.mxu0
      %v3663 = vpop.f32.mrf.mxu0
      %v3664 = vadd.f32 0.0, %v3663
      %v3665 = vpop.f32.mrf.mxu0
      %3666 = vmatprep.mubr.bf16.mxu0 0
      %3667 = vmatmul.mubr.bf16.gmra.mxu0 %v3502
      %v3668 = vpop.f32.mrf.mxu0
      %v3669 = vadd.f32 0.0, %v3668
      %v3670 = vpop.f32.mrf.mxu0
      %v3671 = vpop.f32.mrf.mxu0
      %v3672 = vadd.f32 0.0, %v3671
      %v3673 = vpop.f32.mrf.mxu0
      %3674 = vmatprep.mubr.bf16.mxu0 0
      %3675 = vmatmul.mubr.bf16.gmra.mxu0 %v3505
      %v3676 = vpop.f32.mrf.mxu0
      %v3677 = vadd.f32 0.0, %v3676
      %v3678 = vpop.f32.mrf.mxu0
      %v3679 = vpop.f32.mrf.mxu0
      %v3680 = vadd.f32 0.0, %v3679
      %v3681 = vpop.f32.mrf.mxu0
      %3682 = vmatprep.mubr.bf16.mxu0 0
      %3683 = vmatmul.mubr.bf16.gmra.mxu0 %v3508
      %v3684 = vpop.f32.mrf.mxu0
      %v3685 = vadd.f32 0.0, %v3684
      %v3686 = vpop.f32.mrf.mxu0
      %v3687 = vpop.f32.mrf.mxu0
      %v3688 = vadd.f32 0.0, %v3687
      %v3689 = vpop.f32.mrf.mxu0
      %3690 = vmatprep.mubr.bf16.mxu0 0
      %3691 = vmatmul.mubr.bf16.gmra.mxu0 %v3511
      %v3692 = vpop.f32.mrf.mxu0
      %v3693 = vadd.f32 0.0, %v3692
      %v3694 = vpop.f32.mrf.mxu0
      %v3695 = vpop.f32.mrf.mxu0
      %v3696 = vadd.f32 0.0, %v3695
      %v3697 = vpop.f32.mrf.mxu0
      %3698 = vmatprep.mubr.bf16.mxu0 0
      %3699 = vmatmul.mubr.bf16.gmra.mxu0 %v3514
      %v3700 = vpop.f32.mrf.mxu0
      %v3701 = vadd.f32 0.0, %v3700
      %v3702 = vpop.f32.mrf.mxu0
      %v3703 = vpop.f32.mrf.mxu0
      %v3704 = vadd.f32 0.0, %v3703
      %v3705 = vpop.f32.mrf.mxu0
      %3706 = vmatprep.mubr.bf16.mxu0 0
      %3707 = vmatmul.mubr.bf16.gmra.mxu0 %v3517
      %v3708 = vpop.f32.mrf.mxu0
      %v3709 = vadd.f32 0.0, %v3708
      %v3710 = vpop.f32.mrf.mxu0
      %v3711 = vpop.f32.mrf.mxu0
      %v3712 = vadd.f32 0.0, %v3711
      %v3713 = vpop.f32.mrf.mxu0
      %3714 = vmatprep.mubr.bf16.mxu0 0
      %3715 = vmatmul.mubr.bf16.gmra.mxu0 %v3520
      %v3716 = vpop.f32.mrf.mxu0
      %v3717 = vadd.f32 0.0, %v3716
      %v3718 = vpop.f32.mrf.mxu0
      %v3719 = vpop.f32.mrf.mxu0
      %v3720 = vpop.f32.mrf.mxu0
      %3721 = vdwg.mxu0
      %v3722 = vadd.f32 %v3066, %v3557
      %v3723 = vadd.f32 %v3067, %v3560
      %v3724 = vadd.f32 %v3068, %v3565
      %v3725 = vadd.f32 %v3069, %v3568
      %v3726 = vadd.f32 %v3070, %v3573
      %v3727 = vadd.f32 %v3071, %v3576
      %v3728 = vadd.f32 %v3072, %v3581
      %v3729 = vadd.f32 %v3073, %v3584
      %v3730 = vadd.f32 %v3074, %v3589
      %v3731 = vadd.f32 %v3075, %v3592
      %v3732 = vadd.f32 %v3076, %v3597
      %v3733 = vadd.f32 %v3077, %v3600
      %v3734 = vadd.f32 %v3078, %v3605
      %v3735 = vadd.f32 %v3079, %v3608
      %v3736 = vadd.f32 %v3080, %v3613
      %v3737 = vadd.f32 %v3081, %v3616
      %v3738 = vadd.f32 %v3082, %v3621
      %v3739 = vadd.f32 %v3083, %v3624
      %v3740 = vadd.f32 %v3084, %v3629
      %v3741 = vadd.f32 %v3085, %v3632
      %v3742 = vadd.f32 %v3086, %v3637
      %v3743 = vadd.f32 %v3087, %v3640
      %v3744 = vadd.f32 %v3088, %v3645
      %v3745 = vadd.f32 %v3089, %v3648
      %v3746 = vadd.f32 %v3090, %v3653
      %v3747 = vadd.f32 %v3091, %v3656
      %v3748 = vadd.f32 %v3092, %v3661
      %v3749 = vadd.f32 %v3093, %v3664
      %v3750 = vadd.f32 %v3094, %v3669
      %v3751 = vadd.f32 %v3095, %v3672
      %v3752 = vadd.f32 %v3096, %v3677
      %v3753 = vadd.f32 %v3097, %v3680
      %v3754 = vadd.f32 %v3098, %v3685
      %v3755 = vadd.f32 %v3099, %v3688
      %v3756 = vadd.f32 %v3100, %v3693
      %v3757 = vadd.f32 %v3101, %v3696
      %v3758 = vadd.f32 %v3102, %v3701
      %v3759 = vadd.f32 %v3103, %v3704
      %v3760 = vadd.f32 %v3104, %v3709
      %v3761 = vadd.f32 %v3105, %v3712
      %v3762 = vadd.f32 %v3106, %v3717
      %s3763 = scalar_lea.vmem %s6, 64
      %v3764 = vld [vmem:[%s3763] sm:$0xf]
      %v3765 = vld [vmem:[%s3763 + $0x4] sm:$0xf]
      %v3766 = vld [vmem:[%s3763 + $0x8] sm:$0xf]
      %v3767 = vld [vmem:[%s3763 + $0xc] sm:$0xf]
      %v3768 = vpack.c.b16 %v3198, %v3197
      %v3769 = vpack.c.b16 %v3200, %v3199
      %v3770 = vpack.c.b16 %v3202, %v3201
      %v3771 = vpack.c.b16 %v3204, %v3203
      %v3772 = vpack.c.b16 %v3206, %v3205
      %v3773 = vpack.c.b16 %v3208, %v3207
      %v3774 = vpack.c.b16 %v3210, %v3209
      %v3775 = vpack.c.b16 %v3212, %v3211
      %v3776 = vpack.c.b16 %v3214, %v3213
      %v3777 = vpack.c.b16 %v3216, %v3215
      %v3778 = vpack.c.b16 %v3218, %v3217
      %v3779 = vpack.c.b16 %v3220, %v3219
      %v3780 = vpack.c.b16 %v3222, %v3221
      %v3781 = vpack.c.b16 %v3224, %v3223
      %v3782 = vpack.c.b16 %v3226, %v3225
      %v3783 = vpack.c.b16 %v3228, %v3227
      %v3784 = vpack.c.b16 %v3230, %v3229
      %v3785 = vpack.c.b16 %v3232, %v3231
      %v3786 = vpack.c.b16 %v3234, %v3233
      %v3787 = vpack.c.b16 %v3236, %v3235
      %v3788 = vpack.c.b16 %v3237, %v3237
      %v3793 = vunpack.c.l.b16 %v3764
      %v3794 = vunpack.c.l.b16 %v3765
      %v3795 = vunpack.c.l.b16 %v3766
      %v3796 = vunpack.c.l.b16 %v3767
      %v3797 = vpack.c.b16 %v3794, %v3793
      %v3798 = vpack.c.b16 %v3796, %v3795
      %v3802 = vsel %vm940, %v3768, 0
      %v3805 = vsel %vm940, %v3769, 0
      %v3808 = vsel %vm940, %v3770, 0
      %v3811 = vsel %vm940, %v3771, 0
      %v3814 = vsel %vm940, %v3772, 0
      %v3817 = vsel %vm940, %v3773, 0
      %v3820 = vsel %vm940, %v3774, 0
      %v3823 = vsel %vm940, %v3775, 0
      %v3826 = vsel %vm940, %v3776, 0
      %v3829 = vsel %vm940, %v3777, 0
      %v3832 = vsel %vm940, %v3778, 0
      %v3835 = vsel %vm940, %v3779, 0
      %v3838 = vsel %vm940, %v3780, 0
      %v3841 = vsel %vm940, %v3781, 0
      %v3844 = vsel %vm940, %v3782, 0
      %v3847 = vsel %vm940, %v3783, 0
      %v3850 = vsel %vm940, %v3784, 0
      %v3853 = vsel %vm940, %v3785, 0
      %v3856 = vsel %vm940, %v3786, 0
      %v3859 = vsel %vm940, %v3787, 0
      %v3862 = vsel %vm940, %v3788, 0
      %3864 = vmatprep.subr.bf16.mxu0 0
      %3865 = vmatpush1.bf16.msra.mxu0 0
      %3866 = vmatprep.subr.bf16.mxu0 0
      %3867 = vmatpush1.bf16.msra.mxu0 0
      %3868 = vmatprep.subr.bf16.mxu0 0
      %3869 = vmatpush1.bf16.msra.mxu0 0
      %3870 = vmatprep.subr.bf16.mxu0 0
      %3871 = vmatpush1.bf16.msra.mxu0 0
      %3872 = vmatprep.subr.bf16.mxu0 0
      %3873 = vmatpush1.bf16.msra.mxu0 0
      %3874 = vmatprep.subr.bf16.mxu0 0
      %3875 = vmatpush1.bf16.msra.mxu0 0
      %3876 = vmatprep.subr.bf16.mxu0 0
      %3877 = vmatpush1.bf16.msra.mxu0 %v3798
      %3878 = vmatprep.subr.bf16.mxu0 0
      %3879 = vmatpush1.bf16.msra.mxu0 %v3797
      %3880 = vmatprep.subr.bf16.mxu0 0
      %3881 = vmatpush2.bf16.msra.mxu0 0
      %3882 = vmatprep.subr.bf16.mxu0 0
      %3883 = vmatpush2.bf16.msra.mxu0 0
      %3884 = vmatprep.subr.bf16.mxu0 0
      %3885 = vmatpush2.bf16.msra.mxu0 0
      %3886 = vmatprep.subr.bf16.mxu0 0
      %3887 = vmatpush2.bf16.msra.mxu0 0
      %3888 = vmatprep.subr.bf16.mxu0 0
      %3889 = vmatpush2.bf16.msra.mxu0 0
      %3890 = vmatprep.subr.bf16.mxu0 0
      %3891 = vmatpush2.bf16.msra.mxu0 0
      %3892 = vmatprep.subr.bf16.mxu0 0
      %3893 = vmatpush2.bf16.msra.mxu0 0
      %3894 = vmatprep.subr.bf16.mxu0 0
      %3895 = vmatpush2.bf16.msra.mxu0 0
      %3896 = vmatprep.mubr.bf16.mxu0 0
      %3897 = vmatmul.mubr.bf16.gmra.mxu0 %v3802
      %v3898 = vpop.f32.mrf.mxu0
      %v3899 = vadd.f32 0.0, %v3898
      %v3900 = vpop.f32.mrf.mxu0
      %v3901 = vpop.f32.mrf.mxu0
      %v3902 = vadd.f32 0.0, %v3901
      %v3903 = vpop.f32.mrf.mxu0
      %3904 = vmatprep.mubr.bf16.mxu0 0
      %3905 = vmatmul.mubr.bf16.gmra.mxu0 %v3805
      %v3906 = vpop.f32.mrf.mxu0
      %v3907 = vadd.f32 0.0, %v3906
      %v3908 = vpop.f32.mrf.mxu0
      %v3909 = vpop.f32.mrf.mxu0
      %v3910 = vadd.f32 0.0, %v3909
      %v3911 = vpop.f32.mrf.mxu0
      %3912 = vmatprep.mubr.bf16.mxu0 0
      %3913 = vmatmul.mubr.bf16.gmra.mxu0 %v3808
      %v3914 = vpop.f32.mrf.mxu0
      %v3915 = vadd.f32 0.0, %v3914
      %v3916 = vpop.f32.mrf.mxu0
      %v3917 = vpop.f32.mrf.mxu0
      %v3918 = vadd.f32 0.0, %v3917
      %v3919 = vpop.f32.mrf.mxu0
      %3920 = vmatprep.mubr.bf16.mxu0 0
      %3921 = vmatmul.mubr.bf16.gmra.mxu0 %v3811
      %v3922 = vpop.f32.mrf.mxu0
      %v3923 = vadd.f32 0.0, %v3922
      %v3924 = vpop.f32.mrf.mxu0
      %v3925 = vpop.f32.mrf.mxu0
      %v3926 = vadd.f32 0.0, %v3925
      %v3927 = vpop.f32.mrf.mxu0
      %3928 = vmatprep.mubr.bf16.mxu0 0
      %3929 = vmatmul.mubr.bf16.gmra.mxu0 %v3814
      %v3930 = vpop.f32.mrf.mxu0
      %v3931 = vadd.f32 0.0, %v3930
      %v3932 = vpop.f32.mrf.mxu0
      %v3933 = vpop.f32.mrf.mxu0
      %v3934 = vadd.f32 0.0, %v3933
      %v3935 = vpop.f32.mrf.mxu0
      %3936 = vmatprep.mubr.bf16.mxu0 0
      %3937 = vmatmul.mubr.bf16.gmra.mxu0 %v3817
      %v3938 = vpop.f32.mrf.mxu0
      %v3939 = vadd.f32 0.0, %v3938
      %v3940 = vpop.f32.mrf.mxu0
      %v3941 = vpop.f32.mrf.mxu0
      %v3942 = vadd.f32 0.0, %v3941
      %v3943 = vpop.f32.mrf.mxu0
      %3944 = vmatprep.mubr.bf16.mxu0 0
      %3945 = vmatmul.mubr.bf16.gmra.mxu0 %v3820
      %v3946 = vpop.f32.mrf.mxu0
      %v3947 = vadd.f32 0.0, %v3946
      %v3948 = vpop.f32.mrf.mxu0
      %v3949 = vpop.f32.mrf.mxu0
      %v3950 = vadd.f32 0.0, %v3949
      %v3951 = vpop.f32.mrf.mxu0
      %3952 = vmatprep.mubr.bf16.mxu0 0
      %3953 = vmatmul.mubr.bf16.gmra.mxu0 %v3823
      %v3954 = vpop.f32.mrf.mxu0
      %v3955 = vadd.f32 0.0, %v3954
      %v3956 = vpop.f32.mrf.mxu0
      %v3957 = vpop.f32.mrf.mxu0
      %v3958 = vadd.f32 0.0, %v3957
      %v3959 = vpop.f32.mrf.mxu0
      %3960 = vmatprep.mubr.bf16.mxu0 0
      %3961 = vmatmul.mubr.bf16.gmra.mxu0 %v3826
      %v3962 = vpop.f32.mrf.mxu0
      %v3963 = vadd.f32 0.0, %v3962
      %v3964 = vpop.f32.mrf.mxu0
      %v3965 = vpop.f32.mrf.mxu0
      %v3966 = vadd.f32 0.0, %v3965
      %v3967 = vpop.f32.mrf.mxu0
      %3968 = vmatprep.mubr.bf16.mxu0 0
      %3969 = vmatmul.mubr.bf16.gmra.mxu0 %v3829
      %v3970 = vpop.f32.mrf.mxu0
      %v3971 = vadd.f32 0.0, %v3970
      %v3972 = vpop.f32.mrf.mxu0
      %v3973 = vpop.f32.mrf.mxu0
      %v3974 = vadd.f32 0.0, %v3973
      %v3975 = vpop.f32.mrf.mxu0
      %3976 = vmatprep.mubr.bf16.mxu0 0
      %3977 = vmatmul.mubr.bf16.gmra.mxu0 %v3832
      %v3978 = vpop.f32.mrf.mxu0
      %v3979 = vadd.f32 0.0, %v3978
      %v3980 = vpop.f32.mrf.mxu0
      %v3981 = vpop.f32.mrf.mxu0
      %v3982 = vadd.f32 0.0, %v3981
      %v3983 = vpop.f32.mrf.mxu0
      %3984 = vmatprep.mubr.bf16.mxu0 0
      %3985 = vmatmul.mubr.bf16.gmra.mxu0 %v3835
      %v3986 = vpop.f32.mrf.mxu0
      %v3987 = vadd.f32 0.0, %v3986
      %v3988 = vpop.f32.mrf.mxu0
      %v3989 = vpop.f32.mrf.mxu0
      %v3990 = vadd.f32 0.0, %v3989
      %v3991 = vpop.f32.mrf.mxu0
      %3992 = vmatprep.mubr.bf16.mxu0 0
      %3993 = vmatmul.mubr.bf16.gmra.mxu0 %v3838
      %v3994 = vpop.f32.mrf.mxu0
      %v3995 = vadd.f32 0.0, %v3994
      %v3996 = vpop.f32.mrf.mxu0
      %v3997 = vpop.f32.mrf.mxu0
      %v3998 = vadd.f32 0.0, %v3997
      %v3999 = vpop.f32.mrf.mxu0
      %4000 = vmatprep.mubr.bf16.mxu0 0
      %4001 = vmatmul.mubr.bf16.gmra.mxu0 %v3841
      %v4002 = vpop.f32.mrf.mxu0
      %v4003 = vadd.f32 0.0, %v4002
      %v4004 = vpop.f32.mrf.mxu0
      %v4005 = vpop.f32.mrf.mxu0
      %v4006 = vadd.f32 0.0, %v4005
      %v4007 = vpop.f32.mrf.mxu0
      %4008 = vmatprep.mubr.bf16.mxu0 0
      %4009 = vmatmul.mubr.bf16.gmra.mxu0 %v3844
      %v4010 = vpop.f32.mrf.mxu0
      %v4011 = vadd.f32 0.0, %v4010
      %v4012 = vpop.f32.mrf.mxu0
      %v4013 = vpop.f32.mrf.mxu0
      %v4014 = vadd.f32 0.0, %v4013
      %v4015 = vpop.f32.mrf.mxu0
      %4016 = vmatprep.mubr.bf16.mxu0 0
      %4017 = vmatmul.mubr.bf16.gmra.mxu0 %v3847
      %v4018 = vpop.f32.mrf.mxu0
      %v4019 = vadd.f32 0.0, %v4018
      %v4020 = vpop.f32.mrf.mxu0
      %v4021 = vpop.f32.mrf.mxu0
      %v4022 = vadd.f32 0.0, %v4021
      %v4023 = vpop.f32.mrf.mxu0
      %4024 = vmatprep.mubr.bf16.mxu0 0
      %4025 = vmatmul.mubr.bf16.gmra.mxu0 %v3850
      %v4026 = vpop.f32.mrf.mxu0
      %v4027 = vadd.f32 0.0, %v4026
      %v4028 = vpop.f32.mrf.mxu0
      %v4029 = vpop.f32.mrf.mxu0
      %v4030 = vadd.f32 0.0, %v4029
      %v4031 = vpop.f32.mrf.mxu0
      %4032 = vmatprep.mubr.bf16.mxu0 0
      %4033 = vmatmul.mubr.bf16.gmra.mxu0 %v3853
      %v4034 = vpop.f32.mrf.mxu0
      %v4035 = vadd.f32 0.0, %v4034
      %v4036 = vpop.f32.mrf.mxu0
      %v4037 = vpop.f32.mrf.mxu0
      %v4038 = vadd.f32 0.0, %v4037
      %v4039 = vpop.f32.mrf.mxu0
      %4040 = vmatprep.mubr.bf16.mxu0 0
      %4041 = vmatmul.mubr.bf16.gmra.mxu0 %v3856
      %v4042 = vpop.f32.mrf.mxu0
      %v4043 = vadd.f32 0.0, %v4042
      %v4044 = vpop.f32.mrf.mxu0
      %v4045 = vpop.f32.mrf.mxu0
      %v4046 = vadd.f32 0.0, %v4045
      %v4047 = vpop.f32.mrf.mxu0
      %4048 = vmatprep.mubr.bf16.mxu0 0
      %4049 = vmatmul.mubr.bf16.gmra.mxu0 %v3859
      %v4050 = vpop.f32.mrf.mxu0
      %v4051 = vadd.f32 0.0, %v4050
      %v4052 = vpop.f32.mrf.mxu0
      %v4053 = vpop.f32.mrf.mxu0
      %v4054 = vadd.f32 0.0, %v4053
      %v4055 = vpop.f32.mrf.mxu0
      %4056 = vmatprep.mubr.bf16.mxu0 0
      %4057 = vmatmul.mubr.bf16.gmra.mxu0 %v3862
      %v4058 = vpop.f32.mrf.mxu0
      %v4059 = vadd.f32 0.0, %v4058
      %v4060 = vpop.f32.mrf.mxu0
      %v4061 = vpop.f32.mrf.mxu0
      %v4062 = vpop.f32.mrf.mxu0
      %4063 = vdwg.mxu0
      %v4064 = vadd.f32 %v3722, %v3899
      %v4065 = vadd.f32 %v3723, %v3902
      %v4066 = vadd.f32 %v3724, %v3907
      %v4067 = vadd.f32 %v3725, %v3910
      %v4068 = vadd.f32 %v3726, %v3915
      %v4069 = vadd.f32 %v3727, %v3918
      %v4070 = vadd.f32 %v3728, %v3923
      %v4071 = vadd.f32 %v3729, %v3926
      %v4072 = vadd.f32 %v3730, %v3931
      %v4073 = vadd.f32 %v3731, %v3934
      %v4074 = vadd.f32 %v3732, %v3939
      %v4075 = vadd.f32 %v3733, %v3942
      %v4076 = vadd.f32 %v3734, %v3947
      %v4077 = vadd.f32 %v3735, %v3950
      %v4078 = vadd.f32 %v3736, %v3955
      %v4079 = vadd.f32 %v3737, %v3958
      %v4080 = vadd.f32 %v3738, %v3963
      %v4081 = vadd.f32 %v3739, %v3966
      %v4082 = vadd.f32 %v3740, %v3971
      %v4083 = vadd.f32 %v3741, %v3974
      %v4084 = vadd.f32 %v3742, %v3979
      %v4085 = vadd.f32 %v3743, %v3982
      %v4086 = vadd.f32 %v3744, %v3987
      %v4087 = vadd.f32 %v3745, %v3990
      %v4088 = vadd.f32 %v3746, %v3995
      %v4089 = vadd.f32 %v3747, %v3998
      %v4090 = vadd.f32 %v3748, %v4003
      %v4091 = vadd.f32 %v3749, %v4006
      %v4092 = vadd.f32 %v3750, %v4011
      %v4093 = vadd.f32 %v3751, %v4014
      %v4094 = vadd.f32 %v3752, %v4019
      %v4095 = vadd.f32 %v3753, %v4022
      %v4096 = vadd.f32 %v3754, %v4027
      %v4097 = vadd.f32 %v3755, %v4030
      %v4098 = vadd.f32 %v3756, %v4035
      %v4099 = vadd.f32 %v3757, %v4038
      %v4100 = vadd.f32 %v3758, %v4043
      %v4101 = vadd.f32 %v3759, %v4046
      %v4102 = vadd.f32 %v3760, %v4051
      %v4103 = vadd.f32 %v3761, %v4054
      %v4104 = vadd.f32 %v3762, %v4059
      %v4105 = vld [vmem:[#allocation2 + $0xb0] sm:$0x7]
      %s4106 = scalar_lea.vmem %s6, 80
      %v4107 = vld [vmem:[%s4106] sm:$0xf]
      %v4108 = vld [vmem:[%s4106 + $0x4] sm:$0xf]
      %v4109 = vld [vmem:[%s4106 + $0x8] sm:$0xf]
      %v4110 = vld [vmem:[%s4106 + $0xc] sm:$0xf]
      %v4112 = vunpack.c.l.b16 %v4105
      %v4113 = vpack.c.b16 %v4112, %v4112
      %vm4114 = vsmask.f32 7424
      %v4115 = vshrl.u32 %v3768, 16
      %v4117 = vshll.u32 %v3768, 16
      %v4119 = vrot.slane %v4117, 1
      %v4120 = vor.u32 %v4115, %v4119
      %v4121 = vshll.u32 %v3769, 16
      %v4123 = vrot.slane %v4121, 1
      %v4124 = vsel %vm4114, %v4120, %v4123
      %v4125 = vshrl.u32 %v3769, 16
      %v4127 = vor.u32 %v4125, %v4123
      %v4128 = vshll.u32 %v3770, 16
      %v4130 = vrot.slane %v4128, 1
      %v4131 = vsel %vm4114, %v4127, %v4130
      %v4132 = vshrl.u32 %v3770, 16
      %v4134 = vor.u32 %v4132, %v4130
      %v4135 = vshll.u32 %v3771, 16
      %v4137 = vrot.slane %v4135, 1
      %v4138 = vsel %vm4114, %v4134, %v4137
      %v4139 = vshrl.u32 %v3771, 16
      %v4141 = vor.u32 %v4139, %v4137
      %v4142 = vshll.u32 %v3772, 16
      %v4144 = vrot.slane %v4142, 1
      %v4145 = vsel %vm4114, %v4141, %v4144
      %v4146 = vshrl.u32 %v3772, 16
      %v4148 = vor.u32 %v4146, %v4144
      %v4149 = vshll.u32 %v3773, 16
      %v4151 = vrot.slane %v4149, 1
      %v4152 = vsel %vm4114, %v4148, %v4151
      %v4153 = vshrl.u32 %v3773, 16
      %v4155 = vor.u32 %v4153, %v4151
      %v4156 = vshll.u32 %v3774, 16
      %v4158 = vrot.slane %v4156, 1
      %v4159 = vsel %vm4114, %v4155, %v4158
      %v4160 = vshrl.u32 %v3774, 16
      %v4162 = vor.u32 %v4160, %v4158
      %v4163 = vshll.u32 %v3775, 16
      %v4165 = vrot.slane %v4163, 1
      %v4166 = vsel %vm4114, %v4162, %v4165
      %v4167 = vshrl.u32 %v3775, 16
      %v4169 = vor.u32 %v4167, %v4165
      %v4170 = vshll.u32 %v3776, 16
      %v4172 = vrot.slane %v4170, 1
      %v4173 = vsel %vm4114, %v4169, %v4172
      %v4174 = vshrl.u32 %v3776, 16
      %v4176 = vor.u32 %v4174, %v4172
      %v4177 = vshll.u32 %v3777, 16
      %v4179 = vrot.slane %v4177, 1
      %v4180 = vsel %vm4114, %v4176, %v4179
      %v4181 = vshrl.u32 %v3777, 16
      %v4183 = vor.u32 %v4181, %v4179
      %v4184 = vshll.u32 %v3778, 16
      %v4186 = vrot.slane %v4184, 1
      %v4187 = vsel %vm4114, %v4183, %v4186
      %v4188 = vshrl.u32 %v3778, 16
      %v4190 = vor.u32 %v4188, %v4186
      %v4191 = vshll.u32 %v3779, 16
      %v4193 = vrot.slane %v4191, 1
      %v4194 = vsel %vm4114, %v4190, %v4193
      %v4195 = vshrl.u32 %v3779, 16
      %v4197 = vor.u32 %v4195, %v4193
      %v4198 = vshll.u32 %v3780, 16
      %v4200 = vrot.slane %v4198, 1
      %v4201 = vsel %vm4114, %v4197, %v4200
      %v4202 = vshrl.u32 %v3780, 16
      %v4204 = vor.u32 %v4202, %v4200
      %v4205 = vshll.u32 %v3781, 16
      %v4207 = vrot.slane %v4205, 1
      %v4208 = vsel %vm4114, %v4204, %v4207
      %v4209 = vshrl.u32 %v3781, 16
      %v4211 = vor.u32 %v4209, %v4207
      %v4212 = vshll.u32 %v3782, 16
      %v4214 = vrot.slane %v4212, 1
      %v4215 = vsel %vm4114, %v4211, %v4214
      %v4216 = vshrl.u32 %v3782, 16
      %v4218 = vor.u32 %v4216, %v4214
      %v4219 = vshll.u32 %v3783, 16
      %v4221 = vrot.slane %v4219, 1
      %v4222 = vsel %vm4114, %v4218, %v4221
      %v4223 = vshrl.u32 %v3783, 16
      %v4225 = vor.u32 %v4223, %v4221
      %v4226 = vshll.u32 %v3784, 16
      %v4228 = vrot.slane %v4226, 1
      %v4229 = vsel %vm4114, %v4225, %v4228
      %v4230 = vshrl.u32 %v3784, 16
      %v4232 = vor.u32 %v4230, %v4228
      %v4233 = vshll.u32 %v3785, 16
      %v4235 = vrot.slane %v4233, 1
      %v4236 = vsel %vm4114, %v4232, %v4235
      %v4237 = vshrl.u32 %v3785, 16
      %v4239 = vor.u32 %v4237, %v4235
      %v4240 = vshll.u32 %v3786, 16
      %v4242 = vrot.slane %v4240, 1
      %v4243 = vsel %vm4114, %v4239, %v4242
      %v4244 = vshrl.u32 %v3786, 16
      %v4246 = vor.u32 %v4244, %v4242
      %v4247 = vshll.u32 %v3787, 16
      %v4249 = vrot.slane %v4247, 1
      %v4250 = vsel %vm4114, %v4246, %v4249
      %v4251 = vshrl.u32 %v3787, 16
      %v4253 = vor.u32 %v4251, %v4249
      %v4255 = vshll.u32 %v4113, 16
      %v4257 = vrot.slane %v4255, 1
      %v4258 = vsel %vm4114, %v4253, %v4257
      %v4259 = vshrl.u32 %v4113, 16
      %v4261 = vor.u32 %v4259, %v4257
      %v4266 = vunpack.c.l.b16 %v4107
      %v4267 = vunpack.c.l.b16 %v4108
      %v4268 = vunpack.c.l.b16 %v4109
      %v4269 = vunpack.c.l.b16 %v4110
      %v4270 = vpack.c.b16 %v4267, %v4266
      %v4271 = vpack.c.b16 %v4269, %v4268
      %v4275 = vsel %vm940, %v4124, 0
      %v4278 = vsel %vm940, %v4131, 0
      %v4281 = vsel %vm940, %v4138, 0
      %v4284 = vsel %vm940, %v4145, 0
      %v4287 = vsel %vm940, %v4152, 0
      %v4290 = vsel %vm940, %v4159, 0
      %v4293 = vsel %vm940, %v4166, 0
      %v4296 = vsel %vm940, %v4173, 0
      %v4299 = vsel %vm940, %v4180, 0
      %v4302 = vsel %vm940, %v4187, 0
      %v4305 = vsel %vm940, %v4194, 0
      %v4308 = vsel %vm940, %v4201, 0
      %v4311 = vsel %vm940, %v4208, 0
      %v4314 = vsel %vm940, %v4215, 0
      %v4317 = vsel %vm940, %v4222, 0
      %v4320 = vsel %vm940, %v4229, 0
      %v4323 = vsel %vm940, %v4236, 0
      %v4326 = vsel %vm940, %v4243, 0
      %v4329 = vsel %vm940, %v4250, 0
      %v4332 = vsel %vm940, %v4258, 0
      %v4335 = vsel %vm940, %v4261, 0
      %4337 = vmatprep.subr.bf16.mxu0 0
      %4338 = vmatpush1.bf16.msra.mxu0 0
      %4339 = vmatprep.subr.bf16.mxu0 0
      %4340 = vmatpush1.bf16.msra.mxu0 0
      %4341 = vmatprep.subr.bf16.mxu0 0
      %4342 = vmatpush1.bf16.msra.mxu0 0
      %4343 = vmatprep.subr.bf16.mxu0 0
      %4344 = vmatpush1.bf16.msra.mxu0 0
      %4345 = vmatprep.subr.bf16.mxu0 0
      %4346 = vmatpush1.bf16.msra.mxu0 0
      %4347 = vmatprep.subr.bf16.mxu0 0
      %4348 = vmatpush1.bf16.msra.mxu0 0
      %4349 = vmatprep.subr.bf16.mxu0 0
      %4350 = vmatpush1.bf16.msra.mxu0 %v4271
      %4351 = vmatprep.subr.bf16.mxu0 0
      %4352 = vmatpush1.bf16.msra.mxu0 %v4270
      %4353 = vmatprep.subr.bf16.mxu0 0
      %4354 = vmatpush2.bf16.msra.mxu0 0
      %4355 = vmatprep.subr.bf16.mxu0 0
      %4356 = vmatpush2.bf16.msra.mxu0 0
      %4357 = vmatprep.subr.bf16.mxu0 0
      %4358 = vmatpush2.bf16.msra.mxu0 0
      %4359 = vmatprep.subr.bf16.mxu0 0
      %4360 = vmatpush2.bf16.msra.mxu0 0
      %4361 = vmatprep.subr.bf16.mxu0 0
      %4362 = vmatpush2.bf16.msra.mxu0 0
      %4363 = vmatprep.subr.bf16.mxu0 0
      %4364 = vmatpush2.bf16.msra.mxu0 0
      %4365 = vmatprep.subr.bf16.mxu0 0
      %4366 = vmatpush2.bf16.msra.mxu0 0
      %4367 = vmatprep.subr.bf16.mxu0 0
      %4368 = vmatpush2.bf16.msra.mxu0 0
      %4369 = vmatprep.mubr.bf16.mxu0 0
      %4370 = vmatmul.mubr.bf16.gmra.mxu0 %v4275
      %v4371 = vpop.f32.mrf.mxu0
      %v4372 = vadd.f32 0.0, %v4371
      %v4373 = vpop.f32.mrf.mxu0
      %v4374 = vpop.f32.mrf.mxu0
      %v4375 = vadd.f32 0.0, %v4374
      %v4376 = vpop.f32.mrf.mxu0
      %4377 = vmatprep.mubr.bf16.mxu0 0
      %4378 = vmatmul.mubr.bf16.gmra.mxu0 %v4278
      %v4379 = vpop.f32.mrf.mxu0
      %v4380 = vadd.f32 0.0, %v4379
      %v4381 = vpop.f32.mrf.mxu0
      %v4382 = vpop.f32.mrf.mxu0
      %v4383 = vadd.f32 0.0, %v4382
      %v4384 = vpop.f32.mrf.mxu0
      %4385 = vmatprep.mubr.bf16.mxu0 0
      %4386 = vmatmul.mubr.bf16.gmra.mxu0 %v4281
      %v4387 = vpop.f32.mrf.mxu0
      %v4388 = vadd.f32 0.0, %v4387
      %v4389 = vpop.f32.mrf.mxu0
      %v4390 = vpop.f32.mrf.mxu0
      %v4391 = vadd.f32 0.0, %v4390
      %v4392 = vpop.f32.mrf.mxu0
      %4393 = vmatprep.mubr.bf16.mxu0 0
      %4394 = vmatmul.mubr.bf16.gmra.mxu0 %v4284
      %v4395 = vpop.f32.mrf.mxu0
      %v4396 = vadd.f32 0.0, %v4395
      %v4397 = vpop.f32.mrf.mxu0
      %v4398 = vpop.f32.mrf.mxu0
      %v4399 = vadd.f32 0.0, %v4398
      %v4400 = vpop.f32.mrf.mxu0
      %4401 = vmatprep.mubr.bf16.mxu0 0
      %4402 = vmatmul.mubr.bf16.gmra.mxu0 %v4287
      %v4403 = vpop.f32.mrf.mxu0
      %v4404 = vadd.f32 0.0, %v4403
      %v4405 = vpop.f32.mrf.mxu0
      %v4406 = vpop.f32.mrf.mxu0
      %v4407 = vadd.f32 0.0, %v4406
      %v4408 = vpop.f32.mrf.mxu0
      %4409 = vmatprep.mubr.bf16.mxu0 0
      %4410 = vmatmul.mubr.bf16.gmra.mxu0 %v4290
      %v4411 = vpop.f32.mrf.mxu0
      %v4412 = vadd.f32 0.0, %v4411
      %v4413 = vpop.f32.mrf.mxu0
      %v4414 = vpop.f32.mrf.mxu0
      %v4415 = vadd.f32 0.0, %v4414
      %v4416 = vpop.f32.mrf.mxu0
      %4417 = vmatprep.mubr.bf16.mxu0 0
      %4418 = vmatmul.mubr.bf16.gmra.mxu0 %v4293
      %v4419 = vpop.f32.mrf.mxu0
      %v4420 = vadd.f32 0.0, %v4419
      %v4421 = vpop.f32.mrf.mxu0
      %v4422 = vpop.f32.mrf.mxu0
      %v4423 = vadd.f32 0.0, %v4422
      %v4424 = vpop.f32.mrf.mxu0
      %4425 = vmatprep.mubr.bf16.mxu0 0
      %4426 = vmatmul.mubr.bf16.gmra.mxu0 %v4296
      %v4427 = vpop.f32.mrf.mxu0
      %v4428 = vadd.f32 0.0, %v4427
      %v4429 = vpop.f32.mrf.mxu0
      %v4430 = vpop.f32.mrf.mxu0
      %v4431 = vadd.f32 0.0, %v4430
      %v4432 = vpop.f32.mrf.mxu0
      %4433 = vmatprep.mubr.bf16.mxu0 0
      %4434 = vmatmul.mubr.bf16.gmra.mxu0 %v4299
      %v4435 = vpop.f32.mrf.mxu0
      %v4436 = vadd.f32 0.0, %v4435
      %v4437 = vpop.f32.mrf.mxu0
      %v4438 = vpop.f32.mrf.mxu0
      %v4439 = vadd.f32 0.0, %v4438
      %v4440 = vpop.f32.mrf.mxu0
      %4441 = vmatprep.mubr.bf16.mxu0 0
      %4442 = vmatmul.mubr.bf16.gmra.mxu0 %v4302
      %v4443 = vpop.f32.mrf.mxu0
      %v4444 = vadd.f32 0.0, %v4443
      %v4445 = vpop.f32.mrf.mxu0
      %v4446 = vpop.f32.mrf.mxu0
      %v4447 = vadd.f32 0.0, %v4446
      %v4448 = vpop.f32.mrf.mxu0
      %4449 = vmatprep.mubr.bf16.mxu0 0
      %4450 = vmatmul.mubr.bf16.gmra.mxu0 %v4305
      %v4451 = vpop.f32.mrf.mxu0
      %v4452 = vadd.f32 0.0, %v4451
      %v4453 = vpop.f32.mrf.mxu0
      %v4454 = vpop.f32.mrf.mxu0
      %v4455 = vadd.f32 0.0, %v4454
      %v4456 = vpop.f32.mrf.mxu0
      %4457 = vmatprep.mubr.bf16.mxu0 0
      %4458 = vmatmul.mubr.bf16.gmra.mxu0 %v4308
      %v4459 = vpop.f32.mrf.mxu0
      %v4460 = vadd.f32 0.0, %v4459
      %v4461 = vpop.f32.mrf.mxu0
      %v4462 = vpop.f32.mrf.mxu0
      %v4463 = vadd.f32 0.0, %v4462
      %v4464 = vpop.f32.mrf.mxu0
      %4465 = vmatprep.mubr.bf16.mxu0 0
      %4466 = vmatmul.mubr.bf16.gmra.mxu0 %v4311
      %v4467 = vpop.f32.mrf.mxu0
      %v4468 = vadd.f32 0.0, %v4467
      %v4469 = vpop.f32.mrf.mxu0
      %v4470 = vpop.f32.mrf.mxu0
      %v4471 = vadd.f32 0.0, %v4470
      %v4472 = vpop.f32.mrf.mxu0
      %4473 = vmatprep.mubr.bf16.mxu0 0
      %4474 = vmatmul.mubr.bf16.gmra.mxu0 %v4314
      %v4475 = vpop.f32.mrf.mxu0
      %v4476 = vadd.f32 0.0, %v4475
      %v4477 = vpop.f32.mrf.mxu0
      %v4478 = vpop.f32.mrf.mxu0
      %v4479 = vadd.f32 0.0, %v4478
      %v4480 = vpop.f32.mrf.mxu0
      %4481 = vmatprep.mubr.bf16.mxu0 0
      %4482 = vmatmul.mubr.bf16.gmra.mxu0 %v4317
      %v4483 = vpop.f32.mrf.mxu0
      %v4484 = vadd.f32 0.0, %v4483
      %v4485 = vpop.f32.mrf.mxu0
      %v4486 = vpop.f32.mrf.mxu0
      %v4487 = vadd.f32 0.0, %v4486
      %v4488 = vpop.f32.mrf.mxu0
      %4489 = vmatprep.mubr.bf16.mxu0 0
      %4490 = vmatmul.mubr.bf16.gmra.mxu0 %v4320
      %v4491 = vpop.f32.mrf.mxu0
      %v4492 = vadd.f32 0.0, %v4491
      %v4493 = vpop.f32.mrf.mxu0
      %v4494 = vpop.f32.mrf.mxu0
      %v4495 = vadd.f32 0.0, %v4494
      %v4496 = vpop.f32.mrf.mxu0
      %4497 = vmatprep.mubr.bf16.mxu0 0
      %4498 = vmatmul.mubr.bf16.gmra.mxu0 %v4323
      %v4499 = vpop.f32.mrf.mxu0
      %v4500 = vadd.f32 0.0, %v4499
      %v4501 = vpop.f32.mrf.mxu0
      %v4502 = vpop.f32.mrf.mxu0
      %v4503 = vadd.f32 0.0, %v4502
      %v4504 = vpop.f32.mrf.mxu0
      %4505 = vmatprep.mubr.bf16.mxu0 0
      %4506 = vmatmul.mubr.bf16.gmra.mxu0 %v4326
      %v4507 = vpop.f32.mrf.mxu0
      %v4508 = vadd.f32 0.0, %v4507
      %v4509 = vpop.f32.mrf.mxu0
      %v4510 = vpop.f32.mrf.mxu0
      %v4511 = vadd.f32 0.0, %v4510
      %v4512 = vpop.f32.mrf.mxu0
      %4513 = vmatprep.mubr.bf16.mxu0 0
      %4514 = vmatmul.mubr.bf16.gmra.mxu0 %v4329
      %v4515 = vpop.f32.mrf.mxu0
      %v4516 = vadd.f32 0.0, %v4515
      %v4517 = vpop.f32.mrf.mxu0
      %v4518 = vpop.f32.mrf.mxu0
      %v4519 = vadd.f32 0.0, %v4518
      %v4520 = vpop.f32.mrf.mxu0
      %4521 = vmatprep.mubr.bf16.mxu0 0
      %4522 = vmatmul.mubr.bf16.gmra.mxu0 %v4332
      %v4523 = vpop.f32.mrf.mxu0
      %v4524 = vadd.f32 0.0, %v4523
      %v4525 = vpop.f32.mrf.mxu0
      %v4526 = vpop.f32.mrf.mxu0
      %v4527 = vadd.f32 0.0, %v4526
      %v4528 = vpop.f32.mrf.mxu0
      %4529 = vmatprep.mubr.bf16.mxu0 0
      %4530 = vmatmul.mubr.bf16.gmra.mxu0 %v4335
      %v4531 = vpop.f32.mrf.mxu0
      %v4532 = vadd.f32 0.0, %v4531
      %v4533 = vpop.f32.mrf.mxu0
      %v4534 = vpop.f32.mrf.mxu0
      %v4535 = vpop.f32.mrf.mxu0
      %4536 = vdwg.mxu0
      %v4537 = vadd.f32 %v4064, %v4372
      %v4538 = vadd.f32 %v4065, %v4375
      %v4539 = vadd.f32 %v4066, %v4380
      %v4540 = vadd.f32 %v4067, %v4383
      %v4541 = vadd.f32 %v4068, %v4388
      %v4542 = vadd.f32 %v4069, %v4391
      %v4543 = vadd.f32 %v4070, %v4396
      %v4544 = vadd.f32 %v4071, %v4399
      %v4545 = vadd.f32 %v4072, %v4404
      %v4546 = vadd.f32 %v4073, %v4407
      %v4547 = vadd.f32 %v4074, %v4412
      %v4548 = vadd.f32 %v4075, %v4415
      %v4549 = vadd.f32 %v4076, %v4420
      %v4550 = vadd.f32 %v4077, %v4423
      %v4551 = vadd.f32 %v4078, %v4428
      %v4552 = vadd.f32 %v4079, %v4431
      %v4553 = vadd.f32 %v4080, %v4436
      %v4554 = vadd.f32 %v4081, %v4439
      %v4555 = vadd.f32 %v4082, %v4444
      %v4556 = vadd.f32 %v4083, %v4447
      %v4557 = vadd.f32 %v4084, %v4452
      %v4558 = vadd.f32 %v4085, %v4455
      %v4559 = vadd.f32 %v4086, %v4460
      %v4560 = vadd.f32 %v4087, %v4463
      %v4561 = vadd.f32 %v4088, %v4468
      %v4562 = vadd.f32 %v4089, %v4471
      %v4563 = vadd.f32 %v4090, %v4476
      %v4564 = vadd.f32 %v4091, %v4479
      %v4565 = vadd.f32 %v4092, %v4484
      %v4566 = vadd.f32 %v4093, %v4487
      %v4567 = vadd.f32 %v4094, %v4492
      %v4568 = vadd.f32 %v4095, %v4495
      %v4569 = vadd.f32 %v4096, %v4500
      %v4570 = vadd.f32 %v4097, %v4503
      %v4571 = vadd.f32 %v4098, %v4508
      %v4572 = vadd.f32 %v4099, %v4511
      %v4573 = vadd.f32 %v4100, %v4516
      %v4574 = vadd.f32 %v4101, %v4519
      %v4575 = vadd.f32 %v4102, %v4524
      %v4576 = vadd.f32 %v4103, %v4527
      %v4577 = vadd.f32 %v4104, %v4532
      %v4578 = vld [vmem:[#allocation2 + $0x18] sm:$0xf]
      %v4579 = vld [vmem:[#allocation2 + $0x1c] sm:$0xf]
      %v4580 = vld [vmem:[#allocation2 + $0x20] sm:$0xf]
      %v4581 = vld [vmem:[#allocation2 + $0x24] sm:$0xf]
      %v4582 = vld [vmem:[#allocation2 + $0x28] sm:$0xf]
      %v4583 = vld [vmem:[#allocation2 + $0x2c] sm:$0xf]
      %v4584 = vld [vmem:[#allocation2 + $0x30] sm:$0xf]
      %v4585 = vld [vmem:[#allocation2 + $0x34] sm:$0xf]
      %v4586 = vld [vmem:[#allocation2 + $0x38] sm:$0xf]
      %v4587 = vld [vmem:[#allocation2 + $0x3c] sm:$0xf]
      %v4588 = vld [vmem:[#allocation2 + $0x40] sm:$0xf]
      %v4589 = vld [vmem:[#allocation2 + $0x44] sm:$0xf]
      %v4590 = vld [vmem:[#allocation2 + $0x48] sm:$0xf]
      %v4591 = vld [vmem:[#allocation2 + $0x4c] sm:$0xf]
      %v4592 = vld [vmem:[#allocation2 + $0x50] sm:$0xf]
      %v4593 = vld [vmem:[#allocation2 + $0x54] sm:$0xf]
      %v4594 = vld [vmem:[#allocation2 + $0x58] sm:$0xf]
      %v4595 = vld [vmem:[#allocation2 + $0x5c] sm:$0xf]
      %v4596 = vld [vmem:[#allocation2 + $0x60] sm:$0xf]
      %v4597 = vld [vmem:[#allocation2 + $0x64] sm:$0xf]
      %v4598 = vld [vmem:[#allocation2 + $0x68] sm:$0xf]
      %v4599 = vld [vmem:[#allocation2 + $0x6c] sm:$0xf]
      %v4600 = vld [vmem:[#allocation2 + $0x70] sm:$0xf]
      %v4601 = vld [vmem:[#allocation2 + $0x74] sm:$0xf]
      %v4602 = vld [vmem:[#allocation2 + $0x78] sm:$0xf]
      %v4603 = vld [vmem:[#allocation2 + $0x7c] sm:$0xf]
      %v4604 = vld [vmem:[#allocation2 + $0x80] sm:$0xf]
      %v4605 = vld [vmem:[#allocation2 + $0x84] sm:$0xf]
      %v4606 = vld [vmem:[#allocation2 + $0x88] sm:$0xf]
      %v4607 = vld [vmem:[#allocation2 + $0x8c] sm:$0xf]
      %v4608 = vld [vmem:[#allocation2 + $0x90] sm:$0xf]
      %v4609 = vld [vmem:[#allocation2 + $0x94] sm:$0xf]
      %v4610 = vld [vmem:[#allocation2 + $0x98] sm:$0xf]
      %v4611 = vld [vmem:[#allocation2 + $0x9c] sm:$0xf]
      %v4612 = vld [vmem:[#allocation2 + $0xa0] sm:$0xf]
      %v4613 = vld [vmem:[#allocation2 + $0xa4] sm:$0xf]
      %v4614 = vld [vmem:[#allocation2 + $0xa8] sm:$0xf]
      %v4615 = vld [vmem:[#allocation2 + $0xac] sm:$0xf]
      %v4616 = vld [vmem:[#allocation2 + $0xb0] sm:$0xf]
      %v4617 = vld [vmem:[#allocation2 + $0xb4] sm:$0xf]
      %v4618 = vld [vmem:[#allocation2 + $0xb8] sm:$0x7]
      %s4619 = scalar_lea.vmem %s6, 96
      %v4620 = vld [vmem:[%s4619] sm:$0xf]
      %v4621 = vld [vmem:[%s4619 + $0x4] sm:$0xf]
      %v4622 = vld [vmem:[%s4619 + $0x8] sm:$0xf]
      %v4623 = vld [vmem:[%s4619 + $0xc] sm:$0xf]
      %v4665 = vunpack.c.l.b16 %v4578
      %v4666 = vunpack.c.l.b16 %v4579
      %v4667 = vunpack.c.l.b16 %v4580
      %v4668 = vunpack.c.l.b16 %v4581
      %v4669 = vunpack.c.l.b16 %v4582
      %v4670 = vunpack.c.l.b16 %v4583
      %v4671 = vunpack.c.l.b16 %v4584
      %v4672 = vunpack.c.l.b16 %v4585
      %v4673 = vunpack.c.l.b16 %v4586
      %v4674 = vunpack.c.l.b16 %v4587
      %v4675 = vunpack.c.l.b16 %v4588
      %v4676 = vunpack.c.l.b16 %v4589
      %v4677 = vunpack.c.l.b16 %v4590
      %v4678 = vunpack.c.l.b16 %v4591
      %v4679 = vunpack.c.l.b16 %v4592
      %v4680 = vunpack.c.l.b16 %v4593
      %v4681 = vunpack.c.l.b16 %v4594
      %v4682 = vunpack.c.l.b16 %v4595
      %v4683 = vunpack.c.l.b16 %v4596
      %v4684 = vunpack.c.l.b16 %v4597
      %v4685 = vunpack.c.l.b16 %v4598
      %v4686 = vunpack.c.l.b16 %v4599
      %v4687 = vunpack.c.l.b16 %v4600
      %v4688 = vunpack.c.l.b16 %v4601
      %v4689 = vunpack.c.l.b16 %v4602
      %v4690 = vunpack.c.l.b16 %v4603
      %v4691 = vunpack.c.l.b16 %v4604
      %v4692 = vunpack.c.l.b16 %v4605
      %v4693 = vunpack.c.l.b16 %v4606
      %v4694 = vunpack.c.l.b16 %v4607
      %v4695 = vunpack.c.l.b16 %v4608
      %v4696 = vunpack.c.l.b16 %v4609
      %v4697 = vunpack.c.l.b16 %v4610
      %v4698 = vunpack.c.l.b16 %v4611
      %v4699 = vunpack.c.l.b16 %v4612
      %v4700 = vunpack.c.l.b16 %v4613
      %v4701 = vunpack.c.l.b16 %v4614
      %v4702 = vunpack.c.l.b16 %v4615
      %v4703 = vunpack.c.l.b16 %v4616
      %v4704 = vunpack.c.l.b16 %v4617
      %v4705 = vunpack.c.l.b16 %v4618
      %v4706 = vpack.c.b16 %v4666, %v4665
      %v4707 = vpack.c.b16 %v4668, %v4667
      %v4708 = vpack.c.b16 %v4670, %v4669
      %v4709 = vpack.c.b16 %v4672, %v4671
      %v4710 = vpack.c.b16 %v4674, %v4673
      %v4711 = vpack.c.b16 %v4676, %v4675
      %v4712 = vpack.c.b16 %v4678, %v4677
      %v4713 = vpack.c.b16 %v4680, %v4679
      %v4714 = vpack.c.b16 %v4682, %v4681
      %v4715 = vpack.c.b16 %v4684, %v4683
      %v4716 = vpack.c.b16 %v4686, %v4685
      %v4717 = vpack.c.b16 %v4688, %v4687
      %v4718 = vpack.c.b16 %v4690, %v4689
      %v4719 = vpack.c.b16 %v4692, %v4691
      %v4720 = vpack.c.b16 %v4694, %v4693
      %v4721 = vpack.c.b16 %v4696, %v4695
      %v4722 = vpack.c.b16 %v4698, %v4697
      %v4723 = vpack.c.b16 %v4700, %v4699
      %v4724 = vpack.c.b16 %v4702, %v4701
      %v4725 = vpack.c.b16 %v4704, %v4703
      %v4726 = vpack.c.b16 %v4705, %v4705
      %v4728 = vshrl.u32 %v4706, 16
      %v4730 = vshll.u32 %v4706, 16
      %v4732 = vrot.slane %v4730, 1
      %v4733 = vor.u32 %v4728, %v4732
      %v4735 = vshll.u32 %v4707, 16
      %v4737 = vrot.slane %v4735, 1
      %v4738 = vsel %vm4114, %v4733, %v4737
      %v4739 = vshrl.u32 %v4707, 16
      %v4741 = vor.u32 %v4739, %v4737
      %v4743 = vshll.u32 %v4708, 16
      %v4745 = vrot.slane %v4743, 1
      %v4746 = vsel %vm4114, %v4741, %v4745
      %v4747 = vshrl.u32 %v4708, 16
      %v4749 = vor.u32 %v4747, %v4745
      %v4751 = vshll.u32 %v4709, 16
      %v4753 = vrot.slane %v4751, 1
      %v4754 = vsel %vm4114, %v4749, %v4753
      %v4755 = vshrl.u32 %v4709, 16
      %v4757 = vor.u32 %v4755, %v4753
      %v4759 = vshll.u32 %v4710, 16
      %v4761 = vrot.slane %v4759, 1
      %v4762 = vsel %vm4114, %v4757, %v4761
      %v4763 = vshrl.u32 %v4710, 16
      %v4765 = vor.u32 %v4763, %v4761
      %v4767 = vshll.u32 %v4711, 16
      %v4769 = vrot.slane %v4767, 1
      %v4770 = vsel %vm4114, %v4765, %v4769
      %v4771 = vshrl.u32 %v4711, 16
      %v4773 = vor.u32 %v4771, %v4769
      %v4775 = vshll.u32 %v4712, 16
      %v4777 = vrot.slane %v4775, 1
      %v4778 = vsel %vm4114, %v4773, %v4777
      %v4779 = vshrl.u32 %v4712, 16
      %v4781 = vor.u32 %v4779, %v4777
      %v4783 = vshll.u32 %v4713, 16
      %v4785 = vrot.slane %v4783, 1
      %v4786 = vsel %vm4114, %v4781, %v4785
      %v4787 = vshrl.u32 %v4713, 16
      %v4789 = vor.u32 %v4787, %v4785
      %v4791 = vshll.u32 %v4714, 16
      %v4793 = vrot.slane %v4791, 1
      %v4794 = vsel %vm4114, %v4789, %v4793
      %v4795 = vshrl.u32 %v4714, 16
      %v4797 = vor.u32 %v4795, %v4793
      %v4799 = vshll.u32 %v4715, 16
      %v4801 = vrot.slane %v4799, 1
      %v4802 = vsel %vm4114, %v4797, %v4801
      %v4803 = vshrl.u32 %v4715, 16
      %v4805 = vor.u32 %v4803, %v4801
      %v4807 = vshll.u32 %v4716, 16
      %v4809 = vrot.slane %v4807, 1
      %v4810 = vsel %vm4114, %v4805, %v4809
      %v4811 = vshrl.u32 %v4716, 16
      %v4813 = vor.u32 %v4811, %v4809
      %v4815 = vshll.u32 %v4717, 16
      %v4817 = vrot.slane %v4815, 1
      %v4818 = vsel %vm4114, %v4813, %v4817
      %v4819 = vshrl.u32 %v4717, 16
      %v4821 = vor.u32 %v4819, %v4817
      %v4823 = vshll.u32 %v4718, 16
      %v4825 = vrot.slane %v4823, 1
      %v4826 = vsel %vm4114, %v4821, %v4825
      %v4827 = vshrl.u32 %v4718, 16
      %v4829 = vor.u32 %v4827, %v4825
      %v4831 = vshll.u32 %v4719, 16
      %v4833 = vrot.slane %v4831, 1
      %v4834 = vsel %vm4114, %v4829, %v4833
      %v4835 = vshrl.u32 %v4719, 16
      %v4837 = vor.u32 %v4835, %v4833
      %v4839 = vshll.u32 %v4720, 16
      %v4841 = vrot.slane %v4839, 1
      %v4842 = vsel %vm4114, %v4837, %v4841
      %v4843 = vshrl.u32 %v4720, 16
      %v4845 = vor.u32 %v4843, %v4841
      %v4847 = vshll.u32 %v4721, 16
      %v4849 = vrot.slane %v4847, 1
      %v4850 = vsel %vm4114, %v4845, %v4849
      %v4851 = vshrl.u32 %v4721, 16
      %v4853 = vor.u32 %v4851, %v4849
      %v4855 = vshll.u32 %v4722, 16
      %v4857 = vrot.slane %v4855, 1
      %v4858 = vsel %vm4114, %v4853, %v4857
      %v4859 = vshrl.u32 %v4722, 16
      %v4861 = vor.u32 %v4859, %v4857
      %v4863 = vshll.u32 %v4723, 16
      %v4865 = vrot.slane %v4863, 1
      %v4866 = vsel %vm4114, %v4861, %v4865
      %v4867 = vshrl.u32 %v4723, 16
      %v4869 = vor.u32 %v4867, %v4865
      %v4871 = vshll.u32 %v4724, 16
      %v4873 = vrot.slane %v4871, 1
      %v4874 = vsel %vm4114, %v4869, %v4873
      %v4875 = vshrl.u32 %v4724, 16
      %v4877 = vor.u32 %v4875, %v4873
      %v4879 = vshll.u32 %v4725, 16
      %v4881 = vrot.slane %v4879, 1
      %v4882 = vsel %vm4114, %v4877, %v4881
      %v4883 = vshrl.u32 %v4725, 16
      %v4885 = vor.u32 %v4883, %v4881
      %v4887 = vshll.u32 %v4726, 16
      %v4889 = vrot.slane %v4887, 1
      %v4890 = vsel %vm4114, %v4885, %v4889
      %v4891 = vshrl.u32 %v4726, 16
      %v4893 = vor.u32 %v4891, %v4889
      %v4898 = vunpack.c.l.b16 %v4620
      %v4899 = vunpack.c.l.b16 %v4621
      %v4900 = vunpack.c.l.b16 %v4622
      %v4901 = vunpack.c.l.b16 %v4623
      %v4902 = vpack.c.b16 %v4899, %v4898
      %v4903 = vpack.c.b16 %v4901, %v4900
      %v4907 = vsel %vm940, %v4738, 0
      %v4910 = vsel %vm940, %v4746, 0
      %v4913 = vsel %vm940, %v4754, 0
      %v4916 = vsel %vm940, %v4762, 0
      %v4919 = vsel %vm940, %v4770, 0
      %v4922 = vsel %vm940, %v4778, 0
      %v4925 = vsel %vm940, %v4786, 0
      %v4928 = vsel %vm940, %v4794, 0
      %v4931 = vsel %vm940, %v4802, 0
      %v4934 = vsel %vm940, %v4810, 0
      %v4937 = vsel %vm940, %v4818, 0
      %v4940 = vsel %vm940, %v4826, 0
      %v4943 = vsel %vm940, %v4834, 0
      %v4946 = vsel %vm940, %v4842, 0
      %v4949 = vsel %vm940, %v4850, 0
      %v4952 = vsel %vm940, %v4858, 0
      %v4955 = vsel %vm940, %v4866, 0
      %v4958 = vsel %vm940, %v4874, 0
      %v4961 = vsel %vm940, %v4882, 0
      %v4964 = vsel %vm940, %v4890, 0
      %v4967 = vsel %vm940, %v4893, 0
      %4969 = vmatprep.subr.bf16.mxu0 0
      %4970 = vmatpush1.bf16.msra.mxu0 0
      %4971 = vmatprep.subr.bf16.mxu0 0
      %4972 = vmatpush1.bf16.msra.mxu0 0
      %4973 = vmatprep.subr.bf16.mxu0 0
      %4974 = vmatpush1.bf16.msra.mxu0 0
      %4975 = vmatprep.subr.bf16.mxu0 0
      %4976 = vmatpush1.bf16.msra.mxu0 0
      %4977 = vmatprep.subr.bf16.mxu0 0
      %4978 = vmatpush1.bf16.msra.mxu0 0
      %4979 = vmatprep.subr.bf16.mxu0 0
      %4980 = vmatpush1.bf16.msra.mxu0 0
      %4981 = vmatprep.subr.bf16.mxu0 0
      %4982 = vmatpush1.bf16.msra.mxu0 %v4903
      %4983 = vmatprep.subr.bf16.mxu0 0
      %4984 = vmatpush1.bf16.msra.mxu0 %v4902
      %4985 = vmatprep.subr.bf16.mxu0 0
      %4986 = vmatpush2.bf16.msra.mxu0 0
      %4987 = vmatprep.subr.bf16.mxu0 0
      %4988 = vmatpush2.bf16.msra.mxu0 0
      %4989 = vmatprep.subr.bf16.mxu0 0
      %4990 = vmatpush2.bf16.msra.mxu0 0
      %4991 = vmatprep.subr.bf16.mxu0 0
      %4992 = vmatpush2.bf16.msra.mxu0 0
      %4993 = vmatprep.subr.bf16.mxu0 0
      %4994 = vmatpush2.bf16.msra.mxu0 0
      %4995 = vmatprep.subr.bf16.mxu0 0
      %4996 = vmatpush2.bf16.msra.mxu0 0
      %4997 = vmatprep.subr.bf16.mxu0 0
      %4998 = vmatpush2.bf16.msra.mxu0 0
      %4999 = vmatprep.subr.bf16.mxu0 0
      %5000 = vmatpush2.bf16.msra.mxu0 0
      %5001 = vmatprep.mubr.bf16.mxu0 0
      %5002 = vmatmul.mubr.bf16.gmra.mxu0 %v4907
      %v5003 = vpop.f32.mrf.mxu0
      %v5004 = vadd.f32 0.0, %v5003
      %v5005 = vpop.f32.mrf.mxu0
      %v5006 = vpop.f32.mrf.mxu0
      %v5007 = vadd.f32 0.0, %v5006
      %v5008 = vpop.f32.mrf.mxu0
      %5009 = vmatprep.mubr.bf16.mxu0 0
      %5010 = vmatmul.mubr.bf16.gmra.mxu0 %v4910
      %v5011 = vpop.f32.mrf.mxu0
      %v5012 = vadd.f32 0.0, %v5011
      %v5013 = vpop.f32.mrf.mxu0
      %v5014 = vpop.f32.mrf.mxu0
      %v5015 = vadd.f32 0.0, %v5014
      %v5016 = vpop.f32.mrf.mxu0
      %5017 = vmatprep.mubr.bf16.mxu0 0
      %5018 = vmatmul.mubr.bf16.gmra.mxu0 %v4913
      %v5019 = vpop.f32.mrf.mxu0
      %v5020 = vadd.f32 0.0, %v5019
      %v5021 = vpop.f32.mrf.mxu0
      %v5022 = vpop.f32.mrf.mxu0
      %v5023 = vadd.f32 0.0, %v5022
      %v5024 = vpop.f32.mrf.mxu0
      %5025 = vmatprep.mubr.bf16.mxu0 0
      %5026 = vmatmul.mubr.bf16.gmra.mxu0 %v4916
      %v5027 = vpop.f32.mrf.mxu0
      %v5028 = vadd.f32 0.0, %v5027
      %v5029 = vpop.f32.mrf.mxu0
      %v5030 = vpop.f32.mrf.mxu0
      %v5031 = vadd.f32 0.0, %v5030
      %v5032 = vpop.f32.mrf.mxu0
      %5033 = vmatprep.mubr.bf16.mxu0 0
      %5034 = vmatmul.mubr.bf16.gmra.mxu0 %v4919
      %v5035 = vpop.f32.mrf.mxu0
      %v5036 = vadd.f32 0.0, %v5035
      %v5037 = vpop.f32.mrf.mxu0
      %v5038 = vpop.f32.mrf.mxu0
      %v5039 = vadd.f32 0.0, %v5038
      %v5040 = vpop.f32.mrf.mxu0
      %5041 = vmatprep.mubr.bf16.mxu0 0
      %5042 = vmatmul.mubr.bf16.gmra.mxu0 %v4922
      %v5043 = vpop.f32.mrf.mxu0
      %v5044 = vadd.f32 0.0, %v5043
      %v5045 = vpop.f32.mrf.mxu0
      %v5046 = vpop.f32.mrf.mxu0
      %v5047 = vadd.f32 0.0, %v5046
      %v5048 = vpop.f32.mrf.mxu0
      %5049 = vmatprep.mubr.bf16.mxu0 0
      %5050 = vmatmul.mubr.bf16.gmra.mxu0 %v4925
      %v5051 = vpop.f32.mrf.mxu0
      %v5052 = vadd.f32 0.0, %v5051
      %v5053 = vpop.f32.mrf.mxu0
      %v5054 = vpop.f32.mrf.mxu0
      %v5055 = vadd.f32 0.0, %v5054
      %v5056 = vpop.f32.mrf.mxu0
      %5057 = vmatprep.mubr.bf16.mxu0 0
      %5058 = vmatmul.mubr.bf16.gmra.mxu0 %v4928
      %v5059 = vpop.f32.mrf.mxu0
      %v5060 = vadd.f32 0.0, %v5059
      %v5061 = vpop.f32.mrf.mxu0
      %v5062 = vpop.f32.mrf.mxu0
      %v5063 = vadd.f32 0.0, %v5062
      %v5064 = vpop.f32.mrf.mxu0
      %5065 = vmatprep.mubr.bf16.mxu0 0
      %5066 = vmatmul.mubr.bf16.gmra.mxu0 %v4931
      %v5067 = vpop.f32.mrf.mxu0
      %v5068 = vadd.f32 0.0, %v5067
      %v5069 = vpop.f32.mrf.mxu0
      %v5070 = vpop.f32.mrf.mxu0
      %v5071 = vadd.f32 0.0, %v5070
      %v5072 = vpop.f32.mrf.mxu0
      %5073 = vmatprep.mubr.bf16.mxu0 0
      %5074 = vmatmul.mubr.bf16.gmra.mxu0 %v4934
      %v5075 = vpop.f32.mrf.mxu0
      %v5076 = vadd.f32 0.0, %v5075
      %v5077 = vpop.f32.mrf.mxu0
      %v5078 = vpop.f32.mrf.mxu0
      %v5079 = vadd.f32 0.0, %v5078
      %v5080 = vpop.f32.mrf.mxu0
      %5081 = vmatprep.mubr.bf16.mxu0 0
      %5082 = vmatmul.mubr.bf16.gmra.mxu0 %v4937
      %v5083 = vpop.f32.mrf.mxu0
      %v5084 = vadd.f32 0.0, %v5083
      %v5085 = vpop.f32.mrf.mxu0
      %v5086 = vpop.f32.mrf.mxu0
      %v5087 = vadd.f32 0.0, %v5086
      %v5088 = vpop.f32.mrf.mxu0
      %5089 = vmatprep.mubr.bf16.mxu0 0
      %5090 = vmatmul.mubr.bf16.gmra.mxu0 %v4940
      %v5091 = vpop.f32.mrf.mxu0
      %v5092 = vadd.f32 0.0, %v5091
      %v5093 = vpop.f32.mrf.mxu0
      %v5094 = vpop.f32.mrf.mxu0
      %v5095 = vadd.f32 0.0, %v5094
      %v5096 = vpop.f32.mrf.mxu0
      %5097 = vmatprep.mubr.bf16.mxu0 0
      %5098 = vmatmul.mubr.bf16.gmra.mxu0 %v4943
      %v5099 = vpop.f32.mrf.mxu0
      %v5100 = vadd.f32 0.0, %v5099
      %v5101 = vpop.f32.mrf.mxu0
      %v5102 = vpop.f32.mrf.mxu0
      %v5103 = vadd.f32 0.0, %v5102
      %v5104 = vpop.f32.mrf.mxu0
      %5105 = vmatprep.mubr.bf16.mxu0 0
      %5106 = vmatmul.mubr.bf16.gmra.mxu0 %v4946
      %v5107 = vpop.f32.mrf.mxu0
      %v5108 = vadd.f32 0.0, %v5107
      %v5109 = vpop.f32.mrf.mxu0
      %v5110 = vpop.f32.mrf.mxu0
      %v5111 = vadd.f32 0.0, %v5110
      %v5112 = vpop.f32.mrf.mxu0
      %5113 = vmatprep.mubr.bf16.mxu0 0
      %5114 = vmatmul.mubr.bf16.gmra.mxu0 %v4949
      %v5115 = vpop.f32.mrf.mxu0
      %v5116 = vadd.f32 0.0, %v5115
      %v5117 = vpop.f32.mrf.mxu0
      %v5118 = vpop.f32.mrf.mxu0
      %v5119 = vadd.f32 0.0, %v5118
      %v5120 = vpop.f32.mrf.mxu0
      %5121 = vmatprep.mubr.bf16.mxu0 0
      %5122 = vmatmul.mubr.bf16.gmra.mxu0 %v4952
      %v5123 = vpop.f32.mrf.mxu0
      %v5124 = vadd.f32 0.0, %v5123
      %v5125 = vpop.f32.mrf.mxu0
      %v5126 = vpop.f32.mrf.mxu0
      %v5127 = vadd.f32 0.0, %v5126
      %v5128 = vpop.f32.mrf.mxu0
      %5129 = vmatprep.mubr.bf16.mxu0 0
      %5130 = vmatmul.mubr.bf16.gmra.mxu0 %v4955
      %v5131 = vpop.f32.mrf.mxu0
      %v5132 = vadd.f32 0.0, %v5131
      %v5133 = vpop.f32.mrf.mxu0
      %v5134 = vpop.f32.mrf.mxu0
      %v5135 = vadd.f32 0.0, %v5134
      %v5136 = vpop.f32.mrf.mxu0
      %5137 = vmatprep.mubr.bf16.mxu0 0
      %5138 = vmatmul.mubr.bf16.gmra.mxu0 %v4958
      %v5139 = vpop.f32.mrf.mxu0
      %v5140 = vadd.f32 0.0, %v5139
      %v5141 = vpop.f32.mrf.mxu0
      %v5142 = vpop.f32.mrf.mxu0
      %v5143 = vadd.f32 0.0, %v5142
      %v5144 = vpop.f32.mrf.mxu0
      %5145 = vmatprep.mubr.bf16.mxu0 0
      %5146 = vmatmul.mubr.bf16.gmra.mxu0 %v4961
      %v5147 = vpop.f32.mrf.mxu0
      %v5148 = vadd.f32 0.0, %v5147
      %v5149 = vpop.f32.mrf.mxu0
      %v5150 = vpop.f32.mrf.mxu0
      %v5151 = vadd.f32 0.0, %v5150
      %v5152 = vpop.f32.mrf.mxu0
      %5153 = vmatprep.mubr.bf16.mxu0 0
      %5154 = vmatmul.mubr.bf16.gmra.mxu0 %v4964
      %v5155 = vpop.f32.mrf.mxu0
      %v5156 = vadd.f32 0.0, %v5155
      %v5157 = vpop.f32.mrf.mxu0
      %v5158 = vpop.f32.mrf.mxu0
      %v5159 = vadd.f32 0.0, %v5158
      %v5160 = vpop.f32.mrf.mxu0
      %5161 = vmatprep.mubr.bf16.mxu0 0
      %5162 = vmatmul.mubr.bf16.gmra.mxu0 %v4967
      %v5163 = vpop.f32.mrf.mxu0
      %v5164 = vadd.f32 0.0, %v5163
      %v5165 = vpop.f32.mrf.mxu0
      %v5166 = vpop.f32.mrf.mxu0
      %v5167 = vpop.f32.mrf.mxu0
      %5168 = vdwg.mxu0
      %v5169 = vadd.f32 %v4537, %v5004
      %v5170 = vadd.f32 %v4538, %v5007
      %v5171 = vadd.f32 %v4539, %v5012
      %v5172 = vadd.f32 %v4540, %v5015
      %v5173 = vadd.f32 %v4541, %v5020
      %v5174 = vadd.f32 %v4542, %v5023
      %v5175 = vadd.f32 %v4543, %v5028
      %v5176 = vadd.f32 %v4544, %v5031
      %v5177 = vadd.f32 %v4545, %v5036
      %v5178 = vadd.f32 %v4546, %v5039
      %v5179 = vadd.f32 %v4547, %v5044
      %v5180 = vadd.f32 %v4548, %v5047
      %v5181 = vadd.f32 %v4549, %v5052
      %v5182 = vadd.f32 %v4550, %v5055
      %v5183 = vadd.f32 %v4551, %v5060
      %v5184 = vadd.f32 %v4552, %v5063
      %v5185 = vadd.f32 %v4553, %v5068
      %v5186 = vadd.f32 %v4554, %v5071
      %v5187 = vadd.f32 %v4555, %v5076
      %v5188 = vadd.f32 %v4556, %v5079
      %v5189 = vadd.f32 %v4557, %v5084
      %v5190 = vadd.f32 %v4558, %v5087
      %v5191 = vadd.f32 %v4559, %v5092
      %v5192 = vadd.f32 %v4560, %v5095
      %v5193 = vadd.f32 %v4561, %v5100
      %v5194 = vadd.f32 %v4562, %v5103
      %v5195 = vadd.f32 %v4563, %v5108
      %v5196 = vadd.f32 %v4564, %v5111
      %v5197 = vadd.f32 %v4565, %v5116
      %v5198 = vadd.f32 %v4566, %v5119
      %v5199 = vadd.f32 %v4567, %v5124
      %v5200 = vadd.f32 %v4568, %v5127
      %v5201 = vadd.f32 %v4569, %v5132
      %v5202 = vadd.f32 %v4570, %v5135
      %v5203 = vadd.f32 %v4571, %v5140
      %v5204 = vadd.f32 %v4572, %v5143
      %v5205 = vadd.f32 %v4573, %v5148
      %v5206 = vadd.f32 %v4574, %v5151
      %v5207 = vadd.f32 %v4575, %v5156
      %v5208 = vadd.f32 %v4576, %v5159
      %v5209 = vadd.f32 %v4577, %v5164
      %v5210 = vld [vmem:[#allocation2 + $0x18] sm:$0xe]
      %s5211 = scalar_lea.vmem %s6, 112
      %v5212 = vld [vmem:[%s5211] sm:$0xf]
      %v5213 = vld [vmem:[%s5211 + $0x4] sm:$0xf]
      %v5214 = vld [vmem:[%s5211 + $0x8] sm:$0xf]
      %v5215 = vld [vmem:[%s5211 + $0xc] sm:$0xf]
      %v5217 = vunpack.c.l.b16 %v5210
      %v5218 = vpack.c.b16 %v4666, %v5217
      %vm5219 = vcmask 1046528
      %v5220 = vrot.slane %v5218, 1
      %v5221 = vrot.slane %v4707, 1
      %v5222 = vsel %vm5219, %v5220, %v5221
      %v5223 = vrot.slane %v4708, 1
      %v5224 = vsel %vm5219, %v5221, %v5223
      %v5225 = vrot.slane %v4709, 1
      %v5226 = vsel %vm5219, %v5223, %v5225
      %v5227 = vrot.slane %v4710, 1
      %v5228 = vsel %vm5219, %v5225, %v5227
      %v5229 = vrot.slane %v4711, 1
      %v5230 = vsel %vm5219, %v5227, %v5229
      %v5231 = vrot.slane %v4712, 1
      %v5232 = vsel %vm5219, %v5229, %v5231
      %v5233 = vrot.slane %v4713, 1
      %v5234 = vsel %vm5219, %v5231, %v5233
      %v5235 = vrot.slane %v4714, 1
      %v5236 = vsel %vm5219, %v5233, %v5235
      %v5237 = vrot.slane %v4715, 1
      %v5238 = vsel %vm5219, %v5235, %v5237
      %v5239 = vrot.slane %v4716, 1
      %v5240 = vsel %vm5219, %v5237, %v5239
      %v5241 = vrot.slane %v4717, 1
      %v5242 = vsel %vm5219, %v5239, %v5241
      %v5243 = vrot.slane %v4718, 1
      %v5244 = vsel %vm5219, %v5241, %v5243
      %v5245 = vrot.slane %v4719, 1
      %v5246 = vsel %vm5219, %v5243, %v5245
      %v5247 = vrot.slane %v4720, 1
      %v5248 = vsel %vm5219, %v5245, %v5247
      %v5249 = vrot.slane %v4721, 1
      %v5250 = vsel %vm5219, %v5247, %v5249
      %v5251 = vrot.slane %v4722, 1
      %v5252 = vsel %vm5219, %v5249, %v5251
      %v5253 = vrot.slane %v4723, 1
      %v5254 = vsel %vm5219, %v5251, %v5253
      %v5255 = vrot.slane %v4724, 1
      %v5256 = vsel %vm5219, %v5253, %v5255
      %v5257 = vrot.slane %v4725, 1
      %v5258 = vsel %vm5219, %v5255, %v5257
      %v5259 = vrot.slane %v4726, 1
      %v5260 = vsel %vm5219, %v5257, %v5259
      %v5265 = vunpack.c.l.b16 %v5212
      %v5266 = vunpack.c.l.b16 %v5213
      %v5267 = vunpack.c.l.b16 %v5214
      %v5268 = vunpack.c.l.b16 %v5215
      %v5269 = vpack.c.b16 %v5266, %v5265
      %v5270 = vpack.c.b16 %v5268, %v5267
      %v5274 = vsel %vm940, %v5222, 0
      %v5277 = vsel %vm940, %v5224, 0
      %v5280 = vsel %vm940, %v5226, 0
      %v5283 = vsel %vm940, %v5228, 0
      %v5286 = vsel %vm940, %v5230, 0
      %v5289 = vsel %vm940, %v5232, 0
      %v5292 = vsel %vm940, %v5234, 0
      %v5295 = vsel %vm940, %v5236, 0
      %v5298 = vsel %vm940, %v5238, 0
      %v5301 = vsel %vm940, %v5240, 0
      %v5304 = vsel %vm940, %v5242, 0
      %v5307 = vsel %vm940, %v5244, 0
      %v5310 = vsel %vm940, %v5246, 0
      %v5313 = vsel %vm940, %v5248, 0
      %v5316 = vsel %vm940, %v5250, 0
      %v5319 = vsel %vm940, %v5252, 0
      %v5322 = vsel %vm940, %v5254, 0
      %v5325 = vsel %vm940, %v5256, 0
      %v5328 = vsel %vm940, %v5258, 0
      %v5331 = vsel %vm940, %v5260, 0
      %v5334 = vsel %vm940, %v5259, 0
      %5336 = vmatprep.subr.bf16.mxu0 0
      %5337 = vmatpush1.bf16.msra.mxu0 0
      %5338 = vmatprep.subr.bf16.mxu0 0
      %5339 = vmatpush1.bf16.msra.mxu0 0
      %5340 = vmatprep.subr.bf16.mxu0 0
      %5341 = vmatpush1.bf16.msra.mxu0 0
      %5342 = vmatprep.subr.bf16.mxu0 0
      %5343 = vmatpush1.bf16.msra.mxu0 0
      %5344 = vmatprep.subr.bf16.mxu0 0
      %5345 = vmatpush1.bf16.msra.mxu0 0
      %5346 = vmatprep.subr.bf16.mxu0 0
      %5347 = vmatpush1.bf16.msra.mxu0 0
      %5348 = vmatprep.subr.bf16.mxu0 0
      %5349 = vmatpush1.bf16.msra.mxu0 %v5270
      %5350 = vmatprep.subr.bf16.mxu0 0
      %5351 = vmatpush1.bf16.msra.mxu0 %v5269
      %5352 = vmatprep.subr.bf16.mxu0 0
      %5353 = vmatpush2.bf16.msra.mxu0 0
      %5354 = vmatprep.subr.bf16.mxu0 0
      %5355 = vmatpush2.bf16.msra.mxu0 0
      %5356 = vmatprep.subr.bf16.mxu0 0
      %5357 = vmatpush2.bf16.msra.mxu0 0
      %5358 = vmatprep.subr.bf16.mxu0 0
      %5359 = vmatpush2.bf16.msra.mxu0 0
      %5360 = vmatprep.subr.bf16.mxu0 0
      %5361 = vmatpush2.bf16.msra.mxu0 0
      %5362 = vmatprep.subr.bf16.mxu0 0
      %5363 = vmatpush2.bf16.msra.mxu0 0
      %5364 = vmatprep.subr.bf16.mxu0 0
      %5365 = vmatpush2.bf16.msra.mxu0 0
      %5366 = vmatprep.subr.bf16.mxu0 0
      %5367 = vmatpush2.bf16.msra.mxu0 0
      %5368 = vmatprep.mubr.bf16.mxu0 0
      %5369 = vmatmul.mubr.bf16.gmra.mxu0 %v5274
      %v5370 = vpop.f32.mrf.mxu0
      %v5371 = vadd.f32 0.0, %v5370
      %v5372 = vpop.f32.mrf.mxu0
      %v5373 = vpop.f32.mrf.mxu0
      %v5374 = vadd.f32 0.0, %v5373
      %v5375 = vpop.f32.mrf.mxu0
      %5376 = vmatprep.mubr.bf16.mxu0 0
      %5377 = vmatmul.mubr.bf16.gmra.mxu0 %v5277
      %v5378 = vpop.f32.mrf.mxu0
      %v5379 = vadd.f32 0.0, %v5378
      %v5380 = vpop.f32.mrf.mxu0
      %v5381 = vpop.f32.mrf.mxu0
      %v5382 = vadd.f32 0.0, %v5381
      %v5383 = vpop.f32.mrf.mxu0
      %5384 = vmatprep.mubr.bf16.mxu0 0
      %5385 = vmatmul.mubr.bf16.gmra.mxu0 %v5280
      %v5386 = vpop.f32.mrf.mxu0
      %v5387 = vadd.f32 0.0, %v5386
      %v5388 = vpop.f32.mrf.mxu0
      %v5389 = vpop.f32.mrf.mxu0
      %v5390 = vadd.f32 0.0, %v5389
      %v5391 = vpop.f32.mrf.mxu0
      %5392 = vmatprep.mubr.bf16.mxu0 0
      %5393 = vmatmul.mubr.bf16.gmra.mxu0 %v5283
      %v5394 = vpop.f32.mrf.mxu0
      %v5395 = vadd.f32 0.0, %v5394
      %v5396 = vpop.f32.mrf.mxu0
      %v5397 = vpop.f32.mrf.mxu0
      %v5398 = vadd.f32 0.0, %v5397
      %v5399 = vpop.f32.mrf.mxu0
      %5400 = vmatprep.mubr.bf16.mxu0 0
      %5401 = vmatmul.mubr.bf16.gmra.mxu0 %v5286
      %v5402 = vpop.f32.mrf.mxu0
      %v5403 = vadd.f32 0.0, %v5402
      %v5404 = vpop.f32.mrf.mxu0
      %v5405 = vpop.f32.mrf.mxu0
      %v5406 = vadd.f32 0.0, %v5405
      %v5407 = vpop.f32.mrf.mxu0
      %5408 = vmatprep.mubr.bf16.mxu0 0
      %5409 = vmatmul.mubr.bf16.gmra.mxu0 %v5289
      %v5410 = vpop.f32.mrf.mxu0
      %v5411 = vadd.f32 0.0, %v5410
      %v5412 = vpop.f32.mrf.mxu0
      %v5413 = vpop.f32.mrf.mxu0
      %v5414 = vadd.f32 0.0, %v5413
      %v5415 = vpop.f32.mrf.mxu0
      %5416 = vmatprep.mubr.bf16.mxu0 0
      %5417 = vmatmul.mubr.bf16.gmra.mxu0 %v5292
      %v5418 = vpop.f32.mrf.mxu0
      %v5419 = vadd.f32 0.0, %v5418
      %v5420 = vpop.f32.mrf.mxu0
      %v5421 = vpop.f32.mrf.mxu0
      %v5422 = vadd.f32 0.0, %v5421
      %v5423 = vpop.f32.mrf.mxu0
      %5424 = vmatprep.mubr.bf16.mxu0 0
      %5425 = vmatmul.mubr.bf16.gmra.mxu0 %v5295
      %v5426 = vpop.f32.mrf.mxu0
      %v5427 = vadd.f32 0.0, %v5426
      %v5428 = vpop.f32.mrf.mxu0
      %v5429 = vpop.f32.mrf.mxu0
      %v5430 = vadd.f32 0.0, %v5429
      %v5431 = vpop.f32.mrf.mxu0
      %5432 = vmatprep.mubr.bf16.mxu0 0
      %5433 = vmatmul.mubr.bf16.gmra.mxu0 %v5298
      %v5434 = vpop.f32.mrf.mxu0
      %v5435 = vadd.f32 0.0, %v5434
      %v5436 = vpop.f32.mrf.mxu0
      %v5437 = vpop.f32.mrf.mxu0
      %v5438 = vadd.f32 0.0, %v5437
      %v5439 = vpop.f32.mrf.mxu0
      %5440 = vmatprep.mubr.bf16.mxu0 0
      %5441 = vmatmul.mubr.bf16.gmra.mxu0 %v5301
      %v5442 = vpop.f32.mrf.mxu0
      %v5443 = vadd.f32 0.0, %v5442
      %v5444 = vpop.f32.mrf.mxu0
      %v5445 = vpop.f32.mrf.mxu0
      %v5446 = vadd.f32 0.0, %v5445
      %v5447 = vpop.f32.mrf.mxu0
      %5448 = vmatprep.mubr.bf16.mxu0 0
      %5449 = vmatmul.mubr.bf16.gmra.mxu0 %v5304
      %v5450 = vpop.f32.mrf.mxu0
      %v5451 = vadd.f32 0.0, %v5450
      %v5452 = vpop.f32.mrf.mxu0
      %v5453 = vpop.f32.mrf.mxu0
      %v5454 = vadd.f32 0.0, %v5453
      %v5455 = vpop.f32.mrf.mxu0
      %5456 = vmatprep.mubr.bf16.mxu0 0
      %5457 = vmatmul.mubr.bf16.gmra.mxu0 %v5307
      %v5458 = vpop.f32.mrf.mxu0
      %v5459 = vadd.f32 0.0, %v5458
      %v5460 = vpop.f32.mrf.mxu0
      %v5461 = vpop.f32.mrf.mxu0
      %v5462 = vadd.f32 0.0, %v5461
      %v5463 = vpop.f32.mrf.mxu0
      %5464 = vmatprep.mubr.bf16.mxu0 0
      %5465 = vmatmul.mubr.bf16.gmra.mxu0 %v5310
      %v5466 = vpop.f32.mrf.mxu0
      %v5467 = vadd.f32 0.0, %v5466
      %v5468 = vpop.f32.mrf.mxu0
      %v5469 = vpop.f32.mrf.mxu0
      %v5470 = vadd.f32 0.0, %v5469
      %v5471 = vpop.f32.mrf.mxu0
      %5472 = vmatprep.mubr.bf16.mxu0 0
      %5473 = vmatmul.mubr.bf16.gmra.mxu0 %v5313
      %v5474 = vpop.f32.mrf.mxu0
      %v5475 = vadd.f32 0.0, %v5474
      %v5476 = vpop.f32.mrf.mxu0
      %v5477 = vpop.f32.mrf.mxu0
      %v5478 = vadd.f32 0.0, %v5477
      %v5479 = vpop.f32.mrf.mxu0
      %5480 = vmatprep.mubr.bf16.mxu0 0
      %5481 = vmatmul.mubr.bf16.gmra.mxu0 %v5316
      %v5482 = vpop.f32.mrf.mxu0
      %v5483 = vadd.f32 0.0, %v5482
      %v5484 = vpop.f32.mrf.mxu0
      %v5485 = vpop.f32.mrf.mxu0
      %v5486 = vadd.f32 0.0, %v5485
      %v5487 = vpop.f32.mrf.mxu0
      %5488 = vmatprep.mubr.bf16.mxu0 0
      %5489 = vmatmul.mubr.bf16.gmra.mxu0 %v5319
      %v5490 = vpop.f32.mrf.mxu0
      %v5491 = vadd.f32 0.0, %v5490
      %v5492 = vpop.f32.mrf.mxu0
      %v5493 = vpop.f32.mrf.mxu0
      %v5494 = vadd.f32 0.0, %v5493
      %v5495 = vpop.f32.mrf.mxu0
      %5496 = vmatprep.mubr.bf16.mxu0 0
      %5497 = vmatmul.mubr.bf16.gmra.mxu0 %v5322
      %v5498 = vpop.f32.mrf.mxu0
      %v5499 = vadd.f32 0.0, %v5498
      %v5500 = vpop.f32.mrf.mxu0
      %v5501 = vpop.f32.mrf.mxu0
      %v5502 = vadd.f32 0.0, %v5501
      %v5503 = vpop.f32.mrf.mxu0
      %5504 = vmatprep.mubr.bf16.mxu0 0
      %5505 = vmatmul.mubr.bf16.gmra.mxu0 %v5325
      %v5506 = vpop.f32.mrf.mxu0
      %v5507 = vadd.f32 0.0, %v5506
      %v5508 = vpop.f32.mrf.mxu0
      %v5509 = vpop.f32.mrf.mxu0
      %v5510 = vadd.f32 0.0, %v5509
      %v5511 = vpop.f32.mrf.mxu0
      %5512 = vmatprep.mubr.bf16.mxu0 0
      %5513 = vmatmul.mubr.bf16.gmra.mxu0 %v5328
      %v5514 = vpop.f32.mrf.mxu0
      %v5515 = vadd.f32 0.0, %v5514
      %v5516 = vpop.f32.mrf.mxu0
      %v5517 = vpop.f32.mrf.mxu0
      %v5518 = vadd.f32 0.0, %v5517
      %v5519 = vpop.f32.mrf.mxu0
      %5520 = vmatprep.mubr.bf16.mxu0 0
      %5521 = vmatmul.mubr.bf16.gmra.mxu0 %v5331
      %v5522 = vpop.f32.mrf.mxu0
      %v5523 = vadd.f32 0.0, %v5522
      %v5524 = vpop.f32.mrf.mxu0
      %v5525 = vpop.f32.mrf.mxu0
      %v5526 = vadd.f32 0.0, %v5525
      %v5527 = vpop.f32.mrf.mxu0
      %5528 = vmatprep.mubr.bf16.mxu0 0
      %5529 = vmatmul.mubr.bf16.gmra.mxu0 %v5334
      %v5530 = vpop.f32.mrf.mxu0
      %v5531 = vadd.f32 0.0, %v5530
      %v5532 = vpop.f32.mrf.mxu0
      %v5533 = vpop.f32.mrf.mxu0
      %v5534 = vpop.f32.mrf.mxu0
      %5535 = vdwg.mxu0
      %v5536 = vadd.f32 %v5169, %v5371
      %v5537 = vadd.f32 %v5170, %v5374
      %v5538 = vadd.f32 %v5171, %v5379
      %v5539 = vadd.f32 %v5172, %v5382
      %v5540 = vadd.f32 %v5173, %v5387
      %v5541 = vadd.f32 %v5174, %v5390
      %v5542 = vadd.f32 %v5175, %v5395
      %v5543 = vadd.f32 %v5176, %v5398
      %v5544 = vadd.f32 %v5177, %v5403
      %v5545 = vadd.f32 %v5178, %v5406
      %v5546 = vadd.f32 %v5179, %v5411
      %v5547 = vadd.f32 %v5180, %v5414
      %v5548 = vadd.f32 %v5181, %v5419
      %v5549 = vadd.f32 %v5182, %v5422
      %v5550 = vadd.f32 %v5183, %v5427
      %v5551 = vadd.f32 %v5184, %v5430
      %v5552 = vadd.f32 %v5185, %v5435
      %v5553 = vadd.f32 %v5186, %v5438
      %v5554 = vadd.f32 %v5187, %v5443
      %v5555 = vadd.f32 %v5188, %v5446
      %v5556 = vadd.f32 %v5189, %v5451
      %v5557 = vadd.f32 %v5190, %v5454
      %v5558 = vadd.f32 %v5191, %v5459
      %v5559 = vadd.f32 %v5192, %v5462
      %v5560 = vadd.f32 %v5193, %v5467
      %v5561 = vadd.f32 %v5194, %v5470
      %v5562 = vadd.f32 %v5195, %v5475
      %v5563 = vadd.f32 %v5196, %v5478
      %v5564 = vadd.f32 %v5197, %v5483
      %v5565 = vadd.f32 %v5198, %v5486
      %v5566 = vadd.f32 %v5199, %v5491
      %v5567 = vadd.f32 %v5200, %v5494
      %v5568 = vadd.f32 %v5201, %v5499
      %v5569 = vadd.f32 %v5202, %v5502
      %v5570 = vadd.f32 %v5203, %v5507
      %v5571 = vadd.f32 %v5204, %v5510
      %v5572 = vadd.f32 %v5205, %v5515
      %v5573 = vadd.f32 %v5206, %v5518
      %v5574 = vadd.f32 %v5207, %v5523
      %v5575 = vadd.f32 %v5208, %v5526
      %v5576 = vadd.f32 %v5209, %v5531
      %v5577 = vld [vmem:[#allocation2 + $0xb8] sm:$0xf]
      %s5578 = scalar_lea.vmem %s6, 128
      %v5579 = vld [vmem:[%s5578] sm:$0xf]
      %v5580 = vld [vmem:[%s5578 + $0x4] sm:$0xf]
      %v5581 = vld [vmem:[%s5578 + $0x8] sm:$0xf]
      %v5582 = vld [vmem:[%s5578 + $0xc] sm:$0xf]
      %v5584 = vunpack.c.l.b16 %v5577
      %v5585 = vpack.c.b16 %v5584, %v5584
      %vm5586 = vsmask.f32 6400
      %v5588 = vshrl.u32 %v5218, 16
      %v5590 = vrot.slane %v5588, 1
      %v5591 = vshll.u32 %v5218, 16
      %v5593 = vrot.slane %v5591, 2
      %v5594 = vor.u32 %v5590, %v5593
      %v5595 = vrot.slane %v4739, 1
      %v5596 = vrot.slane %v4735, 2
      %v5597 = vor.u32 %v5595, %v5596
      %v5598 = vsel %vm5586, %v5594, %v5597
      %v5599 = vrot.slane %v4747, 1
      %v5600 = vrot.slane %v4743, 2
      %v5601 = vor.u32 %v5599, %v5600
      %v5602 = vsel %vm5586, %v5597, %v5601
      %v5603 = vrot.slane %v4755, 1
      %v5604 = vrot.slane %v4751, 2
      %v5605 = vor.u32 %v5603, %v5604
      %v5606 = vsel %vm5586, %v5601, %v5605
      %v5607 = vrot.slane %v4763, 1
      %v5608 = vrot.slane %v4759, 2
      %v5609 = vor.u32 %v5607, %v5608
      %v5610 = vsel %vm5586, %v5605, %v5609
      %v5611 = vrot.slane %v4771, 1
      %v5612 = vrot.slane %v4767, 2
      %v5613 = vor.u32 %v5611, %v5612
      %v5614 = vsel %vm5586, %v5609, %v5613
      %v5615 = vrot.slane %v4779, 1
      %v5616 = vrot.slane %v4775, 2
      %v5617 = vor.u32 %v5615, %v5616
      %v5618 = vsel %vm5586, %v5613, %v5617
      %v5619 = vrot.slane %v4787, 1
      %v5620 = vrot.slane %v4783, 2
      %v5621 = vor.u32 %v5619, %v5620
      %v5622 = vsel %vm5586, %v5617, %v5621
      %v5623 = vrot.slane %v4795, 1
      %v5624 = vrot.slane %v4791, 2
      %v5625 = vor.u32 %v5623, %v5624
      %v5626 = vsel %vm5586, %v5621, %v5625
      %v5627 = vrot.slane %v4803, 1
      %v5628 = vrot.slane %v4799, 2
      %v5629 = vor.u32 %v5627, %v5628
      %v5630 = vsel %vm5586, %v5625, %v5629
      %v5631 = vrot.slane %v4811, 1
      %v5632 = vrot.slane %v4807, 2
      %v5633 = vor.u32 %v5631, %v5632
      %v5634 = vsel %vm5586, %v5629, %v5633
      %v5635 = vrot.slane %v4819, 1
      %v5636 = vrot.slane %v4815, 2
      %v5637 = vor.u32 %v5635, %v5636
      %v5638 = vsel %vm5586, %v5633, %v5637
      %v5639 = vrot.slane %v4827, 1
      %v5640 = vrot.slane %v4823, 2
      %v5641 = vor.u32 %v5639, %v5640
      %v5642 = vsel %vm5586, %v5637, %v5641
      %v5643 = vrot.slane %v4835, 1
      %v5644 = vrot.slane %v4831, 2
      %v5645 = vor.u32 %v5643, %v5644
      %v5646 = vsel %vm5586, %v5641, %v5645
      %v5647 = vrot.slane %v4843, 1
      %v5648 = vrot.slane %v4839, 2
      %v5649 = vor.u32 %v5647, %v5648
      %v5650 = vsel %vm5586, %v5645, %v5649
      %v5651 = vrot.slane %v4851, 1
      %v5652 = vrot.slane %v4847, 2
      %v5653 = vor.u32 %v5651, %v5652
      %v5654 = vsel %vm5586, %v5649, %v5653
      %v5655 = vrot.slane %v4859, 1
      %v5656 = vrot.slane %v4855, 2
      %v5657 = vor.u32 %v5655, %v5656
      %v5658 = vsel %vm5586, %v5653, %v5657
      %v5659 = vrot.slane %v4867, 1
      %v5660 = vrot.slane %v4863, 2
      %v5661 = vor.u32 %v5659, %v5660
      %v5662 = vsel %vm5586, %v5657, %v5661
      %v5663 = vrot.slane %v4875, 1
      %v5664 = vrot.slane %v4871, 2
      %v5665 = vor.u32 %v5663, %v5664
      %v5666 = vsel %vm5586, %v5661, %v5665
      %v5667 = vrot.slane %v4883, 1
      %v5668 = vrot.slane %v4879, 2
      %v5669 = vor.u32 %v5667, %v5668
      %v5670 = vsel %vm5586, %v5665, %v5669
      %v5672 = vshrl.u32 %v5585, 16
      %v5674 = vrot.slane %v5672, 1
      %v5675 = vshll.u32 %v5585, 16
      %v5677 = vrot.slane %v5675, 2
      %v5678 = vor.u32 %v5674, %v5677
      %v5679 = vsel %vm5586, %v5669, %v5678
      %v5684 = vunpack.c.l.b16 %v5579
      %v5685 = vunpack.c.l.b16 %v5580
      %v5686 = vunpack.c.l.b16 %v5581
      %v5687 = vunpack.c.l.b16 %v5582
      %v5688 = vpack.c.b16 %v5685, %v5684
      %v5689 = vpack.c.b16 %v5687, %v5686
      %v5693 = vsel %vm940, %v5598, 0
      %v5696 = vsel %vm940, %v5602, 0
      %v5699 = vsel %vm940, %v5606, 0
      %v5702 = vsel %vm940, %v5610, 0
      %v5705 = vsel %vm940, %v5614, 0
      %v5708 = vsel %vm940, %v5618, 0
      %v5711 = vsel %vm940, %v5622, 0
      %v5714 = vsel %vm940, %v5626, 0
      %v5717 = vsel %vm940, %v5630, 0
      %v5720 = vsel %vm940, %v5634, 0
      %v5723 = vsel %vm940, %v5638, 0
      %v5726 = vsel %vm940, %v5642, 0
      %v5729 = vsel %vm940, %v5646, 0
      %v5732 = vsel %vm940, %v5650, 0
      %v5735 = vsel %vm940, %v5654, 0
      %v5738 = vsel %vm940, %v5658, 0
      %v5741 = vsel %vm940, %v5662, 0
      %v5744 = vsel %vm940, %v5666, 0
      %v5747 = vsel %vm940, %v5670, 0
      %v5750 = vsel %vm940, %v5679, 0
      %v5753 = vsel %vm940, %v5678, 0
      %5755 = vmatprep.subr.bf16.mxu0 0
      %5756 = vmatpush1.bf16.msra.mxu0 0
      %5757 = vmatprep.subr.bf16.mxu0 0
      %5758 = vmatpush1.bf16.msra.mxu0 0
      %5759 = vmatprep.subr.bf16.mxu0 0
      %5760 = vmatpush1.bf16.msra.mxu0 0
      %5761 = vmatprep.subr.bf16.mxu0 0
      %5762 = vmatpush1.bf16.msra.mxu0 0
      %5763 = vmatprep.subr.bf16.mxu0 0
      %5764 = vmatpush1.bf16.msra.mxu0 0
      %5765 = vmatprep.subr.bf16.mxu0 0
      %5766 = vmatpush1.bf16.msra.mxu0 0
      %5767 = vmatprep.subr.bf16.mxu0 0
      %5768 = vmatpush1.bf16.msra.mxu0 %v5689
      %5769 = vmatprep.subr.bf16.mxu0 0
      %5770 = vmatpush1.bf16.msra.mxu0 %v5688
      %5771 = vmatprep.subr.bf16.mxu0 0
      %5772 = vmatpush2.bf16.msra.mxu0 0
      %5773 = vmatprep.subr.bf16.mxu0 0
      %5774 = vmatpush2.bf16.msra.mxu0 0
      %5775 = vmatprep.subr.bf16.mxu0 0
      %5776 = vmatpush2.bf16.msra.mxu0 0
      %5777 = vmatprep.subr.bf16.mxu0 0
      %5778 = vmatpush2.bf16.msra.mxu0 0
      %5779 = vmatprep.subr.bf16.mxu0 0
      %5780 = vmatpush2.bf16.msra.mxu0 0
      %5781 = vmatprep.subr.bf16.mxu0 0
      %5782 = vmatpush2.bf16.msra.mxu0 0
      %5783 = vmatprep.subr.bf16.mxu0 0
      %5784 = vmatpush2.bf16.msra.mxu0 0
      %5785 = vmatprep.subr.bf16.mxu0 0
      %5786 = vmatpush2.bf16.msra.mxu0 0
      %5787 = vmatprep.mubr.bf16.mxu0 0
      %5788 = vmatmul.mubr.bf16.gmra.mxu0 %v5693
      %v5789 = vpop.f32.mrf.mxu0
      %v5790 = vadd.f32 0.0, %v5789
      %v5791 = vpop.f32.mrf.mxu0
      %v5792 = vpop.f32.mrf.mxu0
      %v5793 = vadd.f32 0.0, %v5792
      %v5794 = vpop.f32.mrf.mxu0
      %5795 = vmatprep.mubr.bf16.mxu0 0
      %5796 = vmatmul.mubr.bf16.gmra.mxu0 %v5696
      %v5797 = vpop.f32.mrf.mxu0
      %v5798 = vadd.f32 0.0, %v5797
      %v5799 = vpop.f32.mrf.mxu0
      %v5800 = vpop.f32.mrf.mxu0
      %v5801 = vadd.f32 0.0, %v5800
      %v5802 = vpop.f32.mrf.mxu0
      %5803 = vmatprep.mubr.bf16.mxu0 0
      %5804 = vmatmul.mubr.bf16.gmra.mxu0 %v5699
      %v5805 = vpop.f32.mrf.mxu0
      %v5806 = vadd.f32 0.0, %v5805
      %v5807 = vpop.f32.mrf.mxu0
      %v5808 = vpop.f32.mrf.mxu0
      %v5809 = vadd.f32 0.0, %v5808
      %v5810 = vpop.f32.mrf.mxu0
      %5811 = vmatprep.mubr.bf16.mxu0 0
      %5812 = vmatmul.mubr.bf16.gmra.mxu0 %v5702
      %v5813 = vpop.f32.mrf.mxu0
      %v5814 = vadd.f32 0.0, %v5813
      %v5815 = vpop.f32.mrf.mxu0
      %v5816 = vpop.f32.mrf.mxu0
      %v5817 = vadd.f32 0.0, %v5816
      %v5818 = vpop.f32.mrf.mxu0
      %5819 = vmatprep.mubr.bf16.mxu0 0
      %5820 = vmatmul.mubr.bf16.gmra.mxu0 %v5705
      %v5821 = vpop.f32.mrf.mxu0
      %v5822 = vadd.f32 0.0, %v5821
      %v5823 = vpop.f32.mrf.mxu0
      %v5824 = vpop.f32.mrf.mxu0
      %v5825 = vadd.f32 0.0, %v5824
      %v5826 = vpop.f32.mrf.mxu0
      %5827 = vmatprep.mubr.bf16.mxu0 0
      %5828 = vmatmul.mubr.bf16.gmra.mxu0 %v5708
      %v5829 = vpop.f32.mrf.mxu0
      %v5830 = vadd.f32 0.0, %v5829
      %v5831 = vpop.f32.mrf.mxu0
      %v5832 = vpop.f32.mrf.mxu0
      %v5833 = vadd.f32 0.0, %v5832
      %v5834 = vpop.f32.mrf.mxu0
      %5835 = vmatprep.mubr.bf16.mxu0 0
      %5836 = vmatmul.mubr.bf16.gmra.mxu0 %v5711
      %v5837 = vpop.f32.mrf.mxu0
      %v5838 = vadd.f32 0.0, %v5837
      %v5839 = vpop.f32.mrf.mxu0
      %v5840 = vpop.f32.mrf.mxu0
      %v5841 = vadd.f32 0.0, %v5840
      %v5842 = vpop.f32.mrf.mxu0
      %5843 = vmatprep.mubr.bf16.mxu0 0
      %5844 = vmatmul.mubr.bf16.gmra.mxu0 %v5714
      %v5845 = vpop.f32.mrf.mxu0
      %v5846 = vadd.f32 0.0, %v5845
      %v5847 = vpop.f32.mrf.mxu0
      %v5848 = vpop.f32.mrf.mxu0
      %v5849 = vadd.f32 0.0, %v5848
      %v5850 = vpop.f32.mrf.mxu0
      %5851 = vmatprep.mubr.bf16.mxu0 0
      %5852 = vmatmul.mubr.bf16.gmra.mxu0 %v5717
      %v5853 = vpop.f32.mrf.mxu0
      %v5854 = vadd.f32 0.0, %v5853
      %v5855 = vpop.f32.mrf.mxu0
      %v5856 = vpop.f32.mrf.mxu0
      %v5857 = vadd.f32 0.0, %v5856
      %v5858 = vpop.f32.mrf.mxu0
      %5859 = vmatprep.mubr.bf16.mxu0 0
      %5860 = vmatmul.mubr.bf16.gmra.mxu0 %v5720
      %v5861 = vpop.f32.mrf.mxu0
      %v5862 = vadd.f32 0.0, %v5861
      %v5863 = vpop.f32.mrf.mxu0
      %v5864 = vpop.f32.mrf.mxu0
      %v5865 = vadd.f32 0.0, %v5864
      %v5866 = vpop.f32.mrf.mxu0
      %5867 = vmatprep.mubr.bf16.mxu0 0
      %5868 = vmatmul.mubr.bf16.gmra.mxu0 %v5723
      %v5869 = vpop.f32.mrf.mxu0
      %v5870 = vadd.f32 0.0, %v5869
      %v5871 = vpop.f32.mrf.mxu0
      %v5872 = vpop.f32.mrf.mxu0
      %v5873 = vadd.f32 0.0, %v5872
      %v5874 = vpop.f32.mrf.mxu0
      %5875 = vmatprep.mubr.bf16.mxu0 0
      %5876 = vmatmul.mubr.bf16.gmra.mxu0 %v5726
      %v5877 = vpop.f32.mrf.mxu0
      %v5878 = vadd.f32 0.0, %v5877
      %v5879 = vpop.f32.mrf.mxu0
      %v5880 = vpop.f32.mrf.mxu0
      %v5881 = vadd.f32 0.0, %v5880
      %v5882 = vpop.f32.mrf.mxu0
      %5883 = vmatprep.mubr.bf16.mxu0 0
      %5884 = vmatmul.mubr.bf16.gmra.mxu0 %v5729
      %v5885 = vpop.f32.mrf.mxu0
      %v5886 = vadd.f32 0.0, %v5885
      %v5887 = vpop.f32.mrf.mxu0
      %v5888 = vpop.f32.mrf.mxu0
      %v5889 = vadd.f32 0.0, %v5888
      %v5890 = vpop.f32.mrf.mxu0
      %5891 = vmatprep.mubr.bf16.mxu0 0
      %5892 = vmatmul.mubr.bf16.gmra.mxu0 %v5732
      %v5893 = vpop.f32.mrf.mxu0
      %v5894 = vadd.f32 0.0, %v5893
      %v5895 = vpop.f32.mrf.mxu0
      %v5896 = vpop.f32.mrf.mxu0
      %v5897 = vadd.f32 0.0, %v5896
      %v5898 = vpop.f32.mrf.mxu0
      %5899 = vmatprep.mubr.bf16.mxu0 0
      %5900 = vmatmul.mubr.bf16.gmra.mxu0 %v5735
      %v5901 = vpop.f32.mrf.mxu0
      %v5902 = vadd.f32 0.0, %v5901
      %v5903 = vpop.f32.mrf.mxu0
      %v5904 = vpop.f32.mrf.mxu0
      %v5905 = vadd.f32 0.0, %v5904
      %v5906 = vpop.f32.mrf.mxu0
      %5907 = vmatprep.mubr.bf16.mxu0 0
      %5908 = vmatmul.mubr.bf16.gmra.mxu0 %v5738
      %v5909 = vpop.f32.mrf.mxu0
      %v5910 = vadd.f32 0.0, %v5909
      %v5911 = vpop.f32.mrf.mxu0
      %v5912 = vpop.f32.mrf.mxu0
      %v5913 = vadd.f32 0.0, %v5912
      %v5914 = vpop.f32.mrf.mxu0
      %5915 = vmatprep.mubr.bf16.mxu0 0
      %5916 = vmatmul.mubr.bf16.gmra.mxu0 %v5741
      %v5917 = vpop.f32.mrf.mxu0
      %v5918 = vadd.f32 0.0, %v5917
      %v5919 = vpop.f32.mrf.mxu0
      %v5920 = vpop.f32.mrf.mxu0
      %v5921 = vadd.f32 0.0, %v5920
      %v5922 = vpop.f32.mrf.mxu0
      %5923 = vmatprep.mubr.bf16.mxu0 0
      %5924 = vmatmul.mubr.bf16.gmra.mxu0 %v5744
      %v5925 = vpop.f32.mrf.mxu0
      %v5926 = vadd.f32 0.0, %v5925
      %v5927 = vpop.f32.mrf.mxu0
      %v5928 = vpop.f32.mrf.mxu0
      %v5929 = vadd.f32 0.0, %v5928
      %v5930 = vpop.f32.mrf.mxu0
      %5931 = vmatprep.mubr.bf16.mxu0 0
      %5932 = vmatmul.mubr.bf16.gmra.mxu0 %v5747
      %v5933 = vpop.f32.mrf.mxu0
      %v5934 = vadd.f32 0.0, %v5933
      %v5935 = vpop.f32.mrf.mxu0
      %v5936 = vpop.f32.mrf.mxu0
      %v5937 = vadd.f32 0.0, %v5936
      %v5938 = vpop.f32.mrf.mxu0
      %5939 = vmatprep.mubr.bf16.mxu0 0
      %5940 = vmatmul.mubr.bf16.gmra.mxu0 %v5750
      %v5941 = vpop.f32.mrf.mxu0
      %v5942 = vadd.f32 0.0, %v5941
      %v5943 = vpop.f32.mrf.mxu0
      %v5944 = vpop.f32.mrf.mxu0
      %v5945 = vadd.f32 0.0, %v5944
      %v5946 = vpop.f32.mrf.mxu0
      %5947 = vmatprep.mubr.bf16.mxu0 0
      %5948 = vmatmul.mubr.bf16.gmra.mxu0 %v5753
      %v5949 = vpop.f32.mrf.mxu0
      %v5950 = vadd.f32 0.0, %v5949
      %v5951 = vpop.f32.mrf.mxu0
      %v5952 = vpop.f32.mrf.mxu0
      %v5953 = vpop.f32.mrf.mxu0
      %5954 = vdwg.mxu0
      %v5955 = vadd.f32 %v5536, %v5790
      %v5956 = vadd.f32 %v5537, %v5793
      %v5957 = vadd.f32 %v5538, %v5798
      %v5958 = vadd.f32 %v5539, %v5801
      %v5959 = vadd.f32 %v5540, %v5806
      %v5960 = vadd.f32 %v5541, %v5809
      %v5961 = vadd.f32 %v5542, %v5814
      %v5962 = vadd.f32 %v5543, %v5817
      %v5963 = vadd.f32 %v5544, %v5822
      %v5964 = vadd.f32 %v5545, %v5825
      %v5965 = vadd.f32 %v5546, %v5830
      %v5966 = vadd.f32 %v5547, %v5833
      %v5967 = vadd.f32 %v5548, %v5838
      %v5968 = vadd.f32 %v5549, %v5841
      %v5969 = vadd.f32 %v5550, %v5846
      %v5970 = vadd.f32 %v5551, %v5849
      %v5971 = vadd.f32 %v5552, %v5854
      %v5972 = vadd.f32 %v5553, %v5857
      %v5973 = vadd.f32 %v5554, %v5862
      %v5974 = vadd.f32 %v5555, %v5865
      %v5975 = vadd.f32 %v5556, %v5870
      %v5976 = vadd.f32 %v5557, %v5873
      %v5977 = vadd.f32 %v5558, %v5878
      %v5978 = vadd.f32 %v5559, %v5881
      %v5979 = vadd.f32 %v5560, %v5886
      %v5980 = vadd.f32 %v5561, %v5889
      %v5981 = vadd.f32 %v5562, %v5894
      %v5982 = vadd.f32 %v5563, %v5897
      %v5983 = vadd.f32 %v5564, %v5902
      %v5984 = vadd.f32 %v5565, %v5905
      %v5985 = vadd.f32 %v5566, %v5910
      %v5986 = vadd.f32 %v5567, %v5913
      %v5987 = vadd.f32 %v5568, %v5918
      %v5988 = vadd.f32 %v5569, %v5921
      %v5989 = vadd.f32 %v5570, %v5926
      %v5990 = vadd.f32 %v5571, %v5929
      %v5991 = vadd.f32 %v5572, %v5934
      %v5992 = vadd.f32 %v5573, %v5937
      %v5993 = vadd.f32 %v5574, %v5942
      %v5994 = vadd.f32 %v5575, %v5945
      %v5995 = vadd.f32 %v5576, %v5950
      %v5997 = vlaneseq
      %v5998 = vshrl.u32 %v5997, 7
      %v5999 = vsub.s32 0, %v5998
      %v6000 = vrot.slane %v1746, %v5999
      %v6002 = vadd.f32 %v5955, %v6000
      %v6003 = vadd.f32 %v5956, %v6000
      %v6004 = vadd.f32 %v5957, %v6000
      %v6005 = vadd.f32 %v5958, %v6000
      %v6006 = vadd.f32 %v5959, %v6000
      %v6007 = vadd.f32 %v5960, %v6000
      %v6008 = vadd.f32 %v5961, %v6000
      %v6009 = vadd.f32 %v5962, %v6000
      %v6010 = vadd.f32 %v5963, %v6000
      %v6011 = vadd.f32 %v5964, %v6000
      %v6012 = vadd.f32 %v5965, %v6000
      %v6013 = vadd.f32 %v5966, %v6000
      %v6014 = vadd.f32 %v5967, %v6000
      %v6015 = vadd.f32 %v5968, %v6000
      %v6016 = vadd.f32 %v5969, %v6000
      %v6017 = vadd.f32 %v5970, %v6000
      %v6018 = vadd.f32 %v5971, %v6000
      %v6019 = vadd.f32 %v5972, %v6000
      %v6020 = vadd.f32 %v5973, %v6000
      %v6021 = vadd.f32 %v5974, %v6000
      %v6022 = vadd.f32 %v5975, %v6000
      %v6023 = vadd.f32 %v5976, %v6000
      %v6024 = vadd.f32 %v5977, %v6000
      %v6025 = vadd.f32 %v5978, %v6000
      %v6026 = vadd.f32 %v5979, %v6000
      %v6027 = vadd.f32 %v5980, %v6000
      %v6028 = vadd.f32 %v5981, %v6000
      %v6029 = vadd.f32 %v5982, %v6000
      %v6030 = vadd.f32 %v5983, %v6000
      %v6031 = vadd.f32 %v5984, %v6000
      %v6032 = vadd.f32 %v5985, %v6000
      %v6033 = vadd.f32 %v5986, %v6000
      %v6034 = vadd.f32 %v5987, %v6000
      %v6035 = vadd.f32 %v5988, %v6000
      %v6036 = vadd.f32 %v5989, %v6000
      %v6037 = vadd.f32 %v5990, %v6000
      %v6038 = vadd.f32 %v5991, %v6000
      %v6039 = vadd.f32 %v5992, %v6000
      %v6040 = vadd.f32 %v5993, %v6000
      %v6041 = vadd.f32 %v5994, %v6000
      %v6042 = vadd.f32 %v5995, %v6000
      %vm6043 = vcmp.gt.f32.partialorder %v6002, 0.0
      %vm6044 = vcmp.gt.f32.partialorder %v6003, 0.0
      %vm6045 = vcmp.gt.f32.partialorder %v6004, 0.0
      %vm6046 = vcmp.gt.f32.partialorder %v6005, 0.0
      %vm6047 = vcmp.gt.f32.partialorder %v6006, 0.0
      %vm6048 = vcmp.gt.f32.partialorder %v6007, 0.0
      %vm6049 = vcmp.gt.f32.partialorder %v6008, 0.0
      %vm6050 = vcmp.gt.f32.partialorder %v6009, 0.0
      %vm6051 = vcmp.gt.f32.partialorder %v6010, 0.0
      %vm6052 = vcmp.gt.f32.partialorder %v6011, 0.0
      %vm6053 = vcmp.gt.f32.partialorder %v6012, 0.0
      %vm6054 = vcmp.gt.f32.partialorder %v6013, 0.0
      %vm6055 = vcmp.gt.f32.partialorder %v6014, 0.0
      %vm6056 = vcmp.gt.f32.partialorder %v6015, 0.0
      %vm6057 = vcmp.gt.f32.partialorder %v6016, 0.0
      %vm6058 = vcmp.gt.f32.partialorder %v6017, 0.0
      %vm6059 = vcmp.gt.f32.partialorder %v6018, 0.0
      %vm6060 = vcmp.gt.f32.partialorder %v6019, 0.0
      %vm6061 = vcmp.gt.f32.partialorder %v6020, 0.0
      %vm6062 = vcmp.gt.f32.partialorder %v6021, 0.0
      %vm6063 = vcmp.gt.f32.partialorder %v6022, 0.0
      %vm6064 = vcmp.gt.f32.partialorder %v6023, 0.0
      %vm6065 = vcmp.gt.f32.partialorder %v6024, 0.0
      %vm6066 = vcmp.gt.f32.partialorder %v6025, 0.0
      %vm6067 = vcmp.gt.f32.partialorder %v6026, 0.0
      %vm6068 = vcmp.gt.f32.partialorder %v6027, 0.0
      %vm6069 = vcmp.gt.f32.partialorder %v6028, 0.0
      %vm6070 = vcmp.gt.f32.partialorder %v6029, 0.0
      %vm6071 = vcmp.gt.f32.partialorder %v6030, 0.0
      %vm6072 = vcmp.gt.f32.partialorder %v6031, 0.0
      %vm6073 = vcmp.gt.f32.partialorder %v6032, 0.0
      %vm6074 = vcmp.gt.f32.partialorder %v6033, 0.0
      %vm6075 = vcmp.gt.f32.partialorder %v6034, 0.0
      %vm6076 = vcmp.gt.f32.partialorder %v6035, 0.0
      %vm6077 = vcmp.gt.f32.partialorder %v6036, 0.0
      %vm6078 = vcmp.gt.f32.partialorder %v6037, 0.0
      %vm6079 = vcmp.gt.f32.partialorder %v6038, 0.0
      %vm6080 = vcmp.gt.f32.partialorder %v6039, 0.0
      %vm6081 = vcmp.gt.f32.partialorder %v6040, 0.0
      %vm6082 = vcmp.gt.f32.partialorder %v6041, 0.0
      %vm6083 = vcmp.gt.f32.partialorder %v6042, 0.0
      %v6084 = vmul.f32 %v6002, 0.01
      %v6085 = vmul.f32 %v6003, 0.01
      %v6086 = vmul.f32 %v6004, 0.01
      %v6087 = vmul.f32 %v6005, 0.01
      %v6088 = vmul.f32 %v6006, 0.01
      %v6089 = vmul.f32 %v6007, 0.01
      %v6090 = vmul.f32 %v6008, 0.01
      %v6091 = vmul.f32 %v6009, 0.01
      %v6092 = vmul.f32 %v6010, 0.01
      %v6093 = vmul.f32 %v6011, 0.01
      %v6094 = vmul.f32 %v6012, 0.01
      %v6095 = vmul.f32 %v6013, 0.01
      %v6096 = vmul.f32 %v6014, 0.01
      %v6097 = vmul.f32 %v6015, 0.01
      %v6098 = vmul.f32 %v6016, 0.01
      %v6099 = vmul.f32 %v6017, 0.01
      %v6100 = vmul.f32 %v6018, 0.01
      %v6101 = vmul.f32 %v6019, 0.01
      %v6102 = vmul.f32 %v6020, 0.01
      %v6103 = vmul.f32 %v6021, 0.01
      %v6104 = vmul.f32 %v6022, 0.01
      %v6105 = vmul.f32 %v6023, 0.01
      %v6106 = vmul.f32 %v6024, 0.01
      %v6107 = vmul.f32 %v6025, 0.01
      %v6108 = vmul.f32 %v6026, 0.01
      %v6109 = vmul.f32 %v6027, 0.01
      %v6110 = vmul.f32 %v6028, 0.01
      %v6111 = vmul.f32 %v6029, 0.01
      %v6112 = vmul.f32 %v6030, 0.01
      %v6113 = vmul.f32 %v6031, 0.01
      %v6114 = vmul.f32 %v6032, 0.01
      %v6115 = vmul.f32 %v6033, 0.01
      %v6116 = vmul.f32 %v6034, 0.01
      %v6117 = vmul.f32 %v6035, 0.01
      %v6118 = vmul.f32 %v6036, 0.01
      %v6119 = vmul.f32 %v6037, 0.01
      %v6120 = vmul.f32 %v6038, 0.01
      %v6121 = vmul.f32 %v6039, 0.01
      %v6122 = vmul.f32 %v6040, 0.01
      %v6123 = vmul.f32 %v6041, 0.01
      %v6124 = vmul.f32 %v6042, 0.01
      %v6125 = vsel %vm6043, %v6002, %v6084
      %v6126 = vsel %vm6044, %v6003, %v6085
      %v6127 = vsel %vm6045, %v6004, %v6086
      %v6128 = vsel %vm6046, %v6005, %v6087
      %v6129 = vsel %vm6047, %v6006, %v6088
      %v6130 = vsel %vm6048, %v6007, %v6089
      %v6131 = vsel %vm6049, %v6008, %v6090
      %v6132 = vsel %vm6050, %v6009, %v6091
      %v6133 = vsel %vm6051, %v6010, %v6092
      %v6134 = vsel %vm6052, %v6011, %v6093
      %v6135 = vsel %vm6053, %v6012, %v6094
      %v6136 = vsel %vm6054, %v6013, %v6095
      %v6137 = vsel %vm6055, %v6014, %v6096
      %v6138 = vsel %vm6056, %v6015, %v6097
      %v6139 = vsel %vm6057, %v6016, %v6098
      %v6140 = vsel %vm6058, %v6017, %v6099
      %v6141 = vsel %vm6059, %v6018, %v6100
      %v6142 = vsel %vm6060, %v6019, %v6101
      %v6143 = vsel %vm6061, %v6020, %v6102
      %v6144 = vsel %vm6062, %v6021, %v6103
      %v6145 = vsel %vm6063, %v6022, %v6104
      %v6146 = vsel %vm6064, %v6023, %v6105
      %v6147 = vsel %vm6065, %v6024, %v6106
      %v6148 = vsel %vm6066, %v6025, %v6107
      %v6149 = vsel %vm6067, %v6026, %v6108
      %v6150 = vsel %vm6068, %v6027, %v6109
      %v6151 = vsel %vm6069, %v6028, %v6110
      %v6152 = vsel %vm6070, %v6029, %v6111
      %v6153 = vsel %vm6071, %v6030, %v6112
      %v6154 = vsel %vm6072, %v6031, %v6113
      %v6155 = vsel %vm6073, %v6032, %v6114
      %v6156 = vsel %vm6074, %v6033, %v6115
      %v6157 = vsel %vm6075, %v6034, %v6116
      %v6158 = vsel %vm6076, %v6035, %v6117
      %v6159 = vsel %vm6077, %v6036, %v6118
      %v6160 = vsel %vm6078, %v6037, %v6119
      %v6161 = vsel %vm6079, %v6038, %v6120
      %v6162 = vsel %vm6080, %v6039, %v6121
      %v6163 = vsel %vm6081, %v6040, %v6122
      %v6164 = vsel %vm6082, %v6041, %v6123
      %v6165 = vsel %vm6083, %v6042, %v6124
      %v6166 = vmul.f32 %v6125, %v1296
      %v6167 = vmul.f32 %v6126, %v1301
      %v6168 = vmul.f32 %v6127, %v1306
      %v6169 = vmul.f32 %v6128, %v1311
      %v6170 = vmul.f32 %v6129, %v1316
      %v6171 = vmul.f32 %v6130, %v1321
      %v6172 = vmul.f32 %v6131, %v1326
      %v6173 = vmul.f32 %v6132, %v1331
      %v6174 = vmul.f32 %v6133, %v1336
      %v6175 = vmul.f32 %v6134, %v1341
      %v6176 = vmul.f32 %v6135, %v1346
      %v6177 = vmul.f32 %v6136, %v1351
      %v6178 = vmul.f32 %v6137, %v1356
      %v6179 = vmul.f32 %v6138, %v1361
      %v6180 = vmul.f32 %v6139, %v1366
      %v6181 = vmul.f32 %v6140, %v1371
      %v6182 = vmul.f32 %v6141, %v1376
      %v6183 = vmul.f32 %v6142, %v1381
      %v6184 = vmul.f32 %v6143, %v1386
      %v6185 = vmul.f32 %v6144, %v1391
      %v6186 = vmul.f32 %v6145, %v1396
      %v6187 = vmul.f32 %v6146, %v1401
      %v6188 = vmul.f32 %v6147, %v1406
      %v6189 = vmul.f32 %v6148, %v1411
      %v6190 = vmul.f32 %v6149, %v1416
      %v6191 = vmul.f32 %v6150, %v1421
      %v6192 = vmul.f32 %v6151, %v1426
      %v6193 = vmul.f32 %v6152, %v1431
      %v6194 = vmul.f32 %v6153, %v1436
      %v6195 = vmul.f32 %v6154, %v1441
      %v6196 = vmul.f32 %v6155, %v1446
      %v6197 = vmul.f32 %v6156, %v1451
      %v6198 = vmul.f32 %v6157, %v1456
      %v6199 = vmul.f32 %v6158, %v1461
      %v6200 = vmul.f32 %v6159, %v1466
      %v6201 = vmul.f32 %v6160, %v1471
      %v6202 = vmul.f32 %v6161, %v1476
      %v6203 = vmul.f32 %v6162, %v1481
      %v6204 = vmul.f32 %v6163, %v1486
      %v6205 = vmul.f32 %v6164, %v1491
      %v6206 = vmul.f32 %v6165, %v1496
      %6207 = vst.msk [vmem:[%s515] sm:$0xff] %vm940, %v6166
      %6208 = vst.msk [vmem:[%s515 + $0x8] sm:$0xff] %vm940, %v6167
      %6209 = vst.msk [vmem:[%s515 + $0x10] sm:$0xff] %vm940, %v6168
      %6210 = vst.msk [vmem:[%s515 + $0x18] sm:$0xff] %vm940, %v6169
      %6211 = vst.msk [vmem:[%s515 + $0x20] sm:$0xff] %vm940, %v6170
      %6212 = vst.msk [vmem:[%s515 + $0x28] sm:$0xff] %vm940, %v6171
      %6213 = vst.msk [vmem:[%s515 + $0x30] sm:$0xff] %vm940, %v6172
      %6214 = vst.msk [vmem:[%s515 + $0x38] sm:$0xff] %vm940, %v6173
      %6215 = vst.msk [vmem:[%s515 + $0x40] sm:$0xff] %vm940, %v6174
      %6216 = vst.msk [vmem:[%s515 + $0x48] sm:$0xff] %vm940, %v6175
      %6217 = vst.msk [vmem:[%s515 + $0x50] sm:$0xff] %vm940, %v6176
      %6218 = vst.msk [vmem:[%s515 + $0x58] sm:$0xff] %vm940, %v6177
      %6219 = vst.msk [vmem:[%s515 + $0x60] sm:$0xff] %vm940, %v6178
      %6220 = vst.msk [vmem:[%s515 + $0x68] sm:$0xff] %vm940, %v6179
      %6221 = vst.msk [vmem:[%s515 + $0x70] sm:$0xff] %vm940, %v6180
      %6222 = vst.msk [vmem:[%s515 + $0x78] sm:$0xff] %vm940, %v6181
      %6223 = vst.msk [vmem:[%s515 + $0x80] sm:$0xff] %vm940, %v6182
      %6224 = vst.msk [vmem:[%s515 + $0x88] sm:$0xff] %vm940, %v6183
      %6225 = vst.msk [vmem:[%s515 + $0x90] sm:$0xff] %vm940, %v6184
      %6226 = vst.msk [vmem:[%s515 + $0x98] sm:$0xff] %vm940, %v6185
      %6227 = vst.msk [vmem:[%s515 + $0xa0] sm:$0xff] %vm940, %v6186
      %6228 = vst.msk [vmem:[%s515 + $0xa8] sm:$0xff] %vm940, %v6187
      %6229 = vst.msk [vmem:[%s515 + $0xb0] sm:$0xff] %vm940, %v6188
      %6230 = vst.msk [vmem:[%s515 + $0xb8] sm:$0xff] %vm940, %v6189
      %6231 = vst.msk [vmem:[%s515 + $0xc0] sm:$0xff] %vm940, %v6190
      %6232 = vst.msk [vmem:[%s515 + $0xc8] sm:$0xff] %vm940, %v6191
      %6233 = vst.msk [vmem:[%s515 + $0xd0] sm:$0xff] %vm940, %v6192
      %6234 = vst.msk [vmem:[%s515 + $0xd8] sm:$0xff] %vm940, %v6193
      %6235 = vst.msk [vmem:[%s515 + $0xe0] sm:$0xff] %vm940, %v6194
      %6236 = vst.msk [vmem:[%s515 + $0xe8] sm:$0xff] %vm940, %v6195
      %6237 = vst.msk [vmem:[%s515 + $0xf0] sm:$0xff] %vm940, %v6196
      %6238 = vst.msk [vmem:[%s515 + $0xf8] sm:$0xff] %vm940, %v6197
      %6239 = vst.msk [vmem:[%s515 + $0x100] sm:$0xff] %vm940, %v6198
      %6240 = vst.msk [vmem:[%s515 + $0x108] sm:$0xff] %vm940, %v6199
      %6241 = vst.msk [vmem:[%s515 + $0x110] sm:$0xff] %vm940, %v6200
      %6242 = vst.msk [vmem:[%s515 + $0x118] sm:$0xff] %vm940, %v6201
      %6243 = vst.msk [vmem:[%s515 + $0x120] sm:$0xff] %vm940, %v6202
      %6244 = vst.msk [vmem:[%s515 + $0x128] sm:$0xff] %vm940, %v6203
      %6245 = vst.msk [vmem:[%s515 + $0x130] sm:$0xff] %vm940, %v6204
      %6246 = vst.msk [vmem:[%s515 + $0x138] sm:$0xff] %vm940, %v6205
      %6247 = vst.msk [vmem:[%s515 + $0x140] sm:$0xf] %vm522, %v6206
      %v6248 = vld [vmem:[%s8] sm:$0xf]
      %v6249 = vld [vmem:[%s8 + $0x4] sm:$0xf]
      %v6250 = vld [vmem:[%s8 + $0x8] sm:$0xf]
      %v6251 = vld [vmem:[%s8 + $0xc] sm:$0xf]
      %v6256 = vunpack.c.l.b16 %v6248
      %v6257 = vunpack.c.l.b16 %v6249
      %v6258 = vunpack.c.l.b16 %v6250
      %v6259 = vunpack.c.l.b16 %v6251
      %v6260 = vpack.c.b16 %v6257, %v6256
      %v6261 = vpack.c.b16 %v6259, %v6258
      %6264 = vmatprep.subr.bf16.mxu0 0
      %6265 = vmatpush1.bf16.msra.mxu0 0
      %6266 = vmatprep.subr.bf16.mxu0 0
      %6267 = vmatpush1.bf16.msra.mxu0 0
      %6268 = vmatprep.subr.bf16.mxu0 0
      %6269 = vmatpush1.bf16.msra.mxu0 0
      %6270 = vmatprep.subr.bf16.mxu0 0
      %6271 = vmatpush1.bf16.msra.mxu0 0
      %6272 = vmatprep.subr.bf16.mxu0 0
      %6273 = vmatpush1.bf16.msra.mxu0 0
      %6274 = vmatprep.subr.bf16.mxu0 0
      %6275 = vmatpush1.bf16.msra.mxu0 0
      %6276 = vmatprep.subr.bf16.mxu0 0
      %6277 = vmatpush1.bf16.msra.mxu0 %v6261
      %6278 = vmatprep.subr.bf16.mxu0 0
      %6279 = vmatpush1.bf16.msra.mxu0 %v6260
      %6280 = vmatprep.subr.bf16.mxu0 0
      %6281 = vmatpush2.bf16.msra.mxu0 0
      %6282 = vmatprep.subr.bf16.mxu0 0
      %6283 = vmatpush2.bf16.msra.mxu0 0
      %6284 = vmatprep.subr.bf16.mxu0 0
      %6285 = vmatpush2.bf16.msra.mxu0 0
      %6286 = vmatprep.subr.bf16.mxu0 0
      %6287 = vmatpush2.bf16.msra.mxu0 0
      %6288 = vmatprep.subr.bf16.mxu0 0
      %6289 = vmatpush2.bf16.msra.mxu0 0
      %6290 = vmatprep.subr.bf16.mxu0 0
      %6291 = vmatpush2.bf16.msra.mxu0 0
      %6292 = vmatprep.subr.bf16.mxu0 0
      %6293 = vmatpush2.bf16.msra.mxu0 0
      %6294 = vmatprep.subr.bf16.mxu0 0
      %6295 = vmatpush2.bf16.msra.mxu0 0
      %6296 = vmatprep.mubr.bf16.mxu0 0
      %6297 = vmatmul.mubr.bf16.gmra.mxu0 %v942
      %v6298 = vpop.f32.mrf.mxu0
      %v6299 = vadd.f32 0.0, %v6298
      %v6300 = vpop.f32.mrf.mxu0
      %v6301 = vpop.f32.mrf.mxu0
      %v6302 = vadd.f32 0.0, %v6301
      %v6303 = vpop.f32.mrf.mxu0
      %6304 = vmatprep.mubr.bf16.mxu0 0
      %6305 = vmatmul.mubr.bf16.gmra.mxu0 %v945
      %v6306 = vpop.f32.mrf.mxu0
      %v6307 = vadd.f32 0.0, %v6306
      %v6308 = vpop.f32.mrf.mxu0
      %v6309 = vpop.f32.mrf.mxu0
      %v6310 = vadd.f32 0.0, %v6309
      %v6311 = vpop.f32.mrf.mxu0
      %6312 = vmatprep.mubr.bf16.mxu0 0
      %6313 = vmatmul.mubr.bf16.gmra.mxu0 %v948
      %v6314 = vpop.f32.mrf.mxu0
      %v6315 = vadd.f32 0.0, %v6314
      %v6316 = vpop.f32.mrf.mxu0
      %v6317 = vpop.f32.mrf.mxu0
      %v6318 = vadd.f32 0.0, %v6317
      %v6319 = vpop.f32.mrf.mxu0
      %6320 = vmatprep.mubr.bf16.mxu0 0
      %6321 = vmatmul.mubr.bf16.gmra.mxu0 %v951
      %v6322 = vpop.f32.mrf.mxu0
      %v6323 = vadd.f32 0.0, %v6322
      %v6324 = vpop.f32.mrf.mxu0
      %v6325 = vpop.f32.mrf.mxu0
      %v6326 = vadd.f32 0.0, %v6325
      %v6327 = vpop.f32.mrf.mxu0
      %6328 = vmatprep.mubr.bf16.mxu0 0
      %6329 = vmatmul.mubr.bf16.gmra.mxu0 %v954
      %v6330 = vpop.f32.mrf.mxu0
      %v6331 = vadd.f32 0.0, %v6330
      %v6332 = vpop.f32.mrf.mxu0
      %v6333 = vpop.f32.mrf.mxu0
      %v6334 = vadd.f32 0.0, %v6333
      %v6335 = vpop.f32.mrf.mxu0
      %6336 = vmatprep.mubr.bf16.mxu0 0
      %6337 = vmatmul.mubr.bf16.gmra.mxu0 %v957
      %v6338 = vpop.f32.mrf.mxu0
      %v6339 = vadd.f32 0.0, %v6338
      %v6340 = vpop.f32.mrf.mxu0
      %v6341 = vpop.f32.mrf.mxu0
      %v6342 = vadd.f32 0.0, %v6341
      %v6343 = vpop.f32.mrf.mxu0
      %6344 = vmatprep.mubr.bf16.mxu0 0
      %6345 = vmatmul.mubr.bf16.gmra.mxu0 %v960
      %v6346 = vpop.f32.mrf.mxu0
      %v6347 = vadd.f32 0.0, %v6346
      %v6348 = vpop.f32.mrf.mxu0
      %v6349 = vpop.f32.mrf.mxu0
      %v6350 = vadd.f32 0.0, %v6349
      %v6351 = vpop.f32.mrf.mxu0
      %6352 = vmatprep.mubr.bf16.mxu0 0
      %6353 = vmatmul.mubr.bf16.gmra.mxu0 %v963
      %v6354 = vpop.f32.mrf.mxu0
      %v6355 = vadd.f32 0.0, %v6354
      %v6356 = vpop.f32.mrf.mxu0
      %v6357 = vpop.f32.mrf.mxu0
      %v6358 = vadd.f32 0.0, %v6357
      %v6359 = vpop.f32.mrf.mxu0
      %6360 = vmatprep.mubr.bf16.mxu0 0
      %6361 = vmatmul.mubr.bf16.gmra.mxu0 %v966
      %v6362 = vpop.f32.mrf.mxu0
      %v6363 = vadd.f32 0.0, %v6362
      %v6364 = vpop.f32.mrf.mxu0
      %v6365 = vpop.f32.mrf.mxu0
      %v6366 = vadd.f32 0.0, %v6365
      %v6367 = vpop.f32.mrf.mxu0
      %6368 = vmatprep.mubr.bf16.mxu0 0
      %6369 = vmatmul.mubr.bf16.gmra.mxu0 %v969
      %v6370 = vpop.f32.mrf.mxu0
      %v6371 = vadd.f32 0.0, %v6370
      %v6372 = vpop.f32.mrf.mxu0
      %v6373 = vpop.f32.mrf.mxu0
      %v6374 = vadd.f32 0.0, %v6373
      %v6375 = vpop.f32.mrf.mxu0
      %6376 = vmatprep.mubr.bf16.mxu0 0
      %6377 = vmatmul.mubr.bf16.gmra.mxu0 %v972
      %v6378 = vpop.f32.mrf.mxu0
      %v6379 = vadd.f32 0.0, %v6378
      %v6380 = vpop.f32.mrf.mxu0
      %v6381 = vpop.f32.mrf.mxu0
      %v6382 = vadd.f32 0.0, %v6381
      %v6383 = vpop.f32.mrf.mxu0
      %6384 = vmatprep.mubr.bf16.mxu0 0
      %6385 = vmatmul.mubr.bf16.gmra.mxu0 %v975
      %v6386 = vpop.f32.mrf.mxu0
      %v6387 = vadd.f32 0.0, %v6386
      %v6388 = vpop.f32.mrf.mxu0
      %v6389 = vpop.f32.mrf.mxu0
      %v6390 = vadd.f32 0.0, %v6389
      %v6391 = vpop.f32.mrf.mxu0
      %6392 = vmatprep.mubr.bf16.mxu0 0
      %6393 = vmatmul.mubr.bf16.gmra.mxu0 %v978
      %v6394 = vpop.f32.mrf.mxu0
      %v6395 = vadd.f32 0.0, %v6394
      %v6396 = vpop.f32.mrf.mxu0
      %v6397 = vpop.f32.mrf.mxu0
      %v6398 = vadd.f32 0.0, %v6397
      %v6399 = vpop.f32.mrf.mxu0
      %6400 = vmatprep.mubr.bf16.mxu0 0
      %6401 = vmatmul.mubr.bf16.gmra.mxu0 %v981
      %v6402 = vpop.f32.mrf.mxu0
      %v6403 = vadd.f32 0.0, %v6402
      %v6404 = vpop.f32.mrf.mxu0
      %v6405 = vpop.f32.mrf.mxu0
      %v6406 = vadd.f32 0.0, %v6405
      %v6407 = vpop.f32.mrf.mxu0
      %6408 = vmatprep.mubr.bf16.mxu0 0
      %6409 = vmatmul.mubr.bf16.gmra.mxu0 %v984
      %v6410 = vpop.f32.mrf.mxu0
      %v6411 = vadd.f32 0.0, %v6410
      %v6412 = vpop.f32.mrf.mxu0
      %v6413 = vpop.f32.mrf.mxu0
      %v6414 = vadd.f32 0.0, %v6413
      %v6415 = vpop.f32.mrf.mxu0
      %6416 = vmatprep.mubr.bf16.mxu0 0
      %6417 = vmatmul.mubr.bf16.gmra.mxu0 %v987
      %v6418 = vpop.f32.mrf.mxu0
      %v6419 = vadd.f32 0.0, %v6418
      %v6420 = vpop.f32.mrf.mxu0
      %v6421 = vpop.f32.mrf.mxu0
      %v6422 = vadd.f32 0.0, %v6421
      %v6423 = vpop.f32.mrf.mxu0
      %6424 = vmatprep.mubr.bf16.mxu0 0
      %6425 = vmatmul.mubr.bf16.gmra.mxu0 %v990
      %v6426 = vpop.f32.mrf.mxu0
      %v6427 = vadd.f32 0.0, %v6426
      %v6428 = vpop.f32.mrf.mxu0
      %v6429 = vpop.f32.mrf.mxu0
      %v6430 = vadd.f32 0.0, %v6429
      %v6431 = vpop.f32.mrf.mxu0
      %6432 = vmatprep.mubr.bf16.mxu0 0
      %6433 = vmatmul.mubr.bf16.gmra.mxu0 %v993
      %v6434 = vpop.f32.mrf.mxu0
      %v6435 = vadd.f32 0.0, %v6434
      %v6436 = vpop.f32.mrf.mxu0
      %v6437 = vpop.f32.mrf.mxu0
      %v6438 = vadd.f32 0.0, %v6437
      %v6439 = vpop.f32.mrf.mxu0
      %6440 = vmatprep.mubr.bf16.mxu0 0
      %6441 = vmatmul.mubr.bf16.gmra.mxu0 %v996
      %v6442 = vpop.f32.mrf.mxu0
      %v6443 = vadd.f32 0.0, %v6442
      %v6444 = vpop.f32.mrf.mxu0
      %v6445 = vpop.f32.mrf.mxu0
      %v6446 = vadd.f32 0.0, %v6445
      %v6447 = vpop.f32.mrf.mxu0
      %6448 = vmatprep.mubr.bf16.mxu0 0
      %6449 = vmatmul.mubr.bf16.gmra.mxu0 %v999
      %v6450 = vpop.f32.mrf.mxu0
      %v6451 = vadd.f32 0.0, %v6450
      %v6452 = vpop.f32.mrf.mxu0
      %v6453 = vpop.f32.mrf.mxu0
      %v6454 = vadd.f32 0.0, %v6453
      %v6455 = vpop.f32.mrf.mxu0
      %6456 = vmatprep.mubr.bf16.mxu0 0
      %6457 = vmatmul.mubr.bf16.gmra.mxu0 %v1002
      %v6458 = vpop.f32.mrf.mxu0
      %v6459 = vadd.f32 0.0, %v6458
      %v6460 = vpop.f32.mrf.mxu0
      %v6461 = vpop.f32.mrf.mxu0
      %v6462 = vpop.f32.mrf.mxu0
      %6463 = vdwg.mxu0
      %v6464 = vadd.f32 %v780, %v6299
      %v6465 = vadd.f32 %v781, %v6302
      %v6466 = vadd.f32 %v782, %v6307
      %v6467 = vadd.f32 %v783, %v6310
      %v6468 = vadd.f32 %v784, %v6315
      %v6469 = vadd.f32 %v785, %v6318
      %v6470 = vadd.f32 %v786, %v6323
      %v6471 = vadd.f32 %v787, %v6326
      %v6472 = vadd.f32 %v788, %v6331
      %v6473 = vadd.f32 %v789, %v6334
      %v6474 = vadd.f32 %v790, %v6339
      %v6475 = vadd.f32 %v791, %v6342
      %v6476 = vadd.f32 %v792, %v6347
      %v6477 = vadd.f32 %v793, %v6350
      %v6478 = vadd.f32 %v794, %v6355
      %v6479 = vadd.f32 %v795, %v6358
      %v6480 = vadd.f32 %v796, %v6363
      %v6481 = vadd.f32 %v797, %v6366
      %v6482 = vadd.f32 %v798, %v6371
      %v6483 = vadd.f32 %v799, %v6374
      %v6484 = vadd.f32 %v800, %v6379
      %v6485 = vadd.f32 %v801, %v6382
      %v6486 = vadd.f32 %v802, %v6387
      %v6487 = vadd.f32 %v803, %v6390
      %v6488 = vadd.f32 %v804, %v6395
      %v6489 = vadd.f32 %v805, %v6398
      %v6490 = vadd.f32 %v806, %v6403
      %v6491 = vadd.f32 %v807, %v6406
      %v6492 = vadd.f32 %v808, %v6411
      %v6493 = vadd.f32 %v809, %v6414
      %v6494 = vadd.f32 %v810, %v6419
      %v6495 = vadd.f32 %v811, %v6422
      %v6496 = vadd.f32 %v812, %v6427
      %v6497 = vadd.f32 %v813, %v6430
      %v6498 = vadd.f32 %v814, %v6435
      %v6499 = vadd.f32 %v815, %v6438
      %v6500 = vadd.f32 %v816, %v6443
      %v6501 = vadd.f32 %v817, %v6446
      %v6502 = vadd.f32 %v818, %v6451
      %v6503 = vadd.f32 %v819, %v6454
      %v6504 = vadd.f32 %v820, %v6459
      %v6505 = vpack.c.bf16 %v6167, %v6166
      %v6506 = vpack.c.bf16 %v6169, %v6168
      %v6507 = vpack.c.bf16 %v6171, %v6170
      %v6508 = vpack.c.bf16 %v6173, %v6172
      %v6509 = vpack.c.bf16 %v6175, %v6174
      %v6510 = vpack.c.bf16 %v6177, %v6176
      %v6511 = vpack.c.bf16 %v6179, %v6178
      %v6512 = vpack.c.bf16 %v6181, %v6180
      %v6513 = vpack.c.bf16 %v6183, %v6182
      %v6514 = vpack.c.bf16 %v6185, %v6184
      %v6515 = vpack.c.bf16 %v6187, %v6186
      %v6516 = vpack.c.bf16 %v6189, %v6188
      %v6517 = vpack.c.bf16 %v6191, %v6190
      %v6518 = vpack.c.bf16 %v6193, %v6192
      %v6519 = vpack.c.bf16 %v6195, %v6194
      %v6520 = vpack.c.bf16 %v6197, %v6196
      %v6521 = vpack.c.bf16 %v6199, %v6198
      %v6522 = vpack.c.bf16 %v6201, %v6200
      %v6523 = vpack.c.bf16 %v6203, %v6202
      %v6524 = vpack.c.bf16 %v6205, %v6204
      %v6525 = vpack.c.bf16 %v6206, %v6206
      %v6526 = vld [vmem:[%s9] sm:$0xf]
      %v6527 = vld [vmem:[%s9 + $0x4] sm:$0xf]
      %v6528 = vld [vmem:[%s9 + $0x8] sm:$0xf]
      %v6529 = vld [vmem:[%s9 + $0xc] sm:$0xf]
      %v6534 = vunpack.c.l.b16 %v6526
      %v6535 = vunpack.c.l.b16 %v6527
      %v6536 = vunpack.c.l.b16 %v6528
      %v6537 = vunpack.c.l.b16 %v6529
      %v6538 = vpack.c.b16 %v6535, %v6534
      %v6539 = vpack.c.b16 %v6537, %v6536
      %v6543 = vsel %vm940, %v6505, 0
      %v6546 = vsel %vm940, %v6506, 0
      %v6549 = vsel %vm940, %v6507, 0
      %v6552 = vsel %vm940, %v6508, 0
      %v6555 = vsel %vm940, %v6509, 0
      %v6558 = vsel %vm940, %v6510, 0
      %v6561 = vsel %vm940, %v6511, 0
      %v6564 = vsel %vm940, %v6512, 0
      %v6567 = vsel %vm940, %v6513, 0
      %v6570 = vsel %vm940, %v6514, 0
      %v6573 = vsel %vm940, %v6515, 0
      %v6576 = vsel %vm940, %v6516, 0
      %v6579 = vsel %vm940, %v6517, 0
      %v6582 = vsel %vm940, %v6518, 0
      %v6585 = vsel %vm940, %v6519, 0
      %v6588 = vsel %vm940, %v6520, 0
      %v6591 = vsel %vm940, %v6521, 0
      %v6594 = vsel %vm940, %v6522, 0
      %v6597 = vsel %vm940, %v6523, 0
      %v6600 = vsel %vm940, %v6524, 0
      %v6603 = vsel %vm940, %v6525, 0
      %6605 = vmatprep.subr.bf16.mxu0 0
      %6606 = vmatpush1.bf16.msra.mxu0 0
      %6607 = vmatprep.subr.bf16.mxu0 0
      %6608 = vmatpush1.bf16.msra.mxu0 0
      %6609 = vmatprep.subr.bf16.mxu0 0
      %6610 = vmatpush1.bf16.msra.mxu0 0
      %6611 = vmatprep.subr.bf16.mxu0 0
      %6612 = vmatpush1.bf16.msra.mxu0 0
      %6613 = vmatprep.subr.bf16.mxu0 0
      %6614 = vmatpush1.bf16.msra.mxu0 0
      %6615 = vmatprep.subr.bf16.mxu0 0
      %6616 = vmatpush1.bf16.msra.mxu0 0
      %6617 = vmatprep.subr.bf16.mxu0 0
      %6618 = vmatpush1.bf16.msra.mxu0 %v6539
      %6619 = vmatprep.subr.bf16.mxu0 0
      %6620 = vmatpush1.bf16.msra.mxu0 %v6538
      %6621 = vmatprep.subr.bf16.mxu0 0
      %6622 = vmatpush2.bf16.msra.mxu0 0
      %6623 = vmatprep.subr.bf16.mxu0 0
      %6624 = vmatpush2.bf16.msra.mxu0 0
      %6625 = vmatprep.subr.bf16.mxu0 0
      %6626 = vmatpush2.bf16.msra.mxu0 0
      %6627 = vmatprep.subr.bf16.mxu0 0
      %6628 = vmatpush2.bf16.msra.mxu0 0
      %6629 = vmatprep.subr.bf16.mxu0 0
      %6630 = vmatpush2.bf16.msra.mxu0 0
      %6631 = vmatprep.subr.bf16.mxu0 0
      %6632 = vmatpush2.bf16.msra.mxu0 0
      %6633 = vmatprep.subr.bf16.mxu0 0
      %6634 = vmatpush2.bf16.msra.mxu0 0
      %6635 = vmatprep.subr.bf16.mxu0 0
      %6636 = vmatpush2.bf16.msra.mxu0 0
      %6637 = vmatprep.mubr.bf16.mxu0 0
      %6638 = vmatmul.mubr.bf16.gmra.mxu0 %v6543
      %v6639 = vpop.f32.mrf.mxu0
      %v6640 = vadd.f32 0.0, %v6639
      %v6641 = vpop.f32.mrf.mxu0
      %v6642 = vpop.f32.mrf.mxu0
      %v6643 = vadd.f32 0.0, %v6642
      %v6644 = vpop.f32.mrf.mxu0
      %6645 = vmatprep.mubr.bf16.mxu0 0
      %6646 = vmatmul.mubr.bf16.gmra.mxu0 %v6546
      %v6647 = vpop.f32.mrf.mxu0
      %v6648 = vadd.f32 0.0, %v6647
      %v6649 = vpop.f32.mrf.mxu0
      %v6650 = vpop.f32.mrf.mxu0
      %v6651 = vadd.f32 0.0, %v6650
      %v6652 = vpop.f32.mrf.mxu0
      %6653 = vmatprep.mubr.bf16.mxu0 0
      %6654 = vmatmul.mubr.bf16.gmra.mxu0 %v6549
      %v6655 = vpop.f32.mrf.mxu0
      %v6656 = vadd.f32 0.0, %v6655
      %v6657 = vpop.f32.mrf.mxu0
      %v6658 = vpop.f32.mrf.mxu0
      %v6659 = vadd.f32 0.0, %v6658
      %v6660 = vpop.f32.mrf.mxu0
      %6661 = vmatprep.mubr.bf16.mxu0 0
      %6662 = vmatmul.mubr.bf16.gmra.mxu0 %v6552
      %v6663 = vpop.f32.mrf.mxu0
      %v6664 = vadd.f32 0.0, %v6663
      %v6665 = vpop.f32.mrf.mxu0
      %v6666 = vpop.f32.mrf.mxu0
      %v6667 = vadd.f32 0.0, %v6666
      %v6668 = vpop.f32.mrf.mxu0
      %6669 = vmatprep.mubr.bf16.mxu0 0
      %6670 = vmatmul.mubr.bf16.gmra.mxu0 %v6555
      %v6671 = vpop.f32.mrf.mxu0
      %v6672 = vadd.f32 0.0, %v6671
      %v6673 = vpop.f32.mrf.mxu0
      %v6674 = vpop.f32.mrf.mxu0
      %v6675 = vadd.f32 0.0, %v6674
      %v6676 = vpop.f32.mrf.mxu0
      %6677 = vmatprep.mubr.bf16.mxu0 0
      %6678 = vmatmul.mubr.bf16.gmra.mxu0 %v6558
      %v6679 = vpop.f32.mrf.mxu0
      %v6680 = vadd.f32 0.0, %v6679
      %v6681 = vpop.f32.mrf.mxu0
      %v6682 = vpop.f32.mrf.mxu0
      %v6683 = vadd.f32 0.0, %v6682
      %v6684 = vpop.f32.mrf.mxu0
      %6685 = vmatprep.mubr.bf16.mxu0 0
      %6686 = vmatmul.mubr.bf16.gmra.mxu0 %v6561
      %v6687 = vpop.f32.mrf.mxu0
      %v6688 = vadd.f32 0.0, %v6687
      %v6689 = vpop.f32.mrf.mxu0
      %v6690 = vpop.f32.mrf.mxu0
      %v6691 = vadd.f32 0.0, %v6690
      %v6692 = vpop.f32.mrf.mxu0
      %6693 = vmatprep.mubr.bf16.mxu0 0
      %6694 = vmatmul.mubr.bf16.gmra.mxu0 %v6564
      %v6695 = vpop.f32.mrf.mxu0
      %v6696 = vadd.f32 0.0, %v6695
      %v6697 = vpop.f32.mrf.mxu0
      %v6698 = vpop.f32.mrf.mxu0
      %v6699 = vadd.f32 0.0, %v6698
      %v6700 = vpop.f32.mrf.mxu0
      %6701 = vmatprep.mubr.bf16.mxu0 0
      %6702 = vmatmul.mubr.bf16.gmra.mxu0 %v6567
      %v6703 = vpop.f32.mrf.mxu0
      %v6704 = vadd.f32 0.0, %v6703
      %v6705 = vpop.f32.mrf.mxu0
      %v6706 = vpop.f32.mrf.mxu0
      %v6707 = vadd.f32 0.0, %v6706
      %v6708 = vpop.f32.mrf.mxu0
      %6709 = vmatprep.mubr.bf16.mxu0 0
      %6710 = vmatmul.mubr.bf16.gmra.mxu0 %v6570
      %v6711 = vpop.f32.mrf.mxu0
      %v6712 = vadd.f32 0.0, %v6711
      %v6713 = vpop.f32.mrf.mxu0
      %v6714 = vpop.f32.mrf.mxu0
      %v6715 = vadd.f32 0.0, %v6714
      %v6716 = vpop.f32.mrf.mxu0
      %6717 = vmatprep.mubr.bf16.mxu0 0
      %6718 = vmatmul.mubr.bf16.gmra.mxu0 %v6573
      %v6719 = vpop.f32.mrf.mxu0
      %v6720 = vadd.f32 0.0, %v6719
      %v6721 = vpop.f32.mrf.mxu0
      %v6722 = vpop.f32.mrf.mxu0
      %v6723 = vadd.f32 0.0, %v6722
      %v6724 = vpop.f32.mrf.mxu0
      %6725 = vmatprep.mubr.bf16.mxu0 0
      %6726 = vmatmul.mubr.bf16.gmra.mxu0 %v6576
      %v6727 = vpop.f32.mrf.mxu0
      %v6728 = vadd.f32 0.0, %v6727
      %v6729 = vpop.f32.mrf.mxu0
      %v6730 = vpop.f32.mrf.mxu0
      %v6731 = vadd.f32 0.0, %v6730
      %v6732 = vpop.f32.mrf.mxu0
      %6733 = vmatprep.mubr.bf16.mxu0 0
      %6734 = vmatmul.mubr.bf16.gmra.mxu0 %v6579
      %v6735 = vpop.f32.mrf.mxu0
      %v6736 = vadd.f32 0.0, %v6735
      %v6737 = vpop.f32.mrf.mxu0
      %v6738 = vpop.f32.mrf.mxu0
      %v6739 = vadd.f32 0.0, %v6738
      %v6740 = vpop.f32.mrf.mxu0
      %6741 = vmatprep.mubr.bf16.mxu0 0
      %6742 = vmatmul.mubr.bf16.gmra.mxu0 %v6582
      %v6743 = vpop.f32.mrf.mxu0
      %v6744 = vadd.f32 0.0, %v6743
      %v6745 = vpop.f32.mrf.mxu0
      %v6746 = vpop.f32.mrf.mxu0
      %v6747 = vadd.f32 0.0, %v6746
      %v6748 = vpop.f32.mrf.mxu0
      %6749 = vmatprep.mubr.bf16.mxu0 0
      %6750 = vmatmul.mubr.bf16.gmra.mxu0 %v6585
      %v6751 = vpop.f32.mrf.mxu0
      %v6752 = vadd.f32 0.0, %v6751
      %v6753 = vpop.f32.mrf.mxu0
      %v6754 = vpop.f32.mrf.mxu0
      %v6755 = vadd.f32 0.0, %v6754
      %v6756 = vpop.f32.mrf.mxu0
      %6757 = vmatprep.mubr.bf16.mxu0 0
      %6758 = vmatmul.mubr.bf16.gmra.mxu0 %v6588
      %v6759 = vpop.f32.mrf.mxu0
      %v6760 = vadd.f32 0.0, %v6759
      %v6761 = vpop.f32.mrf.mxu0
      %v6762 = vpop.f32.mrf.mxu0
      %v6763 = vadd.f32 0.0, %v6762
      %v6764 = vpop.f32.mrf.mxu0
      %6765 = vmatprep.mubr.bf16.mxu0 0
      %6766 = vmatmul.mubr.bf16.gmra.mxu0 %v6591
      %v6767 = vpop.f32.mrf.mxu0
      %v6768 = vadd.f32 0.0, %v6767
      %v6769 = vpop.f32.mrf.mxu0
      %v6770 = vpop.f32.mrf.mxu0
      %v6771 = vadd.f32 0.0, %v6770
      %v6772 = vpop.f32.mrf.mxu0
      %6773 = vmatprep.mubr.bf16.mxu0 0
      %6774 = vmatmul.mubr.bf16.gmra.mxu0 %v6594
      %v6775 = vpop.f32.mrf.mxu0
      %v6776 = vadd.f32 0.0, %v6775
      %v6777 = vpop.f32.mrf.mxu0
      %v6778 = vpop.f32.mrf.mxu0
      %v6779 = vadd.f32 0.0, %v6778
      %v6780 = vpop.f32.mrf.mxu0
      %6781 = vmatprep.mubr.bf16.mxu0 0
      %6782 = vmatmul.mubr.bf16.gmra.mxu0 %v6597
      %v6783 = vpop.f32.mrf.mxu0
      %v6784 = vadd.f32 0.0, %v6783
      %v6785 = vpop.f32.mrf.mxu0
      %v6786 = vpop.f32.mrf.mxu0
      %v6787 = vadd.f32 0.0, %v6786
      %v6788 = vpop.f32.mrf.mxu0
      %6789 = vmatprep.mubr.bf16.mxu0 0
      %6790 = vmatmul.mubr.bf16.gmra.mxu0 %v6600
      %v6791 = vpop.f32.mrf.mxu0
      %v6792 = vadd.f32 0.0, %v6791
      %v6793 = vpop.f32.mrf.mxu0
      %v6794 = vpop.f32.mrf.mxu0
      %v6795 = vadd.f32 0.0, %v6794
      %v6796 = vpop.f32.mrf.mxu0
      %6797 = vmatprep.mubr.bf16.mxu0 0
      %6798 = vmatmul.mubr.bf16.gmra.mxu0 %v6603
      %v6799 = vpop.f32.mrf.mxu0
      %v6800 = vadd.f32 0.0, %v6799
      %v6801 = vpop.f32.mrf.mxu0
      %v6802 = vpop.f32.mrf.mxu0
      %v6803 = vpop.f32.mrf.mxu0
      %6804 = vdwg.mxu0
      %v6805 = vadd.f32 %v6464, %v6640
      %v6806 = vadd.f32 %v6465, %v6643
      %v6807 = vadd.f32 %v6466, %v6648
      %v6808 = vadd.f32 %v6467, %v6651
      %v6809 = vadd.f32 %v6468, %v6656
      %v6810 = vadd.f32 %v6469, %v6659
      %v6811 = vadd.f32 %v6470, %v6664
      %v6812 = vadd.f32 %v6471, %v6667
      %v6813 = vadd.f32 %v6472, %v6672
      %v6814 = vadd.f32 %v6473, %v6675
      %v6815 = vadd.f32 %v6474, %v6680
      %v6816 = vadd.f32 %v6475, %v6683
      %v6817 = vadd.f32 %v6476, %v6688
      %v6818 = vadd.f32 %v6477, %v6691
      %v6819 = vadd.f32 %v6478, %v6696
      %v6820 = vadd.f32 %v6479, %v6699
      %v6821 = vadd.f32 %v6480, %v6704
      %v6822 = vadd.f32 %v6481, %v6707
      %v6823 = vadd.f32 %v6482, %v6712
      %v6824 = vadd.f32 %v6483, %v6715
      %v6825 = vadd.f32 %v6484, %v6720
      %v6826 = vadd.f32 %v6485, %v6723
      %v6827 = vadd.f32 %v6486, %v6728
      %v6828 = vadd.f32 %v6487, %v6731
      %v6829 = vadd.f32 %v6488, %v6736
      %v6830 = vadd.f32 %v6489, %v6739
      %v6831 = vadd.f32 %v6490, %v6744
      %v6832 = vadd.f32 %v6491, %v6747
      %v6833 = vadd.f32 %v6492, %v6752
      %v6834 = vadd.f32 %v6493, %v6755
      %v6835 = vadd.f32 %v6494, %v6760
      %v6836 = vadd.f32 %v6495, %v6763
      %v6837 = vadd.f32 %v6496, %v6768
      %v6838 = vadd.f32 %v6497, %v6771
      %v6839 = vadd.f32 %v6498, %v6776
      %v6840 = vadd.f32 %v6499, %v6779
      %v6841 = vadd.f32 %v6500, %v6784
      %v6842 = vadd.f32 %v6501, %v6787
      %v6843 = vadd.f32 %v6502, %v6792
      %v6844 = vadd.f32 %v6503, %v6795
      %v6845 = vadd.f32 %v6504, %v6800
      %v6846 = vld [vmem:[%s10] sm:$0x1]
      %v6848 = vlaneseq
      %v6849 = vshrl.u32 %v6848, 7
      %v6850 = vsub.s32 0, %v6849
      %v6851 = vrot.slane %v6846, %v6850
      %v6853 = vadd.f32 %v6805, %v6851
      %v6854 = vadd.f32 %v6806, %v6851
      %v6855 = vadd.f32 %v6807, %v6851
      %v6856 = vadd.f32 %v6808, %v6851
      %v6857 = vadd.f32 %v6809, %v6851
      %v6858 = vadd.f32 %v6810, %v6851
      %v6859 = vadd.f32 %v6811, %v6851
      %v6860 = vadd.f32 %v6812, %v6851
      %v6861 = vadd.f32 %v6813, %v6851
      %v6862 = vadd.f32 %v6814, %v6851
      %v6863 = vadd.f32 %v6815, %v6851
      %v6864 = vadd.f32 %v6816, %v6851
      %v6865 = vadd.f32 %v6817, %v6851
      %v6866 = vadd.f32 %v6818, %v6851
      %v6867 = vadd.f32 %v6819, %v6851
      %v6868 = vadd.f32 %v6820, %v6851
      %v6869 = vadd.f32 %v6821, %v6851
      %v6870 = vadd.f32 %v6822, %v6851
      %v6871 = vadd.f32 %v6823, %v6851
      %v6872 = vadd.f32 %v6824, %v6851
      %v6873 = vadd.f32 %v6825, %v6851
      %v6874 = vadd.f32 %v6826, %v6851
      %v6875 = vadd.f32 %v6827, %v6851
      %v6876 = vadd.f32 %v6828, %v6851
      %v6877 = vadd.f32 %v6829, %v6851
      %v6878 = vadd.f32 %v6830, %v6851
      %v6879 = vadd.f32 %v6831, %v6851
      %v6880 = vadd.f32 %v6832, %v6851
      %v6881 = vadd.f32 %v6833, %v6851
      %v6882 = vadd.f32 %v6834, %v6851
      %v6883 = vadd.f32 %v6835, %v6851
      %v6884 = vadd.f32 %v6836, %v6851
      %v6885 = vadd.f32 %v6837, %v6851
      %v6886 = vadd.f32 %v6838, %v6851
      %v6887 = vadd.f32 %v6839, %v6851
      %v6888 = vadd.f32 %v6840, %v6851
      %v6889 = vadd.f32 %v6841, %v6851
      %v6890 = vadd.f32 %v6842, %v6851
      %v6891 = vadd.f32 %v6843, %v6851
      %v6892 = vadd.f32 %v6844, %v6851
      %v6893 = vadd.f32 %v6845, %v6851
      %v6894 = vmul.f32 %v6853, %v1296
      %v6895 = vmul.f32 %v6854, %v1301
      %v6896 = vmul.f32 %v6855, %v1306
      %v6897 = vmul.f32 %v6856, %v1311
      %v6898 = vmul.f32 %v6857, %v1316
      %v6899 = vmul.f32 %v6858, %v1321
      %v6900 = vmul.f32 %v6859, %v1326
      %v6901 = vmul.f32 %v6860, %v1331
      %v6902 = vmul.f32 %v6861, %v1336
      %v6903 = vmul.f32 %v6862, %v1341
      %v6904 = vmul.f32 %v6863, %v1346
      %v6905 = vmul.f32 %v6864, %v1351
      %v6906 = vmul.f32 %v6865, %v1356
      %v6907 = vmul.f32 %v6866, %v1361
      %v6908 = vmul.f32 %v6867, %v1366
      %v6909 = vmul.f32 %v6868, %v1371
      %v6910 = vmul.f32 %v6869, %v1376
      %v6911 = vmul.f32 %v6870, %v1381
      %v6912 = vmul.f32 %v6871, %v1386
      %v6913 = vmul.f32 %v6872, %v1391
      %v6914 = vmul.f32 %v6873, %v1396
      %v6915 = vmul.f32 %v6874, %v1401
      %v6916 = vmul.f32 %v6875, %v1406
      %v6917 = vmul.f32 %v6876, %v1411
      %v6918 = vmul.f32 %v6877, %v1416
      %v6919 = vmul.f32 %v6878, %v1421
      %v6920 = vmul.f32 %v6879, %v1426
      %v6921 = vmul.f32 %v6880, %v1431
      %v6922 = vmul.f32 %v6881, %v1436
      %v6923 = vmul.f32 %v6882, %v1441
      %v6924 = vmul.f32 %v6883, %v1446
      %v6925 = vmul.f32 %v6884, %v1451
      %v6926 = vmul.f32 %v6885, %v1456
      %v6927 = vmul.f32 %v6886, %v1461
      %v6928 = vmul.f32 %v6887, %v1466
      %v6929 = vmul.f32 %v6888, %v1471
      %v6930 = vmul.f32 %v6889, %v1476
      %v6931 = vmul.f32 %v6890, %v1481
      %v6932 = vmul.f32 %v6891, %v1486
      %v6933 = vmul.f32 %v6892, %v1491
      %v6934 = vmul.f32 %v6893, %v1496
      %v6935 = vpack.c.bf16 %v6895, %v6894
      %v6936 = vpack.c.bf16 %v6897, %v6896
      %v6937 = vpack.c.bf16 %v6899, %v6898
      %v6938 = vpack.c.bf16 %v6901, %v6900
      %v6939 = vpack.c.bf16 %v6903, %v6902
      %v6940 = vpack.c.bf16 %v6905, %v6904
      %v6941 = vpack.c.bf16 %v6907, %v6906
      %v6942 = vpack.c.bf16 %v6909, %v6908
      %v6943 = vpack.c.bf16 %v6911, %v6910
      %v6944 = vpack.c.bf16 %v6913, %v6912
      %v6945 = vpack.c.bf16 %v6915, %v6914
      %v6946 = vpack.c.bf16 %v6917, %v6916
      %v6947 = vpack.c.bf16 %v6919, %v6918
      %v6948 = vpack.c.bf16 %v6921, %v6920
      %v6949 = vpack.c.bf16 %v6923, %v6922
      %v6950 = vpack.c.bf16 %v6925, %v6924
      %v6951 = vpack.c.bf16 %v6927, %v6926
      %v6952 = vpack.c.bf16 %v6929, %v6928
      %v6953 = vpack.c.bf16 %v6931, %v6930
      %v6954 = vpack.c.bf16 %v6933, %v6932
      %v6955 = vpack.c.bf16 %v6934, %v6934
      %v6977 = vunpack.c.l.b16 %v6935
      %v6978 = vunpack.c.h.b16 %v6935
      %v6979 = vunpack.c.l.b16 %v6936
      %v6980 = vunpack.c.h.b16 %v6936
      %v6981 = vunpack.c.l.b16 %v6937
      %v6982 = vunpack.c.h.b16 %v6937
      %v6983 = vunpack.c.l.b16 %v6938
      %v6984 = vunpack.c.h.b16 %v6938
      %v6985 = vunpack.c.l.b16 %v6939
      %v6986 = vunpack.c.h.b16 %v6939
      %v6987 = vunpack.c.l.b16 %v6940
      %v6988 = vunpack.c.h.b16 %v6940
      %v6989 = vunpack.c.l.b16 %v6941
      %v6990 = vunpack.c.h.b16 %v6941
      %v6991 = vunpack.c.l.b16 %v6942
      %v6992 = vunpack.c.h.b16 %v6942
      %v6993 = vunpack.c.l.b16 %v6943
      %v6994 = vunpack.c.h.b16 %v6943
      %v6995 = vunpack.c.l.b16 %v6944
      %v6996 = vunpack.c.h.b16 %v6944
      %v6997 = vunpack.c.l.b16 %v6945
      %v6998 = vunpack.c.h.b16 %v6945
      %v6999 = vunpack.c.l.b16 %v6946
      %v7000 = vunpack.c.h.b16 %v6946
      %v7001 = vunpack.c.l.b16 %v6947
      %v7002 = vunpack.c.h.b16 %v6947
      %v7003 = vunpack.c.l.b16 %v6948
      %v7004 = vunpack.c.h.b16 %v6948
      %v7005 = vunpack.c.l.b16 %v6949
      %v7006 = vunpack.c.h.b16 %v6949
      %v7007 = vunpack.c.l.b16 %v6950
      %v7008 = vunpack.c.h.b16 %v6950
      %v7009 = vunpack.c.l.b16 %v6951
      %v7010 = vunpack.c.h.b16 %v6951
      %v7011 = vunpack.c.l.b16 %v6952
      %v7012 = vunpack.c.h.b16 %v6952
      %v7013 = vunpack.c.l.b16 %v6953
      %v7014 = vunpack.c.h.b16 %v6953
      %v7015 = vunpack.c.l.b16 %v6954
      %v7016 = vunpack.c.h.b16 %v6954
      %v7017 = vunpack.c.l.b16 %v6955
      %v7018 = vpack.c.b16 %v6977, %v6977
      %v7019 = vpack.c.b16 %v6978, %v6978
      %v7020 = vpack.c.b16 %v6979, %v6979
      %v7021 = vpack.c.b16 %v6980, %v6980
      %v7022 = vpack.c.b16 %v6981, %v6981
      %v7023 = vpack.c.b16 %v6982, %v6982
      %v7024 = vpack.c.b16 %v6983, %v6983
      %v7025 = vpack.c.b16 %v6984, %v6984
      %v7026 = vpack.c.b16 %v6985, %v6985
      %v7027 = vpack.c.b16 %v6986, %v6986
      %v7028 = vpack.c.b16 %v6987, %v6987
      %v7029 = vpack.c.b16 %v6988, %v6988
      %v7030 = vpack.c.b16 %v6989, %v6989
      %v7031 = vpack.c.b16 %v6990, %v6990
      %v7032 = vpack.c.b16 %v6991, %v6991
      %v7033 = vpack.c.b16 %v6992, %v6992
      %v7034 = vpack.c.b16 %v6993, %v6993
      %v7035 = vpack.c.b16 %v6994, %v6994
      %v7036 = vpack.c.b16 %v6995, %v6995
      %v7037 = vpack.c.b16 %v6996, %v6996
      %v7038 = vpack.c.b16 %v6997, %v6997
      %v7039 = vpack.c.b16 %v6998, %v6998
      %v7040 = vpack.c.b16 %v6999, %v6999
      %v7041 = vpack.c.b16 %v7000, %v7000
      %v7042 = vpack.c.b16 %v7001, %v7001
      %v7043 = vpack.c.b16 %v7002, %v7002
      %v7044 = vpack.c.b16 %v7003, %v7003
      %v7045 = vpack.c.b16 %v7004, %v7004
      %v7046 = vpack.c.b16 %v7005, %v7005
      %v7047 = vpack.c.b16 %v7006, %v7006
      %v7048 = vpack.c.b16 %v7007, %v7007
      %v7049 = vpack.c.b16 %v7008, %v7008
      %v7050 = vpack.c.b16 %v7009, %v7009
      %v7051 = vpack.c.b16 %v7010, %v7010
      %v7052 = vpack.c.b16 %v7011, %v7011
      %v7053 = vpack.c.b16 %v7012, %v7012
      %v7054 = vpack.c.b16 %v7013, %v7013
      %v7055 = vpack.c.b16 %v7014, %v7014
      %v7056 = vpack.c.b16 %v7015, %v7015
      %v7057 = vpack.c.b16 %v7016, %v7016
      %v7058 = vpack.c.b16 %v7017, %v7017
      %7100 = vst.msk [vmem:[#allocation2 + $0x10] sm:$0xf] %vm522, %v7018
      %7101 = vst.msk [vmem:[#allocation2 + $0x14] sm:$0xf] %vm522, %v7019
      %7102 = vst.msk [vmem:[#allocation2 + $0x18] sm:$0xf] %vm522, %v7020
      %7103 = vst.msk [vmem:[#allocation2 + $0x1c] sm:$0xf] %vm522, %v7021
      %7104 = vst.msk [vmem:[#allocation2 + $0x20] sm:$0xf] %vm522, %v7022
      %7105 = vst.msk [vmem:[#allocation2 + $0x24] sm:$0xf] %vm522, %v7023
      %7106 = vst.msk [vmem:[#allocation2 + $0x28] sm:$0xf] %vm522, %v7024
      %7107 = vst.msk [vmem:[#allocation2 + $0x2c] sm:$0xf] %vm522, %v7025
      %7108 = vst.msk [vmem:[#allocation2 + $0x30] sm:$0xf] %vm522, %v7026
      %7109 = vst.msk [vmem:[#allocation2 + $0x34] sm:$0xf] %vm522, %v7027
      %7110 = vst.msk [vmem:[#allocation2 + $0x38] sm:$0xf] %vm522, %v7028
      %7111 = vst.msk [vmem:[#allocation2 + $0x3c] sm:$0xf] %vm522, %v7029
      %7112 = vst.msk [vmem:[#allocation2 + $0x40] sm:$0xf] %vm522, %v7030
      %7113 = vst.msk [vmem:[#allocation2 + $0x44] sm:$0xf] %vm522, %v7031
      %7114 = vst.msk [vmem:[#allocation2 + $0x48] sm:$0xf] %vm522, %v7032
      %7115 = vst.msk [vmem:[#allocation2 + $0x4c] sm:$0xf] %vm522, %v7033
      %7116 = vst.msk [vmem:[#allocation2 + $0x50] sm:$0xf] %vm522, %v7034
      %7117 = vst.msk [vmem:[#allocation2 + $0x54] sm:$0xf] %vm522, %v7035
      %7118 = vst.msk [vmem:[#allocation2 + $0x58] sm:$0xf] %vm522, %v7036
      %7119 = vst.msk [vmem:[#allocation2 + $0x5c] sm:$0xf] %vm522, %v7037
      %7120 = vst.msk [vmem:[#allocation2 + $0x60] sm:$0xf] %vm522, %v7038
      %7121 = vst.msk [vmem:[#allocation2 + $0x64] sm:$0xf] %vm522, %v7039
      %7122 = vst.msk [vmem:[#allocation2 + $0x68] sm:$0xf] %vm522, %v7040
      %7123 = vst.msk [vmem:[#allocation2 + $0x6c] sm:$0xf] %vm522, %v7041
      %7124 = vst.msk [vmem:[#allocation2 + $0x70] sm:$0xf] %vm522, %v7042
      %7125 = vst.msk [vmem:[#allocation2 + $0x74] sm:$0xf] %vm522, %v7043
      %7126 = vst.msk [vmem:[#allocation2 + $0x78] sm:$0xf] %vm522, %v7044
      %7127 = vst.msk [vmem:[#allocation2 + $0x7c] sm:$0xf] %vm522, %v7045
      %7128 = vst.msk [vmem:[#allocation2 + $0x80] sm:$0xf] %vm522, %v7046
      %7129 = vst.msk [vmem:[#allocation2 + $0x84] sm:$0xf] %vm522, %v7047
      %7130 = vst.msk [vmem:[#allocation2 + $0x88] sm:$0xf] %vm522, %v7048
      %7131 = vst.msk [vmem:[#allocation2 + $0x8c] sm:$0xf] %vm522, %v7049
      %7132 = vst.msk [vmem:[#allocation2 + $0x90] sm:$0xf] %vm522, %v7050
      %7133 = vst.msk [vmem:[#allocation2 + $0x94] sm:$0xf] %vm522, %v7051
      %7134 = vst.msk [vmem:[#allocation2 + $0x98] sm:$0xf] %vm522, %v7052
      %7135 = vst.msk [vmem:[#allocation2 + $0x9c] sm:$0xf] %vm522, %v7053
      %7136 = vst.msk [vmem:[#allocation2 + $0xa0] sm:$0xf] %vm522, %v7054
      %7137 = vst.msk [vmem:[#allocation2 + $0xa4] sm:$0xf] %vm522, %v7055
      %7138 = vst.msk [vmem:[#allocation2 + $0xa8] sm:$0xf] %vm522, %v7056
      %7139 = vst.msk [vmem:[#allocation2 + $0xac] sm:$0xf] %vm522, %v7057
      %7140 = vst.msk [vmem:[#allocation2 + $0xb0] sm:$0x3] %vm1744, %v7058
      %v7141 = vld [vmem:[%s12] sm:$0x1]
      %v7142 = vld [vmem:[#allocation2 + $0x4] sm:$0xc]
      %v7143 = vld [vmem:[#allocation2 + $0x8] sm:$0xf]
      %v7144 = vld [vmem:[#allocation2 + $0xc] sm:$0xf]
      %v7145 = vld [vmem:[#allocation2 + $0x10] sm:$0xf]
      %v7146 = vld [vmem:[#allocation2 + $0x14] sm:$0xf]
      %v7147 = vld [vmem:[#allocation2 + $0x18] sm:$0xf]
      %v7148 = vld [vmem:[#allocation2 + $0x1c] sm:$0xf]
      %v7149 = vld [vmem:[#allocation2 + $0x20] sm:$0xf]
      %v7150 = vld [vmem:[#allocation2 + $0x24] sm:$0xf]
      %v7151 = vld [vmem:[#allocation2 + $0x28] sm:$0xf]
      %v7152 = vld [vmem:[#allocation2 + $0x2c] sm:$0xf]
      %v7153 = vld [vmem:[#allocation2 + $0x30] sm:$0xf]
      %v7154 = vld [vmem:[#allocation2 + $0x34] sm:$0xf]
      %v7155 = vld [vmem:[#allocation2 + $0x38] sm:$0xf]
      %v7156 = vld [vmem:[#allocation2 + $0x3c] sm:$0xf]
      %v7157 = vld [vmem:[#allocation2 + $0x40] sm:$0xf]
      %v7158 = vld [vmem:[#allocation2 + $0x44] sm:$0xf]
      %v7159 = vld [vmem:[#allocation2 + $0x48] sm:$0xf]
      %v7160 = vld [vmem:[#allocation2 + $0x4c] sm:$0xf]
      %v7161 = vld [vmem:[#allocation2 + $0x50] sm:$0xf]
      %v7162 = vld [vmem:[#allocation2 + $0x54] sm:$0xf]
      %v7163 = vld [vmem:[#allocation2 + $0x58] sm:$0xf]
      %v7164 = vld [vmem:[#allocation2 + $0x5c] sm:$0xf]
      %v7165 = vld [vmem:[#allocation2 + $0x60] sm:$0xf]
      %v7166 = vld [vmem:[#allocation2 + $0x64] sm:$0xf]
      %v7167 = vld [vmem:[#allocation2 + $0x68] sm:$0xf]
      %v7168 = vld [vmem:[#allocation2 + $0x6c] sm:$0xf]
      %v7169 = vld [vmem:[#allocation2 + $0x70] sm:$0xf]
      %v7170 = vld [vmem:[#allocation2 + $0x74] sm:$0xf]
      %v7171 = vld [vmem:[#allocation2 + $0x78] sm:$0xf]
      %v7172 = vld [vmem:[#allocation2 + $0x7c] sm:$0xf]
      %v7173 = vld [vmem:[#allocation2 + $0x80] sm:$0xf]
      %v7174 = vld [vmem:[#allocation2 + $0x84] sm:$0xf]
      %v7175 = vld [vmem:[#allocation2 + $0x88] sm:$0xf]
      %v7176 = vld [vmem:[#allocation2 + $0x8c] sm:$0xf]
      %v7177 = vld [vmem:[#allocation2 + $0x90] sm:$0xf]
      %v7178 = vld [vmem:[#allocation2 + $0x94] sm:$0xf]
      %v7179 = vld [vmem:[#allocation2 + $0x98] sm:$0xf]
      %v7180 = vld [vmem:[#allocation2 + $0x9c] sm:$0xf]
      %v7181 = vld [vmem:[#allocation2 + $0xa0] sm:$0xf]
      %v7182 = vld [vmem:[#allocation2 + $0xa4] sm:$0xf]
      %v7183 = vld [vmem:[#allocation2 + $0xa8] sm:$0x1]
      %v7184 = vld [vmem:[%s11] sm:$0xf]
      %v7185 = vld [vmem:[%s11 + $0x4] sm:$0xf]
      %v7186 = vld [vmem:[%s11 + $0x8] sm:$0xf]
      %v7187 = vld [vmem:[%s11 + $0xc] sm:$0xf]
      %v7188 = vld [vmem:[#allocation2 + $0x4] sm:$0x8]
      %s7189 = scalar_lea.vmem %s11, 16
      %v7190 = vld [vmem:[%s7189] sm:$0xf]
      %v7191 = vld [vmem:[%s7189 + $0x4] sm:$0xf]
      %v7192 = vld [vmem:[%s7189 + $0x8] sm:$0xf]
      %v7193 = vld [vmem:[%s7189 + $0xc] sm:$0xf]
      %v7236 = vunpack.c.l.b16 %v7188
      %v7237 = vunpack.c.l.b16 %v7143
      %v7238 = vunpack.c.l.b16 %v7144
      %v7239 = vunpack.c.l.b16 %v7145
      %v7240 = vunpack.c.l.b16 %v7146
      %v7241 = vunpack.c.l.b16 %v7147
      %v7242 = vunpack.c.l.b16 %v7148
      %v7243 = vunpack.c.l.b16 %v7149
      %v7244 = vunpack.c.l.b16 %v7150
      %v7245 = vunpack.c.l.b16 %v7151
      %v7246 = vunpack.c.l.b16 %v7152
      %v7247 = vunpack.c.l.b16 %v7153
      %v7248 = vunpack.c.l.b16 %v7154
      %v7249 = vunpack.c.l.b16 %v7155
      %v7250 = vunpack.c.l.b16 %v7156
      %v7251 = vunpack.c.l.b16 %v7157
      %v7252 = vunpack.c.l.b16 %v7158
      %v7253 = vunpack.c.l.b16 %v7159
      %v7254 = vunpack.c.l.b16 %v7160
      %v7255 = vunpack.c.l.b16 %v7161
      %v7256 = vunpack.c.l.b16 %v7162
      %v7257 = vunpack.c.l.b16 %v7163
      %v7258 = vunpack.c.l.b16 %v7164
      %v7259 = vunpack.c.l.b16 %v7165
      %v7260 = vunpack.c.l.b16 %v7166
      %v7261 = vunpack.c.l.b16 %v7167
      %v7262 = vunpack.c.l.b16 %v7168
      %v7263 = vunpack.c.l.b16 %v7169
      %v7264 = vunpack.c.l.b16 %v7170
      %v7265 = vunpack.c.l.b16 %v7171
      %v7266 = vunpack.c.l.b16 %v7172
      %v7267 = vunpack.c.l.b16 %v7173
      %v7268 = vunpack.c.l.b16 %v7174
      %v7269 = vunpack.c.l.b16 %v7175
      %v7270 = vunpack.c.l.b16 %v7176
      %v7271 = vunpack.c.l.b16 %v7177
      %v7272 = vunpack.c.l.b16 %v7178
      %v7273 = vunpack.c.l.b16 %v7179
      %v7274 = vunpack.c.l.b16 %v7180
      %v7275 = vunpack.c.l.b16 %v7181
      %v7276 = vunpack.c.l.b16 %v7182
      %v7277 = vunpack.c.l.b16 %v7183
      %v7278 = vpack.c.b16 %v7237, %v7236
      %v7279 = vpack.c.b16 %v7239, %v7238
      %v7280 = vpack.c.b16 %v7241, %v7240
      %v7281 = vpack.c.b16 %v7243, %v7242
      %v7282 = vpack.c.b16 %v7245, %v7244
      %v7283 = vpack.c.b16 %v7247, %v7246
      %v7284 = vpack.c.b16 %v7249, %v7248
      %v7285 = vpack.c.b16 %v7251, %v7250
      %v7286 = vpack.c.b16 %v7253, %v7252
      %v7287 = vpack.c.b16 %v7255, %v7254
      %v7288 = vpack.c.b16 %v7257, %v7256
      %v7289 = vpack.c.b16 %v7259, %v7258
      %v7290 = vpack.c.b16 %v7261, %v7260
      %v7291 = vpack.c.b16 %v7263, %v7262
      %v7292 = vpack.c.b16 %v7265, %v7264
      %v7293 = vpack.c.b16 %v7267, %v7266
      %v7294 = vpack.c.b16 %v7269, %v7268
      %v7295 = vpack.c.b16 %v7271, %v7270
      %v7296 = vpack.c.b16 %v7273, %v7272
      %v7297 = vpack.c.b16 %v7275, %v7274
      %v7298 = vpack.c.b16 %v7277, %v7276
      %v7299 = vrot.slane %v7278, 3
      %v7300 = vrot.slane %v7279, 3
      %v7301 = vsel %vm1904, %v7299, %v7300
      %v7302 = vrot.slane %v7280, 3
      %v7303 = vsel %vm1904, %v7300, %v7302
      %v7304 = vrot.slane %v7281, 3
      %v7305 = vsel %vm1904, %v7302, %v7304
      %v7306 = vrot.slane %v7282, 3
      %v7307 = vsel %vm1904, %v7304, %v7306
      %v7308 = vrot.slane %v7283, 3
      %v7309 = vsel %vm1904, %v7306, %v7308
      %v7310 = vrot.slane %v7284, 3
      %v7311 = vsel %vm1904, %v7308, %v7310
      %v7312 = vrot.slane %v7285, 3
      %v7313 = vsel %vm1904, %v7310, %v7312
      %v7314 = vrot.slane %v7286, 3
      %v7315 = vsel %vm1904, %v7312, %v7314
      %v7316 = vrot.slane %v7287, 3
      %v7317 = vsel %vm1904, %v7314, %v7316
      %v7318 = vrot.slane %v7288, 3
      %v7319 = vsel %vm1904, %v7316, %v7318
      %v7320 = vrot.slane %v7289, 3
      %v7321 = vsel %vm1904, %v7318, %v7320
      %v7322 = vrot.slane %v7290, 3
      %v7323 = vsel %vm1904, %v7320, %v7322
      %v7324 = vrot.slane %v7291, 3
      %v7325 = vsel %vm1904, %v7322, %v7324
      %v7326 = vrot.slane %v7292, 3
      %v7327 = vsel %vm1904, %v7324, %v7326
      %v7328 = vrot.slane %v7293, 3
      %v7329 = vsel %vm1904, %v7326, %v7328
      %v7330 = vrot.slane %v7294, 3
      %v7331 = vsel %vm1904, %v7328, %v7330
      %v7332 = vrot.slane %v7295, 3
      %v7333 = vsel %vm1904, %v7330, %v7332
      %v7334 = vrot.slane %v7296, 3
      %v7335 = vsel %vm1904, %v7332, %v7334
      %v7336 = vrot.slane %v7297, 3
      %v7337 = vsel %vm1904, %v7334, %v7336
      %v7338 = vrot.slane %v7298, 3
      %v7339 = vsel %vm1904, %v7336, %v7338
      %v7344 = vunpack.c.l.b16 %v7190
      %v7345 = vunpack.c.l.b16 %v7191
      %v7346 = vunpack.c.l.b16 %v7192
      %v7347 = vunpack.c.l.b16 %v7193
      %v7348 = vpack.c.b16 %v7345, %v7344
      %v7349 = vpack.c.b16 %v7347, %v7346
      %v7353 = vsel %vm940, %v7301, 0
      %v7356 = vsel %vm940, %v7303, 0
      %v7359 = vsel %vm940, %v7305, 0
      %v7362 = vsel %vm940, %v7307, 0
      %v7365 = vsel %vm940, %v7309, 0
      %v7368 = vsel %vm940, %v7311, 0
      %v7371 = vsel %vm940, %v7313, 0
      %v7374 = vsel %vm940, %v7315, 0
      %v7377 = vsel %vm940, %v7317, 0
      %v7380 = vsel %vm940, %v7319, 0
      %v7383 = vsel %vm940, %v7321, 0
      %v7386 = vsel %vm940, %v7323, 0
      %v7389 = vsel %vm940, %v7325, 0
      %v7392 = vsel %vm940, %v7327, 0
      %v7395 = vsel %vm940, %v7329, 0
      %v7398 = vsel %vm940, %v7331, 0
      %v7401 = vsel %vm940, %v7333, 0
      %v7404 = vsel %vm940, %v7335, 0
      %v7407 = vsel %vm940, %v7337, 0
      %v7410 = vsel %vm940, %v7339, 0
      %v7413 = vsel %vm940, %v7338, 0
      %7415 = vmatprep.subr.bf16.mxu0 0
      %7416 = vmatpush1.bf16.msra.mxu0 0
      %7417 = vmatprep.subr.bf16.mxu0 0
      %7418 = vmatpush1.bf16.msra.mxu0 0
      %7419 = vmatprep.subr.bf16.mxu0 0
      %7420 = vmatpush1.bf16.msra.mxu0 0
      %7421 = vmatprep.subr.bf16.mxu0 0
      %7422 = vmatpush1.bf16.msra.mxu0 0
      %7423 = vmatprep.subr.bf16.mxu0 0
      %7424 = vmatpush1.bf16.msra.mxu0 0
      %7425 = vmatprep.subr.bf16.mxu0 0
      %7426 = vmatpush1.bf16.msra.mxu0 0
      %7427 = vmatprep.subr.bf16.mxu0 0
      %7428 = vmatpush1.bf16.msra.mxu0 %v7349
      %7429 = vmatprep.subr.bf16.mxu0 0
      %7430 = vmatpush1.bf16.msra.mxu0 %v7348
      %7431 = vmatprep.subr.bf16.mxu0 0
      %7432 = vmatpush2.bf16.msra.mxu0 0
      %7433 = vmatprep.subr.bf16.mxu0 0
      %7434 = vmatpush2.bf16.msra.mxu0 0
      %7435 = vmatprep.subr.bf16.mxu0 0
      %7436 = vmatpush2.bf16.msra.mxu0 0
      %7437 = vmatprep.subr.bf16.mxu0 0
      %7438 = vmatpush2.bf16.msra.mxu0 0
      %7439 = vmatprep.subr.bf16.mxu0 0
      %7440 = vmatpush2.bf16.msra.mxu0 0
      %7441 = vmatprep.subr.bf16.mxu0 0
      %7442 = vmatpush2.bf16.msra.mxu0 0
      %7443 = vmatprep.subr.bf16.mxu0 0
      %7444 = vmatpush2.bf16.msra.mxu0 0
      %7445 = vmatprep.subr.bf16.mxu0 0
      %7446 = vmatpush2.bf16.msra.mxu0 0
      %7447 = vmatprep.mubr.bf16.mxu0 0
      %7448 = vmatmul.mubr.bf16.gmra.mxu0 %v7353
      %v7449 = vpop.f32.mrf.mxu0
      %v7450 = vadd.f32 0.0, %v7449
      %v7451 = vpop.f32.mrf.mxu0
      %v7452 = vpop.f32.mrf.mxu0
      %v7453 = vadd.f32 0.0, %v7452
      %v7454 = vpop.f32.mrf.mxu0
      %7455 = vmatprep.mubr.bf16.mxu0 0
      %7456 = vmatmul.mubr.bf16.gmra.mxu0 %v7356
      %v7457 = vpop.f32.mrf.mxu0
      %v7458 = vadd.f32 0.0, %v7457
      %v7459 = vpop.f32.mrf.mxu0
      %v7460 = vpop.f32.mrf.mxu0
      %v7461 = vadd.f32 0.0, %v7460
      %v7462 = vpop.f32.mrf.mxu0
      %7463 = vmatprep.mubr.bf16.mxu0 0
      %7464 = vmatmul.mubr.bf16.gmra.mxu0 %v7359
      %v7465 = vpop.f32.mrf.mxu0
      %v7466 = vadd.f32 0.0, %v7465
      %v7467 = vpop.f32.mrf.mxu0
      %v7468 = vpop.f32.mrf.mxu0
      %v7469 = vadd.f32 0.0, %v7468
      %v7470 = vpop.f32.mrf.mxu0
      %7471 = vmatprep.mubr.bf16.mxu0 0
      %7472 = vmatmul.mubr.bf16.gmra.mxu0 %v7362
      %v7473 = vpop.f32.mrf.mxu0
      %v7474 = vadd.f32 0.0, %v7473
      %v7475 = vpop.f32.mrf.mxu0
      %v7476 = vpop.f32.mrf.mxu0
      %v7477 = vadd.f32 0.0, %v7476
      %v7478 = vpop.f32.mrf.mxu0
      %7479 = vmatprep.mubr.bf16.mxu0 0
      %7480 = vmatmul.mubr.bf16.gmra.mxu0 %v7365
      %v7481 = vpop.f32.mrf.mxu0
      %v7482 = vadd.f32 0.0, %v7481
      %v7483 = vpop.f32.mrf.mxu0
      %v7484 = vpop.f32.mrf.mxu0
      %v7485 = vadd.f32 0.0, %v7484
      %v7486 = vpop.f32.mrf.mxu0
      %7487 = vmatprep.mubr.bf16.mxu0 0
      %7488 = vmatmul.mubr.bf16.gmra.mxu0 %v7368
      %v7489 = vpop.f32.mrf.mxu0
      %v7490 = vadd.f32 0.0, %v7489
      %v7491 = vpop.f32.mrf.mxu0
      %v7492 = vpop.f32.mrf.mxu0
      %v7493 = vadd.f32 0.0, %v7492
      %v7494 = vpop.f32.mrf.mxu0
      %7495 = vmatprep.mubr.bf16.mxu0 0
      %7496 = vmatmul.mubr.bf16.gmra.mxu0 %v7371
      %v7497 = vpop.f32.mrf.mxu0
      %v7498 = vadd.f32 0.0, %v7497
      %v7499 = vpop.f32.mrf.mxu0
      %v7500 = vpop.f32.mrf.mxu0
      %v7501 = vadd.f32 0.0, %v7500
      %v7502 = vpop.f32.mrf.mxu0
      %7503 = vmatprep.mubr.bf16.mxu0 0
      %7504 = vmatmul.mubr.bf16.gmra.mxu0 %v7374
      %v7505 = vpop.f32.mrf.mxu0
      %v7506 = vadd.f32 0.0, %v7505
      %v7507 = vpop.f32.mrf.mxu0
      %v7508 = vpop.f32.mrf.mxu0
      %v7509 = vadd.f32 0.0, %v7508
      %v7510 = vpop.f32.mrf.mxu0
      %7511 = vmatprep.mubr.bf16.mxu0 0
      %7512 = vmatmul.mubr.bf16.gmra.mxu0 %v7377
      %v7513 = vpop.f32.mrf.mxu0
      %v7514 = vadd.f32 0.0, %v7513
      %v7515 = vpop.f32.mrf.mxu0
      %v7516 = vpop.f32.mrf.mxu0
      %v7517 = vadd.f32 0.0, %v7516
      %v7518 = vpop.f32.mrf.mxu0
      %7519 = vmatprep.mubr.bf16.mxu0 0
      %7520 = vmatmul.mubr.bf16.gmra.mxu0 %v7380
      %v7521 = vpop.f32.mrf.mxu0
      %v7522 = vadd.f32 0.0, %v7521
      %v7523 = vpop.f32.mrf.mxu0
      %v7524 = vpop.f32.mrf.mxu0
      %v7525 = vadd.f32 0.0, %v7524
      %v7526 = vpop.f32.mrf.mxu0
      %7527 = vmatprep.mubr.bf16.mxu0 0
      %7528 = vmatmul.mubr.bf16.gmra.mxu0 %v7383
      %v7529 = vpop.f32.mrf.mxu0
      %v7530 = vadd.f32 0.0, %v7529
      %v7531 = vpop.f32.mrf.mxu0
      %v7532 = vpop.f32.mrf.mxu0
      %v7533 = vadd.f32 0.0, %v7532
      %v7534 = vpop.f32.mrf.mxu0
      %7535 = vmatprep.mubr.bf16.mxu0 0
      %7536 = vmatmul.mubr.bf16.gmra.mxu0 %v7386
      %v7537 = vpop.f32.mrf.mxu0
      %v7538 = vadd.f32 0.0, %v7537
      %v7539 = vpop.f32.mrf.mxu0
      %v7540 = vpop.f32.mrf.mxu0
      %v7541 = vadd.f32 0.0, %v7540
      %v7542 = vpop.f32.mrf.mxu0
      %7543 = vmatprep.mubr.bf16.mxu0 0
      %7544 = vmatmul.mubr.bf16.gmra.mxu0 %v7389
      %v7545 = vpop.f32.mrf.mxu0
      %v7546 = vadd.f32 0.0, %v7545
      %v7547 = vpop.f32.mrf.mxu0
      %v7548 = vpop.f32.mrf.mxu0
      %v7549 = vadd.f32 0.0, %v7548
      %v7550 = vpop.f32.mrf.mxu0
      %7551 = vmatprep.mubr.bf16.mxu0 0
      %7552 = vmatmul.mubr.bf16.gmra.mxu0 %v7392
      %v7553 = vpop.f32.mrf.mxu0
      %v7554 = vadd.f32 0.0, %v7553
      %v7555 = vpop.f32.mrf.mxu0
      %v7556 = vpop.f32.mrf.mxu0
      %v7557 = vadd.f32 0.0, %v7556
      %v7558 = vpop.f32.mrf.mxu0
      %7559 = vmatprep.mubr.bf16.mxu0 0
      %7560 = vmatmul.mubr.bf16.gmra.mxu0 %v7395
      %v7561 = vpop.f32.mrf.mxu0
      %v7562 = vadd.f32 0.0, %v7561
      %v7563 = vpop.f32.mrf.mxu0
      %v7564 = vpop.f32.mrf.mxu0
      %v7565 = vadd.f32 0.0, %v7564
      %v7566 = vpop.f32.mrf.mxu0
      %7567 = vmatprep.mubr.bf16.mxu0 0
      %7568 = vmatmul.mubr.bf16.gmra.mxu0 %v7398
      %v7569 = vpop.f32.mrf.mxu0
      %v7570 = vadd.f32 0.0, %v7569
      %v7571 = vpop.f32.mrf.mxu0
      %v7572 = vpop.f32.mrf.mxu0
      %v7573 = vadd.f32 0.0, %v7572
      %v7574 = vpop.f32.mrf.mxu0
      %7575 = vmatprep.mubr.bf16.mxu0 0
      %7576 = vmatmul.mubr.bf16.gmra.mxu0 %v7401
      %v7577 = vpop.f32.mrf.mxu0
      %v7578 = vadd.f32 0.0, %v7577
      %v7579 = vpop.f32.mrf.mxu0
      %v7580 = vpop.f32.mrf.mxu0
      %v7581 = vadd.f32 0.0, %v7580
      %v7582 = vpop.f32.mrf.mxu0
      %7583 = vmatprep.mubr.bf16.mxu0 0
      %7584 = vmatmul.mubr.bf16.gmra.mxu0 %v7404
      %v7585 = vpop.f32.mrf.mxu0
      %v7586 = vadd.f32 0.0, %v7585
      %v7587 = vpop.f32.mrf.mxu0
      %v7588 = vpop.f32.mrf.mxu0
      %v7589 = vadd.f32 0.0, %v7588
      %v7590 = vpop.f32.mrf.mxu0
      %7591 = vmatprep.mubr.bf16.mxu0 0
      %7592 = vmatmul.mubr.bf16.gmra.mxu0 %v7407
      %v7593 = vpop.f32.mrf.mxu0
      %v7594 = vadd.f32 0.0, %v7593
      %v7595 = vpop.f32.mrf.mxu0
      %v7596 = vpop.f32.mrf.mxu0
      %v7597 = vadd.f32 0.0, %v7596
      %v7598 = vpop.f32.mrf.mxu0
      %7599 = vmatprep.mubr.bf16.mxu0 0
      %7600 = vmatmul.mubr.bf16.gmra.mxu0 %v7410
      %v7601 = vpop.f32.mrf.mxu0
      %v7602 = vadd.f32 0.0, %v7601
      %v7603 = vpop.f32.mrf.mxu0
      %v7604 = vpop.f32.mrf.mxu0
      %v7605 = vadd.f32 0.0, %v7604
      %v7606 = vpop.f32.mrf.mxu0
      %7607 = vmatprep.mubr.bf16.mxu0 0
      %7608 = vmatmul.mubr.bf16.gmra.mxu0 %v7413
      %v7609 = vpop.f32.mrf.mxu0
      %v7610 = vadd.f32 0.0, %v7609
      %v7611 = vpop.f32.mrf.mxu0
      %v7612 = vpop.f32.mrf.mxu0
      %v7613 = vpop.f32.mrf.mxu0
      %7614 = vdwg.mxu0
      %v7616 = vunpack.c.l.b16 %v7142
      %v7617 = vpack.c.b16 %v7237, %v7616
      %v7619 = vshrl.u32 %v7617, 16
      %v7621 = vrot.slane %v7619, 2
      %v7622 = vshll.u32 %v7617, 16
      %v7624 = vrot.slane %v7622, 3
      %v7625 = vor.u32 %v7621, %v7624
      %v7627 = vshrl.u32 %v7279, 16
      %v7629 = vrot.slane %v7627, 2
      %v7630 = vshll.u32 %v7279, 16
      %v7632 = vrot.slane %v7630, 3
      %v7633 = vor.u32 %v7629, %v7632
      %v7634 = vsel %vm2224, %v7625, %v7633
      %v7636 = vshrl.u32 %v7280, 16
      %v7638 = vrot.slane %v7636, 2
      %v7639 = vshll.u32 %v7280, 16
      %v7641 = vrot.slane %v7639, 3
      %v7642 = vor.u32 %v7638, %v7641
      %v7643 = vsel %vm2224, %v7633, %v7642
      %v7645 = vshrl.u32 %v7281, 16
      %v7647 = vrot.slane %v7645, 2
      %v7648 = vshll.u32 %v7281, 16
      %v7650 = vrot.slane %v7648, 3
      %v7651 = vor.u32 %v7647, %v7650
      %v7652 = vsel %vm2224, %v7642, %v7651
      %v7654 = vshrl.u32 %v7282, 16
      %v7656 = vrot.slane %v7654, 2
      %v7657 = vshll.u32 %v7282, 16
      %v7659 = vrot.slane %v7657, 3
      %v7660 = vor.u32 %v7656, %v7659
      %v7661 = vsel %vm2224, %v7651, %v7660
      %v7663 = vshrl.u32 %v7283, 16
      %v7665 = vrot.slane %v7663, 2
      %v7666 = vshll.u32 %v7283, 16
      %v7668 = vrot.slane %v7666, 3
      %v7669 = vor.u32 %v7665, %v7668
      %v7670 = vsel %vm2224, %v7660, %v7669
      %v7672 = vshrl.u32 %v7284, 16
      %v7674 = vrot.slane %v7672, 2
      %v7675 = vshll.u32 %v7284, 16
      %v7677 = vrot.slane %v7675, 3
      %v7678 = vor.u32 %v7674, %v7677
      %v7679 = vsel %vm2224, %v7669, %v7678
      %v7681 = vshrl.u32 %v7285, 16
      %v7683 = vrot.slane %v7681, 2
      %v7684 = vshll.u32 %v7285, 16
      %v7686 = vrot.slane %v7684, 3
      %v7687 = vor.u32 %v7683, %v7686
      %v7688 = vsel %vm2224, %v7678, %v7687
      %v7690 = vshrl.u32 %v7286, 16
      %v7692 = vrot.slane %v7690, 2
      %v7693 = vshll.u32 %v7286, 16
      %v7695 = vrot.slane %v7693, 3
      %v7696 = vor.u32 %v7692, %v7695
      %v7697 = vsel %vm2224, %v7687, %v7696
      %v7699 = vshrl.u32 %v7287, 16
      %v7701 = vrot.slane %v7699, 2
      %v7702 = vshll.u32 %v7287, 16
      %v7704 = vrot.slane %v7702, 3
      %v7705 = vor.u32 %v7701, %v7704
      %v7706 = vsel %vm2224, %v7696, %v7705
      %v7708 = vshrl.u32 %v7288, 16
      %v7710 = vrot.slane %v7708, 2
      %v7711 = vshll.u32 %v7288, 16
      %v7713 = vrot.slane %v7711, 3
      %v7714 = vor.u32 %v7710, %v7713
      %v7715 = vsel %vm2224, %v7705, %v7714
      %v7717 = vshrl.u32 %v7289, 16
      %v7719 = vrot.slane %v7717, 2
      %v7720 = vshll.u32 %v7289, 16
      %v7722 = vrot.slane %v7720, 3
      %v7723 = vor.u32 %v7719, %v7722
      %v7724 = vsel %vm2224, %v7714, %v7723
      %v7726 = vshrl.u32 %v7290, 16
      %v7728 = vrot.slane %v7726, 2
      %v7729 = vshll.u32 %v7290, 16
      %v7731 = vrot.slane %v7729, 3
      %v7732 = vor.u32 %v7728, %v7731
      %v7733 = vsel %vm2224, %v7723, %v7732
      %v7735 = vshrl.u32 %v7291, 16
      %v7737 = vrot.slane %v7735, 2
      %v7738 = vshll.u32 %v7291, 16
      %v7740 = vrot.slane %v7738, 3
      %v7741 = vor.u32 %v7737, %v7740
      %v7742 = vsel %vm2224, %v7732, %v7741
      %v7744 = vshrl.u32 %v7292, 16
      %v7746 = vrot.slane %v7744, 2
      %v7747 = vshll.u32 %v7292, 16
      %v7749 = vrot.slane %v7747, 3
      %v7750 = vor.u32 %v7746, %v7749
      %v7751 = vsel %vm2224, %v7741, %v7750
      %v7753 = vshrl.u32 %v7293, 16
      %v7755 = vrot.slane %v7753, 2
      %v7756 = vshll.u32 %v7293, 16
      %v7758 = vrot.slane %v7756, 3
      %v7759 = vor.u32 %v7755, %v7758
      %v7760 = vsel %vm2224, %v7750, %v7759
      %v7762 = vshrl.u32 %v7294, 16
      %v7764 = vrot.slane %v7762, 2
      %v7765 = vshll.u32 %v7294, 16
      %v7767 = vrot.slane %v7765, 3
      %v7768 = vor.u32 %v7764, %v7767
      %v7769 = vsel %vm2224, %v7759, %v7768
      %v7771 = vshrl.u32 %v7295, 16
      %v7773 = vrot.slane %v7771, 2
      %v7774 = vshll.u32 %v7295, 16
      %v7776 = vrot.slane %v7774, 3
      %v7777 = vor.u32 %v7773, %v7776
      %v7778 = vsel %vm2224, %v7768, %v7777
      %v7780 = vshrl.u32 %v7296, 16
      %v7782 = vrot.slane %v7780, 2
      %v7783 = vshll.u32 %v7296, 16
      %v7785 = vrot.slane %v7783, 3
      %v7786 = vor.u32 %v7782, %v7785
      %v7787 = vsel %vm2224, %v7777, %v7786
      %v7789 = vshrl.u32 %v7297, 16
      %v7791 = vrot.slane %v7789, 2
      %v7792 = vshll.u32 %v7297, 16
      %v7794 = vrot.slane %v7792, 3
      %v7795 = vor.u32 %v7791, %v7794
      %v7796 = vsel %vm2224, %v7786, %v7795
      %v7798 = vshrl.u32 %v7298, 16
      %v7800 = vrot.slane %v7798, 2
      %v7801 = vshll.u32 %v7298, 16
      %v7803 = vrot.slane %v7801, 3
      %v7804 = vor.u32 %v7800, %v7803
      %v7805 = vsel %vm2224, %v7795, %v7804
      %v7810 = vunpack.c.l.b16 %v7184
      %v7811 = vunpack.c.l.b16 %v7185
      %v7812 = vunpack.c.l.b16 %v7186
      %v7813 = vunpack.c.l.b16 %v7187
      %v7814 = vpack.c.b16 %v7811, %v7810
      %v7815 = vpack.c.b16 %v7813, %v7812
      %v7819 = vsel %vm940, %v7634, 0
      %v7822 = vsel %vm940, %v7643, 0
      %v7825 = vsel %vm940, %v7652, 0
      %v7828 = vsel %vm940, %v7661, 0
      %v7831 = vsel %vm940, %v7670, 0
      %v7834 = vsel %vm940, %v7679, 0
      %v7837 = vsel %vm940, %v7688, 0
      %v7840 = vsel %vm940, %v7697, 0
      %v7843 = vsel %vm940, %v7706, 0
      %v7846 = vsel %vm940, %v7715, 0
      %v7849 = vsel %vm940, %v7724, 0
      %v7852 = vsel %vm940, %v7733, 0
      %v7855 = vsel %vm940, %v7742, 0
      %v7858 = vsel %vm940, %v7751, 0
      %v7861 = vsel %vm940, %v7760, 0
      %v7864 = vsel %vm940, %v7769, 0
      %v7867 = vsel %vm940, %v7778, 0
      %v7870 = vsel %vm940, %v7787, 0
      %v7873 = vsel %vm940, %v7796, 0
      %v7876 = vsel %vm940, %v7805, 0
      %v7879 = vsel %vm940, %v7804, 0
      %7881 = vmatprep.subr.bf16.mxu0 0
      %7882 = vmatpush1.bf16.msra.mxu0 0
      %7883 = vmatprep.subr.bf16.mxu0 0
      %7884 = vmatpush1.bf16.msra.mxu0 0
      %7885 = vmatprep.subr.bf16.mxu0 0
      %7886 = vmatpush1.bf16.msra.mxu0 0
      %7887 = vmatprep.subr.bf16.mxu0 0
      %7888 = vmatpush1.bf16.msra.mxu0 0
      %7889 = vmatprep.subr.bf16.mxu0 0
      %7890 = vmatpush1.bf16.msra.mxu0 0
      %7891 = vmatprep.subr.bf16.mxu0 0
      %7892 = vmatpush1.bf16.msra.mxu0 0
      %7893 = vmatprep.subr.bf16.mxu0 0
      %7894 = vmatpush1.bf16.msra.mxu0 %v7815
      %7895 = vmatprep.subr.bf16.mxu0 0
      %7896 = vmatpush1.bf16.msra.mxu0 %v7814
      %7897 = vmatprep.subr.bf16.mxu0 0
      %7898 = vmatpush2.bf16.msra.mxu0 0
      %7899 = vmatprep.subr.bf16.mxu0 0
      %7900 = vmatpush2.bf16.msra.mxu0 0
      %7901 = vmatprep.subr.bf16.mxu0 0
      %7902 = vmatpush2.bf16.msra.mxu0 0
      %7903 = vmatprep.subr.bf16.mxu0 0
      %7904 = vmatpush2.bf16.msra.mxu0 0
      %7905 = vmatprep.subr.bf16.mxu0 0
      %7906 = vmatpush2.bf16.msra.mxu0 0
      %7907 = vmatprep.subr.bf16.mxu0 0
      %7908 = vmatpush2.bf16.msra.mxu0 0
      %7909 = vmatprep.subr.bf16.mxu0 0
      %7910 = vmatpush2.bf16.msra.mxu0 0
      %7911 = vmatprep.subr.bf16.mxu0 0
      %7912 = vmatpush2.bf16.msra.mxu0 0
      %7913 = vmatprep.mubr.bf16.mxu0 0
      %7914 = vmatmul.mubr.bf16.gmra.mxu0 %v7819
      %v7915 = vpop.f32.mrf.mxu0
      %v7916 = vadd.f32 %v7450, %v7915
      %v7917 = vpop.f32.mrf.mxu0
      %v7918 = vpop.f32.mrf.mxu0
      %v7919 = vadd.f32 %v7453, %v7918
      %v7920 = vpop.f32.mrf.mxu0
      %7921 = vmatprep.mubr.bf16.mxu0 0
      %7922 = vmatmul.mubr.bf16.gmra.mxu0 %v7822
      %v7923 = vpop.f32.mrf.mxu0
      %v7924 = vadd.f32 %v7458, %v7923
      %v7925 = vpop.f32.mrf.mxu0
      %v7926 = vpop.f32.mrf.mxu0
      %v7927 = vadd.f32 %v7461, %v7926
      %v7928 = vpop.f32.mrf.mxu0
      %7929 = vmatprep.mubr.bf16.mxu0 0
      %7930 = vmatmul.mubr.bf16.gmra.mxu0 %v7825
      %v7931 = vpop.f32.mrf.mxu0
      %v7932 = vadd.f32 %v7466, %v7931
      %v7933 = vpop.f32.mrf.mxu0
      %v7934 = vpop.f32.mrf.mxu0
      %v7935 = vadd.f32 %v7469, %v7934
      %v7936 = vpop.f32.mrf.mxu0
      %7937 = vmatprep.mubr.bf16.mxu0 0
      %7938 = vmatmul.mubr.bf16.gmra.mxu0 %v7828
      %v7939 = vpop.f32.mrf.mxu0
      %v7940 = vadd.f32 %v7474, %v7939
      %v7941 = vpop.f32.mrf.mxu0
      %v7942 = vpop.f32.mrf.mxu0
      %v7943 = vadd.f32 %v7477, %v7942
      %v7944 = vpop.f32.mrf.mxu0
      %7945 = vmatprep.mubr.bf16.mxu0 0
      %7946 = vmatmul.mubr.bf16.gmra.mxu0 %v7831
      %v7947 = vpop.f32.mrf.mxu0
      %v7948 = vadd.f32 %v7482, %v7947
      %v7949 = vpop.f32.mrf.mxu0
      %v7950 = vpop.f32.mrf.mxu0
      %v7951 = vadd.f32 %v7485, %v7950
      %v7952 = vpop.f32.mrf.mxu0
      %7953 = vmatprep.mubr.bf16.mxu0 0
      %7954 = vmatmul.mubr.bf16.gmra.mxu0 %v7834
      %v7955 = vpop.f32.mrf.mxu0
      %v7956 = vadd.f32 %v7490, %v7955
      %v7957 = vpop.f32.mrf.mxu0
      %v7958 = vpop.f32.mrf.mxu0
      %v7959 = vadd.f32 %v7493, %v7958
      %v7960 = vpop.f32.mrf.mxu0
      %7961 = vmatprep.mubr.bf16.mxu0 0
      %7962 = vmatmul.mubr.bf16.gmra.mxu0 %v7837
      %v7963 = vpop.f32.mrf.mxu0
      %v7964 = vadd.f32 %v7498, %v7963
      %v7965 = vpop.f32.mrf.mxu0
      %v7966 = vpop.f32.mrf.mxu0
      %v7967 = vadd.f32 %v7501, %v7966
      %v7968 = vpop.f32.mrf.mxu0
      %7969 = vmatprep.mubr.bf16.mxu0 0
      %7970 = vmatmul.mubr.bf16.gmra.mxu0 %v7840
      %v7971 = vpop.f32.mrf.mxu0
      %v7972 = vadd.f32 %v7506, %v7971
      %v7973 = vpop.f32.mrf.mxu0
      %v7974 = vpop.f32.mrf.mxu0
      %v7975 = vadd.f32 %v7509, %v7974
      %v7976 = vpop.f32.mrf.mxu0
      %7977 = vmatprep.mubr.bf16.mxu0 0
      %7978 = vmatmul.mubr.bf16.gmra.mxu0 %v7843
      %v7979 = vpop.f32.mrf.mxu0
      %v7980 = vadd.f32 %v7514, %v7979
      %v7981 = vpop.f32.mrf.mxu0
      %v7982 = vpop.f32.mrf.mxu0
      %v7983 = vadd.f32 %v7517, %v7982
      %v7984 = vpop.f32.mrf.mxu0
      %7985 = vmatprep.mubr.bf16.mxu0 0
      %7986 = vmatmul.mubr.bf16.gmra.mxu0 %v7846
      %v7987 = vpop.f32.mrf.mxu0
      %v7988 = vadd.f32 %v7522, %v7987
      %v7989 = vpop.f32.mrf.mxu0
      %v7990 = vpop.f32.mrf.mxu0
      %v7991 = vadd.f32 %v7525, %v7990
      %v7992 = vpop.f32.mrf.mxu0
      %7993 = vmatprep.mubr.bf16.mxu0 0
      %7994 = vmatmul.mubr.bf16.gmra.mxu0 %v7849
      %v7995 = vpop.f32.mrf.mxu0
      %v7996 = vadd.f32 %v7530, %v7995
      %v7997 = vpop.f32.mrf.mxu0
      %v7998 = vpop.f32.mrf.mxu0
      %v7999 = vadd.f32 %v7533, %v7998
      %v8000 = vpop.f32.mrf.mxu0
      %8001 = vmatprep.mubr.bf16.mxu0 0
      %8002 = vmatmul.mubr.bf16.gmra.mxu0 %v7852
      %v8003 = vpop.f32.mrf.mxu0
      %v8004 = vadd.f32 %v7538, %v8003
      %v8005 = vpop.f32.mrf.mxu0
      %v8006 = vpop.f32.mrf.mxu0
      %v8007 = vadd.f32 %v7541, %v8006
      %v8008 = vpop.f32.mrf.mxu0
      %8009 = vmatprep.mubr.bf16.mxu0 0
      %8010 = vmatmul.mubr.bf16.gmra.mxu0 %v7855
      %v8011 = vpop.f32.mrf.mxu0
      %v8012 = vadd.f32 %v7546, %v8011
      %v8013 = vpop.f32.mrf.mxu0
      %v8014 = vpop.f32.mrf.mxu0
      %v8015 = vadd.f32 %v7549, %v8014
      %v8016 = vpop.f32.mrf.mxu0
      %8017 = vmatprep.mubr.bf16.mxu0 0
      %8018 = vmatmul.mubr.bf16.gmra.mxu0 %v7858
      %v8019 = vpop.f32.mrf.mxu0
      %v8020 = vadd.f32 %v7554, %v8019
      %v8021 = vpop.f32.mrf.mxu0
      %v8022 = vpop.f32.mrf.mxu0
      %v8023 = vadd.f32 %v7557, %v8022
      %v8024 = vpop.f32.mrf.mxu0
      %8025 = vmatprep.mubr.bf16.mxu0 0
      %8026 = vmatmul.mubr.bf16.gmra.mxu0 %v7861
      %v8027 = vpop.f32.mrf.mxu0
      %v8028 = vadd.f32 %v7562, %v8027
      %v8029 = vpop.f32.mrf.mxu0
      %v8030 = vpop.f32.mrf.mxu0
      %v8031 = vadd.f32 %v7565, %v8030
      %v8032 = vpop.f32.mrf.mxu0
      %8033 = vmatprep.mubr.bf16.mxu0 0
      %8034 = vmatmul.mubr.bf16.gmra.mxu0 %v7864
      %v8035 = vpop.f32.mrf.mxu0
      %v8036 = vadd.f32 %v7570, %v8035
      %v8037 = vpop.f32.mrf.mxu0
      %v8038 = vpop.f32.mrf.mxu0
      %v8039 = vadd.f32 %v7573, %v8038
      %v8040 = vpop.f32.mrf.mxu0
      %8041 = vmatprep.mubr.bf16.mxu0 0
      %8042 = vmatmul.mubr.bf16.gmra.mxu0 %v7867
      %v8043 = vpop.f32.mrf.mxu0
      %v8044 = vadd.f32 %v7578, %v8043
      %v8045 = vpop.f32.mrf.mxu0
      %v8046 = vpop.f32.mrf.mxu0
      %v8047 = vadd.f32 %v7581, %v8046
      %v8048 = vpop.f32.mrf.mxu0
      %8049 = vmatprep.mubr.bf16.mxu0 0
      %8050 = vmatmul.mubr.bf16.gmra.mxu0 %v7870
      %v8051 = vpop.f32.mrf.mxu0
      %v8052 = vadd.f32 %v7586, %v8051
      %v8053 = vpop.f32.mrf.mxu0
      %v8054 = vpop.f32.mrf.mxu0
      %v8055 = vadd.f32 %v7589, %v8054
      %v8056 = vpop.f32.mrf.mxu0
      %8057 = vmatprep.mubr.bf16.mxu0 0
      %8058 = vmatmul.mubr.bf16.gmra.mxu0 %v7873
      %v8059 = vpop.f32.mrf.mxu0
      %v8060 = vadd.f32 %v7594, %v8059
      %v8061 = vpop.f32.mrf.mxu0
      %v8062 = vpop.f32.mrf.mxu0
      %v8063 = vadd.f32 %v7597, %v8062
      %v8064 = vpop.f32.mrf.mxu0
      %8065 = vmatprep.mubr.bf16.mxu0 0
      %8066 = vmatmul.mubr.bf16.gmra.mxu0 %v7876
      %v8067 = vpop.f32.mrf.mxu0
      %v8068 = vadd.f32 %v7602, %v8067
      %v8069 = vpop.f32.mrf.mxu0
      %v8070 = vpop.f32.mrf.mxu0
      %v8071 = vadd.f32 %v7605, %v8070
      %v8072 = vpop.f32.mrf.mxu0
      %8073 = vmatprep.mubr.bf16.mxu0 0
      %8074 = vmatmul.mubr.bf16.gmra.mxu0 %v7879
      %v8075 = vpop.f32.mrf.mxu0
      %v8076 = vadd.f32 %v7610, %v8075
      %v8077 = vpop.f32.mrf.mxu0
      %v8078 = vpop.f32.mrf.mxu0
      %v8079 = vpop.f32.mrf.mxu0
      %8080 = vdwg.mxu0
      %v8081 = vld [vmem:[#allocation2 + $0xa8] sm:$0x3]
      %s8082 = scalar_lea.vmem %s11, 32
      %v8083 = vld [vmem:[%s8082] sm:$0xf]
      %v8084 = vld [vmem:[%s8082 + $0x4] sm:$0xf]
      %v8085 = vld [vmem:[%s8082 + $0x8] sm:$0xf]
      %v8086 = vld [vmem:[%s8082 + $0xc] sm:$0xf]
      %v8088 = vunpack.c.l.b16 %v8081
      %v8089 = vpack.c.b16 %v8088, %v7276
      %v8091 = vshrl.u32 %v7278, 16
      %v8093 = vrot.slane %v8091, 3
      %v8094 = vshll.u32 %v7278, 16
      %v8096 = vrot.slane %v8094, 4
      %v8097 = vor.u32 %v8093, %v8096
      %v8098 = vrot.slane %v7627, 3
      %v8099 = vrot.slane %v7630, 4
      %v8100 = vor.u32 %v8098, %v8099
      %v8101 = vsel %vm2697, %v8097, %v8100
      %v8102 = vrot.slane %v7636, 3
      %v8103 = vrot.slane %v7639, 4
      %v8104 = vor.u32 %v8102, %v8103
      %v8105 = vsel %vm2697, %v8100, %v8104
      %v8106 = vrot.slane %v7645, 3
      %v8107 = vrot.slane %v7648, 4
      %v8108 = vor.u32 %v8106, %v8107
      %v8109 = vsel %vm2697, %v8104, %v8108
      %v8110 = vrot.slane %v7654, 3
      %v8111 = vrot.slane %v7657, 4
      %v8112 = vor.u32 %v8110, %v8111
      %v8113 = vsel %vm2697, %v8108, %v8112
      %v8114 = vrot.slane %v7663, 3
      %v8115 = vrot.slane %v7666, 4
      %v8116 = vor.u32 %v8114, %v8115
      %v8117 = vsel %vm2697, %v8112, %v8116
      %v8118 = vrot.slane %v7672, 3
      %v8119 = vrot.slane %v7675, 4
      %v8120 = vor.u32 %v8118, %v8119
      %v8121 = vsel %vm2697, %v8116, %v8120
      %v8122 = vrot.slane %v7681, 3
      %v8123 = vrot.slane %v7684, 4
      %v8124 = vor.u32 %v8122, %v8123
      %v8125 = vsel %vm2697, %v8120, %v8124
      %v8126 = vrot.slane %v7690, 3
      %v8127 = vrot.slane %v7693, 4
      %v8128 = vor.u32 %v8126, %v8127
      %v8129 = vsel %vm2697, %v8124, %v8128
      %v8130 = vrot.slane %v7699, 3
      %v8131 = vrot.slane %v7702, 4
      %v8132 = vor.u32 %v8130, %v8131
      %v8133 = vsel %vm2697, %v8128, %v8132
      %v8134 = vrot.slane %v7708, 3
      %v8135 = vrot.slane %v7711, 4
      %v8136 = vor.u32 %v8134, %v8135
      %v8137 = vsel %vm2697, %v8132, %v8136
      %v8138 = vrot.slane %v7717, 3
      %v8139 = vrot.slane %v7720, 4
      %v8140 = vor.u32 %v8138, %v8139
      %v8141 = vsel %vm2697, %v8136, %v8140
      %v8142 = vrot.slane %v7726, 3
      %v8143 = vrot.slane %v7729, 4
      %v8144 = vor.u32 %v8142, %v8143
      %v8145 = vsel %vm2697, %v8140, %v8144
      %v8146 = vrot.slane %v7735, 3
      %v8147 = vrot.slane %v7738, 4
      %v8148 = vor.u32 %v8146, %v8147
      %v8149 = vsel %vm2697, %v8144, %v8148
      %v8150 = vrot.slane %v7744, 3
      %v8151 = vrot.slane %v7747, 4
      %v8152 = vor.u32 %v8150, %v8151
      %v8153 = vsel %vm2697, %v8148, %v8152
      %v8154 = vrot.slane %v7753, 3
      %v8155 = vrot.slane %v7756, 4
      %v8156 = vor.u32 %v8154, %v8155
      %v8157 = vsel %vm2697, %v8152, %v8156
      %v8158 = vrot.slane %v7762, 3
      %v8159 = vrot.slane %v7765, 4
      %v8160 = vor.u32 %v8158, %v8159
      %v8161 = vsel %vm2697, %v8156, %v8160
      %v8162 = vrot.slane %v7771, 3
      %v8163 = vrot.slane %v7774, 4
      %v8164 = vor.u32 %v8162, %v8163
      %v8165 = vsel %vm2697, %v8160, %v8164
      %v8166 = vrot.slane %v7780, 3
      %v8167 = vrot.slane %v7783, 4
      %v8168 = vor.u32 %v8166, %v8167
      %v8169 = vsel %vm2697, %v8164, %v8168
      %v8170 = vrot.slane %v7789, 3
      %v8171 = vrot.slane %v7792, 4
      %v8172 = vor.u32 %v8170, %v8171
      %v8173 = vsel %vm2697, %v8168, %v8172
      %v8175 = vshrl.u32 %v8089, 16
      %v8177 = vrot.slane %v8175, 3
      %v8178 = vshll.u32 %v8089, 16
      %v8180 = vrot.slane %v8178, 4
      %v8181 = vor.u32 %v8177, %v8180
      %v8182 = vsel %vm2697, %v8172, %v8181
      %v8187 = vunpack.c.l.b16 %v8083
      %v8188 = vunpack.c.l.b16 %v8084
      %v8189 = vunpack.c.l.b16 %v8085
      %v8190 = vunpack.c.l.b16 %v8086
      %v8191 = vpack.c.b16 %v8188, %v8187
      %v8192 = vpack.c.b16 %v8190, %v8189
      %v8196 = vsel %vm940, %v8101, 0
      %v8199 = vsel %vm940, %v8105, 0
      %v8202 = vsel %vm940, %v8109, 0
      %v8205 = vsel %vm940, %v8113, 0
      %v8208 = vsel %vm940, %v8117, 0
      %v8211 = vsel %vm940, %v8121, 0
      %v8214 = vsel %vm940, %v8125, 0
      %v8217 = vsel %vm940, %v8129, 0
      %v8220 = vsel %vm940, %v8133, 0
      %v8223 = vsel %vm940, %v8137, 0
      %v8226 = vsel %vm940, %v8141, 0
      %v8229 = vsel %vm940, %v8145, 0
      %v8232 = vsel %vm940, %v8149, 0
      %v8235 = vsel %vm940, %v8153, 0
      %v8238 = vsel %vm940, %v8157, 0
      %v8241 = vsel %vm940, %v8161, 0
      %v8244 = vsel %vm940, %v8165, 0
      %v8247 = vsel %vm940, %v8169, 0
      %v8250 = vsel %vm940, %v8173, 0
      %v8253 = vsel %vm940, %v8182, 0
      %v8256 = vsel %vm940, %v8181, 0
      %8258 = vmatprep.subr.bf16.mxu0 0
      %8259 = vmatpush1.bf16.msra.mxu0 0
      %8260 = vmatprep.subr.bf16.mxu0 0
      %8261 = vmatpush1.bf16.msra.mxu0 0
      %8262 = vmatprep.subr.bf16.mxu0 0
      %8263 = vmatpush1.bf16.msra.mxu0 0
      %8264 = vmatprep.subr.bf16.mxu0 0
      %8265 = vmatpush1.bf16.msra.mxu0 0
      %8266 = vmatprep.subr.bf16.mxu0 0
      %8267 = vmatpush1.bf16.msra.mxu0 0
      %8268 = vmatprep.subr.bf16.mxu0 0
      %8269 = vmatpush1.bf16.msra.mxu0 0
      %8270 = vmatprep.subr.bf16.mxu0 0
      %8271 = vmatpush1.bf16.msra.mxu0 %v8192
      %8272 = vmatprep.subr.bf16.mxu0 0
      %8273 = vmatpush1.bf16.msra.mxu0 %v8191
      %8274 = vmatprep.subr.bf16.mxu0 0
      %8275 = vmatpush2.bf16.msra.mxu0 0
      %8276 = vmatprep.subr.bf16.mxu0 0
      %8277 = vmatpush2.bf16.msra.mxu0 0
      %8278 = vmatprep.subr.bf16.mxu0 0
      %8279 = vmatpush2.bf16.msra.mxu0 0
      %8280 = vmatprep.subr.bf16.mxu0 0
      %8281 = vmatpush2.bf16.msra.mxu0 0
      %8282 = vmatprep.subr.bf16.mxu0 0
      %8283 = vmatpush2.bf16.msra.mxu0 0
      %8284 = vmatprep.subr.bf16.mxu0 0
      %8285 = vmatpush2.bf16.msra.mxu0 0
      %8286 = vmatprep.subr.bf16.mxu0 0
      %8287 = vmatpush2.bf16.msra.mxu0 0
      %8288 = vmatprep.subr.bf16.mxu0 0
      %8289 = vmatpush2.bf16.msra.mxu0 0
      %8290 = vmatprep.mubr.bf16.mxu0 0
      %8291 = vmatmul.mubr.bf16.gmra.mxu0 %v8196
      %v8292 = vpop.f32.mrf.mxu0
      %v8293 = vadd.f32 0.0, %v8292
      %v8294 = vpop.f32.mrf.mxu0
      %v8295 = vpop.f32.mrf.mxu0
      %v8296 = vadd.f32 0.0, %v8295
      %v8297 = vpop.f32.mrf.mxu0
      %8298 = vmatprep.mubr.bf16.mxu0 0
      %8299 = vmatmul.mubr.bf16.gmra.mxu0 %v8199
      %v8300 = vpop.f32.mrf.mxu0
      %v8301 = vadd.f32 0.0, %v8300
      %v8302 = vpop.f32.mrf.mxu0
      %v8303 = vpop.f32.mrf.mxu0
      %v8304 = vadd.f32 0.0, %v8303
      %v8305 = vpop.f32.mrf.mxu0
      %8306 = vmatprep.mubr.bf16.mxu0 0
      %8307 = vmatmul.mubr.bf16.gmra.mxu0 %v8202
      %v8308 = vpop.f32.mrf.mxu0
      %v8309 = vadd.f32 0.0, %v8308
      %v8310 = vpop.f32.mrf.mxu0
      %v8311 = vpop.f32.mrf.mxu0
      %v8312 = vadd.f32 0.0, %v8311
      %v8313 = vpop.f32.mrf.mxu0
      %8314 = vmatprep.mubr.bf16.mxu0 0
      %8315 = vmatmul.mubr.bf16.gmra.mxu0 %v8205
      %v8316 = vpop.f32.mrf.mxu0
      %v8317 = vadd.f32 0.0, %v8316
      %v8318 = vpop.f32.mrf.mxu0
      %v8319 = vpop.f32.mrf.mxu0
      %v8320 = vadd.f32 0.0, %v8319
      %v8321 = vpop.f32.mrf.mxu0
      %8322 = vmatprep.mubr.bf16.mxu0 0
      %8323 = vmatmul.mubr.bf16.gmra.mxu0 %v8208
      %v8324 = vpop.f32.mrf.mxu0
      %v8325 = vadd.f32 0.0, %v8324
      %v8326 = vpop.f32.mrf.mxu0
      %v8327 = vpop.f32.mrf.mxu0
      %v8328 = vadd.f32 0.0, %v8327
      %v8329 = vpop.f32.mrf.mxu0
      %8330 = vmatprep.mubr.bf16.mxu0 0
      %8331 = vmatmul.mubr.bf16.gmra.mxu0 %v8211
      %v8332 = vpop.f32.mrf.mxu0
      %v8333 = vadd.f32 0.0, %v8332
      %v8334 = vpop.f32.mrf.mxu0
      %v8335 = vpop.f32.mrf.mxu0
      %v8336 = vadd.f32 0.0, %v8335
      %v8337 = vpop.f32.mrf.mxu0
      %8338 = vmatprep.mubr.bf16.mxu0 0
      %8339 = vmatmul.mubr.bf16.gmra.mxu0 %v8214
      %v8340 = vpop.f32.mrf.mxu0
      %v8341 = vadd.f32 0.0, %v8340
      %v8342 = vpop.f32.mrf.mxu0
      %v8343 = vpop.f32.mrf.mxu0
      %v8344 = vadd.f32 0.0, %v8343
      %v8345 = vpop.f32.mrf.mxu0
      %8346 = vmatprep.mubr.bf16.mxu0 0
      %8347 = vmatmul.mubr.bf16.gmra.mxu0 %v8217
      %v8348 = vpop.f32.mrf.mxu0
      %v8349 = vadd.f32 0.0, %v8348
      %v8350 = vpop.f32.mrf.mxu0
      %v8351 = vpop.f32.mrf.mxu0
      %v8352 = vadd.f32 0.0, %v8351
      %v8353 = vpop.f32.mrf.mxu0
      %8354 = vmatprep.mubr.bf16.mxu0 0
      %8355 = vmatmul.mubr.bf16.gmra.mxu0 %v8220
      %v8356 = vpop.f32.mrf.mxu0
      %v8357 = vadd.f32 0.0, %v8356
      %v8358 = vpop.f32.mrf.mxu0
      %v8359 = vpop.f32.mrf.mxu0
      %v8360 = vadd.f32 0.0, %v8359
      %v8361 = vpop.f32.mrf.mxu0
      %8362 = vmatprep.mubr.bf16.mxu0 0
      %8363 = vmatmul.mubr.bf16.gmra.mxu0 %v8223
      %v8364 = vpop.f32.mrf.mxu0
      %v8365 = vadd.f32 0.0, %v8364
      %v8366 = vpop.f32.mrf.mxu0
      %v8367 = vpop.f32.mrf.mxu0
      %v8368 = vadd.f32 0.0, %v8367
      %v8369 = vpop.f32.mrf.mxu0
      %8370 = vmatprep.mubr.bf16.mxu0 0
      %8371 = vmatmul.mubr.bf16.gmra.mxu0 %v8226
      %v8372 = vpop.f32.mrf.mxu0
      %v8373 = vadd.f32 0.0, %v8372
      %v8374 = vpop.f32.mrf.mxu0
      %v8375 = vpop.f32.mrf.mxu0
      %v8376 = vadd.f32 0.0, %v8375
      %v8377 = vpop.f32.mrf.mxu0
      %8378 = vmatprep.mubr.bf16.mxu0 0
      %8379 = vmatmul.mubr.bf16.gmra.mxu0 %v8229
      %v8380 = vpop.f32.mrf.mxu0
      %v8381 = vadd.f32 0.0, %v8380
      %v8382 = vpop.f32.mrf.mxu0
      %v8383 = vpop.f32.mrf.mxu0
      %v8384 = vadd.f32 0.0, %v8383
      %v8385 = vpop.f32.mrf.mxu0
      %8386 = vmatprep.mubr.bf16.mxu0 0
      %8387 = vmatmul.mubr.bf16.gmra.mxu0 %v8232
      %v8388 = vpop.f32.mrf.mxu0
      %v8389 = vadd.f32 0.0, %v8388
      %v8390 = vpop.f32.mrf.mxu0
      %v8391 = vpop.f32.mrf.mxu0
      %v8392 = vadd.f32 0.0, %v8391
      %v8393 = vpop.f32.mrf.mxu0
      %8394 = vmatprep.mubr.bf16.mxu0 0
      %8395 = vmatmul.mubr.bf16.gmra.mxu0 %v8235
      %v8396 = vpop.f32.mrf.mxu0
      %v8397 = vadd.f32 0.0, %v8396
      %v8398 = vpop.f32.mrf.mxu0
      %v8399 = vpop.f32.mrf.mxu0
      %v8400 = vadd.f32 0.0, %v8399
      %v8401 = vpop.f32.mrf.mxu0
      %8402 = vmatprep.mubr.bf16.mxu0 0
      %8403 = vmatmul.mubr.bf16.gmra.mxu0 %v8238
      %v8404 = vpop.f32.mrf.mxu0
      %v8405 = vadd.f32 0.0, %v8404
      %v8406 = vpop.f32.mrf.mxu0
      %v8407 = vpop.f32.mrf.mxu0
      %v8408 = vadd.f32 0.0, %v8407
      %v8409 = vpop.f32.mrf.mxu0
      %8410 = vmatprep.mubr.bf16.mxu0 0
      %8411 = vmatmul.mubr.bf16.gmra.mxu0 %v8241
      %v8412 = vpop.f32.mrf.mxu0
      %v8413 = vadd.f32 0.0, %v8412
      %v8414 = vpop.f32.mrf.mxu0
      %v8415 = vpop.f32.mrf.mxu0
      %v8416 = vadd.f32 0.0, %v8415
      %v8417 = vpop.f32.mrf.mxu0
      %8418 = vmatprep.mubr.bf16.mxu0 0
      %8419 = vmatmul.mubr.bf16.gmra.mxu0 %v8244
      %v8420 = vpop.f32.mrf.mxu0
      %v8421 = vadd.f32 0.0, %v8420
      %v8422 = vpop.f32.mrf.mxu0
      %v8423 = vpop.f32.mrf.mxu0
      %v8424 = vadd.f32 0.0, %v8423
      %v8425 = vpop.f32.mrf.mxu0
      %8426 = vmatprep.mubr.bf16.mxu0 0
      %8427 = vmatmul.mubr.bf16.gmra.mxu0 %v8247
      %v8428 = vpop.f32.mrf.mxu0
      %v8429 = vadd.f32 0.0, %v8428
      %v8430 = vpop.f32.mrf.mxu0
      %v8431 = vpop.f32.mrf.mxu0
      %v8432 = vadd.f32 0.0, %v8431
      %v8433 = vpop.f32.mrf.mxu0
      %8434 = vmatprep.mubr.bf16.mxu0 0
      %8435 = vmatmul.mubr.bf16.gmra.mxu0 %v8250
      %v8436 = vpop.f32.mrf.mxu0
      %v8437 = vadd.f32 0.0, %v8436
      %v8438 = vpop.f32.mrf.mxu0
      %v8439 = vpop.f32.mrf.mxu0
      %v8440 = vadd.f32 0.0, %v8439
      %v8441 = vpop.f32.mrf.mxu0
      %8442 = vmatprep.mubr.bf16.mxu0 0
      %8443 = vmatmul.mubr.bf16.gmra.mxu0 %v8253
      %v8444 = vpop.f32.mrf.mxu0
      %v8445 = vadd.f32 0.0, %v8444
      %v8446 = vpop.f32.mrf.mxu0
      %v8447 = vpop.f32.mrf.mxu0
      %v8448 = vadd.f32 0.0, %v8447
      %v8449 = vpop.f32.mrf.mxu0
      %8450 = vmatprep.mubr.bf16.mxu0 0
      %8451 = vmatmul.mubr.bf16.gmra.mxu0 %v8256
      %v8452 = vpop.f32.mrf.mxu0
      %v8453 = vadd.f32 0.0, %v8452
      %v8454 = vpop.f32.mrf.mxu0
      %v8455 = vpop.f32.mrf.mxu0
      %v8456 = vpop.f32.mrf.mxu0
      %8457 = vdwg.mxu0
      %v8458 = vadd.f32 %v7916, %v8293
      %v8459 = vadd.f32 %v7919, %v8296
      %v8460 = vadd.f32 %v7924, %v8301
      %v8461 = vadd.f32 %v7927, %v8304
      %v8462 = vadd.f32 %v7932, %v8309
      %v8463 = vadd.f32 %v7935, %v8312
      %v8464 = vadd.f32 %v7940, %v8317
      %v8465 = vadd.f32 %v7943, %v8320
      %v8466 = vadd.f32 %v7948, %v8325
      %v8467 = vadd.f32 %v7951, %v8328
      %v8468 = vadd.f32 %v7956, %v8333
      %v8469 = vadd.f32 %v7959, %v8336
      %v8470 = vadd.f32 %v7964, %v8341
      %v8471 = vadd.f32 %v7967, %v8344
      %v8472 = vadd.f32 %v7972, %v8349
      %v8473 = vadd.f32 %v7975, %v8352
      %v8474 = vadd.f32 %v7980, %v8357
      %v8475 = vadd.f32 %v7983, %v8360
      %v8476 = vadd.f32 %v7988, %v8365
      %v8477 = vadd.f32 %v7991, %v8368
      %v8478 = vadd.f32 %v7996, %v8373
      %v8479 = vadd.f32 %v7999, %v8376
      %v8480 = vadd.f32 %v8004, %v8381
      %v8481 = vadd.f32 %v8007, %v8384
      %v8482 = vadd.f32 %v8012, %v8389
      %v8483 = vadd.f32 %v8015, %v8392
      %v8484 = vadd.f32 %v8020, %v8397
      %v8485 = vadd.f32 %v8023, %v8400
      %v8486 = vadd.f32 %v8028, %v8405
      %v8487 = vadd.f32 %v8031, %v8408
      %v8488 = vadd.f32 %v8036, %v8413
      %v8489 = vadd.f32 %v8039, %v8416
      %v8490 = vadd.f32 %v8044, %v8421
      %v8491 = vadd.f32 %v8047, %v8424
      %v8492 = vadd.f32 %v8052, %v8429
      %v8493 = vadd.f32 %v8055, %v8432
      %v8494 = vadd.f32 %v8060, %v8437
      %v8495 = vadd.f32 %v8063, %v8440
      %v8496 = vadd.f32 %v8068, %v8445
      %v8497 = vadd.f32 %v8071, %v8448
      %v8498 = vadd.f32 %v8076, %v8453
      %v8499 = vld [vmem:[#allocation2 + $0xc] sm:$0x8]
      %v8500 = vld [vmem:[#allocation2 + $0x10] sm:$0xf]
      %v8501 = vld [vmem:[#allocation2 + $0x14] sm:$0xf]
      %v8502 = vld [vmem:[#allocation2 + $0x18] sm:$0xf]
      %v8503 = vld [vmem:[#allocation2 + $0x1c] sm:$0xf]
      %v8504 = vld [vmem:[#allocation2 + $0x20] sm:$0xf]
      %v8505 = vld [vmem:[#allocation2 + $0x24] sm:$0xf]
      %v8506 = vld [vmem:[#allocation2 + $0x28] sm:$0xf]
      %v8507 = vld [vmem:[#allocation2 + $0x2c] sm:$0xf]
      %v8508 = vld [vmem:[#allocation2 + $0x30] sm:$0xf]
      %v8509 = vld [vmem:[#allocation2 + $0x34] sm:$0xf]
      %v8510 = vld [vmem:[#allocation2 + $0x38] sm:$0xf]
      %v8511 = vld [vmem:[#allocation2 + $0x3c] sm:$0xf]
      %v8512 = vld [vmem:[#allocation2 + $0x40] sm:$0xf]
      %v8513 = vld [vmem:[#allocation2 + $0x44] sm:$0xf]
      %v8514 = vld [vmem:[#allocation2 + $0x48] sm:$0xf]
      %v8515 = vld [vmem:[#allocation2 + $0x4c] sm:$0xf]
      %v8516 = vld [vmem:[#allocation2 + $0x50] sm:$0xf]
      %v8517 = vld [vmem:[#allocation2 + $0x54] sm:$0xf]
      %v8518 = vld [vmem:[#allocation2 + $0x58] sm:$0xf]
      %v8519 = vld [vmem:[#allocation2 + $0x5c] sm:$0xf]
      %v8520 = vld [vmem:[#allocation2 + $0x60] sm:$0xf]
      %v8521 = vld [vmem:[#allocation2 + $0x64] sm:$0xf]
      %v8522 = vld [vmem:[#allocation2 + $0x68] sm:$0xf]
      %v8523 = vld [vmem:[#allocation2 + $0x6c] sm:$0xf]
      %v8524 = vld [vmem:[#allocation2 + $0x70] sm:$0xf]
      %v8525 = vld [vmem:[#allocation2 + $0x74] sm:$0xf]
      %v8526 = vld [vmem:[#allocation2 + $0x78] sm:$0xf]
      %v8527 = vld [vmem:[#allocation2 + $0x7c] sm:$0xf]
      %v8528 = vld [vmem:[#allocation2 + $0x80] sm:$0xf]
      %v8529 = vld [vmem:[#allocation2 + $0x84] sm:$0xf]
      %v8530 = vld [vmem:[#allocation2 + $0x88] sm:$0xf]
      %v8531 = vld [vmem:[#allocation2 + $0x8c] sm:$0xf]
      %v8532 = vld [vmem:[#allocation2 + $0x90] sm:$0xf]
      %v8533 = vld [vmem:[#allocation2 + $0x94] sm:$0xf]
      %v8534 = vld [vmem:[#allocation2 + $0x98] sm:$0xf]
      %v8535 = vld [vmem:[#allocation2 + $0x9c] sm:$0xf]
      %v8536 = vld [vmem:[#allocation2 + $0xa0] sm:$0xf]
      %v8537 = vld [vmem:[#allocation2 + $0xa4] sm:$0xf]
      %v8538 = vld [vmem:[#allocation2 + $0xa8] sm:$0xf]
      %v8539 = vld [vmem:[#allocation2 + $0xac] sm:$0xf]
      %v8540 = vld [vmem:[#allocation2 + $0xb0] sm:$0x3]
      %s8541 = scalar_lea.vmem %s11, 48
      %v8542 = vld [vmem:[%s8541] sm:$0xf]
      %v8543 = vld [vmem:[%s8541 + $0x4] sm:$0xf]
      %v8544 = vld [vmem:[%s8541 + $0x8] sm:$0xf]
      %v8545 = vld [vmem:[%s8541 + $0xc] sm:$0xf]
      %v8588 = vunpack.c.l.b16 %v8499
      %v8589 = vunpack.c.l.b16 %v8500
      %v8590 = vunpack.c.l.b16 %v8501
      %v8591 = vunpack.c.l.b16 %v8502
      %v8592 = vunpack.c.l.b16 %v8503
      %v8593 = vunpack.c.l.b16 %v8504
      %v8594 = vunpack.c.l.b16 %v8505
      %v8595 = vunpack.c.l.b16 %v8506
      %v8596 = vunpack.c.l.b16 %v8507
      %v8597 = vunpack.c.l.b16 %v8508
      %v8598 = vunpack.c.l.b16 %v8509
      %v8599 = vunpack.c.l.b16 %v8510
      %v8600 = vunpack.c.l.b16 %v8511
      %v8601 = vunpack.c.l.b16 %v8512
      %v8602 = vunpack.c.l.b16 %v8513
      %v8603 = vunpack.c.l.b16 %v8514
      %v8604 = vunpack.c.l.b16 %v8515
      %v8605 = vunpack.c.l.b16 %v8516
      %v8606 = vunpack.c.l.b16 %v8517
      %v8607 = vunpack.c.l.b16 %v8518
      %v8608 = vunpack.c.l.b16 %v8519
      %v8609 = vunpack.c.l.b16 %v8520
      %v8610 = vunpack.c.l.b16 %v8521
      %v8611 = vunpack.c.l.b16 %v8522
      %v8612 = vunpack.c.l.b16 %v8523
      %v8613 = vunpack.c.l.b16 %v8524
      %v8614 = vunpack.c.l.b16 %v8525
      %v8615 = vunpack.c.l.b16 %v8526
      %v8616 = vunpack.c.l.b16 %v8527
      %v8617 = vunpack.c.l.b16 %v8528
      %v8618 = vunpack.c.l.b16 %v8529
      %v8619 = vunpack.c.l.b16 %v8530
      %v8620 = vunpack.c.l.b16 %v8531
      %v8621 = vunpack.c.l.b16 %v8532
      %v8622 = vunpack.c.l.b16 %v8533
      %v8623 = vunpack.c.l.b16 %v8534
      %v8624 = vunpack.c.l.b16 %v8535
      %v8625 = vunpack.c.l.b16 %v8536
      %v8626 = vunpack.c.l.b16 %v8537
      %v8627 = vunpack.c.l.b16 %v8538
      %v8628 = vunpack.c.l.b16 %v8539
      %v8629 = vunpack.c.l.b16 %v8540
      %v8630 = vpack.c.b16 %v8589, %v8588
      %v8631 = vpack.c.b16 %v8591, %v8590
      %v8632 = vpack.c.b16 %v8593, %v8592
      %v8633 = vpack.c.b16 %v8595, %v8594
      %v8634 = vpack.c.b16 %v8597, %v8596
      %v8635 = vpack.c.b16 %v8599, %v8598
      %v8636 = vpack.c.b16 %v8601, %v8600
      %v8637 = vpack.c.b16 %v8603, %v8602
      %v8638 = vpack.c.b16 %v8605, %v8604
      %v8639 = vpack.c.b16 %v8607, %v8606
      %v8640 = vpack.c.b16 %v8609, %v8608
      %v8641 = vpack.c.b16 %v8611, %v8610
      %v8642 = vpack.c.b16 %v8613, %v8612
      %v8643 = vpack.c.b16 %v8615, %v8614
      %v8644 = vpack.c.b16 %v8617, %v8616
      %v8645 = vpack.c.b16 %v8619, %v8618
      %v8646 = vpack.c.b16 %v8621, %v8620
      %v8647 = vpack.c.b16 %v8623, %v8622
      %v8648 = vpack.c.b16 %v8625, %v8624
      %v8649 = vpack.c.b16 %v8627, %v8626
      %v8650 = vpack.c.b16 %v8629, %v8628
      %v8652 = vshrl.u32 %v8630, 16
      %v8654 = vrot.slane %v8652, 3
      %v8655 = vshll.u32 %v8630, 16
      %v8657 = vrot.slane %v8655, 4
      %v8658 = vor.u32 %v8654, %v8657
      %v8660 = vshrl.u32 %v8631, 16
      %v8662 = vrot.slane %v8660, 3
      %v8663 = vshll.u32 %v8631, 16
      %v8665 = vrot.slane %v8663, 4
      %v8666 = vor.u32 %v8662, %v8665
      %v8667 = vsel %vm2697, %v8658, %v8666
      %v8669 = vshrl.u32 %v8632, 16
      %v8671 = vrot.slane %v8669, 3
      %v8672 = vshll.u32 %v8632, 16
      %v8674 = vrot.slane %v8672, 4
      %v8675 = vor.u32 %v8671, %v8674
      %v8676 = vsel %vm2697, %v8666, %v8675
      %v8678 = vshrl.u32 %v8633, 16
      %v8680 = vrot.slane %v8678, 3
      %v8681 = vshll.u32 %v8633, 16
      %v8683 = vrot.slane %v8681, 4
      %v8684 = vor.u32 %v8680, %v8683
      %v8685 = vsel %vm2697, %v8675, %v8684
      %v8687 = vshrl.u32 %v8634, 16
      %v8689 = vrot.slane %v8687, 3
      %v8690 = vshll.u32 %v8634, 16
      %v8692 = vrot.slane %v8690, 4
      %v8693 = vor.u32 %v8689, %v8692
      %v8694 = vsel %vm2697, %v8684, %v8693
      %v8696 = vshrl.u32 %v8635, 16
      %v8698 = vrot.slane %v8696, 3
      %v8699 = vshll.u32 %v8635, 16
      %v8701 = vrot.slane %v8699, 4
      %v8702 = vor.u32 %v8698, %v8701
      %v8703 = vsel %vm2697, %v8693, %v8702
      %v8705 = vshrl.u32 %v8636, 16
      %v8707 = vrot.slane %v8705, 3
      %v8708 = vshll.u32 %v8636, 16
      %v8710 = vrot.slane %v8708, 4
      %v8711 = vor.u32 %v8707, %v8710
      %v8712 = vsel %vm2697, %v8702, %v8711
      %v8714 = vshrl.u32 %v8637, 16
      %v8716 = vrot.slane %v8714, 3
      %v8717 = vshll.u32 %v8637, 16
      %v8719 = vrot.slane %v8717, 4
      %v8720 = vor.u32 %v8716, %v8719
      %v8721 = vsel %vm2697, %v8711, %v8720
      %v8723 = vshrl.u32 %v8638, 16
      %v8725 = vrot.slane %v8723, 3
      %v8726 = vshll.u32 %v8638, 16
      %v8728 = vrot.slane %v8726, 4
      %v8729 = vor.u32 %v8725, %v8728
      %v8730 = vsel %vm2697, %v8720, %v8729
      %v8732 = vshrl.u32 %v8639, 16
      %v8734 = vrot.slane %v8732, 3
      %v8735 = vshll.u32 %v8639, 16
      %v8737 = vrot.slane %v8735, 4
      %v8738 = vor.u32 %v8734, %v8737
      %v8739 = vsel %vm2697, %v8729, %v8738
      %v8741 = vshrl.u32 %v8640, 16
      %v8743 = vrot.slane %v8741, 3
      %v8744 = vshll.u32 %v8640, 16
      %v8746 = vrot.slane %v8744, 4
      %v8747 = vor.u32 %v8743, %v8746
      %v8748 = vsel %vm2697, %v8738, %v8747
      %v8750 = vshrl.u32 %v8641, 16
      %v8752 = vrot.slane %v8750, 3
      %v8753 = vshll.u32 %v8641, 16
      %v8755 = vrot.slane %v8753, 4
      %v8756 = vor.u32 %v8752, %v8755
      %v8757 = vsel %vm2697, %v8747, %v8756
      %v8759 = vshrl.u32 %v8642, 16
      %v8761 = vrot.slane %v8759, 3
      %v8762 = vshll.u32 %v8642, 16
      %v8764 = vrot.slane %v8762, 4
      %v8765 = vor.u32 %v8761, %v8764
      %v8766 = vsel %vm2697, %v8756, %v8765
      %v8768 = vshrl.u32 %v8643, 16
      %v8770 = vrot.slane %v8768, 3
      %v8771 = vshll.u32 %v8643, 16
      %v8773 = vrot.slane %v8771, 4
      %v8774 = vor.u32 %v8770, %v8773
      %v8775 = vsel %vm2697, %v8765, %v8774
      %v8777 = vshrl.u32 %v8644, 16
      %v8779 = vrot.slane %v8777, 3
      %v8780 = vshll.u32 %v8644, 16
      %v8782 = vrot.slane %v8780, 4
      %v8783 = vor.u32 %v8779, %v8782
      %v8784 = vsel %vm2697, %v8774, %v8783
      %v8786 = vshrl.u32 %v8645, 16
      %v8788 = vrot.slane %v8786, 3
      %v8789 = vshll.u32 %v8645, 16
      %v8791 = vrot.slane %v8789, 4
      %v8792 = vor.u32 %v8788, %v8791
      %v8793 = vsel %vm2697, %v8783, %v8792
      %v8795 = vshrl.u32 %v8646, 16
      %v8797 = vrot.slane %v8795, 3
      %v8798 = vshll.u32 %v8646, 16
      %v8800 = vrot.slane %v8798, 4
      %v8801 = vor.u32 %v8797, %v8800
      %v8802 = vsel %vm2697, %v8792, %v8801
      %v8804 = vshrl.u32 %v8647, 16
      %v8806 = vrot.slane %v8804, 3
      %v8807 = vshll.u32 %v8647, 16
      %v8809 = vrot.slane %v8807, 4
      %v8810 = vor.u32 %v8806, %v8809
      %v8811 = vsel %vm2697, %v8801, %v8810
      %v8813 = vshrl.u32 %v8648, 16
      %v8815 = vrot.slane %v8813, 3
      %v8816 = vshll.u32 %v8648, 16
      %v8818 = vrot.slane %v8816, 4
      %v8819 = vor.u32 %v8815, %v8818
      %v8820 = vsel %vm2697, %v8810, %v8819
      %v8822 = vshrl.u32 %v8649, 16
      %v8824 = vrot.slane %v8822, 3
      %v8825 = vshll.u32 %v8649, 16
      %v8827 = vrot.slane %v8825, 4
      %v8828 = vor.u32 %v8824, %v8827
      %v8829 = vsel %vm2697, %v8819, %v8828
      %v8831 = vshrl.u32 %v8650, 16
      %v8833 = vrot.slane %v8831, 3
      %v8834 = vshll.u32 %v8650, 16
      %v8836 = vrot.slane %v8834, 4
      %v8837 = vor.u32 %v8833, %v8836
      %v8838 = vsel %vm2697, %v8828, %v8837
      %v8843 = vunpack.c.l.b16 %v8542
      %v8844 = vunpack.c.l.b16 %v8543
      %v8845 = vunpack.c.l.b16 %v8544
      %v8846 = vunpack.c.l.b16 %v8545
      %v8847 = vpack.c.b16 %v8844, %v8843
      %v8848 = vpack.c.b16 %v8846, %v8845
      %v8852 = vsel %vm940, %v8667, 0
      %v8855 = vsel %vm940, %v8676, 0
      %v8858 = vsel %vm940, %v8685, 0
      %v8861 = vsel %vm940, %v8694, 0
      %v8864 = vsel %vm940, %v8703, 0
      %v8867 = vsel %vm940, %v8712, 0
      %v8870 = vsel %vm940, %v8721, 0
      %v8873 = vsel %vm940, %v8730, 0
      %v8876 = vsel %vm940, %v8739, 0
      %v8879 = vsel %vm940, %v8748, 0
      %v8882 = vsel %vm940, %v8757, 0
      %v8885 = vsel %vm940, %v8766, 0
      %v8888 = vsel %vm940, %v8775, 0
      %v8891 = vsel %vm940, %v8784, 0
      %v8894 = vsel %vm940, %v8793, 0
      %v8897 = vsel %vm940, %v8802, 0
      %v8900 = vsel %vm940, %v8811, 0
      %v8903 = vsel %vm940, %v8820, 0
      %v8906 = vsel %vm940, %v8829, 0
      %v8909 = vsel %vm940, %v8838, 0
      %v8912 = vsel %vm940, %v8837, 0
      %8914 = vmatprep.subr.bf16.mxu0 0
      %8915 = vmatpush1.bf16.msra.mxu0 0
      %8916 = vmatprep.subr.bf16.mxu0 0
      %8917 = vmatpush1.bf16.msra.mxu0 0
      %8918 = vmatprep.subr.bf16.mxu0 0
      %8919 = vmatpush1.bf16.msra.mxu0 0
      %8920 = vmatprep.subr.bf16.mxu0 0
      %8921 = vmatpush1.bf16.msra.mxu0 0
      %8922 = vmatprep.subr.bf16.mxu0 0
      %8923 = vmatpush1.bf16.msra.mxu0 0
      %8924 = vmatprep.subr.bf16.mxu0 0
      %8925 = vmatpush1.bf16.msra.mxu0 0
      %8926 = vmatprep.subr.bf16.mxu0 0
      %8927 = vmatpush1.bf16.msra.mxu0 %v8848
      %8928 = vmatprep.subr.bf16.mxu0 0
      %8929 = vmatpush1.bf16.msra.mxu0 %v8847
      %8930 = vmatprep.subr.bf16.mxu0 0
      %8931 = vmatpush2.bf16.msra.mxu0 0
      %8932 = vmatprep.subr.bf16.mxu0 0
      %8933 = vmatpush2.bf16.msra.mxu0 0
      %8934 = vmatprep.subr.bf16.mxu0 0
      %8935 = vmatpush2.bf16.msra.mxu0 0
      %8936 = vmatprep.subr.bf16.mxu0 0
      %8937 = vmatpush2.bf16.msra.mxu0 0
      %8938 = vmatprep.subr.bf16.mxu0 0
      %8939 = vmatpush2.bf16.msra.mxu0 0
      %8940 = vmatprep.subr.bf16.mxu0 0
      %8941 = vmatpush2.bf16.msra.mxu0 0
      %8942 = vmatprep.subr.bf16.mxu0 0
      %8943 = vmatpush2.bf16.msra.mxu0 0
      %8944 = vmatprep.subr.bf16.mxu0 0
      %8945 = vmatpush2.bf16.msra.mxu0 0
      %8946 = vmatprep.mubr.bf16.mxu0 0
      %8947 = vmatmul.mubr.bf16.gmra.mxu0 %v8852
      %v8948 = vpop.f32.mrf.mxu0
      %v8949 = vadd.f32 0.0, %v8948
      %v8950 = vpop.f32.mrf.mxu0
      %v8951 = vpop.f32.mrf.mxu0
      %v8952 = vadd.f32 0.0, %v8951
      %v8953 = vpop.f32.mrf.mxu0
      %8954 = vmatprep.mubr.bf16.mxu0 0
      %8955 = vmatmul.mubr.bf16.gmra.mxu0 %v8855
      %v8956 = vpop.f32.mrf.mxu0
      %v8957 = vadd.f32 0.0, %v8956
      %v8958 = vpop.f32.mrf.mxu0
      %v8959 = vpop.f32.mrf.mxu0
      %v8960 = vadd.f32 0.0, %v8959
      %v8961 = vpop.f32.mrf.mxu0
      %8962 = vmatprep.mubr.bf16.mxu0 0
      %8963 = vmatmul.mubr.bf16.gmra.mxu0 %v8858
      %v8964 = vpop.f32.mrf.mxu0
      %v8965 = vadd.f32 0.0, %v8964
      %v8966 = vpop.f32.mrf.mxu0
      %v8967 = vpop.f32.mrf.mxu0
      %v8968 = vadd.f32 0.0, %v8967
      %v8969 = vpop.f32.mrf.mxu0
      %8970 = vmatprep.mubr.bf16.mxu0 0
      %8971 = vmatmul.mubr.bf16.gmra.mxu0 %v8861
      %v8972 = vpop.f32.mrf.mxu0
      %v8973 = vadd.f32 0.0, %v8972
      %v8974 = vpop.f32.mrf.mxu0
      %v8975 = vpop.f32.mrf.mxu0
      %v8976 = vadd.f32 0.0, %v8975
      %v8977 = vpop.f32.mrf.mxu0
      %8978 = vmatprep.mubr.bf16.mxu0 0
      %8979 = vmatmul.mubr.bf16.gmra.mxu0 %v8864
      %v8980 = vpop.f32.mrf.mxu0
      %v8981 = vadd.f32 0.0, %v8980
      %v8982 = vpop.f32.mrf.mxu0
      %v8983 = vpop.f32.mrf.mxu0
      %v8984 = vadd.f32 0.0, %v8983
      %v8985 = vpop.f32.mrf.mxu0
      %8986 = vmatprep.mubr.bf16.mxu0 0
      %8987 = vmatmul.mubr.bf16.gmra.mxu0 %v8867
      %v8988 = vpop.f32.mrf.mxu0
      %v8989 = vadd.f32 0.0, %v8988
      %v8990 = vpop.f32.mrf.mxu0
      %v8991 = vpop.f32.mrf.mxu0
      %v8992 = vadd.f32 0.0, %v8991
      %v8993 = vpop.f32.mrf.mxu0
      %8994 = vmatprep.mubr.bf16.mxu0 0
      %8995 = vmatmul.mubr.bf16.gmra.mxu0 %v8870
      %v8996 = vpop.f32.mrf.mxu0
      %v8997 = vadd.f32 0.0, %v8996
      %v8998 = vpop.f32.mrf.mxu0
      %v8999 = vpop.f32.mrf.mxu0
      %v9000 = vadd.f32 0.0, %v8999
      %v9001 = vpop.f32.mrf.mxu0
      %9002 = vmatprep.mubr.bf16.mxu0 0
      %9003 = vmatmul.mubr.bf16.gmra.mxu0 %v8873
      %v9004 = vpop.f32.mrf.mxu0
      %v9005 = vadd.f32 0.0, %v9004
      %v9006 = vpop.f32.mrf.mxu0
      %v9007 = vpop.f32.mrf.mxu0
      %v9008 = vadd.f32 0.0, %v9007
      %v9009 = vpop.f32.mrf.mxu0
      %9010 = vmatprep.mubr.bf16.mxu0 0
      %9011 = vmatmul.mubr.bf16.gmra.mxu0 %v8876
      %v9012 = vpop.f32.mrf.mxu0
      %v9013 = vadd.f32 0.0, %v9012
      %v9014 = vpop.f32.mrf.mxu0
      %v9015 = vpop.f32.mrf.mxu0
      %v9016 = vadd.f32 0.0, %v9015
      %v9017 = vpop.f32.mrf.mxu0
      %9018 = vmatprep.mubr.bf16.mxu0 0
      %9019 = vmatmul.mubr.bf16.gmra.mxu0 %v8879
      %v9020 = vpop.f32.mrf.mxu0
      %v9021 = vadd.f32 0.0, %v9020
      %v9022 = vpop.f32.mrf.mxu0
      %v9023 = vpop.f32.mrf.mxu0
      %v9024 = vadd.f32 0.0, %v9023
      %v9025 = vpop.f32.mrf.mxu0
      %9026 = vmatprep.mubr.bf16.mxu0 0
      %9027 = vmatmul.mubr.bf16.gmra.mxu0 %v8882
      %v9028 = vpop.f32.mrf.mxu0
      %v9029 = vadd.f32 0.0, %v9028
      %v9030 = vpop.f32.mrf.mxu0
      %v9031 = vpop.f32.mrf.mxu0
      %v9032 = vadd.f32 0.0, %v9031
      %v9033 = vpop.f32.mrf.mxu0
      %9034 = vmatprep.mubr.bf16.mxu0 0
      %9035 = vmatmul.mubr.bf16.gmra.mxu0 %v8885
      %v9036 = vpop.f32.mrf.mxu0
      %v9037 = vadd.f32 0.0, %v9036
      %v9038 = vpop.f32.mrf.mxu0
      %v9039 = vpop.f32.mrf.mxu0
      %v9040 = vadd.f32 0.0, %v9039
      %v9041 = vpop.f32.mrf.mxu0
      %9042 = vmatprep.mubr.bf16.mxu0 0
      %9043 = vmatmul.mubr.bf16.gmra.mxu0 %v8888
      %v9044 = vpop.f32.mrf.mxu0
      %v9045 = vadd.f32 0.0, %v9044
      %v9046 = vpop.f32.mrf.mxu0
      %v9047 = vpop.f32.mrf.mxu0
      %v9048 = vadd.f32 0.0, %v9047
      %v9049 = vpop.f32.mrf.mxu0
      %9050 = vmatprep.mubr.bf16.mxu0 0
      %9051 = vmatmul.mubr.bf16.gmra.mxu0 %v8891
      %v9052 = vpop.f32.mrf.mxu0
      %v9053 = vadd.f32 0.0, %v9052
      %v9054 = vpop.f32.mrf.mxu0
      %v9055 = vpop.f32.mrf.mxu0
      %v9056 = vadd.f32 0.0, %v9055
      %v9057 = vpop.f32.mrf.mxu0
      %9058 = vmatprep.mubr.bf16.mxu0 0
      %9059 = vmatmul.mubr.bf16.gmra.mxu0 %v8894
      %v9060 = vpop.f32.mrf.mxu0
      %v9061 = vadd.f32 0.0, %v9060
      %v9062 = vpop.f32.mrf.mxu0
      %v9063 = vpop.f32.mrf.mxu0
      %v9064 = vadd.f32 0.0, %v9063
      %v9065 = vpop.f32.mrf.mxu0
      %9066 = vmatprep.mubr.bf16.mxu0 0
      %9067 = vmatmul.mubr.bf16.gmra.mxu0 %v8897
      %v9068 = vpop.f32.mrf.mxu0
      %v9069 = vadd.f32 0.0, %v9068
      %v9070 = vpop.f32.mrf.mxu0
      %v9071 = vpop.f32.mrf.mxu0
      %v9072 = vadd.f32 0.0, %v9071
      %v9073 = vpop.f32.mrf.mxu0
      %9074 = vmatprep.mubr.bf16.mxu0 0
      %9075 = vmatmul.mubr.bf16.gmra.mxu0 %v8900
      %v9076 = vpop.f32.mrf.mxu0
      %v9077 = vadd.f32 0.0, %v9076
      %v9078 = vpop.f32.mrf.mxu0
      %v9079 = vpop.f32.mrf.mxu0
      %v9080 = vadd.f32 0.0, %v9079
      %v9081 = vpop.f32.mrf.mxu0
      %9082 = vmatprep.mubr.bf16.mxu0 0
      %9083 = vmatmul.mubr.bf16.gmra.mxu0 %v8903
      %v9084 = vpop.f32.mrf.mxu0
      %v9085 = vadd.f32 0.0, %v9084
      %v9086 = vpop.f32.mrf.mxu0
      %v9087 = vpop.f32.mrf.mxu0
      %v9088 = vadd.f32 0.0, %v9087
      %v9089 = vpop.f32.mrf.mxu0
      %9090 = vmatprep.mubr.bf16.mxu0 0
      %9091 = vmatmul.mubr.bf16.gmra.mxu0 %v8906
      %v9092 = vpop.f32.mrf.mxu0
      %v9093 = vadd.f32 0.0, %v9092
      %v9094 = vpop.f32.mrf.mxu0
      %v9095 = vpop.f32.mrf.mxu0
      %v9096 = vadd.f32 0.0, %v9095
      %v9097 = vpop.f32.mrf.mxu0
      %9098 = vmatprep.mubr.bf16.mxu0 0
      %9099 = vmatmul.mubr.bf16.gmra.mxu0 %v8909
      %v9100 = vpop.f32.mrf.mxu0
      %v9101 = vadd.f32 0.0, %v9100
      %v9102 = vpop.f32.mrf.mxu0
      %v9103 = vpop.f32.mrf.mxu0
      %v9104 = vadd.f32 0.0, %v9103
      %v9105 = vpop.f32.mrf.mxu0
      %9106 = vmatprep.mubr.bf16.mxu0 0
      %9107 = vmatmul.mubr.bf16.gmra.mxu0 %v8912
      %v9108 = vpop.f32.mrf.mxu0
      %v9109 = vadd.f32 0.0, %v9108
      %v9110 = vpop.f32.mrf.mxu0
      %v9111 = vpop.f32.mrf.mxu0
      %v9112 = vpop.f32.mrf.mxu0
      %9113 = vdwg.mxu0
      %v9114 = vadd.f32 %v8458, %v8949
      %v9115 = vadd.f32 %v8459, %v8952
      %v9116 = vadd.f32 %v8460, %v8957
      %v9117 = vadd.f32 %v8461, %v8960
      %v9118 = vadd.f32 %v8462, %v8965
      %v9119 = vadd.f32 %v8463, %v8968
      %v9120 = vadd.f32 %v8464, %v8973
      %v9121 = vadd.f32 %v8465, %v8976
      %v9122 = vadd.f32 %v8466, %v8981
      %v9123 = vadd.f32 %v8467, %v8984
      %v9124 = vadd.f32 %v8468, %v8989
      %v9125 = vadd.f32 %v8469, %v8992
      %v9126 = vadd.f32 %v8470, %v8997
      %v9127 = vadd.f32 %v8471, %v9000
      %v9128 = vadd.f32 %v8472, %v9005
      %v9129 = vadd.f32 %v8473, %v9008
      %v9130 = vadd.f32 %v8474, %v9013
      %v9131 = vadd.f32 %v8475, %v9016
      %v9132 = vadd.f32 %v8476, %v9021
      %v9133 = vadd.f32 %v8477, %v9024
      %v9134 = vadd.f32 %v8478, %v9029
      %v9135 = vadd.f32 %v8479, %v9032
      %v9136 = vadd.f32 %v8480, %v9037
      %v9137 = vadd.f32 %v8481, %v9040
      %v9138 = vadd.f32 %v8482, %v9045
      %v9139 = vadd.f32 %v8483, %v9048
      %v9140 = vadd.f32 %v8484, %v9053
      %v9141 = vadd.f32 %v8485, %v9056
      %v9142 = vadd.f32 %v8486, %v9061
      %v9143 = vadd.f32 %v8487, %v9064
      %v9144 = vadd.f32 %v8488, %v9069
      %v9145 = vadd.f32 %v8489, %v9072
      %v9146 = vadd.f32 %v8490, %v9077
      %v9147 = vadd.f32 %v8491, %v9080
      %v9148 = vadd.f32 %v8492, %v9085
      %v9149 = vadd.f32 %v8493, %v9088
      %v9150 = vadd.f32 %v8494, %v9093
      %v9151 = vadd.f32 %v8495, %v9096
      %v9152 = vadd.f32 %v8496, %v9101
      %v9153 = vadd.f32 %v8497, %v9104
      %v9154 = vadd.f32 %v8498, %v9109
      %s9155 = scalar_lea.vmem %s11, 64
      %v9156 = vld [vmem:[%s9155] sm:$0xf]
      %v9157 = vld [vmem:[%s9155 + $0x4] sm:$0xf]
      %v9158 = vld [vmem:[%s9155 + $0x8] sm:$0xf]
      %v9159 = vld [vmem:[%s9155 + $0xc] sm:$0xf]
      %v9160 = vpack.c.b16 %v8590, %v8589
      %v9161 = vpack.c.b16 %v8592, %v8591
      %v9162 = vpack.c.b16 %v8594, %v8593
      %v9163 = vpack.c.b16 %v8596, %v8595
      %v9164 = vpack.c.b16 %v8598, %v8597
      %v9165 = vpack.c.b16 %v8600, %v8599
      %v9166 = vpack.c.b16 %v8602, %v8601
      %v9167 = vpack.c.b16 %v8604, %v8603
      %v9168 = vpack.c.b16 %v8606, %v8605
      %v9169 = vpack.c.b16 %v8608, %v8607
      %v9170 = vpack.c.b16 %v8610, %v8609
      %v9171 = vpack.c.b16 %v8612, %v8611
      %v9172 = vpack.c.b16 %v8614, %v8613
      %v9173 = vpack.c.b16 %v8616, %v8615
      %v9174 = vpack.c.b16 %v8618, %v8617
      %v9175 = vpack.c.b16 %v8620, %v8619
      %v9176 = vpack.c.b16 %v8622, %v8621
      %v9177 = vpack.c.b16 %v8624, %v8623
      %v9178 = vpack.c.b16 %v8626, %v8625
      %v9179 = vpack.c.b16 %v8628, %v8627
      %v9180 = vpack.c.b16 %v8629, %v8629
      %v9185 = vunpack.c.l.b16 %v9156
      %v9186 = vunpack.c.l.b16 %v9157
      %v9187 = vunpack.c.l.b16 %v9158
      %v9188 = vunpack.c.l.b16 %v9159
      %v9189 = vpack.c.b16 %v9186, %v9185
      %v9190 = vpack.c.b16 %v9188, %v9187
      %v9194 = vsel %vm940, %v9160, 0
      %v9197 = vsel %vm940, %v9161, 0
      %v9200 = vsel %vm940, %v9162, 0
      %v9203 = vsel %vm940, %v9163, 0
      %v9206 = vsel %vm940, %v9164, 0
      %v9209 = vsel %vm940, %v9165, 0
      %v9212 = vsel %vm940, %v9166, 0
      %v9215 = vsel %vm940, %v9167, 0
      %v9218 = vsel %vm940, %v9168, 0
      %v9221 = vsel %vm940, %v9169, 0
      %v9224 = vsel %vm940, %v9170, 0
      %v9227 = vsel %vm940, %v9171, 0
      %v9230 = vsel %vm940, %v9172, 0
      %v9233 = vsel %vm940, %v9173, 0
      %v9236 = vsel %vm940, %v9174, 0
      %v9239 = vsel %vm940, %v9175, 0
      %v9242 = vsel %vm940, %v9176, 0
      %v9245 = vsel %vm940, %v9177, 0
      %v9248 = vsel %vm940, %v9178, 0
      %v9251 = vsel %vm940, %v9179, 0
      %v9254 = vsel %vm940, %v9180, 0
      %9256 = vmatprep.subr.bf16.mxu0 0
      %9257 = vmatpush1.bf16.msra.mxu0 0
      %9258 = vmatprep.subr.bf16.mxu0 0
      %9259 = vmatpush1.bf16.msra.mxu0 0
      %9260 = vmatprep.subr.bf16.mxu0 0
      %9261 = vmatpush1.bf16.msra.mxu0 0
      %9262 = vmatprep.subr.bf16.mxu0 0
      %9263 = vmatpush1.bf16.msra.mxu0 0
      %9264 = vmatprep.subr.bf16.mxu0 0
      %9265 = vmatpush1.bf16.msra.mxu0 0
      %9266 = vmatprep.subr.bf16.mxu0 0
      %9267 = vmatpush1.bf16.msra.mxu0 0
      %9268 = vmatprep.subr.bf16.mxu0 0
      %9269 = vmatpush1.bf16.msra.mxu0 %v9190
      %9270 = vmatprep.subr.bf16.mxu0 0
      %9271 = vmatpush1.bf16.msra.mxu0 %v9189
      %9272 = vmatprep.subr.bf16.mxu0 0
      %9273 = vmatpush2.bf16.msra.mxu0 0
      %9274 = vmatprep.subr.bf16.mxu0 0
      %9275 = vmatpush2.bf16.msra.mxu0 0
      %9276 = vmatprep.subr.bf16.mxu0 0
      %9277 = vmatpush2.bf16.msra.mxu0 0
      %9278 = vmatprep.subr.bf16.mxu0 0
      %9279 = vmatpush2.bf16.msra.mxu0 0
      %9280 = vmatprep.subr.bf16.mxu0 0
      %9281 = vmatpush2.bf16.msra.mxu0 0
      %9282 = vmatprep.subr.bf16.mxu0 0
      %9283 = vmatpush2.bf16.msra.mxu0 0
      %9284 = vmatprep.subr.bf16.mxu0 0
      %9285 = vmatpush2.bf16.msra.mxu0 0
      %9286 = vmatprep.subr.bf16.mxu0 0
      %9287 = vmatpush2.bf16.msra.mxu0 0
      %9288 = vmatprep.mubr.bf16.mxu0 0
      %9289 = vmatmul.mubr.bf16.gmra.mxu0 %v9194
      %v9290 = vpop.f32.mrf.mxu0
      %v9291 = vadd.f32 0.0, %v9290
      %v9292 = vpop.f32.mrf.mxu0
      %v9293 = vpop.f32.mrf.mxu0
      %v9294 = vadd.f32 0.0, %v9293
      %v9295 = vpop.f32.mrf.mxu0
      %9296 = vmatprep.mubr.bf16.mxu0 0
      %9297 = vmatmul.mubr.bf16.gmra.mxu0 %v9197
      %v9298 = vpop.f32.mrf.mxu0
      %v9299 = vadd.f32 0.0, %v9298
      %v9300 = vpop.f32.mrf.mxu0
      %v9301 = vpop.f32.mrf.mxu0
      %v9302 = vadd.f32 0.0, %v9301
      %v9303 = vpop.f32.mrf.mxu0
      %9304 = vmatprep.mubr.bf16.mxu0 0
      %9305 = vmatmul.mubr.bf16.gmra.mxu0 %v9200
      %v9306 = vpop.f32.mrf.mxu0
      %v9307 = vadd.f32 0.0, %v9306
      %v9308 = vpop.f32.mrf.mxu0
      %v9309 = vpop.f32.mrf.mxu0
      %v9310 = vadd.f32 0.0, %v9309
      %v9311 = vpop.f32.mrf.mxu0
      %9312 = vmatprep.mubr.bf16.mxu0 0
      %9313 = vmatmul.mubr.bf16.gmra.mxu0 %v9203
      %v9314 = vpop.f32.mrf.mxu0
      %v9315 = vadd.f32 0.0, %v9314
      %v9316 = vpop.f32.mrf.mxu0
      %v9317 = vpop.f32.mrf.mxu0
      %v9318 = vadd.f32 0.0, %v9317
      %v9319 = vpop.f32.mrf.mxu0
      %9320 = vmatprep.mubr.bf16.mxu0 0
      %9321 = vmatmul.mubr.bf16.gmra.mxu0 %v9206
      %v9322 = vpop.f32.mrf.mxu0
      %v9323 = vadd.f32 0.0, %v9322
      %v9324 = vpop.f32.mrf.mxu0
      %v9325 = vpop.f32.mrf.mxu0
      %v9326 = vadd.f32 0.0, %v9325
      %v9327 = vpop.f32.mrf.mxu0
      %9328 = vmatprep.mubr.bf16.mxu0 0
      %9329 = vmatmul.mubr.bf16.gmra.mxu0 %v9209
      %v9330 = vpop.f32.mrf.mxu0
      %v9331 = vadd.f32 0.0, %v9330
      %v9332 = vpop.f32.mrf.mxu0
      %v9333 = vpop.f32.mrf.mxu0
      %v9334 = vadd.f32 0.0, %v9333
      %v9335 = vpop.f32.mrf.mxu0
      %9336 = vmatprep.mubr.bf16.mxu0 0
      %9337 = vmatmul.mubr.bf16.gmra.mxu0 %v9212
      %v9338 = vpop.f32.mrf.mxu0
      %v9339 = vadd.f32 0.0, %v9338
      %v9340 = vpop.f32.mrf.mxu0
      %v9341 = vpop.f32.mrf.mxu0
      %v9342 = vadd.f32 0.0, %v9341
      %v9343 = vpop.f32.mrf.mxu0
      %9344 = vmatprep.mubr.bf16.mxu0 0
      %9345 = vmatmul.mubr.bf16.gmra.mxu0 %v9215
      %v9346 = vpop.f32.mrf.mxu0
      %v9347 = vadd.f32 0.0, %v9346
      %v9348 = vpop.f32.mrf.mxu0
      %v9349 = vpop.f32.mrf.mxu0
      %v9350 = vadd.f32 0.0, %v9349
      %v9351 = vpop.f32.mrf.mxu0
      %9352 = vmatprep.mubr.bf16.mxu0 0
      %9353 = vmatmul.mubr.bf16.gmra.mxu0 %v9218
      %v9354 = vpop.f32.mrf.mxu0
      %v9355 = vadd.f32 0.0, %v9354
      %v9356 = vpop.f32.mrf.mxu0
      %v9357 = vpop.f32.mrf.mxu0
      %v9358 = vadd.f32 0.0, %v9357
      %v9359 = vpop.f32.mrf.mxu0
      %9360 = vmatprep.mubr.bf16.mxu0 0
      %9361 = vmatmul.mubr.bf16.gmra.mxu0 %v9221
      %v9362 = vpop.f32.mrf.mxu0
      %v9363 = vadd.f32 0.0, %v9362
      %v9364 = vpop.f32.mrf.mxu0
      %v9365 = vpop.f32.mrf.mxu0
      %v9366 = vadd.f32 0.0, %v9365
      %v9367 = vpop.f32.mrf.mxu0
      %9368 = vmatprep.mubr.bf16.mxu0 0
      %9369 = vmatmul.mubr.bf16.gmra.mxu0 %v9224
      %v9370 = vpop.f32.mrf.mxu0
      %v9371 = vadd.f32 0.0, %v9370
      %v9372 = vpop.f32.mrf.mxu0
      %v9373 = vpop.f32.mrf.mxu0
      %v9374 = vadd.f32 0.0, %v9373
      %v9375 = vpop.f32.mrf.mxu0
      %9376 = vmatprep.mubr.bf16.mxu0 0
      %9377 = vmatmul.mubr.bf16.gmra.mxu0 %v9227
      %v9378 = vpop.f32.mrf.mxu0
      %v9379 = vadd.f32 0.0, %v9378
      %v9380 = vpop.f32.mrf.mxu0
      %v9381 = vpop.f32.mrf.mxu0
      %v9382 = vadd.f32 0.0, %v9381
      %v9383 = vpop.f32.mrf.mxu0
      %9384 = vmatprep.mubr.bf16.mxu0 0
      %9385 = vmatmul.mubr.bf16.gmra.mxu0 %v9230
      %v9386 = vpop.f32.mrf.mxu0
      %v9387 = vadd.f32 0.0, %v9386
      %v9388 = vpop.f32.mrf.mxu0
      %v9389 = vpop.f32.mrf.mxu0
      %v9390 = vadd.f32 0.0, %v9389
      %v9391 = vpop.f32.mrf.mxu0
      %9392 = vmatprep.mubr.bf16.mxu0 0
      %9393 = vmatmul.mubr.bf16.gmra.mxu0 %v9233
      %v9394 = vpop.f32.mrf.mxu0
      %v9395 = vadd.f32 0.0, %v9394
      %v9396 = vpop.f32.mrf.mxu0
      %v9397 = vpop.f32.mrf.mxu0
      %v9398 = vadd.f32 0.0, %v9397
      %v9399 = vpop.f32.mrf.mxu0
      %9400 = vmatprep.mubr.bf16.mxu0 0
      %9401 = vmatmul.mubr.bf16.gmra.mxu0 %v9236
      %v9402 = vpop.f32.mrf.mxu0
      %v9403 = vadd.f32 0.0, %v9402
      %v9404 = vpop.f32.mrf.mxu0
      %v9405 = vpop.f32.mrf.mxu0
      %v9406 = vadd.f32 0.0, %v9405
      %v9407 = vpop.f32.mrf.mxu0
      %9408 = vmatprep.mubr.bf16.mxu0 0
      %9409 = vmatmul.mubr.bf16.gmra.mxu0 %v9239
      %v9410 = vpop.f32.mrf.mxu0
      %v9411 = vadd.f32 0.0, %v9410
      %v9412 = vpop.f32.mrf.mxu0
      %v9413 = vpop.f32.mrf.mxu0
      %v9414 = vadd.f32 0.0, %v9413
      %v9415 = vpop.f32.mrf.mxu0
      %9416 = vmatprep.mubr.bf16.mxu0 0
      %9417 = vmatmul.mubr.bf16.gmra.mxu0 %v9242
      %v9418 = vpop.f32.mrf.mxu0
      %v9419 = vadd.f32 0.0, %v9418
      %v9420 = vpop.f32.mrf.mxu0
      %v9421 = vpop.f32.mrf.mxu0
      %v9422 = vadd.f32 0.0, %v9421
      %v9423 = vpop.f32.mrf.mxu0
      %9424 = vmatprep.mubr.bf16.mxu0 0
      %9425 = vmatmul.mubr.bf16.gmra.mxu0 %v9245
      %v9426 = vpop.f32.mrf.mxu0
      %v9427 = vadd.f32 0.0, %v9426
      %v9428 = vpop.f32.mrf.mxu0
      %v9429 = vpop.f32.mrf.mxu0
      %v9430 = vadd.f32 0.0, %v9429
      %v9431 = vpop.f32.mrf.mxu0
      %9432 = vmatprep.mubr.bf16.mxu0 0
      %9433 = vmatmul.mubr.bf16.gmra.mxu0 %v9248
      %v9434 = vpop.f32.mrf.mxu0
      %v9435 = vadd.f32 0.0, %v9434
      %v9436 = vpop.f32.mrf.mxu0
      %v9437 = vpop.f32.mrf.mxu0
      %v9438 = vadd.f32 0.0, %v9437
      %v9439 = vpop.f32.mrf.mxu0
      %9440 = vmatprep.mubr.bf16.mxu0 0
      %9441 = vmatmul.mubr.bf16.gmra.mxu0 %v9251
      %v9442 = vpop.f32.mrf.mxu0
      %v9443 = vadd.f32 0.0, %v9442
      %v9444 = vpop.f32.mrf.mxu0
      %v9445 = vpop.f32.mrf.mxu0
      %v9446 = vadd.f32 0.0, %v9445
      %v9447 = vpop.f32.mrf.mxu0
      %9448 = vmatprep.mubr.bf16.mxu0 0
      %9449 = vmatmul.mubr.bf16.gmra.mxu0 %v9254
      %v9450 = vpop.f32.mrf.mxu0
      %v9451 = vadd.f32 0.0, %v9450
      %v9452 = vpop.f32.mrf.mxu0
      %v9453 = vpop.f32.mrf.mxu0
      %v9454 = vpop.f32.mrf.mxu0
      %9455 = vdwg.mxu0
      %v9456 = vadd.f32 %v9114, %v9291
      %v9457 = vadd.f32 %v9115, %v9294
      %v9458 = vadd.f32 %v9116, %v9299
      %v9459 = vadd.f32 %v9117, %v9302
      %v9460 = vadd.f32 %v9118, %v9307
      %v9461 = vadd.f32 %v9119, %v9310
      %v9462 = vadd.f32 %v9120, %v9315
      %v9463 = vadd.f32 %v9121, %v9318
      %v9464 = vadd.f32 %v9122, %v9323
      %v9465 = vadd.f32 %v9123, %v9326
      %v9466 = vadd.f32 %v9124, %v9331
      %v9467 = vadd.f32 %v9125, %v9334
      %v9468 = vadd.f32 %v9126, %v9339
      %v9469 = vadd.f32 %v9127, %v9342
      %v9470 = vadd.f32 %v9128, %v9347
      %v9471 = vadd.f32 %v9129, %v9350
      %v9472 = vadd.f32 %v9130, %v9355
      %v9473 = vadd.f32 %v9131, %v9358
      %v9474 = vadd.f32 %v9132, %v9363
      %v9475 = vadd.f32 %v9133, %v9366
      %v9476 = vadd.f32 %v9134, %v9371
      %v9477 = vadd.f32 %v9135, %v9374
      %v9478 = vadd.f32 %v9136, %v9379
      %v9479 = vadd.f32 %v9137, %v9382
      %v9480 = vadd.f32 %v9138, %v9387
      %v9481 = vadd.f32 %v9139, %v9390
      %v9482 = vadd.f32 %v9140, %v9395
      %v9483 = vadd.f32 %v9141, %v9398
      %v9484 = vadd.f32 %v9142, %v9403
      %v9485 = vadd.f32 %v9143, %v9406
      %v9486 = vadd.f32 %v9144, %v9411
      %v9487 = vadd.f32 %v9145, %v9414
      %v9488 = vadd.f32 %v9146, %v9419
      %v9489 = vadd.f32 %v9147, %v9422
      %v9490 = vadd.f32 %v9148, %v9427
      %v9491 = vadd.f32 %v9149, %v9430
      %v9492 = vadd.f32 %v9150, %v9435
      %v9493 = vadd.f32 %v9151, %v9438
      %v9494 = vadd.f32 %v9152, %v9443
      %v9495 = vadd.f32 %v9153, %v9446
      %v9496 = vadd.f32 %v9154, %v9451
      %v9497 = vld [vmem:[#allocation2 + $0xb0] sm:$0x7]
      %s9498 = scalar_lea.vmem %s11, 80
      %v9499 = vld [vmem:[%s9498] sm:$0xf]
      %v9500 = vld [vmem:[%s9498 + $0x4] sm:$0xf]
      %v9501 = vld [vmem:[%s9498 + $0x8] sm:$0xf]
      %v9502 = vld [vmem:[%s9498 + $0xc] sm:$0xf]
      %v9504 = vunpack.c.l.b16 %v9497
      %v9505 = vpack.c.b16 %v9504, %v9504
      %v9506 = vshrl.u32 %v9160, 16
      %v9508 = vshll.u32 %v9160, 16
      %v9510 = vrot.slane %v9508, 1
      %v9511 = vor.u32 %v9506, %v9510
      %v9512 = vshll.u32 %v9161, 16
      %v9514 = vrot.slane %v9512, 1
      %v9515 = vsel %vm4114, %v9511, %v9514
      %v9516 = vshrl.u32 %v9161, 16
      %v9518 = vor.u32 %v9516, %v9514
      %v9519 = vshll.u32 %v9162, 16
      %v9521 = vrot.slane %v9519, 1
      %v9522 = vsel %vm4114, %v9518, %v9521
      %v9523 = vshrl.u32 %v9162, 16
      %v9525 = vor.u32 %v9523, %v9521
      %v9526 = vshll.u32 %v9163, 16
      %v9528 = vrot.slane %v9526, 1
      %v9529 = vsel %vm4114, %v9525, %v9528
      %v9530 = vshrl.u32 %v9163, 16
      %v9532 = vor.u32 %v9530, %v9528
      %v9533 = vshll.u32 %v9164, 16
      %v9535 = vrot.slane %v9533, 1
      %v9536 = vsel %vm4114, %v9532, %v9535
      %v9537 = vshrl.u32 %v9164, 16
      %v9539 = vor.u32 %v9537, %v9535
      %v9540 = vshll.u32 %v9165, 16
      %v9542 = vrot.slane %v9540, 1
      %v9543 = vsel %vm4114, %v9539, %v9542
      %v9544 = vshrl.u32 %v9165, 16
      %v9546 = vor.u32 %v9544, %v9542
      %v9547 = vshll.u32 %v9166, 16
      %v9549 = vrot.slane %v9547, 1
      %v9550 = vsel %vm4114, %v9546, %v9549
      %v9551 = vshrl.u32 %v9166, 16
      %v9553 = vor.u32 %v9551, %v9549
      %v9554 = vshll.u32 %v9167, 16
      %v9556 = vrot.slane %v9554, 1
      %v9557 = vsel %vm4114, %v9553, %v9556
      %v9558 = vshrl.u32 %v9167, 16
      %v9560 = vor.u32 %v9558, %v9556
      %v9561 = vshll.u32 %v9168, 16
      %v9563 = vrot.slane %v9561, 1
      %v9564 = vsel %vm4114, %v9560, %v9563
      %v9565 = vshrl.u32 %v9168, 16
      %v9567 = vor.u32 %v9565, %v9563
      %v9568 = vshll.u32 %v9169, 16
      %v9570 = vrot.slane %v9568, 1
      %v9571 = vsel %vm4114, %v9567, %v9570
      %v9572 = vshrl.u32 %v9169, 16
      %v9574 = vor.u32 %v9572, %v9570
      %v9575 = vshll.u32 %v9170, 16
      %v9577 = vrot.slane %v9575, 1
      %v9578 = vsel %vm4114, %v9574, %v9577
      %v9579 = vshrl.u32 %v9170, 16
      %v9581 = vor.u32 %v9579, %v9577
      %v9582 = vshll.u32 %v9171, 16
      %v9584 = vrot.slane %v9582, 1
      %v9585 = vsel %vm4114, %v9581, %v9584
      %v9586 = vshrl.u32 %v9171, 16
      %v9588 = vor.u32 %v9586, %v9584
      %v9589 = vshll.u32 %v9172, 16
      %v9591 = vrot.slane %v9589, 1
      %v9592 = vsel %vm4114, %v9588, %v9591
      %v9593 = vshrl.u32 %v9172, 16
      %v9595 = vor.u32 %v9593, %v9591
      %v9596 = vshll.u32 %v9173, 16
      %v9598 = vrot.slane %v9596, 1
      %v9599 = vsel %vm4114, %v9595, %v9598
      %v9600 = vshrl.u32 %v9173, 16
      %v9602 = vor.u32 %v9600, %v9598
      %v9603 = vshll.u32 %v9174, 16
      %v9605 = vrot.slane %v9603, 1
      %v9606 = vsel %vm4114, %v9602, %v9605
      %v9607 = vshrl.u32 %v9174, 16
      %v9609 = vor.u32 %v9607, %v9605
      %v9610 = vshll.u32 %v9175, 16
      %v9612 = vrot.slane %v9610, 1
      %v9613 = vsel %vm4114, %v9609, %v9612
      %v9614 = vshrl.u32 %v9175, 16
      %v9616 = vor.u32 %v9614, %v9612
      %v9617 = vshll.u32 %v9176, 16
      %v9619 = vrot.slane %v9617, 1
      %v9620 = vsel %vm4114, %v9616, %v9619
      %v9621 = vshrl.u32 %v9176, 16
      %v9623 = vor.u32 %v9621, %v9619
      %v9624 = vshll.u32 %v9177, 16
      %v9626 = vrot.slane %v9624, 1
      %v9627 = vsel %vm4114, %v9623, %v9626
      %v9628 = vshrl.u32 %v9177, 16
      %v9630 = vor.u32 %v9628, %v9626
      %v9631 = vshll.u32 %v9178, 16
      %v9633 = vrot.slane %v9631, 1
      %v9634 = vsel %vm4114, %v9630, %v9633
      %v9635 = vshrl.u32 %v9178, 16
      %v9637 = vor.u32 %v9635, %v9633
      %v9638 = vshll.u32 %v9179, 16
      %v9640 = vrot.slane %v9638, 1
      %v9641 = vsel %vm4114, %v9637, %v9640
      %v9642 = vshrl.u32 %v9179, 16
      %v9644 = vor.u32 %v9642, %v9640
      %v9646 = vshll.u32 %v9505, 16
      %v9648 = vrot.slane %v9646, 1
      %v9649 = vsel %vm4114, %v9644, %v9648
      %v9650 = vshrl.u32 %v9505, 16
      %v9652 = vor.u32 %v9650, %v9648
      %v9657 = vunpack.c.l.b16 %v9499
      %v9658 = vunpack.c.l.b16 %v9500
      %v9659 = vunpack.c.l.b16 %v9501
      %v9660 = vunpack.c.l.b16 %v9502
      %v9661 = vpack.c.b16 %v9658, %v9657
      %v9662 = vpack.c.b16 %v9660, %v9659
      %v9666 = vsel %vm940, %v9515, 0
      %v9669 = vsel %vm940, %v9522, 0
      %v9672 = vsel %vm940, %v9529, 0
      %v9675 = vsel %vm940, %v9536, 0
      %v9678 = vsel %vm940, %v9543, 0
      %v9681 = vsel %vm940, %v9550, 0
      %v9684 = vsel %vm940, %v9557, 0
      %v9687 = vsel %vm940, %v9564, 0
      %v9690 = vsel %vm940, %v9571, 0
      %v9693 = vsel %vm940, %v9578, 0
      %v9696 = vsel %vm940, %v9585, 0
      %v9699 = vsel %vm940, %v9592, 0
      %v9702 = vsel %vm940, %v9599, 0
      %v9705 = vsel %vm940, %v9606, 0
      %v9708 = vsel %vm940, %v9613, 0
      %v9711 = vsel %vm940, %v9620, 0
      %v9714 = vsel %vm940, %v9627, 0
      %v9717 = vsel %vm940, %v9634, 0
      %v9720 = vsel %vm940, %v9641, 0
      %v9723 = vsel %vm940, %v9649, 0
      %v9726 = vsel %vm940, %v9652, 0
      %9728 = vmatprep.subr.bf16.mxu0 0
      %9729 = vmatpush1.bf16.msra.mxu0 0
      %9730 = vmatprep.subr.bf16.mxu0 0
      %9731 = vmatpush1.bf16.msra.mxu0 0
      %9732 = vmatprep.subr.bf16.mxu0 0
      %9733 = vmatpush1.bf16.msra.mxu0 0
      %9734 = vmatprep.subr.bf16.mxu0 0
      %9735 = vmatpush1.bf16.msra.mxu0 0
      %9736 = vmatprep.subr.bf16.mxu0 0
      %9737 = vmatpush1.bf16.msra.mxu0 0
      %9738 = vmatprep.subr.bf16.mxu0 0
      %9739 = vmatpush1.bf16.msra.mxu0 0
      %9740 = vmatprep.subr.bf16.mxu0 0
      %9741 = vmatpush1.bf16.msra.mxu0 %v9662
      %9742 = vmatprep.subr.bf16.mxu0 0
      %9743 = vmatpush1.bf16.msra.mxu0 %v9661
      %9744 = vmatprep.subr.bf16.mxu0 0
      %9745 = vmatpush2.bf16.msra.mxu0 0
      %9746 = vmatprep.subr.bf16.mxu0 0
      %9747 = vmatpush2.bf16.msra.mxu0 0
      %9748 = vmatprep.subr.bf16.mxu0 0
      %9749 = vmatpush2.bf16.msra.mxu0 0
      %9750 = vmatprep.subr.bf16.mxu0 0
      %9751 = vmatpush2.bf16.msra.mxu0 0
      %9752 = vmatprep.subr.bf16.mxu0 0
      %9753 = vmatpush2.bf16.msra.mxu0 0
      %9754 = vmatprep.subr.bf16.mxu0 0
      %9755 = vmatpush2.bf16.msra.mxu0 0
      %9756 = vmatprep.subr.bf16.mxu0 0
      %9757 = vmatpush2.bf16.msra.mxu0 0
      %9758 = vmatprep.subr.bf16.mxu0 0
      %9759 = vmatpush2.bf16.msra.mxu0 0
      %9760 = vmatprep.mubr.bf16.mxu0 0
      %9761 = vmatmul.mubr.bf16.gmra.mxu0 %v9666
      %v9762 = vpop.f32.mrf.mxu0
      %v9763 = vadd.f32 0.0, %v9762
      %v9764 = vpop.f32.mrf.mxu0
      %v9765 = vpop.f32.mrf.mxu0
      %v9766 = vadd.f32 0.0, %v9765
      %v9767 = vpop.f32.mrf.mxu0
      %9768 = vmatprep.mubr.bf16.mxu0 0
      %9769 = vmatmul.mubr.bf16.gmra.mxu0 %v9669
      %v9770 = vpop.f32.mrf.mxu0
      %v9771 = vadd.f32 0.0, %v9770
      %v9772 = vpop.f32.mrf.mxu0
      %v9773 = vpop.f32.mrf.mxu0
      %v9774 = vadd.f32 0.0, %v9773
      %v9775 = vpop.f32.mrf.mxu0
      %9776 = vmatprep.mubr.bf16.mxu0 0
      %9777 = vmatmul.mubr.bf16.gmra.mxu0 %v9672
      %v9778 = vpop.f32.mrf.mxu0
      %v9779 = vadd.f32 0.0, %v9778
      %v9780 = vpop.f32.mrf.mxu0
      %v9781 = vpop.f32.mrf.mxu0
      %v9782 = vadd.f32 0.0, %v9781
      %v9783 = vpop.f32.mrf.mxu0
      %9784 = vmatprep.mubr.bf16.mxu0 0
      %9785 = vmatmul.mubr.bf16.gmra.mxu0 %v9675
      %v9786 = vpop.f32.mrf.mxu0
      %v9787 = vadd.f32 0.0, %v9786
      %v9788 = vpop.f32.mrf.mxu0
      %v9789 = vpop.f32.mrf.mxu0
      %v9790 = vadd.f32 0.0, %v9789
      %v9791 = vpop.f32.mrf.mxu0
      %9792 = vmatprep.mubr.bf16.mxu0 0
      %9793 = vmatmul.mubr.bf16.gmra.mxu0 %v9678
      %v9794 = vpop.f32.mrf.mxu0
      %v9795 = vadd.f32 0.0, %v9794
      %v9796 = vpop.f32.mrf.mxu0
      %v9797 = vpop.f32.mrf.mxu0
      %v9798 = vadd.f32 0.0, %v9797
      %v9799 = vpop.f32.mrf.mxu0
      %9800 = vmatprep.mubr.bf16.mxu0 0
      %9801 = vmatmul.mubr.bf16.gmra.mxu0 %v9681
      %v9802 = vpop.f32.mrf.mxu0
      %v9803 = vadd.f32 0.0, %v9802
      %v9804 = vpop.f32.mrf.mxu0
      %v9805 = vpop.f32.mrf.mxu0
      %v9806 = vadd.f32 0.0, %v9805
      %v9807 = vpop.f32.mrf.mxu0
      %9808 = vmatprep.mubr.bf16.mxu0 0
      %9809 = vmatmul.mubr.bf16.gmra.mxu0 %v9684
      %v9810 = vpop.f32.mrf.mxu0
      %v9811 = vadd.f32 0.0, %v9810
      %v9812 = vpop.f32.mrf.mxu0
      %v9813 = vpop.f32.mrf.mxu0
      %v9814 = vadd.f32 0.0, %v9813
      %v9815 = vpop.f32.mrf.mxu0
      %9816 = vmatprep.mubr.bf16.mxu0 0
      %9817 = vmatmul.mubr.bf16.gmra.mxu0 %v9687
      %v9818 = vpop.f32.mrf.mxu0
      %v9819 = vadd.f32 0.0, %v9818
      %v9820 = vpop.f32.mrf.mxu0
      %v9821 = vpop.f32.mrf.mxu0
      %v9822 = vadd.f32 0.0, %v9821
      %v9823 = vpop.f32.mrf.mxu0
      %9824 = vmatprep.mubr.bf16.mxu0 0
      %9825 = vmatmul.mubr.bf16.gmra.mxu0 %v9690
      %v9826 = vpop.f32.mrf.mxu0
      %v9827 = vadd.f32 0.0, %v9826
      %v9828 = vpop.f32.mrf.mxu0
      %v9829 = vpop.f32.mrf.mxu0
      %v9830 = vadd.f32 0.0, %v9829
      %v9831 = vpop.f32.mrf.mxu0
      %9832 = vmatprep.mubr.bf16.mxu0 0
      %9833 = vmatmul.mubr.bf16.gmra.mxu0 %v9693
      %v9834 = vpop.f32.mrf.mxu0
      %v9835 = vadd.f32 0.0, %v9834
      %v9836 = vpop.f32.mrf.mxu0
      %v9837 = vpop.f32.mrf.mxu0
      %v9838 = vadd.f32 0.0, %v9837
      %v9839 = vpop.f32.mrf.mxu0
      %9840 = vmatprep.mubr.bf16.mxu0 0
      %9841 = vmatmul.mubr.bf16.gmra.mxu0 %v9696
      %v9842 = vpop.f32.mrf.mxu0
      %v9843 = vadd.f32 0.0, %v9842
      %v9844 = vpop.f32.mrf.mxu0
      %v9845 = vpop.f32.mrf.mxu0
      %v9846 = vadd.f32 0.0, %v9845
      %v9847 = vpop.f32.mrf.mxu0
      %9848 = vmatprep.mubr.bf16.mxu0 0
      %9849 = vmatmul.mubr.bf16.gmra.mxu0 %v9699
      %v9850 = vpop.f32.mrf.mxu0
      %v9851 = vadd.f32 0.0, %v9850
      %v9852 = vpop.f32.mrf.mxu0
      %v9853 = vpop.f32.mrf.mxu0
      %v9854 = vadd.f32 0.0, %v9853
      %v9855 = vpop.f32.mrf.mxu0
      %9856 = vmatprep.mubr.bf16.mxu0 0
      %9857 = vmatmul.mubr.bf16.gmra.mxu0 %v9702
      %v9858 = vpop.f32.mrf.mxu0
      %v9859 = vadd.f32 0.0, %v9858
      %v9860 = vpop.f32.mrf.mxu0
      %v9861 = vpop.f32.mrf.mxu0
      %v9862 = vadd.f32 0.0, %v9861
      %v9863 = vpop.f32.mrf.mxu0
      %9864 = vmatprep.mubr.bf16.mxu0 0
      %9865 = vmatmul.mubr.bf16.gmra.mxu0 %v9705
      %v9866 = vpop.f32.mrf.mxu0
      %v9867 = vadd.f32 0.0, %v9866
      %v9868 = vpop.f32.mrf.mxu0
      %v9869 = vpop.f32.mrf.mxu0
      %v9870 = vadd.f32 0.0, %v9869
      %v9871 = vpop.f32.mrf.mxu0
      %9872 = vmatprep.mubr.bf16.mxu0 0
      %9873 = vmatmul.mubr.bf16.gmra.mxu0 %v9708
      %v9874 = vpop.f32.mrf.mxu0
      %v9875 = vadd.f32 0.0, %v9874
      %v9876 = vpop.f32.mrf.mxu0
      %v9877 = vpop.f32.mrf.mxu0
      %v9878 = vadd.f32 0.0, %v9877
      %v9879 = vpop.f32.mrf.mxu0
      %9880 = vmatprep.mubr.bf16.mxu0 0
      %9881 = vmatmul.mubr.bf16.gmra.mxu0 %v9711
      %v9882 = vpop.f32.mrf.mxu0
      %v9883 = vadd.f32 0.0, %v9882
      %v9884 = vpop.f32.mrf.mxu0
      %v9885 = vpop.f32.mrf.mxu0
      %v9886 = vadd.f32 0.0, %v9885
      %v9887 = vpop.f32.mrf.mxu0
      %9888 = vmatprep.mubr.bf16.mxu0 0
      %9889 = vmatmul.mubr.bf16.gmra.mxu0 %v9714
      %v9890 = vpop.f32.mrf.mxu0
      %v9891 = vadd.f32 0.0, %v9890
      %v9892 = vpop.f32.mrf.mxu0
      %v9893 = vpop.f32.mrf.mxu0
      %v9894 = vadd.f32 0.0, %v9893
      %v9895 = vpop.f32.mrf.mxu0
      %9896 = vmatprep.mubr.bf16.mxu0 0
      %9897 = vmatmul.mubr.bf16.gmra.mxu0 %v9717
      %v9898 = vpop.f32.mrf.mxu0
      %v9899 = vadd.f32 0.0, %v9898
      %v9900 = vpop.f32.mrf.mxu0
      %v9901 = vpop.f32.mrf.mxu0
      %v9902 = vadd.f32 0.0, %v9901
      %v9903 = vpop.f32.mrf.mxu0
      %9904 = vmatprep.mubr.bf16.mxu0 0
      %9905 = vmatmul.mubr.bf16.gmra.mxu0 %v9720
      %v9906 = vpop.f32.mrf.mxu0
      %v9907 = vadd.f32 0.0, %v9906
      %v9908 = vpop.f32.mrf.mxu0
      %v9909 = vpop.f32.mrf.mxu0
      %v9910 = vadd.f32 0.0, %v9909
      %v9911 = vpop.f32.mrf.mxu0
      %9912 = vmatprep.mubr.bf16.mxu0 0
      %9913 = vmatmul.mubr.bf16.gmra.mxu0 %v9723
      %v9914 = vpop.f32.mrf.mxu0
      %v9915 = vadd.f32 0.0, %v9914
      %v9916 = vpop.f32.mrf.mxu0
      %v9917 = vpop.f32.mrf.mxu0
      %v9918 = vadd.f32 0.0, %v9917
      %v9919 = vpop.f32.mrf.mxu0
      %9920 = vmatprep.mubr.bf16.mxu0 0
      %9921 = vmatmul.mubr.bf16.gmra.mxu0 %v9726
      %v9922 = vpop.f32.mrf.mxu0
      %v9923 = vadd.f32 0.0, %v9922
      %v9924 = vpop.f32.mrf.mxu0
      %v9925 = vpop.f32.mrf.mxu0
      %v9926 = vpop.f32.mrf.mxu0
      %9927 = vdwg.mxu0
      %v9928 = vadd.f32 %v9456, %v9763
      %v9929 = vadd.f32 %v9457, %v9766
      %v9930 = vadd.f32 %v9458, %v9771
      %v9931 = vadd.f32 %v9459, %v9774
      %v9932 = vadd.f32 %v9460, %v9779
      %v9933 = vadd.f32 %v9461, %v9782
      %v9934 = vadd.f32 %v9462, %v9787
      %v9935 = vadd.f32 %v9463, %v9790
      %v9936 = vadd.f32 %v9464, %v9795
      %v9937 = vadd.f32 %v9465, %v9798
      %v9938 = vadd.f32 %v9466, %v9803
      %v9939 = vadd.f32 %v9467, %v9806
      %v9940 = vadd.f32 %v9468, %v9811
      %v9941 = vadd.f32 %v9469, %v9814
      %v9942 = vadd.f32 %v9470, %v9819
      %v9943 = vadd.f32 %v9471, %v9822
      %v9944 = vadd.f32 %v9472, %v9827
      %v9945 = vadd.f32 %v9473, %v9830
      %v9946 = vadd.f32 %v9474, %v9835
      %v9947 = vadd.f32 %v9475, %v9838
      %v9948 = vadd.f32 %v9476, %v9843
      %v9949 = vadd.f32 %v9477, %v9846
      %v9950 = vadd.f32 %v9478, %v9851
      %v9951 = vadd.f32 %v9479, %v9854
      %v9952 = vadd.f32 %v9480, %v9859
      %v9953 = vadd.f32 %v9481, %v9862
      %v9954 = vadd.f32 %v9482, %v9867
      %v9955 = vadd.f32 %v9483, %v9870
      %v9956 = vadd.f32 %v9484, %v9875
      %v9957 = vadd.f32 %v9485, %v9878
      %v9958 = vadd.f32 %v9486, %v9883
      %v9959 = vadd.f32 %v9487, %v9886
      %v9960 = vadd.f32 %v9488, %v9891
      %v9961 = vadd.f32 %v9489, %v9894
      %v9962 = vadd.f32 %v9490, %v9899
      %v9963 = vadd.f32 %v9491, %v9902
      %v9964 = vadd.f32 %v9492, %v9907
      %v9965 = vadd.f32 %v9493, %v9910
      %v9966 = vadd.f32 %v9494, %v9915
      %v9967 = vadd.f32 %v9495, %v9918
      %v9968 = vadd.f32 %v9496, %v9923
      %v9969 = vld [vmem:[#allocation2 + $0x18] sm:$0xf]
      %v9970 = vld [vmem:[#allocation2 + $0x1c] sm:$0xf]
      %v9971 = vld [vmem:[#allocation2 + $0x20] sm:$0xf]
      %v9972 = vld [vmem:[#allocation2 + $0x24] sm:$0xf]
      %v9973 = vld [vmem:[#allocation2 + $0x28] sm:$0xf]
      %v9974 = vld [vmem:[#allocation2 + $0x2c] sm:$0xf]
      %v9975 = vld [vmem:[#allocation2 + $0x30] sm:$0xf]
      %v9976 = vld [vmem:[#allocation2 + $0x34] sm:$0xf]
      %v9977 = vld [vmem:[#allocation2 + $0x38] sm:$0xf]
      %v9978 = vld [vmem:[#allocation2 + $0x3c] sm:$0xf]
      %v9979 = vld [vmem:[#allocation2 + $0x40] sm:$0xf]
      %v9980 = vld [vmem:[#allocation2 + $0x44] sm:$0xf]
      %v9981 = vld [vmem:[#allocation2 + $0x48] sm:$0xf]
      %v9982 = vld [vmem:[#allocation2 + $0x4c] sm:$0xf]
      %v9983 = vld [vmem:[#allocation2 + $0x50] sm:$0xf]
      %v9984 = vld [vmem:[#allocation2 + $0x54] sm:$0xf]
      %v9985 = vld [vmem:[#allocation2 + $0x58] sm:$0xf]
      %v9986 = vld [vmem:[#allocation2 + $0x5c] sm:$0xf]
      %v9987 = vld [vmem:[#allocation2 + $0x60] sm:$0xf]
      %v9988 = vld [vmem:[#allocation2 + $0x64] sm:$0xf]
      %v9989 = vld [vmem:[#allocation2 + $0x68] sm:$0xf]
      %v9990 = vld [vmem:[#allocation2 + $0x6c] sm:$0xf]
      %v9991 = vld [vmem:[#allocation2 + $0x70] sm:$0xf]
      %v9992 = vld [vmem:[#allocation2 + $0x74] sm:$0xf]
      %v9993 = vld [vmem:[#allocation2 + $0x78] sm:$0xf]
      %v9994 = vld [vmem:[#allocation2 + $0x7c] sm:$0xf]
      %v9995 = vld [vmem:[#allocation2 + $0x80] sm:$0xf]
      %v9996 = vld [vmem:[#allocation2 + $0x84] sm:$0xf]
      %v9997 = vld [vmem:[#allocation2 + $0x88] sm:$0xf]
      %v9998 = vld [vmem:[#allocation2 + $0x8c] sm:$0xf]
      %v9999 = vld [vmem:[#allocation2 + $0x90] sm:$0xf]
      %v10000 = vld [vmem:[#allocation2 + $0x94] sm:$0xf]
      %v10001 = vld [vmem:[#allocation2 + $0x98] sm:$0xf]
      %v10002 = vld [vmem:[#allocation2 + $0x9c] sm:$0xf]
      %v10003 = vld [vmem:[#allocation2 + $0xa0] sm:$0xf]
      %v10004 = vld [vmem:[#allocation2 + $0xa4] sm:$0xf]
      %v10005 = vld [vmem:[#allocation2 + $0xa8] sm:$0xf]
      %v10006 = vld [vmem:[#allocation2 + $0xac] sm:$0xf]
      %v10007 = vld [vmem:[#allocation2 + $0xb0] sm:$0xf]
      %v10008 = vld [vmem:[#allocation2 + $0xb4] sm:$0xf]
      %v10009 = vld [vmem:[#allocation2 + $0xb8] sm:$0x7]
      %s10010 = scalar_lea.vmem %s11, 96
      %v10011 = vld [vmem:[%s10010] sm:$0xf]
      %v10012 = vld [vmem:[%s10010 + $0x4] sm:$0xf]
      %v10013 = vld [vmem:[%s10010 + $0x8] sm:$0xf]
      %v10014 = vld [vmem:[%s10010 + $0xc] sm:$0xf]
      %v10056 = vunpack.c.l.b16 %v9969
      %v10057 = vunpack.c.l.b16 %v9970
      %v10058 = vunpack.c.l.b16 %v9971
      %v10059 = vunpack.c.l.b16 %v9972
      %v10060 = vunpack.c.l.b16 %v9973
      %v10061 = vunpack.c.l.b16 %v9974
      %v10062 = vunpack.c.l.b16 %v9975
      %v10063 = vunpack.c.l.b16 %v9976
      %v10064 = vunpack.c.l.b16 %v9977
      %v10065 = vunpack.c.l.b16 %v9978
      %v10066 = vunpack.c.l.b16 %v9979
      %v10067 = vunpack.c.l.b16 %v9980
      %v10068 = vunpack.c.l.b16 %v9981
      %v10069 = vunpack.c.l.b16 %v9982
      %v10070 = vunpack.c.l.b16 %v9983
      %v10071 = vunpack.c.l.b16 %v9984
      %v10072 = vunpack.c.l.b16 %v9985
      %v10073 = vunpack.c.l.b16 %v9986
      %v10074 = vunpack.c.l.b16 %v9987
      %v10075 = vunpack.c.l.b16 %v9988
      %v10076 = vunpack.c.l.b16 %v9989
      %v10077 = vunpack.c.l.b16 %v9990
      %v10078 = vunpack.c.l.b16 %v9991
      %v10079 = vunpack.c.l.b16 %v9992
      %v10080 = vunpack.c.l.b16 %v9993
      %v10081 = vunpack.c.l.b16 %v9994
      %v10082 = vunpack.c.l.b16 %v9995
      %v10083 = vunpack.c.l.b16 %v9996
      %v10084 = vunpack.c.l.b16 %v9997
      %v10085 = vunpack.c.l.b16 %v9998
      %v10086 = vunpack.c.l.b16 %v9999
      %v10087 = vunpack.c.l.b16 %v10000
      %v10088 = vunpack.c.l.b16 %v10001
      %v10089 = vunpack.c.l.b16 %v10002
      %v10090 = vunpack.c.l.b16 %v10003
      %v10091 = vunpack.c.l.b16 %v10004
      %v10092 = vunpack.c.l.b16 %v10005
      %v10093 = vunpack.c.l.b16 %v10006
      %v10094 = vunpack.c.l.b16 %v10007
      %v10095 = vunpack.c.l.b16 %v10008
      %v10096 = vunpack.c.l.b16 %v10009
      %v10097 = vpack.c.b16 %v10057, %v10056
      %v10098 = vpack.c.b16 %v10059, %v10058
      %v10099 = vpack.c.b16 %v10061, %v10060
      %v10100 = vpack.c.b16 %v10063, %v10062
      %v10101 = vpack.c.b16 %v10065, %v10064
      %v10102 = vpack.c.b16 %v10067, %v10066
      %v10103 = vpack.c.b16 %v10069, %v10068
      %v10104 = vpack.c.b16 %v10071, %v10070
      %v10105 = vpack.c.b16 %v10073, %v10072
      %v10106 = vpack.c.b16 %v10075, %v10074
      %v10107 = vpack.c.b16 %v10077, %v10076
      %v10108 = vpack.c.b16 %v10079, %v10078
      %v10109 = vpack.c.b16 %v10081, %v10080
      %v10110 = vpack.c.b16 %v10083, %v10082
      %v10111 = vpack.c.b16 %v10085, %v10084
      %v10112 = vpack.c.b16 %v10087, %v10086
      %v10113 = vpack.c.b16 %v10089, %v10088
      %v10114 = vpack.c.b16 %v10091, %v10090
      %v10115 = vpack.c.b16 %v10093, %v10092
      %v10116 = vpack.c.b16 %v10095, %v10094
      %v10117 = vpack.c.b16 %v10096, %v10096
      %v10119 = vshrl.u32 %v10097, 16
      %v10121 = vshll.u32 %v10097, 16
      %v10123 = vrot.slane %v10121, 1
      %v10124 = vor.u32 %v10119, %v10123
      %v10126 = vshll.u32 %v10098, 16
      %v10128 = vrot.slane %v10126, 1
      %v10129 = vsel %vm4114, %v10124, %v10128
      %v10130 = vshrl.u32 %v10098, 16
      %v10132 = vor.u32 %v10130, %v10128
      %v10134 = vshll.u32 %v10099, 16
      %v10136 = vrot.slane %v10134, 1
      %v10137 = vsel %vm4114, %v10132, %v10136
      %v10138 = vshrl.u32 %v10099, 16
      %v10140 = vor.u32 %v10138, %v10136
      %v10142 = vshll.u32 %v10100, 16
      %v10144 = vrot.slane %v10142, 1
      %v10145 = vsel %vm4114, %v10140, %v10144
      %v10146 = vshrl.u32 %v10100, 16
      %v10148 = vor.u32 %v10146, %v10144
      %v10150 = vshll.u32 %v10101, 16
      %v10152 = vrot.slane %v10150, 1
      %v10153 = vsel %vm4114, %v10148, %v10152
      %v10154 = vshrl.u32 %v10101, 16
      %v10156 = vor.u32 %v10154, %v10152
      %v10158 = vshll.u32 %v10102, 16
      %v10160 = vrot.slane %v10158, 1
      %v10161 = vsel %vm4114, %v10156, %v10160
      %v10162 = vshrl.u32 %v10102, 16
      %v10164 = vor.u32 %v10162, %v10160
      %v10166 = vshll.u32 %v10103, 16
      %v10168 = vrot.slane %v10166, 1
      %v10169 = vsel %vm4114, %v10164, %v10168
      %v10170 = vshrl.u32 %v10103, 16
      %v10172 = vor.u32 %v10170, %v10168
      %v10174 = vshll.u32 %v10104, 16
      %v10176 = vrot.slane %v10174, 1
      %v10177 = vsel %vm4114, %v10172, %v10176
      %v10178 = vshrl.u32 %v10104, 16
      %v10180 = vor.u32 %v10178, %v10176
      %v10182 = vshll.u32 %v10105, 16
      %v10184 = vrot.slane %v10182, 1
      %v10185 = vsel %vm4114, %v10180, %v10184
      %v10186 = vshrl.u32 %v10105, 16
      %v10188 = vor.u32 %v10186, %v10184
      %v10190 = vshll.u32 %v10106, 16
      %v10192 = vrot.slane %v10190, 1
      %v10193 = vsel %vm4114, %v10188, %v10192
      %v10194 = vshrl.u32 %v10106, 16
      %v10196 = vor.u32 %v10194, %v10192
      %v10198 = vshll.u32 %v10107, 16
      %v10200 = vrot.slane %v10198, 1
      %v10201 = vsel %vm4114, %v10196, %v10200
      %v10202 = vshrl.u32 %v10107, 16
      %v10204 = vor.u32 %v10202, %v10200
      %v10206 = vshll.u32 %v10108, 16
      %v10208 = vrot.slane %v10206, 1
      %v10209 = vsel %vm4114, %v10204, %v10208
      %v10210 = vshrl.u32 %v10108, 16
      %v10212 = vor.u32 %v10210, %v10208
      %v10214 = vshll.u32 %v10109, 16
      %v10216 = vrot.slane %v10214, 1
      %v10217 = vsel %vm4114, %v10212, %v10216
      %v10218 = vshrl.u32 %v10109, 16
      %v10220 = vor.u32 %v10218, %v10216
      %v10222 = vshll.u32 %v10110, 16
      %v10224 = vrot.slane %v10222, 1
      %v10225 = vsel %vm4114, %v10220, %v10224
      %v10226 = vshrl.u32 %v10110, 16
      %v10228 = vor.u32 %v10226, %v10224
      %v10230 = vshll.u32 %v10111, 16
      %v10232 = vrot.slane %v10230, 1
      %v10233 = vsel %vm4114, %v10228, %v10232
      %v10234 = vshrl.u32 %v10111, 16
      %v10236 = vor.u32 %v10234, %v10232
      %v10238 = vshll.u32 %v10112, 16
      %v10240 = vrot.slane %v10238, 1
      %v10241 = vsel %vm4114, %v10236, %v10240
      %v10242 = vshrl.u32 %v10112, 16
      %v10244 = vor.u32 %v10242, %v10240
      %v10246 = vshll.u32 %v10113, 16
      %v10248 = vrot.slane %v10246, 1
      %v10249 = vsel %vm4114, %v10244, %v10248
      %v10250 = vshrl.u32 %v10113, 16
      %v10252 = vor.u32 %v10250, %v10248
      %v10254 = vshll.u32 %v10114, 16
      %v10256 = vrot.slane %v10254, 1
      %v10257 = vsel %vm4114, %v10252, %v10256
      %v10258 = vshrl.u32 %v10114, 16
      %v10260 = vor.u32 %v10258, %v10256
      %v10262 = vshll.u32 %v10115, 16
      %v10264 = vrot.slane %v10262, 1
      %v10265 = vsel %vm4114, %v10260, %v10264
      %v10266 = vshrl.u32 %v10115, 16
      %v10268 = vor.u32 %v10266, %v10264
      %v10270 = vshll.u32 %v10116, 16
      %v10272 = vrot.slane %v10270, 1
      %v10273 = vsel %vm4114, %v10268, %v10272
      %v10274 = vshrl.u32 %v10116, 16
      %v10276 = vor.u32 %v10274, %v10272
      %v10278 = vshll.u32 %v10117, 16
      %v10280 = vrot.slane %v10278, 1
      %v10281 = vsel %vm4114, %v10276, %v10280
      %v10282 = vshrl.u32 %v10117, 16
      %v10284 = vor.u32 %v10282, %v10280
      %v10289 = vunpack.c.l.b16 %v10011
      %v10290 = vunpack.c.l.b16 %v10012
      %v10291 = vunpack.c.l.b16 %v10013
      %v10292 = vunpack.c.l.b16 %v10014
      %v10293 = vpack.c.b16 %v10290, %v10289
      %v10294 = vpack.c.b16 %v10292, %v10291
      %v10298 = vsel %vm940, %v10129, 0
      %v10301 = vsel %vm940, %v10137, 0
      %v10304 = vsel %vm940, %v10145, 0
      %v10307 = vsel %vm940, %v10153, 0
      %v10310 = vsel %vm940, %v10161, 0
      %v10313 = vsel %vm940, %v10169, 0
      %v10316 = vsel %vm940, %v10177, 0
      %v10319 = vsel %vm940, %v10185, 0
      %v10322 = vsel %vm940, %v10193, 0
      %v10325 = vsel %vm940, %v10201, 0
      %v10328 = vsel %vm940, %v10209, 0
      %v10331 = vsel %vm940, %v10217, 0
      %v10334 = vsel %vm940, %v10225, 0
      %v10337 = vsel %vm940, %v10233, 0
      %v10340 = vsel %vm940, %v10241, 0
      %v10343 = vsel %vm940, %v10249, 0
      %v10346 = vsel %vm940, %v10257, 0
      %v10349 = vsel %vm940, %v10265, 0
      %v10352 = vsel %vm940, %v10273, 0
      %v10355 = vsel %vm940, %v10281, 0
      %v10358 = vsel %vm940, %v10284, 0
      %10360 = vmatprep.subr.bf16.mxu0 0
      %10361 = vmatpush1.bf16.msra.mxu0 0
      %10362 = vmatprep.subr.bf16.mxu0 0
      %10363 = vmatpush1.bf16.msra.mxu0 0
      %10364 = vmatprep.subr.bf16.mxu0 0
      %10365 = vmatpush1.bf16.msra.mxu0 0
      %10366 = vmatprep.subr.bf16.mxu0 0
      %10367 = vmatpush1.bf16.msra.mxu0 0
      %10368 = vmatprep.subr.bf16.mxu0 0
      %10369 = vmatpush1.bf16.msra.mxu0 0
      %10370 = vmatprep.subr.bf16.mxu0 0
      %10371 = vmatpush1.bf16.msra.mxu0 0
      %10372 = vmatprep.subr.bf16.mxu0 0
      %10373 = vmatpush1.bf16.msra.mxu0 %v10294
      %10374 = vmatprep.subr.bf16.mxu0 0
      %10375 = vmatpush1.bf16.msra.mxu0 %v10293
      %10376 = vmatprep.subr.bf16.mxu0 0
      %10377 = vmatpush2.bf16.msra.mxu0 0
      %10378 = vmatprep.subr.bf16.mxu0 0
      %10379 = vmatpush2.bf16.msra.mxu0 0
      %10380 = vmatprep.subr.bf16.mxu0 0
      %10381 = vmatpush2.bf16.msra.mxu0 0
      %10382 = vmatprep.subr.bf16.mxu0 0
      %10383 = vmatpush2.bf16.msra.mxu0 0
      %10384 = vmatprep.subr.bf16.mxu0 0
      %10385 = vmatpush2.bf16.msra.mxu0 0
      %10386 = vmatprep.subr.bf16.mxu0 0
      %10387 = vmatpush2.bf16.msra.mxu0 0
      %10388 = vmatprep.subr.bf16.mxu0 0
      %10389 = vmatpush2.bf16.msra.mxu0 0
      %10390 = vmatprep.subr.bf16.mxu0 0
      %10391 = vmatpush2.bf16.msra.mxu0 0
      %10392 = vmatprep.mubr.bf16.mxu0 0
      %10393 = vmatmul.mubr.bf16.gmra.mxu0 %v10298
      %v10394 = vpop.f32.mrf.mxu0
      %v10395 = vadd.f32 0.0, %v10394
      %v10396 = vpop.f32.mrf.mxu0
      %v10397 = vpop.f32.mrf.mxu0
      %v10398 = vadd.f32 0.0, %v10397
      %v10399 = vpop.f32.mrf.mxu0
      %10400 = vmatprep.mubr.bf16.mxu0 0
      %10401 = vmatmul.mubr.bf16.gmra.mxu0 %v10301
      %v10402 = vpop.f32.mrf.mxu0
      %v10403 = vadd.f32 0.0, %v10402
      %v10404 = vpop.f32.mrf.mxu0
      %v10405 = vpop.f32.mrf.mxu0
      %v10406 = vadd.f32 0.0, %v10405
      %v10407 = vpop.f32.mrf.mxu0
      %10408 = vmatprep.mubr.bf16.mxu0 0
      %10409 = vmatmul.mubr.bf16.gmra.mxu0 %v10304
      %v10410 = vpop.f32.mrf.mxu0
      %v10411 = vadd.f32 0.0, %v10410
      %v10412 = vpop.f32.mrf.mxu0
      %v10413 = vpop.f32.mrf.mxu0
      %v10414 = vadd.f32 0.0, %v10413
      %v10415 = vpop.f32.mrf.mxu0
      %10416 = vmatprep.mubr.bf16.mxu0 0
      %10417 = vmatmul.mubr.bf16.gmra.mxu0 %v10307
      %v10418 = vpop.f32.mrf.mxu0
      %v10419 = vadd.f32 0.0, %v10418
      %v10420 = vpop.f32.mrf.mxu0
      %v10421 = vpop.f32.mrf.mxu0
      %v10422 = vadd.f32 0.0, %v10421
      %v10423 = vpop.f32.mrf.mxu0
      %10424 = vmatprep.mubr.bf16.mxu0 0
      %10425 = vmatmul.mubr.bf16.gmra.mxu0 %v10310
      %v10426 = vpop.f32.mrf.mxu0
      %v10427 = vadd.f32 0.0, %v10426
      %v10428 = vpop.f32.mrf.mxu0
      %v10429 = vpop.f32.mrf.mxu0
      %v10430 = vadd.f32 0.0, %v10429
      %v10431 = vpop.f32.mrf.mxu0
      %10432 = vmatprep.mubr.bf16.mxu0 0
      %10433 = vmatmul.mubr.bf16.gmra.mxu0 %v10313
      %v10434 = vpop.f32.mrf.mxu0
      %v10435 = vadd.f32 0.0, %v10434
      %v10436 = vpop.f32.mrf.mxu0
      %v10437 = vpop.f32.mrf.mxu0
      %v10438 = vadd.f32 0.0, %v10437
      %v10439 = vpop.f32.mrf.mxu0
      %10440 = vmatprep.mubr.bf16.mxu0 0
      %10441 = vmatmul.mubr.bf16.gmra.mxu0 %v10316
      %v10442 = vpop.f32.mrf.mxu0
      %v10443 = vadd.f32 0.0, %v10442
      %v10444 = vpop.f32.mrf.mxu0
      %v10445 = vpop.f32.mrf.mxu0
      %v10446 = vadd.f32 0.0, %v10445
      %v10447 = vpop.f32.mrf.mxu0
      %10448 = vmatprep.mubr.bf16.mxu0 0
      %10449 = vmatmul.mubr.bf16.gmra.mxu0 %v10319
      %v10450 = vpop.f32.mrf.mxu0
      %v10451 = vadd.f32 0.0, %v10450
      %v10452 = vpop.f32.mrf.mxu0
      %v10453 = vpop.f32.mrf.mxu0
      %v10454 = vadd.f32 0.0, %v10453
      %v10455 = vpop.f32.mrf.mxu0
      %10456 = vmatprep.mubr.bf16.mxu0 0
      %10457 = vmatmul.mubr.bf16.gmra.mxu0 %v10322
      %v10458 = vpop.f32.mrf.mxu0
      %v10459 = vadd.f32 0.0, %v10458
      %v10460 = vpop.f32.mrf.mxu0
      %v10461 = vpop.f32.mrf.mxu0
      %v10462 = vadd.f32 0.0, %v10461
      %v10463 = vpop.f32.mrf.mxu0
      %10464 = vmatprep.mubr.bf16.mxu0 0
      %10465 = vmatmul.mubr.bf16.gmra.mxu0 %v10325
      %v10466 = vpop.f32.mrf.mxu0
      %v10467 = vadd.f32 0.0, %v10466
      %v10468 = vpop.f32.mrf.mxu0
      %v10469 = vpop.f32.mrf.mxu0
      %v10470 = vadd.f32 0.0, %v10469
      %v10471 = vpop.f32.mrf.mxu0
      %10472 = vmatprep.mubr.bf16.mxu0 0
      %10473 = vmatmul.mubr.bf16.gmra.mxu0 %v10328
      %v10474 = vpop.f32.mrf.mxu0
      %v10475 = vadd.f32 0.0, %v10474
      %v10476 = vpop.f32.mrf.mxu0
      %v10477 = vpop.f32.mrf.mxu0
      %v10478 = vadd.f32 0.0, %v10477
      %v10479 = vpop.f32.mrf.mxu0
      %10480 = vmatprep.mubr.bf16.mxu0 0
      %10481 = vmatmul.mubr.bf16.gmra.mxu0 %v10331
      %v10482 = vpop.f32.mrf.mxu0
      %v10483 = vadd.f32 0.0, %v10482
      %v10484 = vpop.f32.mrf.mxu0
      %v10485 = vpop.f32.mrf.mxu0
      %v10486 = vadd.f32 0.0, %v10485
      %v10487 = vpop.f32.mrf.mxu0
      %10488 = vmatprep.mubr.bf16.mxu0 0
      %10489 = vmatmul.mubr.bf16.gmra.mxu0 %v10334
      %v10490 = vpop.f32.mrf.mxu0
      %v10491 = vadd.f32 0.0, %v10490
      %v10492 = vpop.f32.mrf.mxu0
      %v10493 = vpop.f32.mrf.mxu0
      %v10494 = vadd.f32 0.0, %v10493
      %v10495 = vpop.f32.mrf.mxu0
      %10496 = vmatprep.mubr.bf16.mxu0 0
      %10497 = vmatmul.mubr.bf16.gmra.mxu0 %v10337
      %v10498 = vpop.f32.mrf.mxu0
      %v10499 = vadd.f32 0.0, %v10498
      %v10500 = vpop.f32.mrf.mxu0
      %v10501 = vpop.f32.mrf.mxu0
      %v10502 = vadd.f32 0.0, %v10501
      %v10503 = vpop.f32.mrf.mxu0
      %10504 = vmatprep.mubr.bf16.mxu0 0
      %10505 = vmatmul.mubr.bf16.gmra.mxu0 %v10340
      %v10506 = vpop.f32.mrf.mxu0
      %v10507 = vadd.f32 0.0, %v10506
      %v10508 = vpop.f32.mrf.mxu0
      %v10509 = vpop.f32.mrf.mxu0
      %v10510 = vadd.f32 0.0, %v10509
      %v10511 = vpop.f32.mrf.mxu0
      %10512 = vmatprep.mubr.bf16.mxu0 0
      %10513 = vmatmul.mubr.bf16.gmra.mxu0 %v10343
      %v10514 = vpop.f32.mrf.mxu0
      %v10515 = vadd.f32 0.0, %v10514
      %v10516 = vpop.f32.mrf.mxu0
      %v10517 = vpop.f32.mrf.mxu0
      %v10518 = vadd.f32 0.0, %v10517
      %v10519 = vpop.f32.mrf.mxu0
      %10520 = vmatprep.mubr.bf16.mxu0 0
      %10521 = vmatmul.mubr.bf16.gmra.mxu0 %v10346
      %v10522 = vpop.f32.mrf.mxu0
      %v10523 = vadd.f32 0.0, %v10522
      %v10524 = vpop.f32.mrf.mxu0
      %v10525 = vpop.f32.mrf.mxu0
      %v10526 = vadd.f32 0.0, %v10525
      %v10527 = vpop.f32.mrf.mxu0
      %10528 = vmatprep.mubr.bf16.mxu0 0
      %10529 = vmatmul.mubr.bf16.gmra.mxu0 %v10349
      %v10530 = vpop.f32.mrf.mxu0
      %v10531 = vadd.f32 0.0, %v10530
      %v10532 = vpop.f32.mrf.mxu0
      %v10533 = vpop.f32.mrf.mxu0
      %v10534 = vadd.f32 0.0, %v10533
      %v10535 = vpop.f32.mrf.mxu0
      %10536 = vmatprep.mubr.bf16.mxu0 0
      %10537 = vmatmul.mubr.bf16.gmra.mxu0 %v10352
      %v10538 = vpop.f32.mrf.mxu0
      %v10539 = vadd.f32 0.0, %v10538
      %v10540 = vpop.f32.mrf.mxu0
      %v10541 = vpop.f32.mrf.mxu0
      %v10542 = vadd.f32 0.0, %v10541
      %v10543 = vpop.f32.mrf.mxu0
      %10544 = vmatprep.mubr.bf16.mxu0 0
      %10545 = vmatmul.mubr.bf16.gmra.mxu0 %v10355
      %v10546 = vpop.f32.mrf.mxu0
      %v10547 = vadd.f32 0.0, %v10546
      %v10548 = vpop.f32.mrf.mxu0
      %v10549 = vpop.f32.mrf.mxu0
      %v10550 = vadd.f32 0.0, %v10549
      %v10551 = vpop.f32.mrf.mxu0
      %10552 = vmatprep.mubr.bf16.mxu0 0
      %10553 = vmatmul.mubr.bf16.gmra.mxu0 %v10358
      %v10554 = vpop.f32.mrf.mxu0
      %v10555 = vadd.f32 0.0, %v10554
      %v10556 = vpop.f32.mrf.mxu0
      %v10557 = vpop.f32.mrf.mxu0
      %v10558 = vpop.f32.mrf.mxu0
      %10559 = vdwg.mxu0
      %v10560 = vadd.f32 %v9928, %v10395
      %v10561 = vadd.f32 %v9929, %v10398
      %v10562 = vadd.f32 %v9930, %v10403
      %v10563 = vadd.f32 %v9931, %v10406
      %v10564 = vadd.f32 %v9932, %v10411
      %v10565 = vadd.f32 %v9933, %v10414
      %v10566 = vadd.f32 %v9934, %v10419
      %v10567 = vadd.f32 %v9935, %v10422
      %v10568 = vadd.f32 %v9936, %v10427
      %v10569 = vadd.f32 %v9937, %v10430
      %v10570 = vadd.f32 %v9938, %v10435
      %v10571 = vadd.f32 %v9939, %v10438
      %v10572 = vadd.f32 %v9940, %v10443
      %v10573 = vadd.f32 %v9941, %v10446
      %v10574 = vadd.f32 %v9942, %v10451
      %v10575 = vadd.f32 %v9943, %v10454
      %v10576 = vadd.f32 %v9944, %v10459
      %v10577 = vadd.f32 %v9945, %v10462
      %v10578 = vadd.f32 %v9946, %v10467
      %v10579 = vadd.f32 %v9947, %v10470
      %v10580 = vadd.f32 %v9948, %v10475
      %v10581 = vadd.f32 %v9949, %v10478
      %v10582 = vadd.f32 %v9950, %v10483
      %v10583 = vadd.f32 %v9951, %v10486
      %v10584 = vadd.f32 %v9952, %v10491
      %v10585 = vadd.f32 %v9953, %v10494
      %v10586 = vadd.f32 %v9954, %v10499
      %v10587 = vadd.f32 %v9955, %v10502
      %v10588 = vadd.f32 %v9956, %v10507
      %v10589 = vadd.f32 %v9957, %v10510
      %v10590 = vadd.f32 %v9958, %v10515
      %v10591 = vadd.f32 %v9959, %v10518
      %v10592 = vadd.f32 %v9960, %v10523
      %v10593 = vadd.f32 %v9961, %v10526
      %v10594 = vadd.f32 %v9962, %v10531
      %v10595 = vadd.f32 %v9963, %v10534
      %v10596 = vadd.f32 %v9964, %v10539
      %v10597 = vadd.f32 %v9965, %v10542
      %v10598 = vadd.f32 %v9966, %v10547
      %v10599 = vadd.f32 %v9967, %v10550
      %v10600 = vadd.f32 %v9968, %v10555
      %v10601 = vld [vmem:[#allocation2 + $0x18] sm:$0xe]
      %s10602 = scalar_lea.vmem %s11, 112
      %v10603 = vld [vmem:[%s10602] sm:$0xf]
      %v10604 = vld [vmem:[%s10602 + $0x4] sm:$0xf]
      %v10605 = vld [vmem:[%s10602 + $0x8] sm:$0xf]
      %v10606 = vld [vmem:[%s10602 + $0xc] sm:$0xf]
      %v10608 = vunpack.c.l.b16 %v10601
      %v10609 = vpack.c.b16 %v10057, %v10608
      %v10610 = vrot.slane %v10609, 1
      %v10611 = vrot.slane %v10098, 1
      %v10612 = vsel %vm5219, %v10610, %v10611
      %v10613 = vrot.slane %v10099, 1
      %v10614 = vsel %vm5219, %v10611, %v10613
      %v10615 = vrot.slane %v10100, 1
      %v10616 = vsel %vm5219, %v10613, %v10615
      %v10617 = vrot.slane %v10101, 1
      %v10618 = vsel %vm5219, %v10615, %v10617
      %v10619 = vrot.slane %v10102, 1
      %v10620 = vsel %vm5219, %v10617, %v10619
      %v10621 = vrot.slane %v10103, 1
      %v10622 = vsel %vm5219, %v10619, %v10621
      %v10623 = vrot.slane %v10104, 1
      %v10624 = vsel %vm5219, %v10621, %v10623
      %v10625 = vrot.slane %v10105, 1
      %v10626 = vsel %vm5219, %v10623, %v10625
      %v10627 = vrot.slane %v10106, 1
      %v10628 = vsel %vm5219, %v10625, %v10627
      %v10629 = vrot.slane %v10107, 1
      %v10630 = vsel %vm5219, %v10627, %v10629
      %v10631 = vrot.slane %v10108, 1
      %v10632 = vsel %vm5219, %v10629, %v10631
      %v10633 = vrot.slane %v10109, 1
      %v10634 = vsel %vm5219, %v10631, %v10633
      %v10635 = vrot.slane %v10110, 1
      %v10636 = vsel %vm5219, %v10633, %v10635
      %v10637 = vrot.slane %v10111, 1
      %v10638 = vsel %vm5219, %v10635, %v10637
      %v10639 = vrot.slane %v10112, 1
      %v10640 = vsel %vm5219, %v10637, %v10639
      %v10641 = vrot.slane %v10113, 1
      %v10642 = vsel %vm5219, %v10639, %v10641
      %v10643 = vrot.slane %v10114, 1
      %v10644 = vsel %vm5219, %v10641, %v10643
      %v10645 = vrot.slane %v10115, 1
      %v10646 = vsel %vm5219, %v10643, %v10645
      %v10647 = vrot.slane %v10116, 1
      %v10648 = vsel %vm5219, %v10645, %v10647
      %v10649 = vrot.slane %v10117, 1
      %v10650 = vsel %vm5219, %v10647, %v10649
      %v10655 = vunpack.c.l.b16 %v10603
      %v10656 = vunpack.c.l.b16 %v10604
      %v10657 = vunpack.c.l.b16 %v10605
      %v10658 = vunpack.c.l.b16 %v10606
      %v10659 = vpack.c.b16 %v10656, %v10655
      %v10660 = vpack.c.b16 %v10658, %v10657
      %v10664 = vsel %vm940, %v10612, 0
      %v10667 = vsel %vm940, %v10614, 0
      %v10670 = vsel %vm940, %v10616, 0
      %v10673 = vsel %vm940, %v10618, 0
      %v10676 = vsel %vm940, %v10620, 0
      %v10679 = vsel %vm940, %v10622, 0
      %v10682 = vsel %vm940, %v10624, 0
      %v10685 = vsel %vm940, %v10626, 0
      %v10688 = vsel %vm940, %v10628, 0
      %v10691 = vsel %vm940, %v10630, 0
      %v10694 = vsel %vm940, %v10632, 0
      %v10697 = vsel %vm940, %v10634, 0
      %v10700 = vsel %vm940, %v10636, 0
      %v10703 = vsel %vm940, %v10638, 0
      %v10706 = vsel %vm940, %v10640, 0
      %v10709 = vsel %vm940, %v10642, 0
      %v10712 = vsel %vm940, %v10644, 0
      %v10715 = vsel %vm940, %v10646, 0
      %v10718 = vsel %vm940, %v10648, 0
      %v10721 = vsel %vm940, %v10650, 0
      %v10724 = vsel %vm940, %v10649, 0
      %10726 = vmatprep.subr.bf16.mxu0 0
      %10727 = vmatpush1.bf16.msra.mxu0 0
      %10728 = vmatprep.subr.bf16.mxu0 0
      %10729 = vmatpush1.bf16.msra.mxu0 0
      %10730 = vmatprep.subr.bf16.mxu0 0
      %10731 = vmatpush1.bf16.msra.mxu0 0
      %10732 = vmatprep.subr.bf16.mxu0 0
      %10733 = vmatpush1.bf16.msra.mxu0 0
      %10734 = vmatprep.subr.bf16.mxu0 0
      %10735 = vmatpush1.bf16.msra.mxu0 0
      %10736 = vmatprep.subr.bf16.mxu0 0
      %10737 = vmatpush1.bf16.msra.mxu0 0
      %10738 = vmatprep.subr.bf16.mxu0 0
      %10739 = vmatpush1.bf16.msra.mxu0 %v10660
      %10740 = vmatprep.subr.bf16.mxu0 0
      %10741 = vmatpush1.bf16.msra.mxu0 %v10659
      %10742 = vmatprep.subr.bf16.mxu0 0
      %10743 = vmatpush2.bf16.msra.mxu0 0
      %10744 = vmatprep.subr.bf16.mxu0 0
      %10745 = vmatpush2.bf16.msra.mxu0 0
      %10746 = vmatprep.subr.bf16.mxu0 0
      %10747 = vmatpush2.bf16.msra.mxu0 0
      %10748 = vmatprep.subr.bf16.mxu0 0
      %10749 = vmatpush2.bf16.msra.mxu0 0
      %10750 = vmatprep.subr.bf16.mxu0 0
      %10751 = vmatpush2.bf16.msra.mxu0 0
      %10752 = vmatprep.subr.bf16.mxu0 0
      %10753 = vmatpush2.bf16.msra.mxu0 0
      %10754 = vmatprep.subr.bf16.mxu0 0
      %10755 = vmatpush2.bf16.msra.mxu0 0
      %10756 = vmatprep.subr.bf16.mxu0 0
      %10757 = vmatpush2.bf16.msra.mxu0 0
      %10758 = vmatprep.mubr.bf16.mxu0 0
      %10759 = vmatmul.mubr.bf16.gmra.mxu0 %v10664
      %v10760 = vpop.f32.mrf.mxu0
      %v10761 = vadd.f32 0.0, %v10760
      %v10762 = vpop.f32.mrf.mxu0
      %v10763 = vpop.f32.mrf.mxu0
      %v10764 = vadd.f32 0.0, %v10763
      %v10765 = vpop.f32.mrf.mxu0
      %10766 = vmatprep.mubr.bf16.mxu0 0
      %10767 = vmatmul.mubr.bf16.gmra.mxu0 %v10667
      %v10768 = vpop.f32.mrf.mxu0
      %v10769 = vadd.f32 0.0, %v10768
      %v10770 = vpop.f32.mrf.mxu0
      %v10771 = vpop.f32.mrf.mxu0
      %v10772 = vadd.f32 0.0, %v10771
      %v10773 = vpop.f32.mrf.mxu0
      %10774 = vmatprep.mubr.bf16.mxu0 0
      %10775 = vmatmul.mubr.bf16.gmra.mxu0 %v10670
      %v10776 = vpop.f32.mrf.mxu0
      %v10777 = vadd.f32 0.0, %v10776
      %v10778 = vpop.f32.mrf.mxu0
      %v10779 = vpop.f32.mrf.mxu0
      %v10780 = vadd.f32 0.0, %v10779
      %v10781 = vpop.f32.mrf.mxu0
      %10782 = vmatprep.mubr.bf16.mxu0 0
      %10783 = vmatmul.mubr.bf16.gmra.mxu0 %v10673
      %v10784 = vpop.f32.mrf.mxu0
      %v10785 = vadd.f32 0.0, %v10784
      %v10786 = vpop.f32.mrf.mxu0
      %v10787 = vpop.f32.mrf.mxu0
      %v10788 = vadd.f32 0.0, %v10787
      %v10789 = vpop.f32.mrf.mxu0
      %10790 = vmatprep.mubr.bf16.mxu0 0
      %10791 = vmatmul.mubr.bf16.gmra.mxu0 %v10676
      %v10792 = vpop.f32.mrf.mxu0
      %v10793 = vadd.f32 0.0, %v10792
      %v10794 = vpop.f32.mrf.mxu0
      %v10795 = vpop.f32.mrf.mxu0
      %v10796 = vadd.f32 0.0, %v10795
      %v10797 = vpop.f32.mrf.mxu0
      %10798 = vmatprep.mubr.bf16.mxu0 0
      %10799 = vmatmul.mubr.bf16.gmra.mxu0 %v10679
      %v10800 = vpop.f32.mrf.mxu0
      %v10801 = vadd.f32 0.0, %v10800
      %v10802 = vpop.f32.mrf.mxu0
      %v10803 = vpop.f32.mrf.mxu0
      %v10804 = vadd.f32 0.0, %v10803
      %v10805 = vpop.f32.mrf.mxu0
      %10806 = vmatprep.mubr.bf16.mxu0 0
      %10807 = vmatmul.mubr.bf16.gmra.mxu0 %v10682
      %v10808 = vpop.f32.mrf.mxu0
      %v10809 = vadd.f32 0.0, %v10808
      %v10810 = vpop.f32.mrf.mxu0
      %v10811 = vpop.f32.mrf.mxu0
      %v10812 = vadd.f32 0.0, %v10811
      %v10813 = vpop.f32.mrf.mxu0
      %10814 = vmatprep.mubr.bf16.mxu0 0
      %10815 = vmatmul.mubr.bf16.gmra.mxu0 %v10685
      %v10816 = vpop.f32.mrf.mxu0
      %v10817 = vadd.f32 0.0, %v10816
      %v10818 = vpop.f32.mrf.mxu0
      %v10819 = vpop.f32.mrf.mxu0
      %v10820 = vadd.f32 0.0, %v10819
      %v10821 = vpop.f32.mrf.mxu0
      %10822 = vmatprep.mubr.bf16.mxu0 0
      %10823 = vmatmul.mubr.bf16.gmra.mxu0 %v10688
      %v10824 = vpop.f32.mrf.mxu0
      %v10825 = vadd.f32 0.0, %v10824
      %v10826 = vpop.f32.mrf.mxu0
      %v10827 = vpop.f32.mrf.mxu0
      %v10828 = vadd.f32 0.0, %v10827
      %v10829 = vpop.f32.mrf.mxu0
      %10830 = vmatprep.mubr.bf16.mxu0 0
      %10831 = vmatmul.mubr.bf16.gmra.mxu0 %v10691
      %v10832 = vpop.f32.mrf.mxu0
      %v10833 = vadd.f32 0.0, %v10832
      %v10834 = vpop.f32.mrf.mxu0
      %v10835 = vpop.f32.mrf.mxu0
      %v10836 = vadd.f32 0.0, %v10835
      %v10837 = vpop.f32.mrf.mxu0
      %10838 = vmatprep.mubr.bf16.mxu0 0
      %10839 = vmatmul.mubr.bf16.gmra.mxu0 %v10694
      %v10840 = vpop.f32.mrf.mxu0
      %v10841 = vadd.f32 0.0, %v10840
      %v10842 = vpop.f32.mrf.mxu0
      %v10843 = vpop.f32.mrf.mxu0
      %v10844 = vadd.f32 0.0, %v10843
      %v10845 = vpop.f32.mrf.mxu0
      %10846 = vmatprep.mubr.bf16.mxu0 0
      %10847 = vmatmul.mubr.bf16.gmra.mxu0 %v10697
      %v10848 = vpop.f32.mrf.mxu0
      %v10849 = vadd.f32 0.0, %v10848
      %v10850 = vpop.f32.mrf.mxu0
      %v10851 = vpop.f32.mrf.mxu0
      %v10852 = vadd.f32 0.0, %v10851
      %v10853 = vpop.f32.mrf.mxu0
      %10854 = vmatprep.mubr.bf16.mxu0 0
      %10855 = vmatmul.mubr.bf16.gmra.mxu0 %v10700
      %v10856 = vpop.f32.mrf.mxu0
      %v10857 = vadd.f32 0.0, %v10856
      %v10858 = vpop.f32.mrf.mxu0
      %v10859 = vpop.f32.mrf.mxu0
      %v10860 = vadd.f32 0.0, %v10859
      %v10861 = vpop.f32.mrf.mxu0
      %10862 = vmatprep.mubr.bf16.mxu0 0
      %10863 = vmatmul.mubr.bf16.gmra.mxu0 %v10703
      %v10864 = vpop.f32.mrf.mxu0
      %v10865 = vadd.f32 0.0, %v10864
      %v10866 = vpop.f32.mrf.mxu0
      %v10867 = vpop.f32.mrf.mxu0
      %v10868 = vadd.f32 0.0, %v10867
      %v10869 = vpop.f32.mrf.mxu0
      %10870 = vmatprep.mubr.bf16.mxu0 0
      %10871 = vmatmul.mubr.bf16.gmra.mxu0 %v10706
      %v10872 = vpop.f32.mrf.mxu0
      %v10873 = vadd.f32 0.0, %v10872
      %v10874 = vpop.f32.mrf.mxu0
      %v10875 = vpop.f32.mrf.mxu0
      %v10876 = vadd.f32 0.0, %v10875
      %v10877 = vpop.f32.mrf.mxu0
      %10878 = vmatprep.mubr.bf16.mxu0 0
      %10879 = vmatmul.mubr.bf16.gmra.mxu0 %v10709
      %v10880 = vpop.f32.mrf.mxu0
      %v10881 = vadd.f32 0.0, %v10880
      %v10882 = vpop.f32.mrf.mxu0
      %v10883 = vpop.f32.mrf.mxu0
      %v10884 = vadd.f32 0.0, %v10883
      %v10885 = vpop.f32.mrf.mxu0
      %10886 = vmatprep.mubr.bf16.mxu0 0
      %10887 = vmatmul.mubr.bf16.gmra.mxu0 %v10712
      %v10888 = vpop.f32.mrf.mxu0
      %v10889 = vadd.f32 0.0, %v10888
      %v10890 = vpop.f32.mrf.mxu0
      %v10891 = vpop.f32.mrf.mxu0
      %v10892 = vadd.f32 0.0, %v10891
      %v10893 = vpop.f32.mrf.mxu0
      %10894 = vmatprep.mubr.bf16.mxu0 0
      %10895 = vmatmul.mubr.bf16.gmra.mxu0 %v10715
      %v10896 = vpop.f32.mrf.mxu0
      %v10897 = vadd.f32 0.0, %v10896
      %v10898 = vpop.f32.mrf.mxu0
      %v10899 = vpop.f32.mrf.mxu0
      %v10900 = vadd.f32 0.0, %v10899
      %v10901 = vpop.f32.mrf.mxu0
      %10902 = vmatprep.mubr.bf16.mxu0 0
      %10903 = vmatmul.mubr.bf16.gmra.mxu0 %v10718
      %v10904 = vpop.f32.mrf.mxu0
      %v10905 = vadd.f32 0.0, %v10904
      %v10906 = vpop.f32.mrf.mxu0
      %v10907 = vpop.f32.mrf.mxu0
      %v10908 = vadd.f32 0.0, %v10907
      %v10909 = vpop.f32.mrf.mxu0
      %10910 = vmatprep.mubr.bf16.mxu0 0
      %10911 = vmatmul.mubr.bf16.gmra.mxu0 %v10721
      %v10912 = vpop.f32.mrf.mxu0
      %v10913 = vadd.f32 0.0, %v10912
      %v10914 = vpop.f32.mrf.mxu0
      %v10915 = vpop.f32.mrf.mxu0
      %v10916 = vadd.f32 0.0, %v10915
      %v10917 = vpop.f32.mrf.mxu0
      %10918 = vmatprep.mubr.bf16.mxu0 0
      %10919 = vmatmul.mubr.bf16.gmra.mxu0 %v10724
      %v10920 = vpop.f32.mrf.mxu0
      %v10921 = vadd.f32 0.0, %v10920
      %v10922 = vpop.f32.mrf.mxu0
      %v10923 = vpop.f32.mrf.mxu0
      %v10924 = vpop.f32.mrf.mxu0
      %10925 = vdwg.mxu0
      %v10926 = vadd.f32 %v10560, %v10761
      %v10927 = vadd.f32 %v10561, %v10764
      %v10928 = vadd.f32 %v10562, %v10769
      %v10929 = vadd.f32 %v10563, %v10772
      %v10930 = vadd.f32 %v10564, %v10777
      %v10931 = vadd.f32 %v10565, %v10780
      %v10932 = vadd.f32 %v10566, %v10785
      %v10933 = vadd.f32 %v10567, %v10788
      %v10934 = vadd.f32 %v10568, %v10793
      %v10935 = vadd.f32 %v10569, %v10796
      %v10936 = vadd.f32 %v10570, %v10801
      %v10937 = vadd.f32 %v10571, %v10804
      %v10938 = vadd.f32 %v10572, %v10809
      %v10939 = vadd.f32 %v10573, %v10812
      %v10940 = vadd.f32 %v10574, %v10817
      %v10941 = vadd.f32 %v10575, %v10820
      %v10942 = vadd.f32 %v10576, %v10825
      %v10943 = vadd.f32 %v10577, %v10828
      %v10944 = vadd.f32 %v10578, %v10833
      %v10945 = vadd.f32 %v10579, %v10836
      %v10946 = vadd.f32 %v10580, %v10841
      %v10947 = vadd.f32 %v10581, %v10844
      %v10948 = vadd.f32 %v10582, %v10849
      %v10949 = vadd.f32 %v10583, %v10852
      %v10950 = vadd.f32 %v10584, %v10857
      %v10951 = vadd.f32 %v10585, %v10860
      %v10952 = vadd.f32 %v10586, %v10865
      %v10953 = vadd.f32 %v10587, %v10868
      %v10954 = vadd.f32 %v10588, %v10873
      %v10955 = vadd.f32 %v10589, %v10876
      %v10956 = vadd.f32 %v10590, %v10881
      %v10957 = vadd.f32 %v10591, %v10884
      %v10958 = vadd.f32 %v10592, %v10889
      %v10959 = vadd.f32 %v10593, %v10892
      %v10960 = vadd.f32 %v10594, %v10897
      %v10961 = vadd.f32 %v10595, %v10900
      %v10962 = vadd.f32 %v10596, %v10905
      %v10963 = vadd.f32 %v10597, %v10908
      %v10964 = vadd.f32 %v10598, %v10913
      %v10965 = vadd.f32 %v10599, %v10916
      %v10966 = vadd.f32 %v10600, %v10921
      %v10967 = vld [vmem:[#allocation2 + $0xb8] sm:$0xf]
      %s10968 = scalar_lea.vmem %s11, 128
      %v10969 = vld [vmem:[%s10968] sm:$0xf]
      %v10970 = vld [vmem:[%s10968 + $0x4] sm:$0xf]
      %v10971 = vld [vmem:[%s10968 + $0x8] sm:$0xf]
      %v10972 = vld [vmem:[%s10968 + $0xc] sm:$0xf]
      %v10974 = vunpack.c.l.b16 %v10967
      %v10975 = vpack.c.b16 %v10974, %v10974
      %v10977 = vshrl.u32 %v10609, 16
      %v10979 = vrot.slane %v10977, 1
      %v10980 = vshll.u32 %v10609, 16
      %v10982 = vrot.slane %v10980, 2
      %v10983 = vor.u32 %v10979, %v10982
      %v10984 = vrot.slane %v10130, 1
      %v10985 = vrot.slane %v10126, 2
      %v10986 = vor.u32 %v10984, %v10985
      %v10987 = vsel %vm5586, %v10983, %v10986
      %v10988 = vrot.slane %v10138, 1
      %v10989 = vrot.slane %v10134, 2
      %v10990 = vor.u32 %v10988, %v10989
      %v10991 = vsel %vm5586, %v10986, %v10990
      %v10992 = vrot.slane %v10146, 1
      %v10993 = vrot.slane %v10142, 2
      %v10994 = vor.u32 %v10992, %v10993
      %v10995 = vsel %vm5586, %v10990, %v10994
      %v10996 = vrot.slane %v10154, 1
      %v10997 = vrot.slane %v10150, 2
      %v10998 = vor.u32 %v10996, %v10997
      %v10999 = vsel %vm5586, %v10994, %v10998
      %v11000 = vrot.slane %v10162, 1
      %v11001 = vrot.slane %v10158, 2
      %v11002 = vor.u32 %v11000, %v11001
      %v11003 = vsel %vm5586, %v10998, %v11002
      %v11004 = vrot.slane %v10170, 1
      %v11005 = vrot.slane %v10166, 2
      %v11006 = vor.u32 %v11004, %v11005
      %v11007 = vsel %vm5586, %v11002, %v11006
      %v11008 = vrot.slane %v10178, 1
      %v11009 = vrot.slane %v10174, 2
      %v11010 = vor.u32 %v11008, %v11009
      %v11011 = vsel %vm5586, %v11006, %v11010
      %v11012 = vrot.slane %v10186, 1
      %v11013 = vrot.slane %v10182, 2
      %v11014 = vor.u32 %v11012, %v11013
      %v11015 = vsel %vm5586, %v11010, %v11014
      %v11016 = vrot.slane %v10194, 1
      %v11017 = vrot.slane %v10190, 2
      %v11018 = vor.u32 %v11016, %v11017
      %v11019 = vsel %vm5586, %v11014, %v11018
      %v11020 = vrot.slane %v10202, 1
      %v11021 = vrot.slane %v10198, 2
      %v11022 = vor.u32 %v11020, %v11021
      %v11023 = vsel %vm5586, %v11018, %v11022
      %v11024 = vrot.slane %v10210, 1
      %v11025 = vrot.slane %v10206, 2
      %v11026 = vor.u32 %v11024, %v11025
      %v11027 = vsel %vm5586, %v11022, %v11026
      %v11028 = vrot.slane %v10218, 1
      %v11029 = vrot.slane %v10214, 2
      %v11030 = vor.u32 %v11028, %v11029
      %v11031 = vsel %vm5586, %v11026, %v11030
      %v11032 = vrot.slane %v10226, 1
      %v11033 = vrot.slane %v10222, 2
      %v11034 = vor.u32 %v11032, %v11033
      %v11035 = vsel %vm5586, %v11030, %v11034
      %v11036 = vrot.slane %v10234, 1
      %v11037 = vrot.slane %v10230, 2
      %v11038 = vor.u32 %v11036, %v11037
      %v11039 = vsel %vm5586, %v11034, %v11038
      %v11040 = vrot.slane %v10242, 1
      %v11041 = vrot.slane %v10238, 2
      %v11042 = vor.u32 %v11040, %v11041
      %v11043 = vsel %vm5586, %v11038, %v11042
      %v11044 = vrot.slane %v10250, 1
      %v11045 = vrot.slane %v10246, 2
      %v11046 = vor.u32 %v11044, %v11045
      %v11047 = vsel %vm5586, %v11042, %v11046
      %v11048 = vrot.slane %v10258, 1
      %v11049 = vrot.slane %v10254, 2
      %v11050 = vor.u32 %v11048, %v11049
      %v11051 = vsel %vm5586, %v11046, %v11050
      %v11052 = vrot.slane %v10266, 1
      %v11053 = vrot.slane %v10262, 2
      %v11054 = vor.u32 %v11052, %v11053
      %v11055 = vsel %vm5586, %v11050, %v11054
      %v11056 = vrot.slane %v10274, 1
      %v11057 = vrot.slane %v10270, 2
      %v11058 = vor.u32 %v11056, %v11057
      %v11059 = vsel %vm5586, %v11054, %v11058
      %v11061 = vshrl.u32 %v10975, 16
      %v11063 = vrot.slane %v11061, 1
      %v11064 = vshll.u32 %v10975, 16
      %v11066 = vrot.slane %v11064, 2
      %v11067 = vor.u32 %v11063, %v11066
      %v11068 = vsel %vm5586, %v11058, %v11067
      %v11073 = vunpack.c.l.b16 %v10969
      %v11074 = vunpack.c.l.b16 %v10970
      %v11075 = vunpack.c.l.b16 %v10971
      %v11076 = vunpack.c.l.b16 %v10972
      %v11077 = vpack.c.b16 %v11074, %v11073
      %v11078 = vpack.c.b16 %v11076, %v11075
      %v11082 = vsel %vm940, %v10987, 0
      %v11085 = vsel %vm940, %v10991, 0
      %v11088 = vsel %vm940, %v10995, 0
      %v11091 = vsel %vm940, %v10999, 0
      %v11094 = vsel %vm940, %v11003, 0
      %v11097 = vsel %vm940, %v11007, 0
      %v11100 = vsel %vm940, %v11011, 0
      %v11103 = vsel %vm940, %v11015, 0
      %v11106 = vsel %vm940, %v11019, 0
      %v11109 = vsel %vm940, %v11023, 0
      %v11112 = vsel %vm940, %v11027, 0
      %v11115 = vsel %vm940, %v11031, 0
      %v11118 = vsel %vm940, %v11035, 0
      %v11121 = vsel %vm940, %v11039, 0
      %v11124 = vsel %vm940, %v11043, 0
      %v11127 = vsel %vm940, %v11047, 0
      %v11130 = vsel %vm940, %v11051, 0
      %v11133 = vsel %vm940, %v11055, 0
      %v11136 = vsel %vm940, %v11059, 0
      %v11139 = vsel %vm940, %v11068, 0
      %v11142 = vsel %vm940, %v11067, 0
      %11144 = vmatprep.subr.bf16.mxu0 0
      %11145 = vmatpush1.bf16.msra.mxu0 0
      %11146 = vmatprep.subr.bf16.mxu0 0
      %11147 = vmatpush1.bf16.msra.mxu0 0
      %11148 = vmatprep.subr.bf16.mxu0 0
      %11149 = vmatpush1.bf16.msra.mxu0 0
      %11150 = vmatprep.subr.bf16.mxu0 0
      %11151 = vmatpush1.bf16.msra.mxu0 0
      %11152 = vmatprep.subr.bf16.mxu0 0
      %11153 = vmatpush1.bf16.msra.mxu0 0
      %11154 = vmatprep.subr.bf16.mxu0 0
      %11155 = vmatpush1.bf16.msra.mxu0 0
      %11156 = vmatprep.subr.bf16.mxu0 0
      %11157 = vmatpush1.bf16.msra.mxu0 %v11078
      %11158 = vmatprep.subr.bf16.mxu0 0
      %11159 = vmatpush1.bf16.msra.mxu0 %v11077
      %11160 = vmatprep.subr.bf16.mxu0 0
      %11161 = vmatpush2.bf16.msra.mxu0 0
      %11162 = vmatprep.subr.bf16.mxu0 0
      %11163 = vmatpush2.bf16.msra.mxu0 0
      %11164 = vmatprep.subr.bf16.mxu0 0
      %11165 = vmatpush2.bf16.msra.mxu0 0
      %11166 = vmatprep.subr.bf16.mxu0 0
      %11167 = vmatpush2.bf16.msra.mxu0 0
      %11168 = vmatprep.subr.bf16.mxu0 0
      %11169 = vmatpush2.bf16.msra.mxu0 0
      %11170 = vmatprep.subr.bf16.mxu0 0
      %11171 = vmatpush2.bf16.msra.mxu0 0
      %11172 = vmatprep.subr.bf16.mxu0 0
      %11173 = vmatpush2.bf16.msra.mxu0 0
      %11174 = vmatprep.subr.bf16.mxu0 0
      %11175 = vmatpush2.bf16.msra.mxu0 0
      %11176 = vmatprep.mubr.bf16.mxu0 0
      %11177 = vmatmul.mubr.bf16.gmra.mxu0 %v11082
      %v11178 = vpop.f32.mrf.mxu0
      %v11179 = vadd.f32 0.0, %v11178
      %v11180 = vpop.f32.mrf.mxu0
      %v11181 = vpop.f32.mrf.mxu0
      %v11182 = vadd.f32 0.0, %v11181
      %v11183 = vpop.f32.mrf.mxu0
      %11184 = vmatprep.mubr.bf16.mxu0 0
      %11185 = vmatmul.mubr.bf16.gmra.mxu0 %v11085
      %v11186 = vpop.f32.mrf.mxu0
      %v11187 = vadd.f32 0.0, %v11186
      %v11188 = vpop.f32.mrf.mxu0
      %v11189 = vpop.f32.mrf.mxu0
      %v11190 = vadd.f32 0.0, %v11189
      %v11191 = vpop.f32.mrf.mxu0
      %11192 = vmatprep.mubr.bf16.mxu0 0
      %11193 = vmatmul.mubr.bf16.gmra.mxu0 %v11088
      %v11194 = vpop.f32.mrf.mxu0
      %v11195 = vadd.f32 0.0, %v11194
      %v11196 = vpop.f32.mrf.mxu0
      %v11197 = vpop.f32.mrf.mxu0
      %v11198 = vadd.f32 0.0, %v11197
      %v11199 = vpop.f32.mrf.mxu0
      %11200 = vmatprep.mubr.bf16.mxu0 0
      %11201 = vmatmul.mubr.bf16.gmra.mxu0 %v11091
      %v11202 = vpop.f32.mrf.mxu0
      %v11203 = vadd.f32 0.0, %v11202
      %v11204 = vpop.f32.mrf.mxu0
      %v11205 = vpop.f32.mrf.mxu0
      %v11206 = vadd.f32 0.0, %v11205
      %v11207 = vpop.f32.mrf.mxu0
      %11208 = vmatprep.mubr.bf16.mxu0 0
      %11209 = vmatmul.mubr.bf16.gmra.mxu0 %v11094
      %v11210 = vpop.f32.mrf.mxu0
      %v11211 = vadd.f32 0.0, %v11210
      %v11212 = vpop.f32.mrf.mxu0
      %v11213 = vpop.f32.mrf.mxu0
      %v11214 = vadd.f32 0.0, %v11213
      %v11215 = vpop.f32.mrf.mxu0
      %11216 = vmatprep.mubr.bf16.mxu0 0
      %11217 = vmatmul.mubr.bf16.gmra.mxu0 %v11097
      %v11218 = vpop.f32.mrf.mxu0
      %v11219 = vadd.f32 0.0, %v11218
      %v11220 = vpop.f32.mrf.mxu0
      %v11221 = vpop.f32.mrf.mxu0
      %v11222 = vadd.f32 0.0, %v11221
      %v11223 = vpop.f32.mrf.mxu0
      %11224 = vmatprep.mubr.bf16.mxu0 0
      %11225 = vmatmul.mubr.bf16.gmra.mxu0 %v11100
      %v11226 = vpop.f32.mrf.mxu0
      %v11227 = vadd.f32 0.0, %v11226
      %v11228 = vpop.f32.mrf.mxu0
      %v11229 = vpop.f32.mrf.mxu0
      %v11230 = vadd.f32 0.0, %v11229
      %v11231 = vpop.f32.mrf.mxu0
      %11232 = vmatprep.mubr.bf16.mxu0 0
      %11233 = vmatmul.mubr.bf16.gmra.mxu0 %v11103
      %v11234 = vpop.f32.mrf.mxu0
      %v11235 = vadd.f32 0.0, %v11234
      %v11236 = vpop.f32.mrf.mxu0
      %v11237 = vpop.f32.mrf.mxu0
      %v11238 = vadd.f32 0.0, %v11237
      %v11239 = vpop.f32.mrf.mxu0
      %11240 = vmatprep.mubr.bf16.mxu0 0
      %11241 = vmatmul.mubr.bf16.gmra.mxu0 %v11106
      %v11242 = vpop.f32.mrf.mxu0
      %v11243 = vadd.f32 0.0, %v11242
      %v11244 = vpop.f32.mrf.mxu0
      %v11245 = vpop.f32.mrf.mxu0
      %v11246 = vadd.f32 0.0, %v11245
      %v11247 = vpop.f32.mrf.mxu0
      %11248 = vmatprep.mubr.bf16.mxu0 0
      %11249 = vmatmul.mubr.bf16.gmra.mxu0 %v11109
      %v11250 = vpop.f32.mrf.mxu0
      %v11251 = vadd.f32 0.0, %v11250
      %v11252 = vpop.f32.mrf.mxu0
      %v11253 = vpop.f32.mrf.mxu0
      %v11254 = vadd.f32 0.0, %v11253
      %v11255 = vpop.f32.mrf.mxu0
      %11256 = vmatprep.mubr.bf16.mxu0 0
      %11257 = vmatmul.mubr.bf16.gmra.mxu0 %v11112
      %v11258 = vpop.f32.mrf.mxu0
      %v11259 = vadd.f32 0.0, %v11258
      %v11260 = vpop.f32.mrf.mxu0
      %v11261 = vpop.f32.mrf.mxu0
      %v11262 = vadd.f32 0.0, %v11261
      %v11263 = vpop.f32.mrf.mxu0
      %11264 = vmatprep.mubr.bf16.mxu0 0
      %11265 = vmatmul.mubr.bf16.gmra.mxu0 %v11115
      %v11266 = vpop.f32.mrf.mxu0
      %v11267 = vadd.f32 0.0, %v11266
      %v11268 = vpop.f32.mrf.mxu0
      %v11269 = vpop.f32.mrf.mxu0
      %v11270 = vadd.f32 0.0, %v11269
      %v11271 = vpop.f32.mrf.mxu0
      %11272 = vmatprep.mubr.bf16.mxu0 0
      %11273 = vmatmul.mubr.bf16.gmra.mxu0 %v11118
      %v11274 = vpop.f32.mrf.mxu0
      %v11275 = vadd.f32 0.0, %v11274
      %v11276 = vpop.f32.mrf.mxu0
      %v11277 = vpop.f32.mrf.mxu0
      %v11278 = vadd.f32 0.0, %v11277
      %v11279 = vpop.f32.mrf.mxu0
      %11280 = vmatprep.mubr.bf16.mxu0 0
      %11281 = vmatmul.mubr.bf16.gmra.mxu0 %v11121
      %v11282 = vpop.f32.mrf.mxu0
      %v11283 = vadd.f32 0.0, %v11282
      %v11284 = vpop.f32.mrf.mxu0
      %v11285 = vpop.f32.mrf.mxu0
      %v11286 = vadd.f32 0.0, %v11285
      %v11287 = vpop.f32.mrf.mxu0
      %11288 = vmatprep.mubr.bf16.mxu0 0
      %11289 = vmatmul.mubr.bf16.gmra.mxu0 %v11124
      %v11290 = vpop.f32.mrf.mxu0
      %v11291 = vadd.f32 0.0, %v11290
      %v11292 = vpop.f32.mrf.mxu0
      %v11293 = vpop.f32.mrf.mxu0
      %v11294 = vadd.f32 0.0, %v11293
      %v11295 = vpop.f32.mrf.mxu0
      %11296 = vmatprep.mubr.bf16.mxu0 0
      %11297 = vmatmul.mubr.bf16.gmra.mxu0 %v11127
      %v11298 = vpop.f32.mrf.mxu0
      %v11299 = vadd.f32 0.0, %v11298
      %v11300 = vpop.f32.mrf.mxu0
      %v11301 = vpop.f32.mrf.mxu0
      %v11302 = vadd.f32 0.0, %v11301
      %v11303 = vpop.f32.mrf.mxu0
      %11304 = vmatprep.mubr.bf16.mxu0 0
      %11305 = vmatmul.mubr.bf16.gmra.mxu0 %v11130
      %v11306 = vpop.f32.mrf.mxu0
      %v11307 = vadd.f32 0.0, %v11306
      %v11308 = vpop.f32.mrf.mxu0
      %v11309 = vpop.f32.mrf.mxu0
      %v11310 = vadd.f32 0.0, %v11309
      %v11311 = vpop.f32.mrf.mxu0
      %11312 = vmatprep.mubr.bf16.mxu0 0
      %11313 = vmatmul.mubr.bf16.gmra.mxu0 %v11133
      %v11314 = vpop.f32.mrf.mxu0
      %v11315 = vadd.f32 0.0, %v11314
      %v11316 = vpop.f32.mrf.mxu0
      %v11317 = vpop.f32.mrf.mxu0
      %v11318 = vadd.f32 0.0, %v11317
      %v11319 = vpop.f32.mrf.mxu0
      %11320 = vmatprep.mubr.bf16.mxu0 0
      %11321 = vmatmul.mubr.bf16.gmra.mxu0 %v11136
      %v11322 = vpop.f32.mrf.mxu0
      %v11323 = vadd.f32 0.0, %v11322
      %v11324 = vpop.f32.mrf.mxu0
      %v11325 = vpop.f32.mrf.mxu0
      %v11326 = vadd.f32 0.0, %v11325
      %v11327 = vpop.f32.mrf.mxu0
      %11328 = vmatprep.mubr.bf16.mxu0 0
      %11329 = vmatmul.mubr.bf16.gmra.mxu0 %v11139
      %v11330 = vpop.f32.mrf.mxu0
      %v11331 = vadd.f32 0.0, %v11330
      %v11332 = vpop.f32.mrf.mxu0
      %v11333 = vpop.f32.mrf.mxu0
      %v11334 = vadd.f32 0.0, %v11333
      %v11335 = vpop.f32.mrf.mxu0
      %11336 = vmatprep.mubr.bf16.mxu0 0
      %11337 = vmatmul.mubr.bf16.gmra.mxu0 %v11142
      %v11338 = vpop.f32.mrf.mxu0
      %v11339 = vadd.f32 0.0, %v11338
      %v11340 = vpop.f32.mrf.mxu0
      %v11341 = vpop.f32.mrf.mxu0
      %v11342 = vpop.f32.mrf.mxu0
      %11343 = vdwg.mxu0
      %v11344 = vadd.f32 %v10926, %v11179
      %v11345 = vadd.f32 %v10927, %v11182
      %v11346 = vadd.f32 %v10928, %v11187
      %v11347 = vadd.f32 %v10929, %v11190
      %v11348 = vadd.f32 %v10930, %v11195
      %v11349 = vadd.f32 %v10931, %v11198
      %v11350 = vadd.f32 %v10932, %v11203
      %v11351 = vadd.f32 %v10933, %v11206
      %v11352 = vadd.f32 %v10934, %v11211
      %v11353 = vadd.f32 %v10935, %v11214
      %v11354 = vadd.f32 %v10936, %v11219
      %v11355 = vadd.f32 %v10937, %v11222
      %v11356 = vadd.f32 %v10938, %v11227
      %v11357 = vadd.f32 %v10939, %v11230
      %v11358 = vadd.f32 %v10940, %v11235
      %v11359 = vadd.f32 %v10941, %v11238
      %v11360 = vadd.f32 %v10942, %v11243
      %v11361 = vadd.f32 %v10943, %v11246
      %v11362 = vadd.f32 %v10944, %v11251
      %v11363 = vadd.f32 %v10945, %v11254
      %v11364 = vadd.f32 %v10946, %v11259
      %v11365 = vadd.f32 %v10947, %v11262
      %v11366 = vadd.f32 %v10948, %v11267
      %v11367 = vadd.f32 %v10949, %v11270
      %v11368 = vadd.f32 %v10950, %v11275
      %v11369 = vadd.f32 %v10951, %v11278
      %v11370 = vadd.f32 %v10952, %v11283
      %v11371 = vadd.f32 %v10953, %v11286
      %v11372 = vadd.f32 %v10954, %v11291
      %v11373 = vadd.f32 %v10955, %v11294
      %v11374 = vadd.f32 %v10956, %v11299
      %v11375 = vadd.f32 %v10957, %v11302
      %v11376 = vadd.f32 %v10958, %v11307
      %v11377 = vadd.f32 %v10959, %v11310
      %v11378 = vadd.f32 %v10960, %v11315
      %v11379 = vadd.f32 %v10961, %v11318
      %v11380 = vadd.f32 %v10962, %v11323
      %v11381 = vadd.f32 %v10963, %v11326
      %v11382 = vadd.f32 %v10964, %v11331
      %v11383 = vadd.f32 %v10965, %v11334
      %v11384 = vadd.f32 %v10966, %v11339
      %v11386 = vlaneseq
      %v11387 = vshrl.u32 %v11386, 7
      %v11388 = vsub.s32 0, %v11387
      %v11389 = vrot.slane %v7141, %v11388
      %v11391 = vadd.f32 %v11344, %v11389
      %v11392 = vadd.f32 %v11345, %v11389
      %v11393 = vadd.f32 %v11346, %v11389
      %v11394 = vadd.f32 %v11347, %v11389
      %v11395 = vadd.f32 %v11348, %v11389
      %v11396 = vadd.f32 %v11349, %v11389
      %v11397 = vadd.f32 %v11350, %v11389
      %v11398 = vadd.f32 %v11351, %v11389
      %v11399 = vadd.f32 %v11352, %v11389
      %v11400 = vadd.f32 %v11353, %v11389
      %v11401 = vadd.f32 %v11354, %v11389
      %v11402 = vadd.f32 %v11355, %v11389
      %v11403 = vadd.f32 %v11356, %v11389
      %v11404 = vadd.f32 %v11357, %v11389
      %v11405 = vadd.f32 %v11358, %v11389
      %v11406 = vadd.f32 %v11359, %v11389
      %v11407 = vadd.f32 %v11360, %v11389
      %v11408 = vadd.f32 %v11361, %v11389
      %v11409 = vadd.f32 %v11362, %v11389
      %v11410 = vadd.f32 %v11363, %v11389
      %v11411 = vadd.f32 %v11364, %v11389
      %v11412 = vadd.f32 %v11365, %v11389
      %v11413 = vadd.f32 %v11366, %v11389
      %v11414 = vadd.f32 %v11367, %v11389
      %v11415 = vadd.f32 %v11368, %v11389
      %v11416 = vadd.f32 %v11369, %v11389
      %v11417 = vadd.f32 %v11370, %v11389
      %v11418 = vadd.f32 %v11371, %v11389
      %v11419 = vadd.f32 %v11372, %v11389
      %v11420 = vadd.f32 %v11373, %v11389
      %v11421 = vadd.f32 %v11374, %v11389
      %v11422 = vadd.f32 %v11375, %v11389
      %v11423 = vadd.f32 %v11376, %v11389
      %v11424 = vadd.f32 %v11377, %v11389
      %v11425 = vadd.f32 %v11378, %v11389
      %v11426 = vadd.f32 %v11379, %v11389
      %v11427 = vadd.f32 %v11380, %v11389
      %v11428 = vadd.f32 %v11381, %v11389
      %v11429 = vadd.f32 %v11382, %v11389
      %v11430 = vadd.f32 %v11383, %v11389
      %v11431 = vadd.f32 %v11384, %v11389
      %vm11432 = vcmp.gt.f32.partialorder %v11391, 0.0
      %vm11433 = vcmp.gt.f32.partialorder %v11392, 0.0
      %vm11434 = vcmp.gt.f32.partialorder %v11393, 0.0
      %vm11435 = vcmp.gt.f32.partialorder %v11394, 0.0
      %vm11436 = vcmp.gt.f32.partialorder %v11395, 0.0
      %vm11437 = vcmp.gt.f32.partialorder %v11396, 0.0
      %vm11438 = vcmp.gt.f32.partialorder %v11397, 0.0
      %vm11439 = vcmp.gt.f32.partialorder %v11398, 0.0
      %vm11440 = vcmp.gt.f32.partialorder %v11399, 0.0
      %vm11441 = vcmp.gt.f32.partialorder %v11400, 0.0
      %vm11442 = vcmp.gt.f32.partialorder %v11401, 0.0
      %vm11443 = vcmp.gt.f32.partialorder %v11402, 0.0
      %vm11444 = vcmp.gt.f32.partialorder %v11403, 0.0
      %vm11445 = vcmp.gt.f32.partialorder %v11404, 0.0
      %vm11446 = vcmp.gt.f32.partialorder %v11405, 0.0
      %vm11447 = vcmp.gt.f32.partialorder %v11406, 0.0
      %vm11448 = vcmp.gt.f32.partialorder %v11407, 0.0
      %vm11449 = vcmp.gt.f32.partialorder %v11408, 0.0
      %vm11450 = vcmp.gt.f32.partialorder %v11409, 0.0
      %vm11451 = vcmp.gt.f32.partialorder %v11410, 0.0
      %vm11452 = vcmp.gt.f32.partialorder %v11411, 0.0
      %vm11453 = vcmp.gt.f32.partialorder %v11412, 0.0
      %vm11454 = vcmp.gt.f32.partialorder %v11413, 0.0
      %vm11455 = vcmp.gt.f32.partialorder %v11414, 0.0
      %vm11456 = vcmp.gt.f32.partialorder %v11415, 0.0
      %vm11457 = vcmp.gt.f32.partialorder %v11416, 0.0
      %vm11458 = vcmp.gt.f32.partialorder %v11417, 0.0
      %vm11459 = vcmp.gt.f32.partialorder %v11418, 0.0
      %vm11460 = vcmp.gt.f32.partialorder %v11419, 0.0
      %vm11461 = vcmp.gt.f32.partialorder %v11420, 0.0
      %vm11462 = vcmp.gt.f32.partialorder %v11421, 0.0
      %vm11463 = vcmp.gt.f32.partialorder %v11422, 0.0
      %vm11464 = vcmp.gt.f32.partialorder %v11423, 0.0
      %vm11465 = vcmp.gt.f32.partialorder %v11424, 0.0
      %vm11466 = vcmp.gt.f32.partialorder %v11425, 0.0
      %vm11467 = vcmp.gt.f32.partialorder %v11426, 0.0
      %vm11468 = vcmp.gt.f32.partialorder %v11427, 0.0
      %vm11469 = vcmp.gt.f32.partialorder %v11428, 0.0
      %vm11470 = vcmp.gt.f32.partialorder %v11429, 0.0
      %vm11471 = vcmp.gt.f32.partialorder %v11430, 0.0
      %vm11472 = vcmp.gt.f32.partialorder %v11431, 0.0
      %v11473 = vmul.f32 %v11391, 0.01
      %v11474 = vmul.f32 %v11392, 0.01
      %v11475 = vmul.f32 %v11393, 0.01
      %v11476 = vmul.f32 %v11394, 0.01
      %v11477 = vmul.f32 %v11395, 0.01
      %v11478 = vmul.f32 %v11396, 0.01
      %v11479 = vmul.f32 %v11397, 0.01
      %v11480 = vmul.f32 %v11398, 0.01
      %v11481 = vmul.f32 %v11399, 0.01
      %v11482 = vmul.f32 %v11400, 0.01
      %v11483 = vmul.f32 %v11401, 0.01
      %v11484 = vmul.f32 %v11402, 0.01
      %v11485 = vmul.f32 %v11403, 0.01
      %v11486 = vmul.f32 %v11404, 0.01
      %v11487 = vmul.f32 %v11405, 0.01
      %v11488 = vmul.f32 %v11406, 0.01
      %v11489 = vmul.f32 %v11407, 0.01
      %v11490 = vmul.f32 %v11408, 0.01
      %v11491 = vmul.f32 %v11409, 0.01
      %v11492 = vmul.f32 %v11410, 0.01
      %v11493 = vmul.f32 %v11411, 0.01
      %v11494 = vmul.f32 %v11412, 0.01
      %v11495 = vmul.f32 %v11413, 0.01
      %v11496 = vmul.f32 %v11414, 0.01
      %v11497 = vmul.f32 %v11415, 0.01
      %v11498 = vmul.f32 %v11416, 0.01
      %v11499 = vmul.f32 %v11417, 0.01
      %v11500 = vmul.f32 %v11418, 0.01
      %v11501 = vmul.f32 %v11419, 0.01
      %v11502 = vmul.f32 %v11420, 0.01
      %v11503 = vmul.f32 %v11421, 0.01
      %v11504 = vmul.f32 %v11422, 0.01
      %v11505 = vmul.f32 %v11423, 0.01
      %v11506 = vmul.f32 %v11424, 0.01
      %v11507 = vmul.f32 %v11425, 0.01
      %v11508 = vmul.f32 %v11426, 0.01
      %v11509 = vmul.f32 %v11427, 0.01
      %v11510 = vmul.f32 %v11428, 0.01
      %v11511 = vmul.f32 %v11429, 0.01
      %v11512 = vmul.f32 %v11430, 0.01
      %v11513 = vmul.f32 %v11431, 0.01
      %v11514 = vsel %vm11432, %v11391, %v11473
      %v11515 = vsel %vm11433, %v11392, %v11474
      %v11516 = vsel %vm11434, %v11393, %v11475
      %v11517 = vsel %vm11435, %v11394, %v11476
      %v11518 = vsel %vm11436, %v11395, %v11477
      %v11519 = vsel %vm11437, %v11396, %v11478
      %v11520 = vsel %vm11438, %v11397, %v11479
      %v11521 = vsel %vm11439, %v11398, %v11480
      %v11522 = vsel %vm11440, %v11399, %v11481
      %v11523 = vsel %vm11441, %v11400, %v11482
      %v11524 = vsel %vm11442, %v11401, %v11483
      %v11525 = vsel %vm11443, %v11402, %v11484
      %v11526 = vsel %vm11444, %v11403, %v11485
      %v11527 = vsel %vm11445, %v11404, %v11486
      %v11528 = vsel %vm11446, %v11405, %v11487
      %v11529 = vsel %vm11447, %v11406, %v11488
      %v11530 = vsel %vm11448, %v11407, %v11489
      %v11531 = vsel %vm11449, %v11408, %v11490
      %v11532 = vsel %vm11450, %v11409, %v11491
      %v11533 = vsel %vm11451, %v11410, %v11492
      %v11534 = vsel %vm11452, %v11411, %v11493
      %v11535 = vsel %vm11453, %v11412, %v11494
      %v11536 = vsel %vm11454, %v11413, %v11495
      %v11537 = vsel %vm11455, %v11414, %v11496
      %v11538 = vsel %vm11456, %v11415, %v11497
      %v11539 = vsel %vm11457, %v11416, %v11498
      %v11540 = vsel %vm11458, %v11417, %v11499
      %v11541 = vsel %vm11459, %v11418, %v11500
      %v11542 = vsel %vm11460, %v11419, %v11501
      %v11543 = vsel %vm11461, %v11420, %v11502
      %v11544 = vsel %vm11462, %v11421, %v11503
      %v11545 = vsel %vm11463, %v11422, %v11504
      %v11546 = vsel %vm11464, %v11423, %v11505
      %v11547 = vsel %vm11465, %v11424, %v11506
      %v11548 = vsel %vm11466, %v11425, %v11507
      %v11549 = vsel %vm11467, %v11426, %v11508
      %v11550 = vsel %vm11468, %v11427, %v11509
      %v11551 = vsel %vm11469, %v11428, %v11510
      %v11552 = vsel %vm11470, %v11429, %v11511
      %v11553 = vsel %vm11471, %v11430, %v11512
      %v11554 = vsel %vm11472, %v11431, %v11513
      %v11555 = vmul.f32 %v11514, %v1296
      %v11556 = vmul.f32 %v11515, %v1301
      %v11557 = vmul.f32 %v11516, %v1306
      %v11558 = vmul.f32 %v11517, %v1311
      %v11559 = vmul.f32 %v11518, %v1316
      %v11560 = vmul.f32 %v11519, %v1321
      %v11561 = vmul.f32 %v11520, %v1326
      %v11562 = vmul.f32 %v11521, %v1331
      %v11563 = vmul.f32 %v11522, %v1336
      %v11564 = vmul.f32 %v11523, %v1341
      %v11565 = vmul.f32 %v11524, %v1346
      %v11566 = vmul.f32 %v11525, %v1351
      %v11567 = vmul.f32 %v11526, %v1356
      %v11568 = vmul.f32 %v11527, %v1361
      %v11569 = vmul.f32 %v11528, %v1366
      %v11570 = vmul.f32 %v11529, %v1371
      %v11571 = vmul.f32 %v11530, %v1376
      %v11572 = vmul.f32 %v11531, %v1381
      %v11573 = vmul.f32 %v11532, %v1386
      %v11574 = vmul.f32 %v11533, %v1391
      %v11575 = vmul.f32 %v11534, %v1396
      %v11576 = vmul.f32 %v11535, %v1401
      %v11577 = vmul.f32 %v11536, %v1406
      %v11578 = vmul.f32 %v11537, %v1411
      %v11579 = vmul.f32 %v11538, %v1416
      %v11580 = vmul.f32 %v11539, %v1421
      %v11581 = vmul.f32 %v11540, %v1426
      %v11582 = vmul.f32 %v11541, %v1431
      %v11583 = vmul.f32 %v11542, %v1436
      %v11584 = vmul.f32 %v11543, %v1441
      %v11585 = vmul.f32 %v11544, %v1446
      %v11586 = vmul.f32 %v11545, %v1451
      %v11587 = vmul.f32 %v11546, %v1456
      %v11588 = vmul.f32 %v11547, %v1461
      %v11589 = vmul.f32 %v11548, %v1466
      %v11590 = vmul.f32 %v11549, %v1471
      %v11591 = vmul.f32 %v11550, %v1476
      %v11592 = vmul.f32 %v11551, %v1481
      %v11593 = vmul.f32 %v11552, %v1486
      %v11594 = vmul.f32 %v11553, %v1491
      %v11595 = vmul.f32 %v11554, %v1496
      %11596 = vst.msk [vmem:[%s520] sm:$0xff] %vm940, %v11555
      %11597 = vst.msk [vmem:[%s520 + $0x8] sm:$0xff] %vm940, %v11556
      %11598 = vst.msk [vmem:[%s520 + $0x10] sm:$0xff] %vm940, %v11557
      %11599 = vst.msk [vmem:[%s520 + $0x18] sm:$0xff] %vm940, %v11558
      %11600 = vst.msk [vmem:[%s520 + $0x20] sm:$0xff] %vm940, %v11559
      %11601 = vst.msk [vmem:[%s520 + $0x28] sm:$0xff] %vm940, %v11560
      %11602 = vst.msk [vmem:[%s520 + $0x30] sm:$0xff] %vm940, %v11561
      %11603 = vst.msk [vmem:[%s520 + $0x38] sm:$0xff] %vm940, %v11562
      %11604 = vst.msk [vmem:[%s520 + $0x40] sm:$0xff] %vm940, %v11563
      %11605 = vst.msk [vmem:[%s520 + $0x48] sm:$0xff] %vm940, %v11564
      %11606 = vst.msk [vmem:[%s520 + $0x50] sm:$0xff] %vm940, %v11565
      %11607 = vst.msk [vmem:[%s520 + $0x58] sm:$0xff] %vm940, %v11566
      %11608 = vst.msk [vmem:[%s520 + $0x60] sm:$0xff] %vm940, %v11567
      %11609 = vst.msk [vmem:[%s520 + $0x68] sm:$0xff] %vm940, %v11568
      %11610 = vst.msk [vmem:[%s520 + $0x70] sm:$0xff] %vm940, %v11569
      %11611 = vst.msk [vmem:[%s520 + $0x78] sm:$0xff] %vm940, %v11570
      %11612 = vst.msk [vmem:[%s520 + $0x80] sm:$0xff] %vm940, %v11571
      %11613 = vst.msk [vmem:[%s520 + $0x88] sm:$0xff] %vm940, %v11572
      %11614 = vst.msk [vmem:[%s520 + $0x90] sm:$0xff] %vm940, %v11573
      %11615 = vst.msk [vmem:[%s520 + $0x98] sm:$0xff] %vm940, %v11574
      %11616 = vst.msk [vmem:[%s520 + $0xa0] sm:$0xff] %vm940, %v11575
      %11617 = vst.msk [vmem:[%s520 + $0xa8] sm:$0xff] %vm940, %v11576
      %11618 = vst.msk [vmem:[%s520 + $0xb0] sm:$0xff] %vm940, %v11577
      %11619 = vst.msk [vmem:[%s520 + $0xb8] sm:$0xff] %vm940, %v11578
      %11620 = vst.msk [vmem:[%s520 + $0xc0] sm:$0xff] %vm940, %v11579
      %11621 = vst.msk [vmem:[%s520 + $0xc8] sm:$0xff] %vm940, %v11580
      %11622 = vst.msk [vmem:[%s520 + $0xd0] sm:$0xff] %vm940, %v11581
      %11623 = vst.msk [vmem:[%s520 + $0xd8] sm:$0xff] %vm940, %v11582
      %11624 = vst.msk [vmem:[%s520 + $0xe0] sm:$0xff] %vm940, %v11583
      %11625 = vst.msk [vmem:[%s520 + $0xe8] sm:$0xff] %vm940, %v11584
      %11626 = vst.msk [vmem:[%s520 + $0xf0] sm:$0xff] %vm940, %v11585
      %11627 = vst.msk [vmem:[%s520 + $0xf8] sm:$0xff] %vm940, %v11586
      %11628 = vst.msk [vmem:[%s520 + $0x100] sm:$0xff] %vm940, %v11587
      %11629 = vst.msk [vmem:[%s520 + $0x108] sm:$0xff] %vm940, %v11588
      %11630 = vst.msk [vmem:[%s520 + $0x110] sm:$0xff] %vm940, %v11589
      %11631 = vst.msk [vmem:[%s520 + $0x118] sm:$0xff] %vm940, %v11590
      %11632 = vst.msk [vmem:[%s520 + $0x120] sm:$0xff] %vm940, %v11591
      %11633 = vst.msk [vmem:[%s520 + $0x128] sm:$0xff] %vm940, %v11592
      %11634 = vst.msk [vmem:[%s520 + $0x130] sm:$0xff] %vm940, %v11593
      %11635 = vst.msk [vmem:[%s520 + $0x138] sm:$0xff] %vm940, %v11594
      %11636 = vst.msk [vmem:[%s520 + $0x140] sm:$0xf] %vm522, %v11595
      %p11637 = scmp.lt.s32.totalorder %s26, 1
      %s11638 = scalar_select %p11637, %s26, 1
      %s11639 = smul.addr %s11638, 41
      %s11640 = smul.addr %s11639, 8
      %s11641 = scalar_lea.vmem %s13, %s11640
      %p11642 = scmp.lt.s32.totalorder %s26, 1
      %s11643 = scalar_select %p11642, %s26, 1
      %s11644 = smul.addr %s11643, 41
      %s11645 = smul.addr %s11644, 8
      %s11646 = scalar_lea.vmem %s14, %s11645
      // Predicated region
      $region73: #{_lambda_.3} parent=71 // pred_check
        %p11647 = pneg %p332
      $region74: #{_lambda_.3} parent=71 // pred_check_branch
        %11649 = sbr.rel (%p11647) target = $region76
      $region75: #{_lambda_.3} parent=71 // pred_region
        _
      $region76: #{_lambda_.3} parent=71 // pred_fallthru
        _
      // Predicated region
      $region77: #{_lambda_.3} parent=71 // pred_check
        %p11650 = pneg %p358
      $region78: #{_lambda_.3} parent=71 // pred_check_branch
        %11652 = sbr.rel (%p11650) target = $region80
      $region79: #{_lambda_.3} parent=71 // pred_region
        _
      $region80: #{_lambda_.3} parent=71 // pred_fallthru
        _
    $region72: #{_lambda_.3} parent=5 // pred_fallthru
      _
    %p11653 = scmp.le.s32.totalorder 2, %s21
    // Predicated region
    $region81: #{_lambda_.3} parent=5 // pred_check
      %p11654 = pneg %p11653
    $region82: #{_lambda_.3} parent=5 // pred_check_branch
      %11656 = sbr.rel (%p11654) target = $region84
    $region83: #{_lambda_.3} parent=5 // pred_region
      %s11657 = ssub.s32 %s21, 2
      // Predicated region
      $region85: #{_lambda_.3} parent=83 // pred_check
        %p11658 = pneg %p338
      $region86: #{_lambda_.3} parent=83 // pred_check_branch
        %11660 = sbr.rel (%p11658) target = $region88
      $region87: #{_lambda_.3} parent=83 // pred_region
        %p11661 = scmp.lt.s32.totalorder %s27, 1
        %s11662 = scalar_select %p11661, %s27, 1
        %s11663 = smul.addr %s11662, 41
        %s11664 = smul.addr %s11663, 8
        %s11665 = scalar_lea.vmem %s13, %s11664
      $region88: #{_lambda_.3} parent=83 // pred_fallthru
        _
      // Predicated region
      $region89: #{_lambda_.3} parent=83 // pred_check
        %p11666 = pneg %p364
      $region90: #{_lambda_.3} parent=83 // pred_check_branch
        %11668 = sbr.rel (%p11666) target = $region92
      $region91: #{_lambda_.3} parent=83 // pred_region
        %p11669 = scmp.lt.s32.totalorder %s27, 1
        %s11670 = scalar_select %p11669, %s27, 1
        %s11671 = smul.addr %s11670, 41
        %s11672 = smul.addr %s11671, 8
        %s11673 = scalar_lea.vmem %s14, %s11672
      $region92: #{_lambda_.3} parent=83 // pred_fallthru
        _
    $region84: #{_lambda_.3} parent=5 // pred_fallthru
      _
  $region6: #{_lambda_.3} parent=0 // loop_footer
    %s25 = sadd.s32 1, %s21
  $region7: #{_lambda_.3} parent=0 // loop_footer_branch
    %20 = sbr.rel target = $region3
  $region8: #{_lambda_.3} parent=0 // loop_exit
    _

</llo_original>
